<compile_context>
chip_gen: v6e
topology: v6e:2x2x1
jax: 0.10.0
libtpu: 0.0.40
codegen_flags: <defaults>
</compile_context>

<pallas_src>
import jax
import jax.numpy as jnp
from jax.experimental import pallas as pl
from jax.experimental.pallas import tpu as pltpu

FC1_TK = 8192      # K tile for streaming the fc1 weight
CONV1_TN = 5376    # lane (spatial) tile for conv1 (divides 252*448 exactly)
CONV2_TN = 2048    # lane (spatial) tile for conv2


def _round_up(x, m):
    return (x + m - 1) // m * m


# --------------------------------------------------------------------------
# Conv as transposed GEMM: (Cout, K) x (K, M) + bias, ReLU.  Single K/N block,
# grid over M (lane) tiles only.
# --------------------------------------------------------------------------
def _conv_gemm_kernel(w_ref, x_ref, b_ref, o_ref):
    acc = jnp.dot(w_ref[...], x_ref[...], preferred_element_type=jnp.float32)
    acc = jnp.maximum(acc + b_ref[...], 0.0)
    o_ref[...] = acc.astype(o_ref.dtype)


def _conv_gemm(wT, patches, bias, tn):
    """wT: (Cout_p, Kp) bf16; patches: (Kp, Mp) bf16; bias: (Cout_p, 1) f32."""
    cout, kp = wT.shape
    kp2, mp = patches.shape
    assert kp == kp2 and mp % tn == 0
    return pl.pallas_call(
        _conv_gemm_kernel,
        out_shape=jax.ShapeDtypeStruct((cout, mp), jnp.bfloat16),
        grid=(mp // tn,),
        in_specs=[
            pl.BlockSpec((cout, kp), lambda i: (0, 0)),
            pl.BlockSpec((kp, tn), lambda i: (0, i)),
            pl.BlockSpec((cout, 1), lambda i: (0, 0)),
        ],
        out_specs=pl.BlockSpec((cout, tn), lambda i: (0, i)),
        compiler_params=pltpu.CompilerParams(
            dimension_semantics=("parallel",),
            vmem_limit_bytes=32 * 1024 * 1024),
    )(wT, patches, bias)


def conv2d_bias_relu(x, wT, bias, kh, kw, cout_real, tn):
    """x: (N, Cin, H, W) bf16; wT: (Cout_p, Kp) bf16 (K ordered (dh, dw, ci),
    zero-padded); bias: (Cout_p, 1) f32.  VALID conv + ReLU -> (N, cout, OH, OW)."""
    n, c, h, w = x.shape
    oh, ow = h - kh + 1, w - kw + 1
    m = n * oh * ow
    mp = _round_up(m, tn)
    kp = wT.shape[1]
    k_real = kh * kw * c

    # im2col, already transposed (K rows, spatial columns) and tile-padded, so
    # the concat below is the only materialization.
    rows = []
    for dh in range(kh):
        for dw in range(kw):
            t = x[:, :, dh:dh + oh, dw:dw + ow]                     # (N,C,OH,OW)
            t = jnp.transpose(t, (1, 0, 2, 3)).reshape(c, m)        # (C, M)
            if mp != m:
                t = jnp.pad(t, ((0, 0), (0, mp - m)))
            rows.append(t)
    if kp > k_real:
        rows.append(jnp.zeros((kp - k_real, mp), x.dtype))
    patches = jnp.concatenate(rows, axis=0)                          # (Kp, Mp)

    out = _conv_gemm(wT, patches, bias, tn)                          # (Cout_p, Mp)
    out = out[:cout_real, :m].reshape(cout_real, n, oh, ow)
    return jnp.transpose(out, (1, 0, 2, 3))                          # (N, Cout, OH, OW)


# --------------------------------------------------------------------------
# 2x2 max-pool: gridded 4-way elementwise max over (N*C) planes.
# --------------------------------------------------------------------------
def _max4_kernel(a_ref, b_ref, c_ref, d_ref, o_ref):
    o_ref[...] = jnp.maximum(jnp.maximum(a_ref[...], b_ref[...]),
                             jnp.maximum(c_ref[...], d_ref[...]))


def maxpool2x2(x):
    """x: (N, C, H, W) -> (N, C, H//2, W//2); window 2, stride 2 (floor)."""
    n, c, h, w = x.shape
    h2, w2 = h // 2, w // 2
    xr = x.reshape(n * c, h, w)
    phases = [xr[:, i:2 * h2:2, j:2 * w2:2] for i in (0, 1) for j in (0, 1)]
    spec = pl.BlockSpec((1, h2, w2), lambda i: (i, 0, 0))
    out = pl.pallas_call(
        _max4_kernel,
        out_shape=jax.ShapeDtypeStruct((n * c, h2, w2), x.dtype),
        grid=(n * c,),
        in_specs=[spec] * 4,
        out_specs=spec,
        compiler_params=pltpu.CompilerParams(dimension_semantics=("parallel",)),
    )(*phases)
    return out.reshape(n, c, h2, w2)


# --------------------------------------------------------------------------
# FC1: split-K weight streaming -> two f32 partial sums (bias/ReLU later).
# --------------------------------------------------------------------------
def _fc1_partial_kernel(x_ref, w_ref, o_ref):
    @pl.when(pl.program_id(1) == 0)
    def _():
        o_ref[...] = jnp.zeros_like(o_ref)
    o_ref[...] += jnp.dot(x_ref[...], w_ref[...],
                          preferred_element_type=jnp.float32)[None]


def fc1_partial_sums(x, wT, tk):
    """x: (Bp, Kp) bf16; wT: (Kp, Np) bf16 -> (2, Bp, Np) f32 partial sums."""
    bp, kp = x.shape
    kp2, npad = wT.shape
    assert kp == kp2 and kp % (2 * tk) == 0
    half = kp // (2 * tk)
    return pl.pallas_call(
        _fc1_partial_kernel,
        out_shape=jax.ShapeDtypeStruct((2, bp, npad), jnp.float32),
        grid=(2, half),
        in_specs=[
            pl.BlockSpec((bp, tk), lambda p, k: (0, p * half + k)),
            pl.BlockSpec((tk, npad), lambda p, k: (p * half + k, 0)),
        ],
        out_specs=pl.BlockSpec((1, bp, npad), lambda p, k: (p, 0, 0)),
        compiler_params=pltpu.CompilerParams(
            dimension_semantics=("parallel", "arbitrary"),
            vmem_limit_bytes=32 * 1024 * 1024),
    )(x, wT)


# --------------------------------------------------------------------------
# Fused tail: fc1 epilogue (combine halves + bias + ReLU), fc2 + ReLU, fc3.
# --------------------------------------------------------------------------
def _fc_tail_kernel(p_ref, b1_ref, w2_ref, b2_ref, w3_ref, b3_ref, o_ref):
    h1 = jnp.maximum(p_ref[0] + p_ref[1] + b1_ref[...], 0.0)          # (Bp,128) f32
    h2 = jnp.dot(h1.astype(jnp.bfloat16), w2_ref[...],
                 preferred_element_type=jnp.float32) + b2_ref[...]    # (Bp,84)
    h2 = jnp.maximum(h2, 0.0)
    o_ref[...] = jnp.sum(h2 * w3_ref[...], axis=-1, keepdims=True) + b3_ref[...]


def fc_tail(parts, b1, w2T, b2, w3, b3):
    bp = parts.shape[1]

    def full(a):
        return pl.BlockSpec(a.shape, lambda i, nd=a.ndim: (0,) * nd)

    return pl.pallas_call(
        _fc_tail_kernel,
        out_shape=jax.ShapeDtypeStruct((bp, 1), jnp.float32),
        grid=(1,),
        in_specs=[full(parts), full(b1), full(w2T), full(b2), full(w3), full(b3)],
        out_specs=pl.BlockSpec((bp, 1), lambda i: (0, 0)),
    )(parts, b1, w2T, b2, w3, b3)


# --------------------------------------------------------------------------
# Full forward pass (activation layout = NCHW, exactly as PyTorch).
# --------------------------------------------------------------------------
def simple_cnn_forward(x_nchw, p):
    n = x_nchw.shape[0]
    x = x_nchw.astype(jnp.bfloat16)

    x = conv2d_bias_relu(x, p["c1_wT"], p["c1_b"], 5, 5, 6, CONV1_TN)
    x = maxpool2x2(x)
    x = conv2d_bias_relu(x, p["c2_wT"], p["c2_b"], 5, 5, 16, CONV2_TN)
    x = maxpool2x2(x)

    flat = x.reshape(n, -1)            # (N, 16*61*110) in (C,H,W) order == torch view
    kp, _ = p["fc1_wT"].shape
    bp = _round_up(n, 8)
    flat = jnp.pad(flat, ((0, bp - n), (0, kp - flat.shape[1])))
    parts = fc1_partial_sums(flat, p["fc1_wT"], FC1_TK)               # (2, Bp, 128)
    out = fc_tail(parts, p["fc1_b"], p["fc2_wT"], p["fc2_b"],
                  p["fc3_w"], p["fc3_b"])                             # (Bp, 1)
    return out[:n]


# --------------------------------------------------------------------------
# Params: torch-style init, then one-time (outside jit) layout prep.
# --------------------------------------------------------------------------
def init_params(key):
    ks = jax.random.split(key, 10)

    def u(k, shape, fan_in):  # torch-style U(-1/sqrt(fan_in), 1/sqrt(fan_in))
        bound = 1.0 / (fan_in ** 0.5)
        return jax.random.uniform(k, shape, jnp.float32, -bound, bound)

    return {
        "conv1_w": u(ks[0], (6, 3, 5, 5), 3 * 5 * 5),
        "conv1_b": u(ks[1], (6,), 3 * 5 * 5),
        "conv2_w": u(ks[2], (16, 6, 5, 5), 6 * 5 * 5),
        "conv2_b": u(ks[3], (16,), 6 * 5 * 5),
        "fc1_w": u(ks[4], (120, 16 * 61 * 110), 16 * 61 * 110),
        "fc1_b": u(ks[5], (120,), 16 * 61 * 110),
        "fc2_w": u(ks[6], (84, 120), 120),
        "fc2_b": u(ks[7], (84,), 120),
        "fc3_w": u(ks[8], (1, 84), 84),
        "fc3_b": u(ks[9], (1,), 84),
    }


def prepare_params(p, fc1_tk=FC1_TK):
    """One-time weight re-layout: transpose to matmul orientation, zero-pad to
    tile-friendly shapes, cast matmul operands to bf16 (done outside jit)."""
    def conv_wT(w, cout_p, k_p):
        cout, cin, kh, kw = w.shape
        wt = jnp.transpose(w, (0, 2, 3, 1)).reshape(cout, kh * kw * cin)
        wt = jnp.pad(wt, ((0, cout_p - cout), (0, k_p - wt.shape[1])))
        return wt.astype(jnp.bfloat16)

    k1 = 16 * 61 * 110
    kp1 = _round_up(k1, 2 * fc1_tk)
    fc1_wT = jnp.pad(p["fc1_w"].T, ((0, kp1 - k1), (0, 8))).astype(jnp.bfloat16)
    fc2_wT = jnp.pad(p["fc2_w"].T, ((0, 8), (0, 0))).astype(jnp.bfloat16)

    return {
        "c1_wT": conv_wT(p["conv1_w"], 8, 80),                                  # (8, 80)
        "c1_b": jnp.pad(p["conv1_b"], (0, 2)).reshape(8, 1).astype(jnp.float32),
        "c2_wT": conv_wT(p["conv2_w"], 16, 160),                                # (16, 160)
        "c2_b": p["conv2_b"].reshape(16, 1).astype(jnp.float32),
        "fc1_wT": fc1_wT,                                                       # (Kp, 128)
        "fc1_b": jnp.pad(p["fc1_b"], (0, 8)).reshape(1, 128).astype(jnp.float32),
        "fc2_wT": fc2_wT,                                                       # (128, 84)
        "fc2_b": p["fc2_b"].reshape(1, 84).astype(jnp.float32),
        "fc3_w": p["fc3_w"].astype(jnp.float32),                                # (1, 84)
        "fc3_b": p["fc3_b"].reshape(1, 1).astype(jnp.float32),
    }


if __name__ == "__main__":
    key = jax.random.PRNGKey(0)
    pkey, xkey = jax.random.split(key)
    params = prepare_params(init_params(pkey))
    # Spatial size is pinned by fc1 in_features = 16*61*110:
    # 256x452 -conv5-> 252x448 -pool-> 126x224 -conv5-> 122x220 -pool-> 61x110.
    x = jax.random.normal(xkey, (1, 3, 256, 452), dtype=jnp.float32)
    fwd = jax.jit(simple_cnn_forward)
    out = jax.block_until_ready(fwd(x, params))
    assert out.shape == (1, 1), out.shape
    assert bool(jnp.all(jnp.isfinite(out)))
    print("KERNEL_OK")
</pallas_src>

<mosaic_0001>
module attributes {stable_mosaic.version = 11 : i64} {
  func.func @_conv_gemm_kernel(%arg0: i32, %arg1: memref<8x80xbf16, #tpu.memory_space<vmem>>, %arg2: memref<80x5376xbf16, #tpu.memory_space<vmem>>, %arg3: memref<8x1xf32, #tpu.memory_space<vmem>>, %arg4: memref<8x5376xbf16, #tpu.memory_space<vmem>>) attributes {dimension_semantics = [#tpu.dimension_semantics<parallel>], iteration_bounds = array<i64: 21>, scalar_prefetch = 0 : i64, scratch_operands = 0 : i64, tpu.core_type = #tpu.core_type<tc>, window_params = [{pipeline_mode = #tpu.pipeline_mode<synchronous>, transform_indices = @transform_0, window_bounds = array<i64: 8, 80>}, {transform_indices = @transform_1, window_bounds = array<i64: 80, 5376>}, {pipeline_mode = #tpu.pipeline_mode<synchronous>, transform_indices = @transform_2, window_bounds = array<i64: 8, 1>}, {transform_indices = @transform_3, window_bounds = array<i64: 8, 5376>}]} {
    %c0 = arith.constant 0 : index
    %c0_0 = arith.constant 0 : index
    %0 = vector.load %arg1[%c0, %c0_0] : memref<8x80xbf16, #tpu.memory_space<vmem>>, vector<8x80xbf16>
    %c0_1 = arith.constant 0 : index
    %c0_2 = arith.constant 0 : index
    %1 = vector.load %arg2[%c0_1, %c0_2] : memref<80x5376xbf16, #tpu.memory_space<vmem>>, vector<80x5376xbf16>
    %cst = arith.constant dense<0.000000e+00> : vector<8x5376xf32>
    %2 = tpu.matmul %0, %1, %cst {dimension_numbers = #tpu.dot_dimension_numbers<[1], [0], [0], [1], [0, 0, 1, 1], [], []>} : vector<8x80xbf16>, vector<80x5376xbf16>, vector<8x5376xf32> -> vector<8x5376xf32>
    %c0_3 = arith.constant 0 : index
    %c0_4 = arith.constant 0 : index
    %3 = vector.load %arg3[%c0_3, %c0_4] : memref<8x1xf32, #tpu.memory_space<vmem>>, vector<8x1xf32>
    %4 = vector.broadcast %3 : vector<8x1xf32> to vector<8x5376xf32>
    %5 = arith.addf %2, %4 : vector<8x5376xf32>
    %cst_5 = arith.constant 0.000000e+00 : f32
    %6 = vector.broadcast %cst_5 : f32 to vector<8x5376xf32>
    %7 = arith.maximumf %5, %6 : vector<8x5376xf32>
    %8 = arith.truncf %7 : vector<8x5376xf32> to vector<8x5376xbf16>
    %c0_6 = arith.constant 0 : index
    %c0_7 = arith.constant 0 : index
    %9 = vector.load %arg4[%c0_6, %c0_7] : memref<8x5376xbf16, #tpu.memory_space<vmem>>, vector<8x5376xbf16>
    tpu.vector_store %arg4[%c0_6, %c0_7], %8 {strides = array<i32>} : memref<8x5376xbf16, #tpu.memory_space<vmem>>, vector<8x5376xbf16>,
    return
  }
  func.func @transform_0(%arg0: i32) -> (i32, i32) {
    %c0_i32 = arith.constant 0 : i32
    %c0_i32_0 = arith.constant 0 : i32
    %c0_i32_1 = arith.constant 0 : i32
    return %c0_i32, %c0_i32_0 : i32, i32
  }
  func.func @transform_1(%arg0: i32) -> (i32, i32) {
    %c0_i32 = arith.constant 0 : i32
    %c0_i32_0 = arith.constant 0 : i32
    return %c0_i32, %arg0 : i32, i32
  }
  func.func @transform_2(%arg0: i32) -> (i32, i32) {
    %c0_i32 = arith.constant 0 : i32
    %c0_i32_0 = arith.constant 0 : i32
    %c0_i32_1 = arith.constant 0 : i32
    return %c0_i32, %c0_i32_0 : i32, i32
  }
  func.func @transform_3(%arg0: i32) -> (i32, i32) {
    %c0_i32 = arith.constant 0 : i32
    %c0_i32_0 = arith.constant 0 : i32
    return %c0_i32, %arg0 : i32, i32
  }
}

module attributes {stable_mosaic.version = 11 : i64} {
  func.func @_max4_kernel(%arg0: i32, %arg1: memref<1x126x224xbf16, #tpu.memory_space<vmem>>, %arg2: memref<1x126x224xbf16, #tpu.memory_space<vmem>>, %arg3: memref<1x126x224xbf16, #tpu.memory_space<vmem>>, %arg4: memref<1x126x224xbf16, #tpu.memory_space<vmem>>, %arg5: memref<1x126x224xbf16, #tpu.memory_space<vmem>>) attributes {dimension_semantics = [#tpu.dimension_semantics<parallel>], iteration_bounds = array<i64: 6>, scalar_prefetch = 0 : i64, scratch_operands = 0 : i64, tpu.core_type = #tpu.core_type<tc>, window_params = [{transform_indices = @transform_0, window_bounds = array<i64: 1, 126, 224>}, {transform_indices = @transform_1, window_bounds = array<i64: 1, 126, 224>}, {transform_indices = @transform_2, window_bounds = array<i64: 1, 126, 224>}, {transform_indices = @transform_3, window_bounds = array<i64: 1, 126, 224>}, {transform_indices = @transform_4, window_bounds = array<i64: 1, 126, 224>}]} {
    %c0 = arith.constant 0 : index
    %c0_0 = arith.constant 0 : index
    %c0_1 = arith.constant 0 : index
    %0 = vector.load %arg1[%c0, %c0_0, %c0_1] : memref<1x126x224xbf16, #tpu.memory_space<vmem>>, vector<1x126x224xbf16>
    %c0_2 = arith.constant 0 : index
    %c0_3 = arith.constant 0 : index
    %c0_4 = arith.constant 0 : index
    %1 = vector.load %arg2[%c0_2, %c0_3, %c0_4] : memref<1x126x224xbf16, #tpu.memory_space<vmem>>, vector<1x126x224xbf16>
    %2 = arith.maximumf %0, %1 : vector<1x126x224xbf16>
    %c0_5 = arith.constant 0 : index
    %c0_6 = arith.constant 0 : index
    %c0_7 = arith.constant 0 : index
    %3 = vector.load %arg3[%c0_5, %c0_6, %c0_7] : memref<1x126x224xbf16, #tpu.memory_space<vmem>>, vector<1x126x224xbf16>
    %c0_8 = arith.constant 0 : index
    %c0_9 = arith.constant 0 : index
    %c0_10 = arith.constant 0 : index
    %4 = vector.load %arg4[%c0_8, %c0_9, %c0_10] : memref<1x126x224xbf16, #tpu.memory_space<vmem>>, vector<1x126x224xbf16>
    %5 = arith.maximumf %3, %4 : vector<1x126x224xbf16>
    %6 = arith.maximumf %2, %5 : vector<1x126x224xbf16>
    %c0_11 = arith.constant 0 : index
    %c0_12 = arith.constant 0 : index
    %c0_13 = arith.constant 0 : index
    %7 = vector.load %arg5[%c0_11, %c0_12, %c0_13] : memref<1x126x224xbf16, #tpu.memory_space<vmem>>, vector<1x126x224xbf16>
    tpu.vector_store %arg5[%c0_11, %c0_12, %c0_13], %6 {strides = array<i32>} : memref<1x126x224xbf16, #tpu.memory_space<vmem>>, vector<1x126x224xbf16>,
    return
  }
  func.func @transform_0(%arg0: i32) -> (i32, i32, i32) {
    %c0_i32 = arith.constant 0 : i32
    %c0_i32_0 = arith.constant 0 : i32
    %c0_i32_1 = arith.constant 0 : i32
    return %arg0, %c0_i32, %c0_i32_0 : i32, i32, i32
  }
  func.func @transform_1(%arg0: i32) -> (i32, i32, i32) {
    %c0_i32 = arith.constant 0 : i32
    %c0_i32_0 = arith.constant 0 : i32
    %c0_i32_1 = arith.constant 0 : i32
    return %arg0, %c0_i32, %c0_i32_0 : i32, i32, i32
  }
  func.func @transform_2(%arg0: i32) -> (i32, i32, i32) {
    %c0_i32 = arith.constant 0 : i32
    %c0_i32_0 = arith.constant 0 : i32
    %c0_i32_1 = arith.constant 0 : i32
    return %arg0, %c0_i32, %c0_i32_0 : i32, i32, i32
  }
  func.func @transform_3(%arg0: i32) -> (i32, i32, i32) {
    %c0_i32 = arith.constant 0 : i32
    %c0_i32_0 = arith.constant 0 : i32
    %c0_i32_1 = arith.constant 0 : i32
    return %arg0, %c0_i32, %c0_i32_0 : i32, i32, i32
  }
  func.func @transform_4(%arg0: i32) -> (i32, i32, i32) {
    %c0_i32 = arith.constant 0 : i32
    %c0_i32_0 = arith.constant 0 : i32
    %c0_i32_1 = arith.constant 0 : i32
    return %arg0, %c0_i32, %c0_i32_0 : i32, i32, i32
  }
}

module attributes {stable_mosaic.version = 11 : i64} {
  func.func @_conv_gemm_kernel(%arg0: i32, %arg1: memref<16x160xbf16, #tpu.memory_space<vmem>>, %arg2: memref<160x2048xbf16, #tpu.memory_space<vmem>>, %arg3: memref<16x1xf32, #tpu.memory_space<vmem>>, %arg4: memref<16x2048xbf16, #tpu.memory_space<vmem>>) attributes {dimension_semantics = [#tpu.dimension_semantics<parallel>], iteration_bounds = array<i64: 14>, scalar_prefetch = 0 : i64, scratch_operands = 0 : i64, tpu.core_type = #tpu.core_type<tc>, window_params = [{pipeline_mode = #tpu.pipeline_mode<synchronous>, transform_indices = @transform_0, window_bounds = array<i64: 16, 160>}, {transform_indices = @transform_1, window_bounds = array<i64: 160, 2048>}, {pipeline_mode = #tpu.pipeline_mode<synchronous>, transform_indices = @transform_2, window_bounds = array<i64: 16, 1>}, {transform_indices = @transform_3, window_bounds = array<i64: 16, 2048>}]} {
    %c0 = arith.constant 0 : index
    %c0_0 = arith.constant 0 : index
    %0 = vector.load %arg1[%c0, %c0_0] : memref<16x160xbf16, #tpu.memory_space<vmem>>, vector<16x160xbf16>
    %c0_1 = arith.constant 0 : index
    %c0_2 = arith.constant 0 : index
    %1 = vector.load %arg2[%c0_1, %c0_2] : memref<160x2048xbf16, #tpu.memory_space<vmem>>, vector<160x2048xbf16>
    %cst = arith.constant dense<0.000000e+00> : vector<16x2048xf32>
    %2 = tpu.matmul %0, %1, %cst {dimension_numbers = #tpu.dot_dimension_numbers<[1], [0], [0], [1], [0, 0, 1, 1], [], []>} : vector<16x160xbf16>, vector<160x2048xbf16>, vector<16x2048xf32> -> vector<16x2048xf32>
    %c0_3 = arith.constant 0 : index
    %c0_4 = arith.constant 0 : index
    %3 = vector.load %arg3[%c0_3, %c0_4] : memref<16x1xf32, #tpu.memory_space<vmem>>, vector<16x1xf32>
    %4 = vector.broadcast %3 : vector<16x1xf32> to vector<16x2048xf32>
    %5 = arith.addf %2, %4 : vector<16x2048xf32>
    %cst_5 = arith.constant 0.000000e+00 : f32
    %6 = vector.broadcast %cst_5 : f32 to vector<16x2048xf32>
    %7 = arith.maximumf %5, %6 : vector<16x2048xf32>
    %8 = arith.truncf %7 : vector<16x2048xf32> to vector<16x2048xbf16>
    %c0_6 = arith.constant 0 : index
    %c0_7 = arith.constant 0 : index
    %9 = vector.load %arg4[%c0_6, %c0_7] : memref<16x2048xbf16, #tpu.memory_space<vmem>>, vector<16x2048xbf16>
    tpu.vector_store %arg4[%c0_6, %c0_7], %8 {strides = array<i32>} : memref<16x2048xbf16, #tpu.memory_space<vmem>>, vector<16x2048xbf16>,
    return
  }
  func.func @transform_0(%arg0: i32) -> (i32, i32) {
    %c0_i32 = arith.constant 0 : i32
    %c0_i32_0 = arith.constant 0 : i32
    %c0_i32_1 = arith.constant 0 : i32
    return %c0_i32, %c0_i32_0 : i32, i32
  }
  func.func @transform_1(%arg0: i32) -> (i32, i32) {
    %c0_i32 = arith.constant 0 : i32
    %c0_i32_0 = arith.constant 0 : i32
    return %c0_i32, %arg0 : i32, i32
  }
  func.func @transform_2(%arg0: i32) -> (i32, i32) {
    %c0_i32 = arith.constant 0 : i32
    %c0_i32_0 = arith.constant 0 : i32
    %c0_i32_1 = arith.constant 0 : i32
    return %c0_i32, %c0_i32_0 : i32, i32
  }
  func.func @transform_3(%arg0: i32) -> (i32, i32) {
    %c0_i32 = arith.constant 0 : i32
    %c0_i32_0 = arith.constant 0 : i32
    return %c0_i32, %arg0 : i32, i32
  }
}

module attributes {stable_mosaic.version = 11 : i64} {
  func.func @_max4_kernel(%arg0: i32, %arg1: memref<1x61x110xbf16, #tpu.memory_space<vmem>>, %arg2: memref<1x61x110xbf16, #tpu.memory_space<vmem>>, %arg3: memref<1x61x110xbf16, #tpu.memory_space<vmem>>, %arg4: memref<1x61x110xbf16, #tpu.memory_space<vmem>>, %arg5: memref<1x61x110xbf16, #tpu.memory_space<vmem>>) attributes {dimension_semantics = [#tpu.dimension_semantics<parallel>], iteration_bounds = array<i64: 16>, scalar_prefetch = 0 : i64, scratch_operands = 0 : i64, tpu.core_type = #tpu.core_type<tc>, window_params = [{transform_indices = @transform_0, window_bounds = array<i64: 1, 61, 110>}, {transform_indices = @transform_1, window_bounds = array<i64: 1, 61, 110>}, {transform_indices = @transform_2, window_bounds = array<i64: 1, 61, 110>}, {transform_indices = @transform_3, window_bounds = array<i64: 1, 61, 110>}, {transform_indices = @transform_4, window_bounds = array<i64: 1, 61, 110>}]} {
    %c0 = arith.constant 0 : index
    %c0_0 = arith.constant 0 : index
    %c0_1 = arith.constant 0 : index
    %0 = vector.load %arg1[%c0, %c0_0, %c0_1] : memref<1x61x110xbf16, #tpu.memory_space<vmem>>, vector<1x61x110xbf16>
    %c0_2 = arith.constant 0 : index
    %c0_3 = arith.constant 0 : index
    %c0_4 = arith.constant 0 : index
    %1 = vector.load %arg2[%c0_2, %c0_3, %c0_4] : memref<1x61x110xbf16, #tpu.memory_space<vmem>>, vector<1x61x110xbf16>
    %2 = arith.maximumf %0, %1 : vector<1x61x110xbf16>
    %c0_5 = arith.constant 0 : index
    %c0_6 = arith.constant 0 : index
    %c0_7 = arith.constant 0 : index
    %3 = vector.load %arg3[%c0_5, %c0_6, %c0_7] : memref<1x61x110xbf16, #tpu.memory_space<vmem>>, vector<1x61x110xbf16>
    %c0_8 = arith.constant 0 : index
    %c0_9 = arith.constant 0 : index
    %c0_10 = arith.constant 0 : index
    %4 = vector.load %arg4[%c0_8, %c0_9, %c0_10] : memref<1x61x110xbf16, #tpu.memory_space<vmem>>, vector<1x61x110xbf16>
    %5 = arith.maximumf %3, %4 : vector<1x61x110xbf16>
    %6 = arith.maximumf %2, %5 : vector<1x61x110xbf16>
    %c0_11 = arith.constant 0 : index
    %c0_12 = arith.constant 0 : index
    %c0_13 = arith.constant 0 : index
    %7 = vector.load %arg5[%c0_11, %c0_12, %c0_13] : memref<1x61x110xbf16, #tpu.memory_space<vmem>>, vector<1x61x110xbf16>
    tpu.vector_store %arg5[%c0_11, %c0_12, %c0_13], %6 {strides = array<i32>} : memref<1x61x110xbf16, #tpu.memory_space<vmem>>, vector<1x61x110xbf16>,
    return
  }
  func.func @transform_0(%arg0: i32) -> (i32, i32, i32) {
    %c0_i32 = arith.constant 0 : i32
    %c0_i32_0 = arith.constant 0 : i32
    %c0_i32_1 = arith.constant 0 : i32
    return %arg0, %c0_i32, %c0_i32_0 : i32, i32, i32
  }
  func.func @transform_1(%arg0: i32) -> (i32, i32, i32) {
    %c0_i32 = arith.constant 0 : i32
    %c0_i32_0 = arith.constant 0 : i32
    %c0_i32_1 = arith.constant 0 : i32
    return %arg0, %c0_i32, %c0_i32_0 : i32, i32, i32
  }
  func.func @transform_2(%arg0: i32) -> (i32, i32, i32) {
    %c0_i32 = arith.constant 0 : i32
    %c0_i32_0 = arith.constant 0 : i32
    %c0_i32_1 = arith.constant 0 : i32
    return %arg0, %c0_i32, %c0_i32_0 : i32, i32, i32
  }
  func.func @transform_3(%arg0: i32) -> (i32, i32, i32) {
    %c0_i32 = arith.constant 0 : i32
    %c0_i32_0 = arith.constant 0 : i32
    %c0_i32_1 = arith.constant 0 : i32
    return %arg0, %c0_i32, %c0_i32_0 : i32, i32, i32
  }
  func.func @transform_4(%arg0: i32) -> (i32, i32, i32) {
    %c0_i32 = arith.constant 0 : i32
    %c0_i32_0 = arith.constant 0 : i32
    %c0_i32_1 = arith.constant 0 : i32
    return %arg0, %c0_i32, %c0_i32_0 : i32, i32, i32
  }
}

module attributes {stable_mosaic.version = 11 : i64} {
  func.func @_fc1_partial_kernel(%arg0: i32, %arg1: i32, %arg2: memref<8x8192xbf16, #tpu.memory_space<vmem>>, %arg3: memref<8192x128xbf16, #tpu.memory_space<vmem>>, %arg4: memref<1x8x128xf32, #tpu.memory_space<vmem>>) attributes {dimension_semantics = [#tpu.dimension_semantics<parallel>, #tpu.dimension_semantics<arbitrary>], iteration_bounds = array<i64: 2, 7>, scalar_prefetch = 0 : i64, scratch_operands = 0 : i64, tpu.core_type = #tpu.core_type<tc>, window_params = [{transform_indices = @transform_0, window_bounds = array<i64: 8, 8192>}, {transform_indices = @transform_1, window_bounds = array<i64: 8192, 128>}, {transform_indices = @transform_2, window_bounds = array<i64: 1, 8, 128>}]} {
    %c0_i32 = arith.constant 0 : i32
    %0 = arith.cmpi eq, %arg1, %c0_i32 : i32
    %1 = arith.extui %0 : i1 to i32
    %c0_i32_0 = arith.constant 0 : i32
    %2 = arith.cmpi ne, %1, %c0_i32_0 : i32
    scf.if %2 {
      %cst_10 = arith.constant 0.000000e+00 : f32
      %10 = vector.broadcast %cst_10 : f32 to vector<1x8x128xf32>
      %c0_11 = arith.constant 0 : index
      %c0_12 = arith.constant 0 : index
      %c0_13 = arith.constant 0 : index
      %11 = vector.load %arg4[%c0_11, %c0_12, %c0_13] : memref<1x8x128xf32, #tpu.memory_space<vmem>>, vector<1x8x128xf32>
      tpu.vector_store %arg4[%c0_11, %c0_12, %c0_13], %10 {strides = array<i32>} : memref<1x8x128xf32, #tpu.memory_space<vmem>>, vector<1x8x128xf32>,
    } else {
    }
    %c0 = arith.constant 0 : index
    %c0_1 = arith.constant 0 : index
    %c0_2 = arith.constant 0 : index
    %3 = vector.load %arg4[%c0, %c0_1, %c0_2] : memref<1x8x128xf32, #tpu.memory_space<vmem>>, vector<1x8x128xf32>
    %c0_3 = arith.constant 0 : index
    %c0_4 = arith.constant 0 : index
    %4 = vector.load %arg2[%c0_3, %c0_4] : memref<8x8192xbf16, #tpu.memory_space<vmem>>, vector<8x8192xbf16>
    %c0_5 = arith.constant 0 : index
    %c0_6 = arith.constant 0 : index
    %5 = vector.load %arg3[%c0_5, %c0_6] : memref<8192x128xbf16, #tpu.memory_space<vmem>>, vector<8192x128xbf16>
    %cst = arith.constant dense<0.000000e+00> : vector<8x128xf32>
    %6 = tpu.matmul %4, %5, %cst {dimension_numbers = #tpu.dot_dimension_numbers<[1], [0], [0], [1], [0, 0, 1, 1], [], []>} : vector<8x8192xbf16>, vector<8192x128xbf16>, vector<8x128xf32> -> vector<8x128xf32>
    %7 = vector.shape_cast %6 : vector<8x128xf32> to vector<1x8x128xf32>
    %8 = arith.addf %3, %7 : vector<1x8x128xf32>
    %c0_7 = arith.constant 0 : index
    %c0_8 = arith.constant 0 : index
    %c0_9 = arith.constant 0 : index
    %9 = vector.load %arg4[%c0_7, %c0_8, %c0_9] : memref<1x8x128xf32, #tpu.memory_space<vmem>>, vector<1x8x128xf32>
    tpu.vector_store %arg4[%c0_7, %c0_8, %c0_9], %8 {strides = array<i32>} : memref<1x8x128xf32, #tpu.memory_space<vmem>>, vector<1x8x128xf32>,
    return
  }
  func.func @transform_0(%arg0: i32, %arg1: i32) -> (i32, i32) {
    %c7_i32 = arith.constant 7 : i32
    %0 = arith.muli %arg0, %c7_i32 : i32
    %1 = arith.addi %0, %arg1 : i32
    %c0_i32 = arith.constant 0 : i32
    %c0_i32_0 = arith.constant 0 : i32
    return %c0_i32, %1 : i32, i32
  }
  func.func @transform_1(%arg0: i32, %arg1: i32) -> (i32, i32) {
    %c7_i32 = arith.constant 7 : i32
    %0 = arith.muli %arg0, %c7_i32 : i32
    %1 = arith.addi %0, %arg1 : i32
    %c0_i32 = arith.constant 0 : i32
    %c0_i32_0 = arith.constant 0 : i32
    return %1, %c0_i32 : i32, i32
  }
  func.func @transform_2(%arg0: i32, %arg1: i32) -> (i32, i32, i32) {
    %c0_i32 = arith.constant 0 : i32
    %c0_i32_0 = arith.constant 0 : i32
    %c0_i32_1 = arith.constant 0 : i32
    return %arg0, %c0_i32, %c0_i32_0 : i32, i32, i32
  }
}

module attributes {stable_mosaic.version = 11 : i64} {
  func.func @_fc_tail_kernel(%arg0: i32, %arg1: memref<2x8x128xf32, #tpu.memory_space<vmem>>, %arg2: memref<1x128xf32, #tpu.memory_space<vmem>>, %arg3: memref<128x84xbf16, #tpu.memory_space<vmem>>, %arg4: memref<1x84xf32, #tpu.memory_space<vmem>>, %arg5: memref<1x84xf32, #tpu.memory_space<vmem>>, %arg6: memref<1x1xf32, #tpu.memory_space<vmem>>, %arg7: memref<8x1xf32, #tpu.memory_space<vmem>>) attributes {dimension_semantics = [#tpu.dimension_semantics<arbitrary>], iteration_bounds = array<i64: 1>, scalar_prefetch = 0 : i64, scratch_operands = 0 : i64, tpu.core_type = #tpu.core_type<tc>, window_params = [{pipeline_mode = #tpu.pipeline_mode<synchronous>, transform_indices = @transform_0, window_bounds = array<i64: 2, 8, 128>}, {pipeline_mode = #tpu.pipeline_mode<synchronous>, transform_indices = @transform_1, window_bounds = array<i64: 1, 128>}, {pipeline_mode = #tpu.pipeline_mode<synchronous>, transform_indices = @transform_2, window_bounds = array<i64: 128, 84>}, {pipeline_mode = #tpu.pipeline_mode<synchronous>, transform_indices = @transform_3, window_bounds = array<i64: 1, 84>}, {pipeline_mode = #tpu.pipeline_mode<synchronous>, transform_indices = @transform_4, window_bounds = array<i64: 1, 84>}, {pipeline_mode = #tpu.pipeline_mode<synchronous>, transform_indices = @transform_5, window_bounds = array<i64: 1, 1>}, {pipeline_mode = #tpu.pipeline_mode<synchronous>, transform_indices = @transform_6, window_bounds = array<i64: 8, 1>}]} {
    %c0 = arith.constant 0 : index
    %c0_0 = arith.constant 0 : index
    %c0_1 = arith.constant 0 : index
    %0 = vector.load %arg1[%c0, %c0_0, %c0_1] : memref<2x8x128xf32, #tpu.memory_space<vmem>>, vector<1x8x128xf32>
    %1 = vector.shape_cast %0 : vector<1x8x128xf32> to vector<8x128xf32>
    %c1 = arith.constant 1 : index
    %c0_2 = arith.constant 0 : index
    %c0_3 = arith.constant 0 : index
    %2 = vector.load %arg1[%c1, %c0_2, %c0_3] : memref<2x8x128xf32, #tpu.memory_space<vmem>>, vector<1x8x128xf32>
    %3 = vector.shape_cast %2 : vector<1x8x128xf32> to vector<8x128xf32>
    %4 = arith.addf %1, %3 : vector<8x128xf32>
    %c0_4 = arith.constant 0 : index
    %c0_5 = arith.constant 0 : index
    %5 = vector.load %arg2[%c0_4, %c0_5] : memref<1x128xf32, #tpu.memory_space<vmem>>, vector<1x128xf32>
    %6 = vector.broadcast %5 : vector<1x128xf32> to vector<8x128xf32>
    %7 = arith.addf %4, %6 : vector<8x128xf32>
    %cst = arith.constant 0.000000e+00 : f32
    %8 = vector.broadcast %cst : f32 to vector<8x128xf32>
    %9 = arith.maximumf %7, %8 : vector<8x128xf32>
    %10 = arith.truncf %9 : vector<8x128xf32> to vector<8x128xbf16>
    %c0_6 = arith.constant 0 : index
    %c0_7 = arith.constant 0 : index
    %11 = vector.load %arg3[%c0_6, %c0_7] : memref<128x84xbf16, #tpu.memory_space<vmem>>, vector<128x84xbf16>
    %cst_8 = arith.constant dense<0.000000e+00> : vector<8x84xf32>
    %12 = tpu.matmul %10, %11, %cst_8 {dimension_numbers = #tpu.dot_dimension_numbers<[1], [0], [0], [1], [0, 0, 1, 1], [], []>} : vector<8x128xbf16>, vector<128x84xbf16>, vector<8x84xf32> -> vector<8x84xf32>
    %c0_9 = arith.constant 0 : index
    %c0_10 = arith.constant 0 : index
    %13 = vector.load %arg4[%c0_9, %c0_10] : memref<1x84xf32, #tpu.memory_space<vmem>>, vector<1x84xf32>
    %14 = vector.broadcast %13 : vector<1x84xf32> to vector<8x84xf32>
    %15 = arith.addf %12, %14 : vector<8x84xf32>
    %cst_11 = arith.constant 0.000000e+00 : f32
    %16 = vector.broadcast %cst_11 : f32 to vector<8x84xf32>
    %17 = arith.maximumf %15, %16 : vector<8x84xf32>
    %c0_12 = arith.constant 0 : index
    %c0_13 = arith.constant 0 : index
    %18 = vector.load %arg5[%c0_12, %c0_13] : memref<1x84xf32, #tpu.memory_space<vmem>>, vector<1x84xf32>
    %19 = vector.broadcast %18 : vector<1x84xf32> to vector<8x84xf32>
    %20 = arith.mulf %17, %19 : vector<8x84xf32>
    %cst_14 = arith.constant dense<0.000000e+00> : vector<8xf32>
    %21 = vector.multi_reduction <add>, %20, %cst_14 [1] : vector<8x84xf32> to vector<8xf32>
    %22 = vector.shape_cast %21 : vector<8xf32> to vector<8x1xf32>
    %c0_15 = arith.constant 0 : index
    %c0_16 = arith.constant 0 : index
    %23 = vector.load %arg6[%c0_15, %c0_16] : memref<1x1xf32, #tpu.memory_space<vmem>>, vector<1x1xf32>
    %24 = vector.broadcast %23 : vector<1x1xf32> to vector<8x1xf32>
    %25 = arith.addf %22, %24 : vector<8x1xf32>
    %c0_17 = arith.constant 0 : index
    %c0_18 = arith.constant 0 : index
    %26 = vector.load %arg7[%c0_17, %c0_18] : memref<8x1xf32, #tpu.memory_space<vmem>>, vector<8x1xf32>
    tpu.vector_store %arg7[%c0_17, %c0_18], %25 {strides = array<i32>} : memref<8x1xf32, #tpu.memory_space<vmem>>, vector<8x1xf32>,
    return
  }
  func.func @transform_0(%arg0: i32) -> (i32, i32, i32) {
    %c0_i32 = arith.constant 0 : i32
    %c0_i32_0 = arith.constant 0 : i32
    %c0_i32_1 = arith.constant 0 : i32
    %c0_i32_2 = arith.constant 0 : i32
    return %c0_i32, %c0_i32_0, %c0_i32_1 : i32, i32, i32
  }
  func.func @transform_1(%arg0: i32) -> (i32, i32) {
    %c0_i32 = arith.constant 0 : i32
    %c0_i32_0 = arith.constant 0 : i32
    %c0_i32_1 = arith.constant 0 : i32
    return %c0_i32, %c0_i32_0 : i32, i32
  }
  func.func @transform_2(%arg0: i32) -> (i32, i32) {
    %c0_i32 = arith.constant 0 : i32
    %c0_i32_0 = arith.constant 0 : i32
    %c0_i32_1 = arith.constant 0 : i32
    return %c0_i32, %c0_i32_0 : i32, i32
  }
  func.func @transform_3(%arg0: i32) -> (i32, i32) {
    %c0_i32 = arith.constant 0 : i32
    %c0_i32_0 = arith.constant 0 : i32
    %c0_i32_1 = arith.constant 0 : i32
    return %c0_i32, %c0_i32_0 : i32, i32
  }
  func.func @transform_4(%arg0: i32) -> (i32, i32) {
    %c0_i32 = arith.constant 0 : i32
    %c0_i32_0 = arith.constant 0 : i32
    %c0_i32_1 = arith.constant 0 : i32
    return %c0_i32, %c0_i32_0 : i32, i32
  }
  func.func @transform_5(%arg0: i32) -> (i32, i32) {
    %c0_i32 = arith.constant 0 : i32
    %c0_i32_0 = arith.constant 0 : i32
    %c0_i32_1 = arith.constant 0 : i32
    return %c0_i32, %c0_i32_0 : i32, i32
  }
  func.func @transform_6(%arg0: i32) -> (i32, i32) {
    %c0_i32 = arith.constant 0 : i32
    %c0_i32_0 = arith.constant 0 : i32
    %c0_i32_1 = arith.constant 0 : i32
    return %c0_i32, %c0_i32_0 : i32, i32
  }
}

</mosaic_0001>

<llo_original>
// kernel: simple_cnn_forward.6
$region0: #{simple_cnn_forward.6}
  #allocation0 [shape = 'u32[]', space=smem, size = 0x4, offset = 0x4, fixed_abs, tag = 'smem constant byte address 0x4 - core index']
  #allocation1 [shape = 'u32[144,128]{1,0:T(1,128)}', space=vmem, size = 0x12000, scoped, tag = 'internal scratch']
  %s0 = inlined_call_operand.vmem [shape: bf16[8,80], index: 0, kind: input, shape index: {}]
  %s1 = inlined_call_operand.vmem [shape: bf16[80,112896], index: 1, kind: input, shape index: {}]
  %s2 = inlined_call_operand.vmem [shape: f32[8,1], index: 2, kind: input, shape index: {}]
  %s3 = inlined_call_operand.vmem [shape: bf16[8,112896], index: 3, kind: output, shape index: {}]
  %s4 = sld [smem:[#allocation0]]
  $region68: #{simple_cnn_forward.6} parent=0
    _
  %s6 = ssub.s32 1, %s4
  %s7 = scalar_select 0, %s6, %s4
  $region1: #{simple_cnn_forward.6} parent=0
    #allocation2 [shape = 'u8[1720320]{0}', space=vmem, size = 0x1a4000, scoped, tag = 'input window, operand 1']
    loop: start=0, step=1, limit=23
    $region2: #{simple_cnn_forward.6} parent=1 // loop_pre_header
      _
    $region3: #{simple_cnn_forward.6} parent=1 // loop_header
      %s9 = sphi 0, %s13
      %p10 = scmp.ge.s32.totalorder %s9, 23
      %s17 = sphi 0, %s17
      %s19 = sphi 0, %s17
      %s20 = sphi 0, %s19
      %s34 = sphi 0, %s20
      %s40 = sphi 0, %s42
      %s43 = sphi 0, %s40
      %s44 = sphi 0, %s43
      %s60 = sphi 0, %s44
      %s64 = sphi 0, %s64
      %s66 = sphi 0, %s64
      %s67 = sphi 0, %s66
      %s81 = sphi 0, %s67
      %s87 = sphi 0, %s89
      %s90 = sphi 0, %s87
      %s91 = sphi 0, %s90
      %s107 = sphi 0, %s91
    $region4: #{simple_cnn_forward.6} parent=1 // loop_header_branch
      %12 = sbr.rel (%p10) target = $region8
    $region5: #{simple_cnn_forward.6} parent=1 // loop_body
      %s14 = ssub.s32 %s9, 1
      %s15 = ssub.s32 %s9, 2
      %s16 = sadd.s32 %s9, 1
      %s18 = sadd.s32 %s17, 1
      %p21 = scmp.eq.s32.totalorder %s9, 20
      %p22 = scmp.ne.s32.totalorder %s17, %s19
      %p23 = scmp.eq.s32.totalorder %s9, 0
      %p24 = por %p22, %p23
      %p25 = scmp.ne.s32.totalorder %s17, %s19
      %p26 = scmp.eq.s32.totalorder %s14, 20
      %p27 = por %p25, %p26
      %p28 = scmp.ne.s32.totalorder %s19, %s20
      %p29 = scmp.eq.s32.totalorder %s14, 0
      %p30 = por %p28, %p29
      %p31 = scmp.ne.s32.totalorder %s19, %s20
      %p32 = scmp.eq.s32.totalorder %s15, 20
      %p33 = por %p31, %p32
      %p35 = scmp.ne.s32.totalorder %s20, %s34
      %p36 = scmp.eq.s32.totalorder %s15, 0
      %p37 = por %p35, %p36
      %s38 = ssub.s32 %s9, %s16
      %p39 = scmp.eq.s32.totalorder %s38, 0
      %s41 = sadd.s32 %s40, 1
      %s42 = scalar_select %p39, %s40, %s41
      %p45 = pneg %p39
      %p46 = scmp.eq.s32.totalorder %s9, 20
      %p47 = por %p45, %p46
      %p48 = scmp.ne.s32.totalorder %s40, %s43
      %p49 = scmp.eq.s32.totalorder %s9, 0
      %p50 = por %p48, %p49
      %p51 = scmp.ne.s32.totalorder %s40, %s43
      %p52 = scmp.eq.s32.totalorder %s14, 20
      %p53 = por %p51, %p52
      %p54 = scmp.ne.s32.totalorder %s43, %s44
      %p55 = scmp.eq.s32.totalorder %s14, 0
      %p56 = por %p54, %p55
      %p57 = scmp.ne.s32.totalorder %s43, %s44
      %p58 = scmp.eq.s32.totalorder %s15, 20
      %p59 = por %p57, %p58
      %p61 = scmp.ne.s32.totalorder %s44, %s60
      %p62 = scmp.eq.s32.totalorder %s15, 0
      %p63 = por %p61, %p62
      %s65 = sadd.s32 %s64, 1
      %p68 = scmp.eq.s32.totalorder %s9, 20
      %p69 = scmp.ne.s32.totalorder %s64, %s66
      %p70 = scmp.eq.s32.totalorder %s9, 0
      %p71 = por %p69, %p70
      %p72 = scmp.ne.s32.totalorder %s64, %s66
      %p73 = scmp.eq.s32.totalorder %s14, 20
      %p74 = por %p72, %p73
      %p75 = scmp.ne.s32.totalorder %s66, %s67
      %p76 = scmp.eq.s32.totalorder %s14, 0
      %p77 = por %p75, %p76
      %p78 = scmp.ne.s32.totalorder %s66, %s67
      %p79 = scmp.eq.s32.totalorder %s15, 20
      %p80 = por %p78, %p79
      %p82 = scmp.ne.s32.totalorder %s67, %s81
      %p83 = scmp.eq.s32.totalorder %s15, 0
      %p84 = por %p82, %p83
      %s85 = ssub.s32 %s9, %s16
      %p86 = scmp.eq.s32.totalorder %s85, 0
      %s88 = sadd.s32 %s87, 1
      %s89 = scalar_select %p86, %s87, %s88
      %p92 = pneg %p86
      %p93 = scmp.eq.s32.totalorder %s9, 20
      %p94 = por %p92, %p93
      %p95 = scmp.ne.s32.totalorder %s87, %s90
      %p96 = scmp.eq.s32.totalorder %s9, 0
      %p97 = por %p95, %p96
      %p98 = scmp.ne.s32.totalorder %s87, %s90
      %p99 = scmp.eq.s32.totalorder %s14, 20
      %p100 = por %p98, %p99
      %p101 = scmp.ne.s32.totalorder %s90, %s91
      %p102 = scmp.eq.s32.totalorder %s14, 0
      %p103 = por %p101, %p102
      %p104 = scmp.ne.s32.totalorder %s90, %s91
      %p105 = scmp.eq.s32.totalorder %s15, 20
      %p106 = por %p104, %p105
      %p108 = scmp.ne.s32.totalorder %s91, %s107
      %p109 = scmp.eq.s32.totalorder %s15, 0
      %p110 = por %p108, %p109
      %p111 = scmp.le.s32.totalorder 1, %s9
      %p112 = scmp.lt.s32.totalorder %s9, 22
      %p113 = pnand %p111, %p112
      %p114 = pneg %p113
      // Predicated region
      $region9: #{simple_cnn_forward.6} parent=5 // pred_check
        _
      $region10: #{simple_cnn_forward.6} parent=5 // pred_check_branch
        %116 = sbr.rel (%p113) target = $region12
      $region11: #{simple_cnn_forward.6} parent=5 // pred_region
        %s117 = ssub.s32 %s9, 1
        // Predicated region
        $region13: #{simple_cnn_forward.6} parent=11 // pred_check
          %p118 = pneg %p30
        $region14: #{simple_cnn_forward.6} parent=11 // pred_check_branch
          %120 = sbr.rel (%p118) target = $region16
        $region15: #{simple_cnn_forward.6} parent=11 // pred_region
          _
        $region16: #{simple_cnn_forward.6} parent=11 // pred_fallthru
          _
        // Predicated region
        $region17: #{simple_cnn_forward.6} parent=11 // pred_check
          %p121 = pneg %p77
        $region18: #{simple_cnn_forward.6} parent=11 // pred_check_branch
          %123 = sbr.rel (%p121) target = $region20
        $region19: #{simple_cnn_forward.6} parent=11 // pred_region
          _
        $region20: #{simple_cnn_forward.6} parent=11 // pred_fallthru
          _
      $region12: #{simple_cnn_forward.6} parent=5 // pred_fallthru
        _
      %p124 = scmp.lt.s32.totalorder %s9, 21
      // Predicated region
      $region21: #{simple_cnn_forward.6} parent=5 // pred_check
        %p125 = pneg %p124
      $region22: #{simple_cnn_forward.6} parent=5 // pred_check_branch
        %127 = sbr.rel (%p125) target = $region24
      $region23: #{simple_cnn_forward.6} parent=5 // pred_region
        // Predicated region
        $region25: #{simple_cnn_forward.6} parent=23 // pred_check
          %p128 = pneg %p50
        $region26: #{simple_cnn_forward.6} parent=23 // pred_check_branch
          %130 = sbr.rel (%p128) target = $region28
        $region27: #{simple_cnn_forward.6} parent=23 // pred_region
          %s131 = sand.u32 %s40, 1
          %s132 = sand.u32 %s40, 1
          %s133 = smul.addr %s132, 1680
          %s134 = scalar_lea.vmem [#allocation2], %s133
          %s135 = smul.u32 42, %s9
          %s136 = smul.addr %s135, 4
          %s137 = scalar_lea.vmem %s1, %s136
          // Predicated region
          $region29: #{simple_cnn_forward.6} parent=27 // pred_check
            _
          $region30: #{simple_cnn_forward.6} parent=27 // pred_check_branch
            %139 = sbr.rel (0) target = $region32
          $region31: #{simple_cnn_forward.6} parent=27 // pred_region
            // Predicated region
            $region33: #{simple_cnn_forward.6} parent=31 // pred_check
              _
            $region34: #{simple_cnn_forward.6} parent=31 // pred_check_branch
              %141 = sbr.rel (0) target = $region36
            $region35: #{simple_cnn_forward.6} parent=31 // pred_region
              loop: start=0, step=1, limit=1
              $region37: #{simple_cnn_forward.6} parent=35 // loop_pre_header
                _
              $region38: #{simple_cnn_forward.6} parent=35 // loop_header
                %s143 = sphi 0, %s147
                %p144 = scmp.ge.s32.totalorder %s143, 1
                %s148 = sphi %s137, %s137
                %s149 = sphi %s134, %s134
              $region39: #{simple_cnn_forward.6} parent=35 // loop_header_branch
                %146 = sbr.rel (%p144) target = $region43
              $region40: #{simple_cnn_forward.6} parent=35 // loop_body
                %v150 = vld [vmem:[%s148] sm:$0xff]
                %151 = vst [vmem:[%s149] sm:$0xff] %v150
                %v152 = vld [vmem:[%s148 + $0x8] sm:$0xff]
                %153 = vst [vmem:[%s149 + $0x8] sm:$0xff] %v152
                %v154 = vld [vmem:[%s148 + $0x10] sm:$0xff]
                %155 = vst [vmem:[%s149 + $0x10] sm:$0xff] %v154
                %v156 = vld [vmem:[%s148 + $0x18] sm:$0xff]
                %157 = vst [vmem:[%s149 + $0x18] sm:$0xff] %v156
                %v158 = vld [vmem:[%s148 + $0x20] sm:$0xff]
                %159 = vst [vmem:[%s149 + $0x20] sm:$0xff] %v158
                %v160 = vld [vmem:[%s148 + $0x28] sm:$0xff]
                %161 = vst [vmem:[%s149 + $0x28] sm:$0xff] %v160
                %v162 = vld [vmem:[%s148 + $0x30] sm:$0xff]
                %163 = vst [vmem:[%s149 + $0x30] sm:$0xff] %v162
                %v164 = vld [vmem:[%s148 + $0x38] sm:$0xff]
                %165 = vst [vmem:[%s149 + $0x38] sm:$0xff] %v164
                %v166 = vld [vmem:[%s148 + $0x40] sm:$0xff]
                %167 = vst [vmem:[%s149 + $0x40] sm:$0xff] %v166
                %v168 = vld [vmem:[%s148 + $0x48] sm:$0xff]
                %169 = vst [vmem:[%s149 + $0x48] sm:$0xff] %v168
                %v170 = vld [vmem:[%s148 + $0x50] sm:$0xff]
                %171 = vst [vmem:[%s149 + $0x50] sm:$0xff] %v170
                %v172 = vld [vmem:[%s148 + $0x58] sm:$0xff]
                %173 = vst [vmem:[%s149 + $0x58] sm:$0xff] %v172
                %v174 = vld [vmem:[%s148 + $0x60] sm:$0xff]
                %175 = vst [vmem:[%s149 + $0x60] sm:$0xff] %v174
                %v176 = vld [vmem:[%s148 + $0x68] sm:$0xff]
                %177 = vst [vmem:[%s149 + $0x68] sm:$0xff] %v176
                %v178 = vld [vmem:[%s148 + $0x70] sm:$0xff]
                %179 = vst [vmem:[%s149 + $0x70] sm:$0xff] %v178
                %v180 = vld [vmem:[%s148 + $0x78] sm:$0xff]
                %181 = vst [vmem:[%s149 + $0x78] sm:$0xff] %v180
                %v182 = vld [vmem:[%s148 + $0x80] sm:$0xff]
                %183 = vst [vmem:[%s149 + $0x80] sm:$0xff] %v182
                %v184 = vld [vmem:[%s148 + $0x88] sm:$0xff]
                %185 = vst [vmem:[%s149 + $0x88] sm:$0xff] %v184
                %v186 = vld [vmem:[%s148 + $0x90] sm:$0xff]
                %187 = vst [vmem:[%s149 + $0x90] sm:$0xff] %v186
                %v188 = vld [vmem:[%s148 + $0x98] sm:$0xff]
                %189 = vst [vmem:[%s149 + $0x98] sm:$0xff] %v188
                %v190 = vld [vmem:[%s148 + $0xa0] sm:$0xff]
                %191 = vst [vmem:[%s149 + $0xa0] sm:$0xff] %v190
                %v192 = vld [vmem:[%s148 + $0xdc8] sm:$0xff]
                %193 = vst [vmem:[%s149 + $0xa8] sm:$0xff] %v192
                %v194 = vld [vmem:[%s148 + $0xdd0] sm:$0xff]
                %195 = vst [vmem:[%s149 + $0xb0] sm:$0xff] %v194
                %v196 = vld [vmem:[%s148 + $0xdd8] sm:$0xff]
                %197 = vst [vmem:[%s149 + $0xb8] sm:$0xff] %v196
                %v198 = vld [vmem:[%s148 + $0xde0] sm:$0xff]
                %199 = vst [vmem:[%s149 + $0xc0] sm:$0xff] %v198
                %v200 = vld [vmem:[%s148 + $0xde8] sm:$0xff]
                %201 = vst [vmem:[%s149 + $0xc8] sm:$0xff] %v200
                %v202 = vld [vmem:[%s148 + $0xdf0] sm:$0xff]
                %203 = vst [vmem:[%s149 + $0xd0] sm:$0xff] %v202
                %v204 = vld [vmem:[%s148 + $0xdf8] sm:$0xff]
                %205 = vst [vmem:[%s149 + $0xd8] sm:$0xff] %v204
                %v206 = vld [vmem:[%s148 + $0xe00] sm:$0xff]
                %207 = vst [vmem:[%s149 + $0xe0] sm:$0xff] %v206
                %v208 = vld [vmem:[%s148 + $0xe08] sm:$0xff]
                %209 = vst [vmem:[%s149 + $0xe8] sm:$0xff] %v208
                %v210 = vld [vmem:[%s148 + $0xe10] sm:$0xff]
                %211 = vst [vmem:[%s149 + $0xf0] sm:$0xff] %v210
                %v212 = vld [vmem:[%s148 + $0xe18] sm:$0xff]
                %213 = vst [vmem:[%s149 + $0xf8] sm:$0xff] %v212
                %v214 = vld [vmem:[%s148 + $0xe20] sm:$0xff]
                %215 = vst [vmem:[%s149 + $0x100] sm:$0xff] %v214
                %v216 = vld [vmem:[%s148 + $0xe28] sm:$0xff]
                %217 = vst [vmem:[%s149 + $0x108] sm:$0xff] %v216
                %v218 = vld [vmem:[%s148 + $0xe30] sm:$0xff]
                %219 = vst [vmem:[%s149 + $0x110] sm:$0xff] %v218
                %v220 = vld [vmem:[%s148 + $0xe38] sm:$0xff]
                %221 = vst [vmem:[%s149 + $0x118] sm:$0xff] %v220
                %v222 = vld [vmem:[%s148 + $0xe40] sm:$0xff]
                %223 = vst [vmem:[%s149 + $0x120] sm:$0xff] %v222
                %v224 = vld [vmem:[%s148 + $0xe48] sm:$0xff]
                %225 = vst [vmem:[%s149 + $0x128] sm:$0xff] %v224
                %v226 = vld [vmem:[%s148 + $0xe50] sm:$0xff]
                %227 = vst [vmem:[%s149 + $0x130] sm:$0xff] %v226
                %v228 = vld [vmem:[%s148 + $0xe58] sm:$0xff]
                %229 = vst [vmem:[%s149 + $0x138] sm:$0xff] %v228
                %v230 = vld [vmem:[%s148 + $0xe60] sm:$0xff]
                %231 = vst [vmem:[%s149 + $0x140] sm:$0xff] %v230
                %v232 = vld [vmem:[%s148 + $0xe68] sm:$0xff]
                %233 = vst [vmem:[%s149 + $0x148] sm:$0xff] %v232
                %v234 = vld [vmem:[%s148 + $0x1b90] sm:$0xff]
                %235 = vst [vmem:[%s149 + $0x150] sm:$0xff] %v234
                %v236 = vld [vmem:[%s148 + $0x1b98] sm:$0xff]
                %237 = vst [vmem:[%s149 + $0x158] sm:$0xff] %v236
                %v238 = vld [vmem:[%s148 + $0x1ba0] sm:$0xff]
                %239 = vst [vmem:[%s149 + $0x160] sm:$0xff] %v238
                %v240 = vld [vmem:[%s148 + $0x1ba8] sm:$0xff]
                %241 = vst [vmem:[%s149 + $0x168] sm:$0xff] %v240
                %v242 = vld [vmem:[%s148 + $0x1bb0] sm:$0xff]
                %243 = vst [vmem:[%s149 + $0x170] sm:$0xff] %v242
                %v244 = vld [vmem:[%s148 + $0x1bb8] sm:$0xff]
                %245 = vst [vmem:[%s149 + $0x178] sm:$0xff] %v244
                %v246 = vld [vmem:[%s148 + $0x1bc0] sm:$0xff]
                %247 = vst [vmem:[%s149 + $0x180] sm:$0xff] %v246
                %v248 = vld [vmem:[%s148 + $0x1bc8] sm:$0xff]
                %249 = vst [vmem:[%s149 + $0x188] sm:$0xff] %v248
                %v250 = vld [vmem:[%s148 + $0x1bd0] sm:$0xff]
                %251 = vst [vmem:[%s149 + $0x190] sm:$0xff] %v250
                %v252 = vld [vmem:[%s148 + $0x1bd8] sm:$0xff]
                %253 = vst [vmem:[%s149 + $0x198] sm:$0xff] %v252
                %v254 = vld [vmem:[%s148 + $0x1be0] sm:$0xff]
                %255 = vst [vmem:[%s149 + $0x1a0] sm:$0xff] %v254
                %v256 = vld [vmem:[%s148 + $0x1be8] sm:$0xff]
                %257 = vst [vmem:[%s149 + $0x1a8] sm:$0xff] %v256
                %v258 = vld [vmem:[%s148 + $0x1bf0] sm:$0xff]
                %259 = vst [vmem:[%s149 + $0x1b0] sm:$0xff] %v258
                %v260 = vld [vmem:[%s148 + $0x1bf8] sm:$0xff]
                %261 = vst [vmem:[%s149 + $0x1b8] sm:$0xff] %v260
                %v262 = vld [vmem:[%s148 + $0x1c00] sm:$0xff]
                %263 = vst [vmem:[%s149 + $0x1c0] sm:$0xff] %v262
                %v264 = vld [vmem:[%s148 + $0x1c08] sm:$0xff]
                %265 = vst [vmem:[%s149 + $0x1c8] sm:$0xff] %v264
                %v266 = vld [vmem:[%s148 + $0x1c10] sm:$0xff]
                %267 = vst [vmem:[%s149 + $0x1d0] sm:$0xff] %v266
                %v268 = vld [vmem:[%s148 + $0x1c18] sm:$0xff]
                %269 = vst [vmem:[%s149 + $0x1d8] sm:$0xff] %v268
                %v270 = vld [vmem:[%s148 + $0x1c20] sm:$0xff]
                %271 = vst [vmem:[%s149 + $0x1e0] sm:$0xff] %v270
                %v272 = vld [vmem:[%s148 + $0x1c28] sm:$0xff]
                %273 = vst [vmem:[%s149 + $0x1e8] sm:$0xff] %v272
                %v274 = vld [vmem:[%s148 + $0x1c30] sm:$0xff]
                %275 = vst [vmem:[%s149 + $0x1f0] sm:$0xff] %v274
                %v276 = vld [vmem:[%s148 + $0x2958] sm:$0xff]
                %277 = vst [vmem:[%s149 + $0x1f8] sm:$0xff] %v276
                %v278 = vld [vmem:[%s148 + $0x2960] sm:$0xff]
                %279 = vst [vmem:[%s149 + $0x200] sm:$0xff] %v278
                %v280 = vld [vmem:[%s148 + $0x2968] sm:$0xff]
                %281 = vst [vmem:[%s149 + $0x208] sm:$0xff] %v280
                %v282 = vld [vmem:[%s148 + $0x2970] sm:$0xff]
                %283 = vst [vmem:[%s149 + $0x210] sm:$0xff] %v282
                %v284 = vld [vmem:[%s148 + $0x2978] sm:$0xff]
                %285 = vst [vmem:[%s149 + $0x218] sm:$0xff] %v284
                %v286 = vld [vmem:[%s148 + $0x2980] sm:$0xff]
                %287 = vst [vmem:[%s149 + $0x220] sm:$0xff] %v286
                %v288 = vld [vmem:[%s148 + $0x2988] sm:$0xff]
                %289 = vst [vmem:[%s149 + $0x228] sm:$0xff] %v288
                %v290 = vld [vmem:[%s148 + $0x2990] sm:$0xff]
                %291 = vst [vmem:[%s149 + $0x230] sm:$0xff] %v290
                %v292 = vld [vmem:[%s148 + $0x2998] sm:$0xff]
                %293 = vst [vmem:[%s149 + $0x238] sm:$0xff] %v292
                %v294 = vld [vmem:[%s148 + $0x29a0] sm:$0xff]
                %295 = vst [vmem:[%s149 + $0x240] sm:$0xff] %v294
                %v296 = vld [vmem:[%s148 + $0x29a8] sm:$0xff]
                %297 = vst [vmem:[%s149 + $0x248] sm:$0xff] %v296
                %v298 = vld [vmem:[%s148 + $0x29b0] sm:$0xff]
                %299 = vst [vmem:[%s149 + $0x250] sm:$0xff] %v298
                %v300 = vld [vmem:[%s148 + $0x29b8] sm:$0xff]
                %301 = vst [vmem:[%s149 + $0x258] sm:$0xff] %v300
                %v302 = vld [vmem:[%s148 + $0x29c0] sm:$0xff]
                %303 = vst [vmem:[%s149 + $0x260] sm:$0xff] %v302
                %v304 = vld [vmem:[%s148 + $0x29c8] sm:$0xff]
                %305 = vst [vmem:[%s149 + $0x268] sm:$0xff] %v304
                %v306 = vld [vmem:[%s148 + $0x29d0] sm:$0xff]
                %307 = vst [vmem:[%s149 + $0x270] sm:$0xff] %v306
                %v308 = vld [vmem:[%s148 + $0x29d8] sm:$0xff]
                %309 = vst [vmem:[%s149 + $0x278] sm:$0xff] %v308
                %v310 = vld [vmem:[%s148 + $0x29e0] sm:$0xff]
                %311 = vst [vmem:[%s149 + $0x280] sm:$0xff] %v310
                %v312 = vld [vmem:[%s148 + $0x29e8] sm:$0xff]
                %313 = vst [vmem:[%s149 + $0x288] sm:$0xff] %v312
                %v314 = vld [vmem:[%s148 + $0x29f0] sm:$0xff]
                %315 = vst [vmem:[%s149 + $0x290] sm:$0xff] %v314
                %v316 = vld [vmem:[%s148 + $0x29f8] sm:$0xff]
                %317 = vst [vmem:[%s149 + $0x298] sm:$0xff] %v316
                %v318 = vld [vmem:[%s148 + $0x3720] sm:$0xff]
                %319 = vst [vmem:[%s149 + $0x2a0] sm:$0xff] %v318
                %v320 = vld [vmem:[%s148 + $0x3728] sm:$0xff]
                %321 = vst [vmem:[%s149 + $0x2a8] sm:$0xff] %v320
                %v322 = vld [vmem:[%s148 + $0x3730] sm:$0xff]
                %323 = vst [vmem:[%s149 + $0x2b0] sm:$0xff] %v322
                %v324 = vld [vmem:[%s148 + $0x3738] sm:$0xff]
                %325 = vst [vmem:[%s149 + $0x2b8] sm:$0xff] %v324
                %v326 = vld [vmem:[%s148 + $0x3740] sm:$0xff]
                %327 = vst [vmem:[%s149 + $0x2c0] sm:$0xff] %v326
                %v328 = vld [vmem:[%s148 + $0x3748] sm:$0xff]
                %329 = vst [vmem:[%s149 + $0x2c8] sm:$0xff] %v328
                %v330 = vld [vmem:[%s148 + $0x3750] sm:$0xff]
                %331 = vst [vmem:[%s149 + $0x2d0] sm:$0xff] %v330
                %v332 = vld [vmem:[%s148 + $0x3758] sm:$0xff]
                %333 = vst [vmem:[%s149 + $0x2d8] sm:$0xff] %v332
                %v334 = vld [vmem:[%s148 + $0x3760] sm:$0xff]
                %335 = vst [vmem:[%s149 + $0x2e0] sm:$0xff] %v334
                %v336 = vld [vmem:[%s148 + $0x3768] sm:$0xff]
                %337 = vst [vmem:[%s149 + $0x2e8] sm:$0xff] %v336
                %v338 = vld [vmem:[%s148 + $0x3770] sm:$0xff]
                %339 = vst [vmem:[%s149 + $0x2f0] sm:$0xff] %v338
                %v340 = vld [vmem:[%s148 + $0x3778] sm:$0xff]
                %341 = vst [vmem:[%s149 + $0x2f8] sm:$0xff] %v340
                %v342 = vld [vmem:[%s148 + $0x3780] sm:$0xff]
                %343 = vst [vmem:[%s149 + $0x300] sm:$0xff] %v342
                %v344 = vld [vmem:[%s148 + $0x3788] sm:$0xff]
                %345 = vst [vmem:[%s149 + $0x308] sm:$0xff] %v344
                %v346 = vld [vmem:[%s148 + $0x3790] sm:$0xff]
                %347 = vst [vmem:[%s149 + $0x310] sm:$0xff] %v346
                %v348 = vld [vmem:[%s148 + $0x3798] sm:$0xff]
                %349 = vst [vmem:[%s149 + $0x318] sm:$0xff] %v348
                %v350 = vld [vmem:[%s148 + $0x37a0] sm:$0xff]
                %351 = vst [vmem:[%s149 + $0x320] sm:$0xff] %v350
                %v352 = vld [vmem:[%s148 + $0x37a8] sm:$0xff]
                %353 = vst [vmem:[%s149 + $0x328] sm:$0xff] %v352
                %v354 = vld [vmem:[%s148 + $0x37b0] sm:$0xff]
                %355 = vst [vmem:[%s149 + $0x330] sm:$0xff] %v354
                %v356 = vld [vmem:[%s148 + $0x37b8] sm:$0xff]
                %357 = vst [vmem:[%s149 + $0x338] sm:$0xff] %v356
                %v358 = vld [vmem:[%s148 + $0x37c0] sm:$0xff]
                %359 = vst [vmem:[%s149 + $0x340] sm:$0xff] %v358
                %v360 = vld [vmem:[%s148 + $0x44e8] sm:$0xff]
                %361 = vst [vmem:[%s149 + $0x348] sm:$0xff] %v360
                %v362 = vld [vmem:[%s148 + $0x44f0] sm:$0xff]
                %363 = vst [vmem:[%s149 + $0x350] sm:$0xff] %v362
                %v364 = vld [vmem:[%s148 + $0x44f8] sm:$0xff]
                %365 = vst [vmem:[%s149 + $0x358] sm:$0xff] %v364
                %v366 = vld [vmem:[%s148 + $0x4500] sm:$0xff]
                %367 = vst [vmem:[%s149 + $0x360] sm:$0xff] %v366
                %v368 = vld [vmem:[%s148 + $0x4508] sm:$0xff]
                %369 = vst [vmem:[%s149 + $0x368] sm:$0xff] %v368
                %v370 = vld [vmem:[%s148 + $0x4510] sm:$0xff]
                %371 = vst [vmem:[%s149 + $0x370] sm:$0xff] %v370
                %v372 = vld [vmem:[%s148 + $0x4518] sm:$0xff]
                %373 = vst [vmem:[%s149 + $0x378] sm:$0xff] %v372
                %v374 = vld [vmem:[%s148 + $0x4520] sm:$0xff]
                %375 = vst [vmem:[%s149 + $0x380] sm:$0xff] %v374
                %v376 = vld [vmem:[%s148 + $0x4528] sm:$0xff]
                %377 = vst [vmem:[%s149 + $0x388] sm:$0xff] %v376
                %v378 = vld [vmem:[%s148 + $0x4530] sm:$0xff]
                %379 = vst [vmem:[%s149 + $0x390] sm:$0xff] %v378
                %v380 = vld [vmem:[%s148 + $0x4538] sm:$0xff]
                %381 = vst [vmem:[%s149 + $0x398] sm:$0xff] %v380
                %v382 = vld [vmem:[%s148 + $0x4540] sm:$0xff]
                %383 = vst [vmem:[%s149 + $0x3a0] sm:$0xff] %v382
                %v384 = vld [vmem:[%s148 + $0x4548] sm:$0xff]
                %385 = vst [vmem:[%s149 + $0x3a8] sm:$0xff] %v384
                %v386 = vld [vmem:[%s148 + $0x4550] sm:$0xff]
                %387 = vst [vmem:[%s149 + $0x3b0] sm:$0xff] %v386
                %v388 = vld [vmem:[%s148 + $0x4558] sm:$0xff]
                %389 = vst [vmem:[%s149 + $0x3b8] sm:$0xff] %v388
                %v390 = vld [vmem:[%s148 + $0x4560] sm:$0xff]
                %391 = vst [vmem:[%s149 + $0x3c0] sm:$0xff] %v390
                %v392 = vld [vmem:[%s148 + $0x4568] sm:$0xff]
                %393 = vst [vmem:[%s149 + $0x3c8] sm:$0xff] %v392
                %v394 = vld [vmem:[%s148 + $0x4570] sm:$0xff]
                %395 = vst [vmem:[%s149 + $0x3d0] sm:$0xff] %v394
                %v396 = vld [vmem:[%s148 + $0x4578] sm:$0xff]
                %397 = vst [vmem:[%s149 + $0x3d8] sm:$0xff] %v396
                %v398 = vld [vmem:[%s148 + $0x4580] sm:$0xff]
                %399 = vst [vmem:[%s149 + $0x3e0] sm:$0xff] %v398
                %v400 = vld [vmem:[%s148 + $0x4588] sm:$0xff]
                %401 = vst [vmem:[%s149 + $0x3e8] sm:$0xff] %v400
                %v402 = vld [vmem:[%s148 + $0x52b0] sm:$0xff]
                %403 = vst [vmem:[%s149 + $0x3f0] sm:$0xff] %v402
                %v404 = vld [vmem:[%s148 + $0x52b8] sm:$0xff]
                %405 = vst [vmem:[%s149 + $0x3f8] sm:$0xff] %v404
                %v406 = vld [vmem:[%s148 + $0x52c0] sm:$0xff]
                %407 = vst [vmem:[%s149 + $0x400] sm:$0xff] %v406
                %v408 = vld [vmem:[%s148 + $0x52c8] sm:$0xff]
                %409 = vst [vmem:[%s149 + $0x408] sm:$0xff] %v408
                %v410 = vld [vmem:[%s148 + $0x52d0] sm:$0xff]
                %411 = vst [vmem:[%s149 + $0x410] sm:$0xff] %v410
                %v412 = vld [vmem:[%s148 + $0x52d8] sm:$0xff]
                %413 = vst [vmem:[%s149 + $0x418] sm:$0xff] %v412
                %v414 = vld [vmem:[%s148 + $0x52e0] sm:$0xff]
                %415 = vst [vmem:[%s149 + $0x420] sm:$0xff] %v414
                %v416 = vld [vmem:[%s148 + $0x52e8] sm:$0xff]
                %417 = vst [vmem:[%s149 + $0x428] sm:$0xff] %v416
                %v418 = vld [vmem:[%s148 + $0x52f0] sm:$0xff]
                %419 = vst [vmem:[%s149 + $0x430] sm:$0xff] %v418
                %v420 = vld [vmem:[%s148 + $0x52f8] sm:$0xff]
                %421 = vst [vmem:[%s149 + $0x438] sm:$0xff] %v420
                %v422 = vld [vmem:[%s148 + $0x5300] sm:$0xff]
                %423 = vst [vmem:[%s149 + $0x440] sm:$0xff] %v422
                %v424 = vld [vmem:[%s148 + $0x5308] sm:$0xff]
                %425 = vst [vmem:[%s149 + $0x448] sm:$0xff] %v424
                %v426 = vld [vmem:[%s148 + $0x5310] sm:$0xff]
                %427 = vst [vmem:[%s149 + $0x450] sm:$0xff] %v426
                %v428 = vld [vmem:[%s148 + $0x5318] sm:$0xff]
                %429 = vst [vmem:[%s149 + $0x458] sm:$0xff] %v428
                %v430 = vld [vmem:[%s148 + $0x5320] sm:$0xff]
                %431 = vst [vmem:[%s149 + $0x460] sm:$0xff] %v430
                %v432 = vld [vmem:[%s148 + $0x5328] sm:$0xff]
                %433 = vst [vmem:[%s149 + $0x468] sm:$0xff] %v432
                %v434 = vld [vmem:[%s148 + $0x5330] sm:$0xff]
                %435 = vst [vmem:[%s149 + $0x470] sm:$0xff] %v434
                %v436 = vld [vmem:[%s148 + $0x5338] sm:$0xff]
                %437 = vst [vmem:[%s149 + $0x478] sm:$0xff] %v436
                %v438 = vld [vmem:[%s148 + $0x5340] sm:$0xff]
                %439 = vst [vmem:[%s149 + $0x480] sm:$0xff] %v438
                %v440 = vld [vmem:[%s148 + $0x5348] sm:$0xff]
                %441 = vst [vmem:[%s149 + $0x488] sm:$0xff] %v440
                %v442 = vld [vmem:[%s148 + $0x5350] sm:$0xff]
                %443 = vst [vmem:[%s149 + $0x490] sm:$0xff] %v442
                %v444 = vld [vmem:[%s148 + $0x6078] sm:$0xff]
                %445 = vst [vmem:[%s149 + $0x498] sm:$0xff] %v444
                %v446 = vld [vmem:[%s148 + $0x6080] sm:$0xff]
                %447 = vst [vmem:[%s149 + $0x4a0] sm:$0xff] %v446
                %v448 = vld [vmem:[%s148 + $0x6088] sm:$0xff]
                %449 = vst [vmem:[%s149 + $0x4a8] sm:$0xff] %v448
                %v450 = vld [vmem:[%s148 + $0x6090] sm:$0xff]
                %451 = vst [vmem:[%s149 + $0x4b0] sm:$0xff] %v450
                %v452 = vld [vmem:[%s148 + $0x6098] sm:$0xff]
                %453 = vst [vmem:[%s149 + $0x4b8] sm:$0xff] %v452
                %v454 = vld [vmem:[%s148 + $0x60a0] sm:$0xff]
                %455 = vst [vmem:[%s149 + $0x4c0] sm:$0xff] %v454
                %v456 = vld [vmem:[%s148 + $0x60a8] sm:$0xff]
                %457 = vst [vmem:[%s149 + $0x4c8] sm:$0xff] %v456
                %v458 = vld [vmem:[%s148 + $0x60b0] sm:$0xff]
                %459 = vst [vmem:[%s149 + $0x4d0] sm:$0xff] %v458
                %v460 = vld [vmem:[%s148 + $0x60b8] sm:$0xff]
                %461 = vst [vmem:[%s149 + $0x4d8] sm:$0xff] %v460
                %v462 = vld [vmem:[%s148 + $0x60c0] sm:$0xff]
                %463 = vst [vmem:[%s149 + $0x4e0] sm:$0xff] %v462
                %v464 = vld [vmem:[%s148 + $0x60c8] sm:$0xff]
                %465 = vst [vmem:[%s149 + $0x4e8] sm:$0xff] %v464
                %v466 = vld [vmem:[%s148 + $0x60d0] sm:$0xff]
                %467 = vst [vmem:[%s149 + $0x4f0] sm:$0xff] %v466
                %v468 = vld [vmem:[%s148 + $0x60d8] sm:$0xff]
                %469 = vst [vmem:[%s149 + $0x4f8] sm:$0xff] %v468
                %v470 = vld [vmem:[%s148 + $0x60e0] sm:$0xff]
                %471 = vst [vmem:[%s149 + $0x500] sm:$0xff] %v470
                %v472 = vld [vmem:[%s148 + $0x60e8] sm:$0xff]
                %473 = vst [vmem:[%s149 + $0x508] sm:$0xff] %v472
                %v474 = vld [vmem:[%s148 + $0x60f0] sm:$0xff]
                %475 = vst [vmem:[%s149 + $0x510] sm:$0xff] %v474
                %v476 = vld [vmem:[%s148 + $0x60f8] sm:$0xff]
                %477 = vst [vmem:[%s149 + $0x518] sm:$0xff] %v476
                %v478 = vld [vmem:[%s148 + $0x6100] sm:$0xff]
                %479 = vst [vmem:[%s149 + $0x520] sm:$0xff] %v478
                %v480 = vld [vmem:[%s148 + $0x6108] sm:$0xff]
                %481 = vst [vmem:[%s149 + $0x528] sm:$0xff] %v480
                %v482 = vld [vmem:[%s148 + $0x6110] sm:$0xff]
                %483 = vst [vmem:[%s149 + $0x530] sm:$0xff] %v482
                %v484 = vld [vmem:[%s148 + $0x6118] sm:$0xff]
                %485 = vst [vmem:[%s149 + $0x538] sm:$0xff] %v484
                %v486 = vld [vmem:[%s148 + $0x6e40] sm:$0xff]
                %487 = vst [vmem:[%s149 + $0x540] sm:$0xff] %v486
                %v488 = vld [vmem:[%s148 + $0x6e48] sm:$0xff]
                %489 = vst [vmem:[%s149 + $0x548] sm:$0xff] %v488
                %v490 = vld [vmem:[%s148 + $0x6e50] sm:$0xff]
                %491 = vst [vmem:[%s149 + $0x550] sm:$0xff] %v490
                %v492 = vld [vmem:[%s148 + $0x6e58] sm:$0xff]
                %493 = vst [vmem:[%s149 + $0x558] sm:$0xff] %v492
                %v494 = vld [vmem:[%s148 + $0x6e60] sm:$0xff]
                %495 = vst [vmem:[%s149 + $0x560] sm:$0xff] %v494
                %v496 = vld [vmem:[%s148 + $0x6e68] sm:$0xff]
                %497 = vst [vmem:[%s149 + $0x568] sm:$0xff] %v496
                %v498 = vld [vmem:[%s148 + $0x6e70] sm:$0xff]
                %499 = vst [vmem:[%s149 + $0x570] sm:$0xff] %v498
                %v500 = vld [vmem:[%s148 + $0x6e78] sm:$0xff]
                %501 = vst [vmem:[%s149 + $0x578] sm:$0xff] %v500
                %v502 = vld [vmem:[%s148 + $0x6e80] sm:$0xff]
                %503 = vst [vmem:[%s149 + $0x580] sm:$0xff] %v502
                %v504 = vld [vmem:[%s148 + $0x6e88] sm:$0xff]
                %505 = vst [vmem:[%s149 + $0x588] sm:$0xff] %v504
                %v506 = vld [vmem:[%s148 + $0x6e90] sm:$0xff]
                %507 = vst [vmem:[%s149 + $0x590] sm:$0xff] %v506
                %v508 = vld [vmem:[%s148 + $0x6e98] sm:$0xff]
                %509 = vst [vmem:[%s149 + $0x598] sm:$0xff] %v508
                %v510 = vld [vmem:[%s148 + $0x6ea0] sm:$0xff]
                %511 = vst [vmem:[%s149 + $0x5a0] sm:$0xff] %v510
                %v512 = vld [vmem:[%s148 + $0x6ea8] sm:$0xff]
                %513 = vst [vmem:[%s149 + $0x5a8] sm:$0xff] %v512
                %v514 = vld [vmem:[%s148 + $0x6eb0] sm:$0xff]
                %515 = vst [vmem:[%s149 + $0x5b0] sm:$0xff] %v514
                %v516 = vld [vmem:[%s148 + $0x6eb8] sm:$0xff]
                %517 = vst [vmem:[%s149 + $0x5b8] sm:$0xff] %v516
                %v518 = vld [vmem:[%s148 + $0x6ec0] sm:$0xff]
                %519 = vst [vmem:[%s149 + $0x5c0] sm:$0xff] %v518
                %v520 = vld [vmem:[%s148 + $0x6ec8] sm:$0xff]
                %521 = vst [vmem:[%s149 + $0x5c8] sm:$0xff] %v520
                %v522 = vld [vmem:[%s148 + $0x6ed0] sm:$0xff]
                %523 = vst [vmem:[%s149 + $0x5d0] sm:$0xff] %v522
                %v524 = vld [vmem:[%s148 + $0x6ed8] sm:$0xff]
                %525 = vst [vmem:[%s149 + $0x5d8] sm:$0xff] %v524
                %v526 = vld [vmem:[%s148 + $0x6ee0] sm:$0xff]
                %527 = vst [vmem:[%s149 + $0x5e0] sm:$0xff] %v526
                %v528 = vld [vmem:[%s148 + $0x7c08] sm:$0xff]
                %529 = vst [vmem:[%s149 + $0x5e8] sm:$0xff] %v528
                %v530 = vld [vmem:[%s148 + $0x7c10] sm:$0xff]
                %531 = vst [vmem:[%s149 + $0x5f0] sm:$0xff] %v530
                %v532 = vld [vmem:[%s148 + $0x7c18] sm:$0xff]
                %533 = vst [vmem:[%s149 + $0x5f8] sm:$0xff] %v532
                %v534 = vld [vmem:[%s148 + $0x7c20] sm:$0xff]
                %535 = vst [vmem:[%s149 + $0x600] sm:$0xff] %v534
                %v536 = vld [vmem:[%s148 + $0x7c28] sm:$0xff]
                %537 = vst [vmem:[%s149 + $0x608] sm:$0xff] %v536
                %v538 = vld [vmem:[%s148 + $0x7c30] sm:$0xff]
                %539 = vst [vmem:[%s149 + $0x610] sm:$0xff] %v538
                %v540 = vld [vmem:[%s148 + $0x7c38] sm:$0xff]
                %541 = vst [vmem:[%s149 + $0x618] sm:$0xff] %v540
                %v542 = vld [vmem:[%s148 + $0x7c40] sm:$0xff]
                %543 = vst [vmem:[%s149 + $0x620] sm:$0xff] %v542
                %v544 = vld [vmem:[%s148 + $0x7c48] sm:$0xff]
                %545 = vst [vmem:[%s149 + $0x628] sm:$0xff] %v544
                %v546 = vld [vmem:[%s148 + $0x7c50] sm:$0xff]
                %547 = vst [vmem:[%s149 + $0x630] sm:$0xff] %v546
                %v548 = vld [vmem:[%s148 + $0x7c58] sm:$0xff]
                %549 = vst [vmem:[%s149 + $0x638] sm:$0xff] %v548
                %v550 = vld [vmem:[%s148 + $0x7c60] sm:$0xff]
                %551 = vst [vmem:[%s149 + $0x640] sm:$0xff] %v550
                %v552 = vld [vmem:[%s148 + $0x7c68] sm:$0xff]
                %553 = vst [vmem:[%s149 + $0x648] sm:$0xff] %v552
                %v554 = vld [vmem:[%s148 + $0x7c70] sm:$0xff]
                %555 = vst [vmem:[%s149 + $0x650] sm:$0xff] %v554
                %v556 = vld [vmem:[%s148 + $0x7c78] sm:$0xff]
                %557 = vst [vmem:[%s149 + $0x658] sm:$0xff] %v556
                %v558 = vld [vmem:[%s148 + $0x7c80] sm:$0xff]
                %559 = vst [vmem:[%s149 + $0x660] sm:$0xff] %v558
                %v560 = vld [vmem:[%s148 + $0x7c88] sm:$0xff]
                %561 = vst [vmem:[%s149 + $0x668] sm:$0xff] %v560
                %v562 = vld [vmem:[%s148 + $0x7c90] sm:$0xff]
                %563 = vst [vmem:[%s149 + $0x670] sm:$0xff] %v562
                %v564 = vld [vmem:[%s148 + $0x7c98] sm:$0xff]
                %565 = vst [vmem:[%s149 + $0x678] sm:$0xff] %v564
                %v566 = vld [vmem:[%s148 + $0x7ca0] sm:$0xff]
                %567 = vst [vmem:[%s149 + $0x680] sm:$0xff] %v566
                %v568 = vld [vmem:[%s148 + $0x7ca8] sm:$0xff]
                %569 = vst [vmem:[%s149 + $0x688] sm:$0xff] %v568
              $region41: #{simple_cnn_forward.6} parent=35 // loop_footer
                %s147 = sadd.s32 1, %s143
              $region42: #{simple_cnn_forward.6} parent=35 // loop_footer_branch
                %142 = sbr.rel target = $region38
              $region43: #{simple_cnn_forward.6} parent=35 // loop_exit
                _
            $region36: #{simple_cnn_forward.6} parent=31 // pred_fallthru
              _
            // Predicated region
            $region44: #{simple_cnn_forward.6} parent=31 // pred_check
              _
            $region45: #{simple_cnn_forward.6} parent=31 // pred_check_branch
              %571 = sbr.rel target = $region47
            $region46: #{simple_cnn_forward.6} parent=31 // pred_region
              _
            $region47: #{simple_cnn_forward.6} parent=31 // pred_fallthru
              _
          $region32: #{simple_cnn_forward.6} parent=27 // pred_fallthru
            _
          %572 = vnop
        $region28: #{simple_cnn_forward.6} parent=23 // pred_fallthru
          _
      $region24: #{simple_cnn_forward.6} parent=5 // pred_fallthru
        _
      %p573 = scmp.le.s32.totalorder 1, %s9
      %p574 = scmp.lt.s32.totalorder %s9, 22
      %p575 = pnand %p573, %p574
      %p576 = pneg %p575
      // Predicated region
      $region48: #{simple_cnn_forward.6} parent=5 // pred_check
        _
      $region49: #{simple_cnn_forward.6} parent=5 // pred_check_branch
        %578 = sbr.rel (%p575) target = $region51
      $region50: #{simple_cnn_forward.6} parent=5 // pred_region
        %s579 = ssub.s32 %s9, 1
        %s580 = sand.u32 %s43, 1
        %s581 = sand.u32 %s43, 1
        %s582 = smul.addr %s581, 1680
        %s583 = scalar_lea.vmem [#allocation2], %s582
        // Predicated region
        $region52: #{simple_cnn_forward.6} parent=50 // pred_check
          %p584 = pneg %p56
        $region53: #{simple_cnn_forward.6} parent=50 // pred_check_branch
          %586 = sbr.rel (%p584) target = $region55
        $region54: #{simple_cnn_forward.6} parent=50 // pred_region
          _
        $region55: #{simple_cnn_forward.6} parent=50 // pred_fallthru
          _
        %p587 = pneg %p30
        %p588 = pneg %p27
        %s589 = sand.u32 %s43, 1
        %s590 = sand.u32 %s43, 1
        %s591 = smul.addr %s590, 1680
        %s592 = scalar_lea.vmem [#allocation2], %s591
        %p593 = pneg %p56
        %p594 = pneg %p53
        %p595 = pneg %p77
        %p596 = pneg %p74
        %p597 = pneg %p103
        %p598 = pneg %p100
        %s599 = smul.u32 42, %s14
        %p600 = scmp.lt.s32.totalorder %s599, 881
        %s601 = scalar_select %p600, %s599, 881
        %s602 = smul.addr %s601, 4
        %s603 = scalar_lea.vmem %s3, %s602
        %s604 = smul.u32 42, %s14
        %s605 = smul.u32 42, %s14
        %p606 = scmp.lt.s32.totalorder %s605, 881
        %s607 = scalar_select %p606, %s605, 881
        %s608 = smul.addr %s607, 4
        %s609 = scalar_lea.vmem %s3, %s608
        %s610 = smul.u32 42, %s14
        %v612 = vld [vmem:[%s0] sm:$0xf]
        %v613 = vld [vmem:[%s583] sm:$0xff]
        %v614 = vld [vmem:[%s583 + $0x8] sm:$0xff]
        %v615 = vld [vmem:[%s583 + $0x10] sm:$0xff]
        %v616 = vld [vmem:[%s583 + $0x18] sm:$0xff]
        %v617 = vld [vmem:[%s583 + $0x20] sm:$0xff]
        %v618 = vld [vmem:[%s583 + $0x28] sm:$0xff]
        %v619 = vld [vmem:[%s583 + $0x30] sm:$0xff]
        %v620 = vld [vmem:[%s583 + $0x38] sm:$0xff]
        %v621 = vld [vmem:[%s583 + $0x40] sm:$0xff]
        %v622 = vld [vmem:[%s583 + $0x48] sm:$0xff]
        %v623 = vld [vmem:[%s583 + $0x50] sm:$0xff]
        %v624 = vld [vmem:[%s583 + $0x58] sm:$0xff]
        %v625 = vld [vmem:[%s583 + $0x60] sm:$0xff]
        %v626 = vld [vmem:[%s583 + $0x68] sm:$0xff]
        %v627 = vld [vmem:[%s583 + $0x70] sm:$0xff]
        %v628 = vld [vmem:[%s583 + $0x78] sm:$0xff]
        %v629 = vld [vmem:[%s583 + $0x80] sm:$0xff]
        %v630 = vld [vmem:[%s583 + $0x88] sm:$0xff]
        %v631 = vld [vmem:[%s583 + $0x90] sm:$0xff]
        %v632 = vld [vmem:[%s583 + $0x98] sm:$0xff]
        %v633 = vld [vmem:[%s583 + $0xa0] sm:$0xff]
        %v634 = vld [vmem:[%s583 + $0xa8] sm:$0xff]
        %v635 = vld [vmem:[%s583 + $0xb0] sm:$0xff]
        %v636 = vld [vmem:[%s583 + $0xb8] sm:$0xff]
        %v637 = vld [vmem:[%s583 + $0xc0] sm:$0xff]
        %v638 = vld [vmem:[%s583 + $0xc8] sm:$0xff]
        %v639 = vld [vmem:[%s583 + $0xd0] sm:$0xff]
        %v640 = vld [vmem:[%s583 + $0xd8] sm:$0xff]
        %v641 = vld [vmem:[%s583 + $0xe0] sm:$0xff]
        %v642 = vld [vmem:[%s583 + $0xe8] sm:$0xff]
        %v643 = vld [vmem:[%s583 + $0xf0] sm:$0xff]
        %v644 = vld [vmem:[%s583 + $0xf8] sm:$0xff]
        %v645 = vld [vmem:[%s583 + $0x100] sm:$0xff]
        %v646 = vld [vmem:[%s583 + $0x108] sm:$0xff]
        %v647 = vld [vmem:[%s583 + $0x110] sm:$0xff]
        %v648 = vld [vmem:[%s583 + $0x118] sm:$0xff]
        %v649 = vld [vmem:[%s583 + $0x120] sm:$0xff]
        %v650 = vld [vmem:[%s583 + $0x128] sm:$0xff]
        %v651 = vld [vmem:[%s583 + $0x130] sm:$0xff]
        %v652 = vld [vmem:[%s583 + $0x138] sm:$0xff]
        %v653 = vld [vmem:[%s583 + $0x140] sm:$0xff]
        %v654 = vld [vmem:[%s583 + $0x148] sm:$0xff]
        %v655 = vld [vmem:[%s583 + $0x150] sm:$0xff]
        %v656 = vld [vmem:[%s583 + $0x158] sm:$0xff]
        %v657 = vld [vmem:[%s583 + $0x160] sm:$0xff]
        %v658 = vld [vmem:[%s583 + $0x168] sm:$0xff]
        %v659 = vld [vmem:[%s583 + $0x170] sm:$0xff]
        %v660 = vld [vmem:[%s583 + $0x178] sm:$0xff]
        %v661 = vld [vmem:[%s583 + $0x180] sm:$0xff]
        %v662 = vld [vmem:[%s583 + $0x188] sm:$0xff]
        %v663 = vld [vmem:[%s583 + $0x190] sm:$0xff]
        %v664 = vld [vmem:[%s583 + $0x198] sm:$0xff]
        %v665 = vld [vmem:[%s583 + $0x1a0] sm:$0xff]
        %v666 = vld [vmem:[%s583 + $0x1a8] sm:$0xff]
        %v667 = vld [vmem:[%s583 + $0x1b0] sm:$0xff]
        %v668 = vld [vmem:[%s583 + $0x1b8] sm:$0xff]
        %v669 = vld [vmem:[%s583 + $0x1c0] sm:$0xff]
        %v670 = vld [vmem:[%s583 + $0x1c8] sm:$0xff]
        %v671 = vld [vmem:[%s583 + $0x1d0] sm:$0xff]
        %v672 = vld [vmem:[%s583 + $0x1d8] sm:$0xff]
        %v673 = vld [vmem:[%s583 + $0x1e0] sm:$0xff]
        %v674 = vld [vmem:[%s583 + $0x1e8] sm:$0xff]
        %v675 = vld [vmem:[%s583 + $0x1f0] sm:$0xff]
        %v676 = vld [vmem:[%s583 + $0x1f8] sm:$0xff]
        %v677 = vld [vmem:[%s583 + $0x200] sm:$0xff]
        %v678 = vld [vmem:[%s583 + $0x208] sm:$0xff]
        %v679 = vld [vmem:[%s583 + $0x210] sm:$0xff]
        %v680 = vld [vmem:[%s583 + $0x218] sm:$0xff]
        %v681 = vld [vmem:[%s583 + $0x220] sm:$0xff]
        %v682 = vld [vmem:[%s583 + $0x228] sm:$0xff]
        %v683 = vld [vmem:[%s583 + $0x230] sm:$0xff]
        %v684 = vld [vmem:[%s583 + $0x238] sm:$0xff]
        %v685 = vld [vmem:[%s583 + $0x240] sm:$0xff]
        %v686 = vld [vmem:[%s583 + $0x248] sm:$0xff]
        %v687 = vld [vmem:[%s583 + $0x250] sm:$0xff]
        %v688 = vld [vmem:[%s583 + $0x258] sm:$0xff]
        %v689 = vld [vmem:[%s583 + $0x260] sm:$0xff]
        %v690 = vld [vmem:[%s583 + $0x268] sm:$0xff]
        %v691 = vld [vmem:[%s583 + $0x270] sm:$0xff]
        %v692 = vld [vmem:[%s583 + $0x278] sm:$0xff]
        %v693 = vld [vmem:[%s583 + $0x280] sm:$0xff]
        %v694 = vld [vmem:[%s583 + $0x288] sm:$0xff]
        %v695 = vld [vmem:[%s583 + $0x290] sm:$0xff]
        %v696 = vld [vmem:[%s583 + $0x298] sm:$0xff]
        %v697 = vld [vmem:[%s583 + $0x2a0] sm:$0xff]
        %v698 = vld [vmem:[%s583 + $0x2a8] sm:$0xff]
        %v699 = vld [vmem:[%s583 + $0x2b0] sm:$0xff]
        %v700 = vld [vmem:[%s583 + $0x2b8] sm:$0xff]
        %v701 = vld [vmem:[%s583 + $0x2c0] sm:$0xff]
        %v702 = vld [vmem:[%s583 + $0x2c8] sm:$0xff]
        %v703 = vld [vmem:[%s583 + $0x2d0] sm:$0xff]
        %v704 = vld [vmem:[%s583 + $0x2d8] sm:$0xff]
        %v705 = vld [vmem:[%s583 + $0x2e0] sm:$0xff]
        %v706 = vld [vmem:[%s583 + $0x2e8] sm:$0xff]
        %v707 = vld [vmem:[%s583 + $0x2f0] sm:$0xff]
        %v708 = vld [vmem:[%s583 + $0x2f8] sm:$0xff]
        %v709 = vld [vmem:[%s583 + $0x300] sm:$0xff]
        %v710 = vld [vmem:[%s583 + $0x308] sm:$0xff]
        %v711 = vld [vmem:[%s583 + $0x310] sm:$0xff]
        %v712 = vld [vmem:[%s583 + $0x318] sm:$0xff]
        %v713 = vld [vmem:[%s583 + $0x320] sm:$0xff]
        %v714 = vld [vmem:[%s583 + $0x328] sm:$0xff]
        %v715 = vld [vmem:[%s583 + $0x330] sm:$0xff]
        %v716 = vld [vmem:[%s583 + $0x338] sm:$0xff]
        %v717 = vld [vmem:[%s583 + $0x340] sm:$0xff]
        %v718 = vld [vmem:[%s583 + $0x348] sm:$0xff]
        %v719 = vld [vmem:[%s583 + $0x350] sm:$0xff]
        %v720 = vld [vmem:[%s583 + $0x358] sm:$0xff]
        %v721 = vld [vmem:[%s583 + $0x360] sm:$0xff]
        %v722 = vld [vmem:[%s583 + $0x368] sm:$0xff]
        %v723 = vld [vmem:[%s583 + $0x370] sm:$0xff]
        %v724 = vld [vmem:[%s583 + $0x378] sm:$0xff]
        %v725 = vld [vmem:[%s583 + $0x380] sm:$0xff]
        %v726 = vld [vmem:[%s583 + $0x388] sm:$0xff]
        %v727 = vld [vmem:[%s583 + $0x390] sm:$0xff]
        %v728 = vld [vmem:[%s583 + $0x398] sm:$0xff]
        %v729 = vld [vmem:[%s583 + $0x3a0] sm:$0xff]
        %v730 = vld [vmem:[%s583 + $0x3a8] sm:$0xff]
        %v731 = vld [vmem:[%s583 + $0x3b0] sm:$0xff]
        %v732 = vld [vmem:[%s583 + $0x3b8] sm:$0xff]
        %v733 = vld [vmem:[%s583 + $0x3c0] sm:$0xff]
        %v734 = vld [vmem:[%s583 + $0x3c8] sm:$0xff]
        %v735 = vld [vmem:[%s583 + $0x3d0] sm:$0xff]
        %v736 = vld [vmem:[%s583 + $0x3d8] sm:$0xff]
        %v737 = vld [vmem:[%s583 + $0x3e0] sm:$0xff]
        %v738 = vld [vmem:[%s583 + $0x3e8] sm:$0xff]
        %v739 = vld [vmem:[%s583 + $0x3f0] sm:$0xff]
        %v740 = vld [vmem:[%s583 + $0x3f8] sm:$0xff]
        %v741 = vld [vmem:[%s583 + $0x400] sm:$0xff]
        %v742 = vld [vmem:[%s583 + $0x408] sm:$0xff]
        %v743 = vld [vmem:[%s583 + $0x410] sm:$0xff]
        %v744 = vld [vmem:[%s583 + $0x418] sm:$0xff]
        %v745 = vld [vmem:[%s583 + $0x420] sm:$0xff]
        %v746 = vld [vmem:[%s583 + $0x428] sm:$0xff]
        %v747 = vld [vmem:[%s583 + $0x430] sm:$0xff]
        %v748 = vld [vmem:[%s583 + $0x438] sm:$0xff]
        %v749 = vld [vmem:[%s583 + $0x440] sm:$0xff]
        %v750 = vld [vmem:[%s583 + $0x448] sm:$0xff]
        %v751 = vld [vmem:[%s583 + $0x450] sm:$0xff]
        %v752 = vld [vmem:[%s583 + $0x458] sm:$0xff]
        %v753 = vld [vmem:[%s583 + $0x460] sm:$0xff]
        %v754 = vld [vmem:[%s583 + $0x468] sm:$0xff]
        %v755 = vld [vmem:[%s583 + $0x470] sm:$0xff]
        %v756 = vld [vmem:[%s583 + $0x478] sm:$0xff]
        %v757 = vld [vmem:[%s583 + $0x480] sm:$0xff]
        %v758 = vld [vmem:[%s583 + $0x488] sm:$0xff]
        %v759 = vld [vmem:[%s583 + $0x490] sm:$0xff]
        %v760 = vld [vmem:[%s583 + $0x498] sm:$0xff]
        %v761 = vld [vmem:[%s583 + $0x4a0] sm:$0xff]
        %v762 = vld [vmem:[%s583 + $0x4a8] sm:$0xff]
        %v763 = vld [vmem:[%s583 + $0x4b0] sm:$0xff]
        %v764 = vld [vmem:[%s583 + $0x4b8] sm:$0xff]
        %v765 = vld [vmem:[%s583 + $0x4c0] sm:$0xff]
        %v766 = vld [vmem:[%s583 + $0x4c8] sm:$0xff]
        %v767 = vld [vmem:[%s583 + $0x4d0] sm:$0xff]
        %v768 = vld [vmem:[%s583 + $0x4d8] sm:$0xff]
        %v769 = vld [vmem:[%s583 + $0x4e0] sm:$0xff]
        %v770 = vld [vmem:[%s583 + $0x4e8] sm:$0xff]
        %v771 = vld [vmem:[%s583 + $0x4f0] sm:$0xff]
        %v772 = vld [vmem:[%s583 + $0x4f8] sm:$0xff]
        %v773 = vld [vmem:[%s583 + $0x500] sm:$0xff]
        %v774 = vld [vmem:[%s583 + $0x508] sm:$0xff]
        %v775 = vld [vmem:[%s583 + $0x510] sm:$0xff]
        %v776 = vld [vmem:[%s583 + $0x518] sm:$0xff]
        %v777 = vld [vmem:[%s583 + $0x520] sm:$0xff]
        %v778 = vld [vmem:[%s583 + $0x528] sm:$0xff]
        %v779 = vld [vmem:[%s583 + $0x530] sm:$0xff]
        %v780 = vld [vmem:[%s583 + $0x538] sm:$0xff]
        %v781 = vld [vmem:[%s583 + $0x540] sm:$0xff]
        %v782 = vld [vmem:[%s583 + $0x548] sm:$0xff]
        %v783 = vld [vmem:[%s583 + $0x550] sm:$0xff]
        %v784 = vld [vmem:[%s583 + $0x558] sm:$0xff]
        %v785 = vld [vmem:[%s583 + $0x560] sm:$0xff]
        %v786 = vld [vmem:[%s583 + $0x568] sm:$0xff]
        %v787 = vld [vmem:[%s583 + $0x570] sm:$0xff]
        %v788 = vld [vmem:[%s583 + $0x578] sm:$0xff]
        %v789 = vld [vmem:[%s583 + $0x580] sm:$0xff]
        %v790 = vld [vmem:[%s583 + $0x588] sm:$0xff]
        %v791 = vld [vmem:[%s583 + $0x590] sm:$0xff]
        %v792 = vld [vmem:[%s583 + $0x598] sm:$0xff]
        %v793 = vld [vmem:[%s583 + $0x5a0] sm:$0xff]
        %v794 = vld [vmem:[%s583 + $0x5a8] sm:$0xff]
        %v795 = vld [vmem:[%s583 + $0x5b0] sm:$0xff]
        %v796 = vld [vmem:[%s583 + $0x5b8] sm:$0xff]
        %v797 = vld [vmem:[%s583 + $0x5c0] sm:$0xff]
        %v798 = vld [vmem:[%s583 + $0x5c8] sm:$0xff]
        %v799 = vld [vmem:[%s583 + $0x5d0] sm:$0xff]
        %v800 = vld [vmem:[%s583 + $0x5d8] sm:$0xff]
        %v801 = vld [vmem:[%s583 + $0x5e0] sm:$0xff]
        %v802 = vld [vmem:[%s583 + $0x5e8] sm:$0xff]
        %v803 = vld [vmem:[%s583 + $0x5f0] sm:$0xff]
        %v804 = vld [vmem:[%s583 + $0x5f8] sm:$0xff]
        %v805 = vld [vmem:[%s583 + $0x600] sm:$0xff]
        %v806 = vld [vmem:[%s583 + $0x608] sm:$0xff]
        %v807 = vld [vmem:[%s583 + $0x610] sm:$0xff]
        %v808 = vld [vmem:[%s583 + $0x618] sm:$0xff]
        %v809 = vld [vmem:[%s583 + $0x620] sm:$0xff]
        %v810 = vld [vmem:[%s583 + $0x628] sm:$0xff]
        %v811 = vld [vmem:[%s583 + $0x630] sm:$0xff]
        %v812 = vld [vmem:[%s583 + $0x638] sm:$0xff]
        %v813 = vld [vmem:[%s583 + $0x640] sm:$0xff]
        %v814 = vld [vmem:[%s583 + $0x648] sm:$0xff]
        %v815 = vld [vmem:[%s583 + $0x650] sm:$0xff]
        %v816 = vld [vmem:[%s583 + $0x658] sm:$0xff]
        %v817 = vld [vmem:[%s583 + $0x660] sm:$0xff]
        %v818 = vld [vmem:[%s583 + $0x668] sm:$0xff]
        %v819 = vld [vmem:[%s583 + $0x670] sm:$0xff]
        %v820 = vld [vmem:[%s583 + $0x678] sm:$0xff]
        %v821 = vld [vmem:[%s583 + $0x680] sm:$0xff]
        %v822 = vld [vmem:[%s583 + $0x688] sm:$0xff]
        %v823 = vld [vmem:[%s2] sm:$0xff]
        %825 = vset.pattern.permute.xlu0 0
        %826 = vperm.xlu0 %825, %v823
        %v827 = vpop.permute.xlu0 %826
        %v1039 = vunpack.c.l.b16 %v613
        %v1040 = vunpack.c.h.b16 %v613
        %v1041 = vunpack.c.l.b16 %v614
        %v1042 = vunpack.c.h.b16 %v614
        %v1043 = vunpack.c.l.b16 %v615
        %v1044 = vunpack.c.h.b16 %v615
        %v1045 = vunpack.c.l.b16 %v616
        %v1046 = vunpack.c.h.b16 %v616
        %v1047 = vunpack.c.l.b16 %v617
        %v1048 = vunpack.c.h.b16 %v617
        %v1049 = vunpack.c.l.b16 %v618
        %v1050 = vunpack.c.h.b16 %v618
        %v1051 = vunpack.c.l.b16 %v619
        %v1052 = vunpack.c.h.b16 %v619
        %v1053 = vunpack.c.l.b16 %v620
        %v1054 = vunpack.c.h.b16 %v620
        %v1055 = vunpack.c.l.b16 %v621
        %v1056 = vunpack.c.h.b16 %v621
        %v1057 = vunpack.c.l.b16 %v622
        %v1058 = vunpack.c.h.b16 %v622
        %v1059 = vunpack.c.l.b16 %v623
        %v1060 = vunpack.c.h.b16 %v623
        %v1061 = vunpack.c.l.b16 %v624
        %v1062 = vunpack.c.h.b16 %v624
        %v1063 = vunpack.c.l.b16 %v625
        %v1064 = vunpack.c.h.b16 %v625
        %v1065 = vunpack.c.l.b16 %v626
        %v1066 = vunpack.c.h.b16 %v626
        %v1067 = vunpack.c.l.b16 %v627
        %v1068 = vunpack.c.h.b16 %v627
        %v1069 = vunpack.c.l.b16 %v628
        %v1070 = vunpack.c.h.b16 %v628
        %v1071 = vunpack.c.l.b16 %v629
        %v1072 = vunpack.c.h.b16 %v629
        %v1073 = vunpack.c.l.b16 %v630
        %v1074 = vunpack.c.h.b16 %v630
        %v1075 = vunpack.c.l.b16 %v631
        %v1076 = vunpack.c.h.b16 %v631
        %v1077 = vunpack.c.l.b16 %v632
        %v1078 = vunpack.c.h.b16 %v632
        %v1079 = vunpack.c.l.b16 %v633
        %v1080 = vunpack.c.h.b16 %v633
        %v1081 = vunpack.c.l.b16 %v634
        %v1082 = vunpack.c.h.b16 %v634
        %v1083 = vunpack.c.l.b16 %v635
        %v1084 = vunpack.c.h.b16 %v635
        %v1085 = vunpack.c.l.b16 %v636
        %v1086 = vunpack.c.h.b16 %v636
        %v1087 = vunpack.c.l.b16 %v637
        %v1088 = vunpack.c.h.b16 %v637
        %v1089 = vunpack.c.l.b16 %v638
        %v1090 = vunpack.c.h.b16 %v638
        %v1091 = vunpack.c.l.b16 %v639
        %v1092 = vunpack.c.h.b16 %v639
        %v1093 = vunpack.c.l.b16 %v640
        %v1094 = vunpack.c.h.b16 %v640
        %v1095 = vunpack.c.l.b16 %v641
        %v1096 = vunpack.c.h.b16 %v641
        %v1097 = vunpack.c.l.b16 %v642
        %v1098 = vunpack.c.h.b16 %v642
        %v1099 = vunpack.c.l.b16 %v643
        %v1100 = vunpack.c.h.b16 %v643
        %v1101 = vunpack.c.l.b16 %v644
        %v1102 = vunpack.c.h.b16 %v644
        %v1103 = vunpack.c.l.b16 %v645
        %v1104 = vunpack.c.h.b16 %v645
        %v1105 = vunpack.c.l.b16 %v646
        %v1106 = vunpack.c.h.b16 %v646
        %v1107 = vunpack.c.l.b16 %v647
        %v1108 = vunpack.c.h.b16 %v647
        %v1109 = vunpack.c.l.b16 %v648
        %v1110 = vunpack.c.h.b16 %v648
        %v1111 = vunpack.c.l.b16 %v649
        %v1112 = vunpack.c.h.b16 %v649
        %v1113 = vunpack.c.l.b16 %v650
        %v1114 = vunpack.c.h.b16 %v650
        %v1115 = vunpack.c.l.b16 %v651
        %v1116 = vunpack.c.h.b16 %v651
        %v1117 = vunpack.c.l.b16 %v652
        %v1118 = vunpack.c.h.b16 %v652
        %v1119 = vunpack.c.l.b16 %v653
        %v1120 = vunpack.c.h.b16 %v653
        %v1121 = vunpack.c.l.b16 %v654
        %v1122 = vunpack.c.h.b16 %v654
        %v1123 = vunpack.c.l.b16 %v655
        %v1124 = vunpack.c.h.b16 %v655
        %v1125 = vunpack.c.l.b16 %v656
        %v1126 = vunpack.c.h.b16 %v656
        %v1127 = vunpack.c.l.b16 %v657
        %v1128 = vunpack.c.h.b16 %v657
        %v1129 = vunpack.c.l.b16 %v658
        %v1130 = vunpack.c.h.b16 %v658
        %v1131 = vunpack.c.l.b16 %v659
        %v1132 = vunpack.c.h.b16 %v659
        %v1133 = vunpack.c.l.b16 %v660
        %v1134 = vunpack.c.h.b16 %v660
        %v1135 = vunpack.c.l.b16 %v661
        %v1136 = vunpack.c.h.b16 %v661
        %v1137 = vunpack.c.l.b16 %v662
        %v1138 = vunpack.c.h.b16 %v662
        %v1139 = vunpack.c.l.b16 %v663
        %v1140 = vunpack.c.h.b16 %v663
        %v1141 = vunpack.c.l.b16 %v664
        %v1142 = vunpack.c.h.b16 %v664
        %v1143 = vunpack.c.l.b16 %v665
        %v1144 = vunpack.c.h.b16 %v665
        %v1145 = vunpack.c.l.b16 %v666
        %v1146 = vunpack.c.h.b16 %v666
        %v1147 = vunpack.c.l.b16 %v667
        %v1148 = vunpack.c.h.b16 %v667
        %v1149 = vunpack.c.l.b16 %v668
        %v1150 = vunpack.c.h.b16 %v668
        %v1151 = vunpack.c.l.b16 %v669
        %v1152 = vunpack.c.h.b16 %v669
        %v1153 = vunpack.c.l.b16 %v670
        %v1154 = vunpack.c.h.b16 %v670
        %v1155 = vunpack.c.l.b16 %v671
        %v1156 = vunpack.c.h.b16 %v671
        %v1157 = vunpack.c.l.b16 %v672
        %v1158 = vunpack.c.h.b16 %v672
        %v1159 = vunpack.c.l.b16 %v673
        %v1160 = vunpack.c.h.b16 %v673
        %v1161 = vunpack.c.l.b16 %v674
        %v1162 = vunpack.c.h.b16 %v674
        %v1163 = vunpack.c.l.b16 %v675
        %v1164 = vunpack.c.h.b16 %v675
        %v1165 = vunpack.c.l.b16 %v676
        %v1166 = vunpack.c.h.b16 %v676
        %v1167 = vunpack.c.l.b16 %v677
        %v1168 = vunpack.c.h.b16 %v677
        %v1169 = vunpack.c.l.b16 %v678
        %v1170 = vunpack.c.h.b16 %v678
        %v1171 = vunpack.c.l.b16 %v679
        %v1172 = vunpack.c.h.b16 %v679
        %v1173 = vunpack.c.l.b16 %v680
        %v1174 = vunpack.c.h.b16 %v680
        %v1175 = vunpack.c.l.b16 %v681
        %v1176 = vunpack.c.h.b16 %v681
        %v1177 = vunpack.c.l.b16 %v682
        %v1178 = vunpack.c.h.b16 %v682
        %v1179 = vunpack.c.l.b16 %v683
        %v1180 = vunpack.c.h.b16 %v683
        %v1181 = vunpack.c.l.b16 %v684
        %v1182 = vunpack.c.h.b16 %v684
        %v1183 = vunpack.c.l.b16 %v685
        %v1184 = vunpack.c.h.b16 %v685
        %v1185 = vunpack.c.l.b16 %v686
        %v1186 = vunpack.c.h.b16 %v686
        %v1187 = vunpack.c.l.b16 %v687
        %v1188 = vunpack.c.h.b16 %v687
        %v1189 = vunpack.c.l.b16 %v688
        %v1190 = vunpack.c.h.b16 %v688
        %v1191 = vunpack.c.l.b16 %v689
        %v1192 = vunpack.c.h.b16 %v689
        %v1193 = vunpack.c.l.b16 %v690
        %v1194 = vunpack.c.h.b16 %v690
        %v1195 = vunpack.c.l.b16 %v691
        %v1196 = vunpack.c.h.b16 %v691
        %v1197 = vunpack.c.l.b16 %v692
        %v1198 = vunpack.c.h.b16 %v692
        %v1199 = vunpack.c.l.b16 %v693
        %v1200 = vunpack.c.h.b16 %v693
        %v1201 = vunpack.c.l.b16 %v694
        %v1202 = vunpack.c.h.b16 %v694
        %v1203 = vunpack.c.l.b16 %v695
        %v1204 = vunpack.c.h.b16 %v695
        %v1205 = vunpack.c.l.b16 %v696
        %v1206 = vunpack.c.h.b16 %v696
        %v1207 = vunpack.c.l.b16 %v697
        %v1208 = vunpack.c.h.b16 %v697
        %v1209 = vunpack.c.l.b16 %v698
        %v1210 = vunpack.c.h.b16 %v698
        %v1211 = vunpack.c.l.b16 %v699
        %v1212 = vunpack.c.h.b16 %v699
        %v1213 = vunpack.c.l.b16 %v700
        %v1214 = vunpack.c.h.b16 %v700
        %v1215 = vunpack.c.l.b16 %v701
        %v1216 = vunpack.c.h.b16 %v701
        %v1217 = vunpack.c.l.b16 %v702
        %v1218 = vunpack.c.h.b16 %v702
        %v1219 = vunpack.c.l.b16 %v703
        %v1220 = vunpack.c.h.b16 %v703
        %v1221 = vunpack.c.l.b16 %v704
        %v1222 = vunpack.c.h.b16 %v704
        %v1223 = vunpack.c.l.b16 %v705
        %v1224 = vunpack.c.h.b16 %v705
        %v1225 = vunpack.c.l.b16 %v706
        %v1226 = vunpack.c.h.b16 %v706
        %v1227 = vunpack.c.l.b16 %v707
        %v1228 = vunpack.c.h.b16 %v707
        %v1229 = vunpack.c.l.b16 %v708
        %v1230 = vunpack.c.h.b16 %v708
        %v1231 = vunpack.c.l.b16 %v709
        %v1232 = vunpack.c.h.b16 %v709
        %v1233 = vunpack.c.l.b16 %v710
        %v1234 = vunpack.c.h.b16 %v710
        %v1235 = vunpack.c.l.b16 %v711
        %v1236 = vunpack.c.h.b16 %v711
        %v1237 = vunpack.c.l.b16 %v712
        %v1238 = vunpack.c.h.b16 %v712
        %v1239 = vunpack.c.l.b16 %v713
        %v1240 = vunpack.c.h.b16 %v713
        %v1241 = vunpack.c.l.b16 %v714
        %v1242 = vunpack.c.h.b16 %v714
        %v1243 = vunpack.c.l.b16 %v715
        %v1244 = vunpack.c.h.b16 %v715
        %v1245 = vunpack.c.l.b16 %v716
        %v1246 = vunpack.c.h.b16 %v716
        %v1247 = vunpack.c.l.b16 %v717
        %v1248 = vunpack.c.h.b16 %v717
        %v1249 = vunpack.c.l.b16 %v718
        %v1250 = vunpack.c.h.b16 %v718
        %v1251 = vunpack.c.l.b16 %v719
        %v1252 = vunpack.c.h.b16 %v719
        %v1253 = vunpack.c.l.b16 %v720
        %v1254 = vunpack.c.h.b16 %v720
        %v1255 = vunpack.c.l.b16 %v721
        %v1256 = vunpack.c.h.b16 %v721
        %v1257 = vunpack.c.l.b16 %v722
        %v1258 = vunpack.c.h.b16 %v722
        %v1259 = vunpack.c.l.b16 %v723
        %v1260 = vunpack.c.h.b16 %v723
        %v1261 = vunpack.c.l.b16 %v724
        %v1262 = vunpack.c.h.b16 %v724
        %v1263 = vunpack.c.l.b16 %v725
        %v1264 = vunpack.c.h.b16 %v725
        %v1265 = vunpack.c.l.b16 %v726
        %v1266 = vunpack.c.h.b16 %v726
        %v1267 = vunpack.c.l.b16 %v727
        %v1268 = vunpack.c.h.b16 %v727
        %v1269 = vunpack.c.l.b16 %v728
        %v1270 = vunpack.c.h.b16 %v728
        %v1271 = vunpack.c.l.b16 %v729
        %v1272 = vunpack.c.h.b16 %v729
        %v1273 = vunpack.c.l.b16 %v730
        %v1274 = vunpack.c.h.b16 %v730
        %v1275 = vunpack.c.l.b16 %v731
        %v1276 = vunpack.c.h.b16 %v731
        %v1277 = vunpack.c.l.b16 %v732
        %v1278 = vunpack.c.h.b16 %v732
        %v1279 = vunpack.c.l.b16 %v733
        %v1280 = vunpack.c.h.b16 %v733
        %v1281 = vunpack.c.l.b16 %v734
        %v1282 = vunpack.c.h.b16 %v734
        %v1283 = vunpack.c.l.b16 %v735
        %v1284 = vunpack.c.h.b16 %v735
        %v1285 = vunpack.c.l.b16 %v736
        %v1286 = vunpack.c.h.b16 %v736
        %v1287 = vunpack.c.l.b16 %v737
        %v1288 = vunpack.c.h.b16 %v737
        %v1289 = vunpack.c.l.b16 %v738
        %v1290 = vunpack.c.h.b16 %v738
        %v1291 = vunpack.c.l.b16 %v739
        %v1292 = vunpack.c.h.b16 %v739
        %v1293 = vunpack.c.l.b16 %v740
        %v1294 = vunpack.c.h.b16 %v740
        %v1295 = vunpack.c.l.b16 %v741
        %v1296 = vunpack.c.h.b16 %v741
        %v1297 = vunpack.c.l.b16 %v742
        %v1298 = vunpack.c.h.b16 %v742
        %v1299 = vunpack.c.l.b16 %v743
        %v1300 = vunpack.c.h.b16 %v743
        %v1301 = vunpack.c.l.b16 %v744
        %v1302 = vunpack.c.h.b16 %v744
        %v1303 = vunpack.c.l.b16 %v745
        %v1304 = vunpack.c.h.b16 %v745
        %v1305 = vunpack.c.l.b16 %v746
        %v1306 = vunpack.c.h.b16 %v746
        %v1307 = vunpack.c.l.b16 %v747
        %v1308 = vunpack.c.h.b16 %v747
        %v1309 = vunpack.c.l.b16 %v748
        %v1310 = vunpack.c.h.b16 %v748
        %v1311 = vunpack.c.l.b16 %v749
        %v1312 = vunpack.c.h.b16 %v749
        %v1313 = vunpack.c.l.b16 %v750
        %v1314 = vunpack.c.h.b16 %v750
        %v1315 = vunpack.c.l.b16 %v751
        %v1316 = vunpack.c.h.b16 %v751
        %v1317 = vunpack.c.l.b16 %v752
        %v1318 = vunpack.c.h.b16 %v752
        %v1319 = vunpack.c.l.b16 %v753
        %v1320 = vunpack.c.h.b16 %v753
        %v1321 = vunpack.c.l.b16 %v754
        %v1322 = vunpack.c.h.b16 %v754
        %v1323 = vunpack.c.l.b16 %v755
        %v1324 = vunpack.c.h.b16 %v755
        %v1325 = vunpack.c.l.b16 %v756
        %v1326 = vunpack.c.h.b16 %v756
        %v1327 = vunpack.c.l.b16 %v757
        %v1328 = vunpack.c.h.b16 %v757
        %v1329 = vunpack.c.l.b16 %v758
        %v1330 = vunpack.c.h.b16 %v758
        %v1331 = vunpack.c.l.b16 %v759
        %v1332 = vunpack.c.h.b16 %v759
        %v1333 = vunpack.c.l.b16 %v760
        %v1334 = vunpack.c.h.b16 %v760
        %v1335 = vunpack.c.l.b16 %v761
        %v1336 = vunpack.c.h.b16 %v761
        %v1337 = vunpack.c.l.b16 %v762
        %v1338 = vunpack.c.h.b16 %v762
        %v1339 = vunpack.c.l.b16 %v763
        %v1340 = vunpack.c.h.b16 %v763
        %v1341 = vunpack.c.l.b16 %v764
        %v1342 = vunpack.c.h.b16 %v764
        %v1343 = vunpack.c.l.b16 %v765
        %v1344 = vunpack.c.h.b16 %v765
        %v1345 = vunpack.c.l.b16 %v766
        %v1346 = vunpack.c.h.b16 %v766
        %v1347 = vunpack.c.l.b16 %v767
        %v1348 = vunpack.c.h.b16 %v767
        %v1349 = vunpack.c.l.b16 %v768
        %v1350 = vunpack.c.h.b16 %v768
        %v1351 = vunpack.c.l.b16 %v769
        %v1352 = vunpack.c.h.b16 %v769
        %v1353 = vunpack.c.l.b16 %v770
        %v1354 = vunpack.c.h.b16 %v770
        %v1355 = vunpack.c.l.b16 %v771
        %v1356 = vunpack.c.h.b16 %v771
        %v1357 = vunpack.c.l.b16 %v772
        %v1358 = vunpack.c.h.b16 %v772
        %v1359 = vunpack.c.l.b16 %v773
        %v1360 = vunpack.c.h.b16 %v773
        %v1361 = vunpack.c.l.b16 %v774
        %v1362 = vunpack.c.h.b16 %v774
        %v1363 = vunpack.c.l.b16 %v775
        %v1364 = vunpack.c.h.b16 %v775
        %v1365 = vunpack.c.l.b16 %v776
        %v1366 = vunpack.c.h.b16 %v776
        %v1367 = vunpack.c.l.b16 %v777
        %v1368 = vunpack.c.h.b16 %v777
        %v1369 = vunpack.c.l.b16 %v778
        %v1370 = vunpack.c.h.b16 %v778
        %v1371 = vunpack.c.l.b16 %v779
        %v1372 = vunpack.c.h.b16 %v779
        %v1373 = vunpack.c.l.b16 %v780
        %v1374 = vunpack.c.h.b16 %v780
        %v1375 = vunpack.c.l.b16 %v781
        %v1376 = vunpack.c.h.b16 %v781
        %v1377 = vunpack.c.l.b16 %v782
        %v1378 = vunpack.c.h.b16 %v782
        %v1379 = vunpack.c.l.b16 %v783
        %v1380 = vunpack.c.h.b16 %v783
        %v1381 = vunpack.c.l.b16 %v784
        %v1382 = vunpack.c.h.b16 %v784
        %v1383 = vunpack.c.l.b16 %v785
        %v1384 = vunpack.c.h.b16 %v785
        %v1385 = vunpack.c.l.b16 %v786
        %v1386 = vunpack.c.h.b16 %v786
        %v1387 = vunpack.c.l.b16 %v787
        %v1388 = vunpack.c.h.b16 %v787
        %v1389 = vunpack.c.l.b16 %v788
        %v1390 = vunpack.c.h.b16 %v788
        %v1391 = vunpack.c.l.b16 %v789
        %v1392 = vunpack.c.h.b16 %v789
        %v1393 = vunpack.c.l.b16 %v790
        %v1394 = vunpack.c.h.b16 %v790
        %v1395 = vunpack.c.l.b16 %v791
        %v1396 = vunpack.c.h.b16 %v791
        %v1397 = vunpack.c.l.b16 %v792
        %v1398 = vunpack.c.h.b16 %v792
        %v1399 = vunpack.c.l.b16 %v793
        %v1400 = vunpack.c.h.b16 %v793
        %v1401 = vunpack.c.l.b16 %v794
        %v1402 = vunpack.c.h.b16 %v794
        %v1403 = vunpack.c.l.b16 %v795
        %v1404 = vunpack.c.h.b16 %v795
        %v1405 = vunpack.c.l.b16 %v796
        %v1406 = vunpack.c.h.b16 %v796
        %v1407 = vunpack.c.l.b16 %v797
        %v1408 = vunpack.c.h.b16 %v797
        %v1409 = vunpack.c.l.b16 %v798
        %v1410 = vunpack.c.h.b16 %v798
        %v1411 = vunpack.c.l.b16 %v799
        %v1412 = vunpack.c.h.b16 %v799
        %v1413 = vunpack.c.l.b16 %v800
        %v1414 = vunpack.c.h.b16 %v800
        %v1415 = vunpack.c.l.b16 %v801
        %v1416 = vunpack.c.h.b16 %v801
        %v1417 = vunpack.c.l.b16 %v802
        %v1418 = vunpack.c.h.b16 %v802
        %v1419 = vunpack.c.l.b16 %v803
        %v1420 = vunpack.c.h.b16 %v803
        %v1421 = vunpack.c.l.b16 %v804
        %v1422 = vunpack.c.h.b16 %v804
        %v1423 = vunpack.c.l.b16 %v805
        %v1424 = vunpack.c.h.b16 %v805
        %v1425 = vunpack.c.l.b16 %v806
        %v1426 = vunpack.c.h.b16 %v806
        %v1427 = vunpack.c.l.b16 %v807
        %v1428 = vunpack.c.h.b16 %v807
        %v1429 = vunpack.c.l.b16 %v808
        %v1430 = vunpack.c.h.b16 %v808
        %v1431 = vunpack.c.l.b16 %v809
        %v1432 = vunpack.c.h.b16 %v809
        %v1433 = vunpack.c.l.b16 %v810
        %v1434 = vunpack.c.h.b16 %v810
        %v1435 = vunpack.c.l.b16 %v811
        %v1436 = vunpack.c.h.b16 %v811
        %v1437 = vunpack.c.l.b16 %v812
        %v1438 = vunpack.c.h.b16 %v812
        %v1439 = vunpack.c.l.b16 %v813
        %v1440 = vunpack.c.h.b16 %v813
        %v1441 = vunpack.c.l.b16 %v814
        %v1442 = vunpack.c.h.b16 %v814
        %v1443 = vunpack.c.l.b16 %v815
        %v1444 = vunpack.c.h.b16 %v815
        %v1445 = vunpack.c.l.b16 %v816
        %v1446 = vunpack.c.h.b16 %v816
        %v1447 = vunpack.c.l.b16 %v817
        %v1448 = vunpack.c.h.b16 %v817
        %v1449 = vunpack.c.l.b16 %v818
        %v1450 = vunpack.c.h.b16 %v818
        %v1451 = vunpack.c.l.b16 %v819
        %v1452 = vunpack.c.h.b16 %v819
        %v1453 = vunpack.c.l.b16 %v820
        %v1454 = vunpack.c.h.b16 %v820
        %v1455 = vunpack.c.l.b16 %v821
        %v1456 = vunpack.c.h.b16 %v821
        %v1457 = vunpack.c.l.b16 %v822
        %v1458 = vunpack.c.h.b16 %v822
        %v1459 = vpack.c.b16 %v1081, %v1039
        %v1460 = vpack.c.b16 %v1082, %v1040
        %v1461 = vpack.c.b16 %v1083, %v1041
        %v1462 = vpack.c.b16 %v1084, %v1042
        %v1463 = vpack.c.b16 %v1085, %v1043
        %v1464 = vpack.c.b16 %v1086, %v1044
        %v1465 = vpack.c.b16 %v1087, %v1045
        %v1466 = vpack.c.b16 %v1088, %v1046
        %v1467 = vpack.c.b16 %v1089, %v1047
        %v1468 = vpack.c.b16 %v1090, %v1048
        %v1469 = vpack.c.b16 %v1091, %v1049
        %v1470 = vpack.c.b16 %v1092, %v1050
        %v1471 = vpack.c.b16 %v1093, %v1051
        %v1472 = vpack.c.b16 %v1094, %v1052
        %v1473 = vpack.c.b16 %v1095, %v1053
        %v1474 = vpack.c.b16 %v1096, %v1054
        %v1475 = vpack.c.b16 %v1097, %v1055
        %v1476 = vpack.c.b16 %v1098, %v1056
        %v1477 = vpack.c.b16 %v1099, %v1057
        %v1478 = vpack.c.b16 %v1100, %v1058
        %v1479 = vpack.c.b16 %v1101, %v1059
        %v1480 = vpack.c.b16 %v1102, %v1060
        %v1481 = vpack.c.b16 %v1103, %v1061
        %v1482 = vpack.c.b16 %v1104, %v1062
        %v1483 = vpack.c.b16 %v1105, %v1063
        %v1484 = vpack.c.b16 %v1106, %v1064
        %v1485 = vpack.c.b16 %v1107, %v1065
        %v1486 = vpack.c.b16 %v1108, %v1066
        %v1487 = vpack.c.b16 %v1109, %v1067
        %v1488 = vpack.c.b16 %v1110, %v1068
        %v1489 = vpack.c.b16 %v1111, %v1069
        %v1490 = vpack.c.b16 %v1112, %v1070
        %v1491 = vpack.c.b16 %v1113, %v1071
        %v1492 = vpack.c.b16 %v1114, %v1072
        %v1493 = vpack.c.b16 %v1115, %v1073
        %v1494 = vpack.c.b16 %v1116, %v1074
        %v1495 = vpack.c.b16 %v1117, %v1075
        %v1496 = vpack.c.b16 %v1118, %v1076
        %v1497 = vpack.c.b16 %v1119, %v1077
        %v1498 = vpack.c.b16 %v1120, %v1078
        %v1499 = vpack.c.b16 %v1121, %v1079
        %v1500 = vpack.c.b16 %v1122, %v1080
        %v1501 = vpack.c.b16 %v1165, %v1123
        %v1502 = vpack.c.b16 %v1166, %v1124
        %v1503 = vpack.c.b16 %v1167, %v1125
        %v1504 = vpack.c.b16 %v1168, %v1126
        %v1505 = vpack.c.b16 %v1169, %v1127
        %v1506 = vpack.c.b16 %v1170, %v1128
        %v1507 = vpack.c.b16 %v1171, %v1129
        %v1508 = vpack.c.b16 %v1172, %v1130
        %v1509 = vpack.c.b16 %v1173, %v1131
        %v1510 = vpack.c.b16 %v1174, %v1132
        %v1511 = vpack.c.b16 %v1175, %v1133
        %v1512 = vpack.c.b16 %v1176, %v1134
        %v1513 = vpack.c.b16 %v1177, %v1135
        %v1514 = vpack.c.b16 %v1178, %v1136
        %v1515 = vpack.c.b16 %v1179, %v1137
        %v1516 = vpack.c.b16 %v1180, %v1138
        %v1517 = vpack.c.b16 %v1181, %v1139
        %v1518 = vpack.c.b16 %v1182, %v1140
        %v1519 = vpack.c.b16 %v1183, %v1141
        %v1520 = vpack.c.b16 %v1184, %v1142
        %v1521 = vpack.c.b16 %v1185, %v1143
        %v1522 = vpack.c.b16 %v1186, %v1144
        %v1523 = vpack.c.b16 %v1187, %v1145
        %v1524 = vpack.c.b16 %v1188, %v1146
        %v1525 = vpack.c.b16 %v1189, %v1147
        %v1526 = vpack.c.b16 %v1190, %v1148
        %v1527 = vpack.c.b16 %v1191, %v1149
        %v1528 = vpack.c.b16 %v1192, %v1150
        %v1529 = vpack.c.b16 %v1193, %v1151
        %v1530 = vpack.c.b16 %v1194, %v1152
        %v1531 = vpack.c.b16 %v1195, %v1153
        %v1532 = vpack.c.b16 %v1196, %v1154
        %v1533 = vpack.c.b16 %v1197, %v1155
        %v1534 = vpack.c.b16 %v1198, %v1156
        %v1535 = vpack.c.b16 %v1199, %v1157
        %v1536 = vpack.c.b16 %v1200, %v1158
        %v1537 = vpack.c.b16 %v1201, %v1159
        %v1538 = vpack.c.b16 %v1202, %v1160
        %v1539 = vpack.c.b16 %v1203, %v1161
        %v1540 = vpack.c.b16 %v1204, %v1162
        %v1541 = vpack.c.b16 %v1205, %v1163
        %v1542 = vpack.c.b16 %v1206, %v1164
        %v1543 = vpack.c.b16 %v1249, %v1207
        %v1544 = vpack.c.b16 %v1250, %v1208
        %v1545 = vpack.c.b16 %v1251, %v1209
        %v1546 = vpack.c.b16 %v1252, %v1210
        %v1547 = vpack.c.b16 %v1253, %v1211
        %v1548 = vpack.c.b16 %v1254, %v1212
        %v1549 = vpack.c.b16 %v1255, %v1213
        %v1550 = vpack.c.b16 %v1256, %v1214
        %v1551 = vpack.c.b16 %v1257, %v1215
        %v1552 = vpack.c.b16 %v1258, %v1216
        %v1553 = vpack.c.b16 %v1259, %v1217
        %v1554 = vpack.c.b16 %v1260, %v1218
        %v1555 = vpack.c.b16 %v1261, %v1219
        %v1556 = vpack.c.b16 %v1262, %v1220
        %v1557 = vpack.c.b16 %v1263, %v1221
        %v1558 = vpack.c.b16 %v1264, %v1222
        %v1559 = vpack.c.b16 %v1265, %v1223
        %v1560 = vpack.c.b16 %v1266, %v1224
        %v1561 = vpack.c.b16 %v1267, %v1225
        %v1562 = vpack.c.b16 %v1268, %v1226
        %v1563 = vpack.c.b16 %v1269, %v1227
        %v1564 = vpack.c.b16 %v1270, %v1228
        %v1565 = vpack.c.b16 %v1271, %v1229
        %v1566 = vpack.c.b16 %v1272, %v1230
        %v1567 = vpack.c.b16 %v1273, %v1231
        %v1568 = vpack.c.b16 %v1274, %v1232
        %v1569 = vpack.c.b16 %v1275, %v1233
        %v1570 = vpack.c.b16 %v1276, %v1234
        %v1571 = vpack.c.b16 %v1277, %v1235
        %v1572 = vpack.c.b16 %v1278, %v1236
        %v1573 = vpack.c.b16 %v1279, %v1237
        %v1574 = vpack.c.b16 %v1280, %v1238
        %v1575 = vpack.c.b16 %v1281, %v1239
        %v1576 = vpack.c.b16 %v1282, %v1240
        %v1577 = vpack.c.b16 %v1283, %v1241
        %v1578 = vpack.c.b16 %v1284, %v1242
        %v1579 = vpack.c.b16 %v1285, %v1243
        %v1580 = vpack.c.b16 %v1286, %v1244
        %v1581 = vpack.c.b16 %v1287, %v1245
        %v1582 = vpack.c.b16 %v1288, %v1246
        %v1583 = vpack.c.b16 %v1289, %v1247
        %v1584 = vpack.c.b16 %v1290, %v1248
        %v1585 = vpack.c.b16 %v1333, %v1291
        %v1586 = vpack.c.b16 %v1334, %v1292
        %v1587 = vpack.c.b16 %v1335, %v1293
        %v1588 = vpack.c.b16 %v1336, %v1294
        %v1589 = vpack.c.b16 %v1337, %v1295
        %v1590 = vpack.c.b16 %v1338, %v1296
        %v1591 = vpack.c.b16 %v1339, %v1297
        %v1592 = vpack.c.b16 %v1340, %v1298
        %v1593 = vpack.c.b16 %v1341, %v1299
        %v1594 = vpack.c.b16 %v1342, %v1300
        %v1595 = vpack.c.b16 %v1343, %v1301
        %v1596 = vpack.c.b16 %v1344, %v1302
        %v1597 = vpack.c.b16 %v1345, %v1303
        %v1598 = vpack.c.b16 %v1346, %v1304
        %v1599 = vpack.c.b16 %v1347, %v1305
        %v1600 = vpack.c.b16 %v1348, %v1306
        %v1601 = vpack.c.b16 %v1349, %v1307
        %v1602 = vpack.c.b16 %v1350, %v1308
        %v1603 = vpack.c.b16 %v1351, %v1309
        %v1604 = vpack.c.b16 %v1352, %v1310
        %v1605 = vpack.c.b16 %v1353, %v1311
        %v1606 = vpack.c.b16 %v1354, %v1312
        %v1607 = vpack.c.b16 %v1355, %v1313
        %v1608 = vpack.c.b16 %v1356, %v1314
        %v1609 = vpack.c.b16 %v1357, %v1315
        %v1610 = vpack.c.b16 %v1358, %v1316
        %v1611 = vpack.c.b16 %v1359, %v1317
        %v1612 = vpack.c.b16 %v1360, %v1318
        %v1613 = vpack.c.b16 %v1361, %v1319
        %v1614 = vpack.c.b16 %v1362, %v1320
        %v1615 = vpack.c.b16 %v1363, %v1321
        %v1616 = vpack.c.b16 %v1364, %v1322
        %v1617 = vpack.c.b16 %v1365, %v1323
        %v1618 = vpack.c.b16 %v1366, %v1324
        %v1619 = vpack.c.b16 %v1367, %v1325
        %v1620 = vpack.c.b16 %v1368, %v1326
        %v1621 = vpack.c.b16 %v1369, %v1327
        %v1622 = vpack.c.b16 %v1370, %v1328
        %v1623 = vpack.c.b16 %v1371, %v1329
        %v1624 = vpack.c.b16 %v1372, %v1330
        %v1625 = vpack.c.b16 %v1373, %v1331
        %v1626 = vpack.c.b16 %v1374, %v1332
        %v1627 = vpack.c.b16 %v1417, %v1375
        %v1628 = vpack.c.b16 %v1418, %v1376
        %v1629 = vpack.c.b16 %v1419, %v1377
        %v1630 = vpack.c.b16 %v1420, %v1378
        %v1631 = vpack.c.b16 %v1421, %v1379
        %v1632 = vpack.c.b16 %v1422, %v1380
        %v1633 = vpack.c.b16 %v1423, %v1381
        %v1634 = vpack.c.b16 %v1424, %v1382
        %v1635 = vpack.c.b16 %v1425, %v1383
        %v1636 = vpack.c.b16 %v1426, %v1384
        %v1637 = vpack.c.b16 %v1427, %v1385
        %v1638 = vpack.c.b16 %v1428, %v1386
        %v1639 = vpack.c.b16 %v1429, %v1387
        %v1640 = vpack.c.b16 %v1430, %v1388
        %v1641 = vpack.c.b16 %v1431, %v1389
        %v1642 = vpack.c.b16 %v1432, %v1390
        %v1643 = vpack.c.b16 %v1433, %v1391
        %v1644 = vpack.c.b16 %v1434, %v1392
        %v1645 = vpack.c.b16 %v1435, %v1393
        %v1646 = vpack.c.b16 %v1436, %v1394
        %v1647 = vpack.c.b16 %v1437, %v1395
        %v1648 = vpack.c.b16 %v1438, %v1396
        %v1649 = vpack.c.b16 %v1439, %v1397
        %v1650 = vpack.c.b16 %v1440, %v1398
        %v1651 = vpack.c.b16 %v1441, %v1399
        %v1652 = vpack.c.b16 %v1442, %v1400
        %v1653 = vpack.c.b16 %v1443, %v1401
        %v1654 = vpack.c.b16 %v1444, %v1402
        %v1655 = vpack.c.b16 %v1445, %v1403
        %v1656 = vpack.c.b16 %v1446, %v1404
        %v1657 = vpack.c.b16 %v1447, %v1405
        %v1658 = vpack.c.b16 %v1448, %v1406
        %v1659 = vpack.c.b16 %v1449, %v1407
        %v1660 = vpack.c.b16 %v1450, %v1408
        %v1661 = vpack.c.b16 %v1451, %v1409
        %v1662 = vpack.c.b16 %v1452, %v1410
        %v1663 = vpack.c.b16 %v1453, %v1411
        %v1664 = vpack.c.b16 %v1454, %v1412
        %v1665 = vpack.c.b16 %v1455, %v1413
        %v1666 = vpack.c.b16 %v1456, %v1414
        %v1667 = vpack.c.b16 %v1457, %v1415
        %v1668 = vpack.c.b16 %v1458, %v1416
        %vm1879 = vcmask 654336
        %v1881 = vsel %vm1879, %v612, 0
        %1883 = vmatprep.subr.bf16.mxu0 0
        %1884 = vmatpush1.bf16.msra.mxu0 0
        %1885 = vmatprep.subr.bf16.mxu0 0
        %1886 = vmatpush1.bf16.msra.mxu0 0
        %1887 = vmatprep.subr.bf16.mxu0 0
        %1888 = vmatpush1.bf16.msra.mxu0 0
        %1889 = vmatprep.subr.bf16.mxu0 %v1628
        %1890 = vmatpush1.bf16.msra.mxu0 %v1627
        %1891 = vmatprep.subr.bf16.mxu0 %v1586
        %1892 = vmatpush1.bf16.msra.mxu0 %v1585
        %1893 = vmatprep.subr.bf16.mxu0 %v1544
        %1894 = vmatpush1.bf16.msra.mxu0 %v1543
        %1895 = vmatprep.subr.bf16.mxu0 %v1502
        %1896 = vmatpush1.bf16.msra.mxu0 %v1501
        %1897 = vmatprep.subr.bf16.mxu0 %v1460
        %1898 = vmatpush1.bf16.msra.mxu0 %v1459
        %1899 = vmatprep.subr.bf16.mxu0 0
        %1900 = vmatpush2.bf16.msra.mxu0 0
        %1901 = vmatprep.subr.bf16.mxu0 0
        %1902 = vmatpush2.bf16.msra.mxu0 0
        %1903 = vmatprep.subr.bf16.mxu0 0
        %1904 = vmatpush2.bf16.msra.mxu0 0
        %1905 = vmatprep.subr.bf16.mxu0 0
        %1906 = vmatpush2.bf16.msra.mxu0 0
        %1907 = vmatprep.subr.bf16.mxu0 0
        %1908 = vmatpush2.bf16.msra.mxu0 0
        %1909 = vmatprep.subr.bf16.mxu0 0
        %1910 = vmatpush2.bf16.msra.mxu0 0
        %1911 = vmatprep.subr.bf16.mxu0 0
        %1912 = vmatpush2.bf16.msra.mxu0 0
        %1913 = vmatprep.subr.bf16.mxu0 0
        %1914 = vmatpush2.bf16.msra.mxu0 0
        %1915 = vmatprep.mubr.bf16.mxu0 0
        %1916 = vmatmul.mubr.bf16.gmra.mxu0 %v1881
        %v1917 = vpop.f32.mrf.mxu0
        %v1918 = vadd.f32 %v827, %v1917
        %v1919 = vpop.f32.mrf.mxu0
        %v1920 = vadd.f32 %v827, %v1919
        %v1921 = vpop.f32.mrf.mxu0
        %v1922 = vpop.f32.mrf.mxu0
        %1923 = vdwg.mxu0
        %1924 = vmatprep.subr.bf16.mxu0 0
        %1925 = vmatpush1.bf16.msra.mxu0 0
        %1926 = vmatprep.subr.bf16.mxu0 0
        %1927 = vmatpush1.bf16.msra.mxu0 0
        %1928 = vmatprep.subr.bf16.mxu0 0
        %1929 = vmatpush1.bf16.msra.mxu0 0
        %1930 = vmatprep.subr.bf16.mxu0 %v1630
        %1931 = vmatpush1.bf16.msra.mxu0 %v1629
        %1932 = vmatprep.subr.bf16.mxu0 %v1588
        %1933 = vmatpush1.bf16.msra.mxu0 %v1587
        %1934 = vmatprep.subr.bf16.mxu0 %v1546
        %1935 = vmatpush1.bf16.msra.mxu0 %v1545
        %1936 = vmatprep.subr.bf16.mxu0 %v1504
        %1937 = vmatpush1.bf16.msra.mxu0 %v1503
        %1938 = vmatprep.subr.bf16.mxu0 %v1462
        %1939 = vmatpush1.bf16.msra.mxu0 %v1461
        %1940 = vmatprep.subr.bf16.mxu0 0
        %1941 = vmatpush2.bf16.msra.mxu0 0
        %1942 = vmatprep.subr.bf16.mxu0 0
        %1943 = vmatpush2.bf16.msra.mxu0 0
        %1944 = vmatprep.subr.bf16.mxu0 0
        %1945 = vmatpush2.bf16.msra.mxu0 0
        %1946 = vmatprep.subr.bf16.mxu0 0
        %1947 = vmatpush2.bf16.msra.mxu0 0
        %1948 = vmatprep.subr.bf16.mxu0 0
        %1949 = vmatpush2.bf16.msra.mxu0 0
        %1950 = vmatprep.subr.bf16.mxu0 0
        %1951 = vmatpush2.bf16.msra.mxu0 0
        %1952 = vmatprep.subr.bf16.mxu0 0
        %1953 = vmatpush2.bf16.msra.mxu0 0
        %1954 = vmatprep.subr.bf16.mxu0 0
        %1955 = vmatpush2.bf16.msra.mxu0 0
        %1956 = vmatprep.mubr.bf16.mxu0 0
        %1957 = vmatmul.mubr.bf16.gmra.mxu0 %v1881
        %v1958 = vpop.f32.mrf.mxu0
        %v1959 = vadd.f32 %v827, %v1958
        %v1960 = vpop.f32.mrf.mxu0
        %v1961 = vadd.f32 %v827, %v1960
        %v1962 = vpop.f32.mrf.mxu0
        %v1963 = vpop.f32.mrf.mxu0
        %1964 = vdwg.mxu0
        %1965 = vmatprep.subr.bf16.mxu0 0
        %1966 = vmatpush1.bf16.msra.mxu0 0
        %1967 = vmatprep.subr.bf16.mxu0 0
        %1968 = vmatpush1.bf16.msra.mxu0 0
        %1969 = vmatprep.subr.bf16.mxu0 0
        %1970 = vmatpush1.bf16.msra.mxu0 0
        %1971 = vmatprep.subr.bf16.mxu0 %v1632
        %1972 = vmatpush1.bf16.msra.mxu0 %v1631
        %1973 = vmatprep.subr.bf16.mxu0 %v1590
        %1974 = vmatpush1.bf16.msra.mxu0 %v1589
        %1975 = vmatprep.subr.bf16.mxu0 %v1548
        %1976 = vmatpush1.bf16.msra.mxu0 %v1547
        %1977 = vmatprep.subr.bf16.mxu0 %v1506
        %1978 = vmatpush1.bf16.msra.mxu0 %v1505
        %1979 = vmatprep.subr.bf16.mxu0 %v1464
        %1980 = vmatpush1.bf16.msra.mxu0 %v1463
        %1981 = vmatprep.subr.bf16.mxu0 0
        %1982 = vmatpush2.bf16.msra.mxu0 0
        %1983 = vmatprep.subr.bf16.mxu0 0
        %1984 = vmatpush2.bf16.msra.mxu0 0
        %1985 = vmatprep.subr.bf16.mxu0 0
        %1986 = vmatpush2.bf16.msra.mxu0 0
        %1987 = vmatprep.subr.bf16.mxu0 0
        %1988 = vmatpush2.bf16.msra.mxu0 0
        %1989 = vmatprep.subr.bf16.mxu0 0
        %1990 = vmatpush2.bf16.msra.mxu0 0
        %1991 = vmatprep.subr.bf16.mxu0 0
        %1992 = vmatpush2.bf16.msra.mxu0 0
        %1993 = vmatprep.subr.bf16.mxu0 0
        %1994 = vmatpush2.bf16.msra.mxu0 0
        %1995 = vmatprep.subr.bf16.mxu0 0
        %1996 = vmatpush2.bf16.msra.mxu0 0
        %1997 = vmatprep.mubr.bf16.mxu0 0
        %1998 = vmatmul.mubr.bf16.gmra.mxu0 %v1881
        %v1999 = vpop.f32.mrf.mxu0
        %v2000 = vadd.f32 %v827, %v1999
        %v2001 = vpop.f32.mrf.mxu0
        %v2002 = vadd.f32 %v827, %v2001
        %v2003 = vpop.f32.mrf.mxu0
        %v2004 = vpop.f32.mrf.mxu0
        %2005 = vdwg.mxu0
        %2006 = vmatprep.subr.bf16.mxu0 0
        %2007 = vmatpush1.bf16.msra.mxu0 0
        %2008 = vmatprep.subr.bf16.mxu0 0
        %2009 = vmatpush1.bf16.msra.mxu0 0
        %2010 = vmatprep.subr.bf16.mxu0 0
        %2011 = vmatpush1.bf16.msra.mxu0 0
        %2012 = vmatprep.subr.bf16.mxu0 %v1634
        %2013 = vmatpush1.bf16.msra.mxu0 %v1633
        %2014 = vmatprep.subr.bf16.mxu0 %v1592
        %2015 = vmatpush1.bf16.msra.mxu0 %v1591
        %2016 = vmatprep.subr.bf16.mxu0 %v1550
        %2017 = vmatpush1.bf16.msra.mxu0 %v1549
        %2018 = vmatprep.subr.bf16.mxu0 %v1508
        %2019 = vmatpush1.bf16.msra.mxu0 %v1507
        %2020 = vmatprep.subr.bf16.mxu0 %v1466
        %2021 = vmatpush1.bf16.msra.mxu0 %v1465
        %2022 = vmatprep.subr.bf16.mxu0 0
        %2023 = vmatpush2.bf16.msra.mxu0 0
        %2024 = vmatprep.subr.bf16.mxu0 0
        %2025 = vmatpush2.bf16.msra.mxu0 0
        %2026 = vmatprep.subr.bf16.mxu0 0
        %2027 = vmatpush2.bf16.msra.mxu0 0
        %2028 = vmatprep.subr.bf16.mxu0 0
        %2029 = vmatpush2.bf16.msra.mxu0 0
        %2030 = vmatprep.subr.bf16.mxu0 0
        %2031 = vmatpush2.bf16.msra.mxu0 0
        %2032 = vmatprep.subr.bf16.mxu0 0
        %2033 = vmatpush2.bf16.msra.mxu0 0
        %2034 = vmatprep.subr.bf16.mxu0 0
        %2035 = vmatpush2.bf16.msra.mxu0 0
        %2036 = vmatprep.subr.bf16.mxu0 0
        %2037 = vmatpush2.bf16.msra.mxu0 0
        %2038 = vmatprep.mubr.bf16.mxu0 0
        %2039 = vmatmul.mubr.bf16.gmra.mxu0 %v1881
        %v2040 = vpop.f32.mrf.mxu0
        %v2041 = vadd.f32 %v827, %v2040
        %v2042 = vpop.f32.mrf.mxu0
        %v2043 = vadd.f32 %v827, %v2042
        %v2044 = vpop.f32.mrf.mxu0
        %v2045 = vpop.f32.mrf.mxu0
        %2046 = vdwg.mxu0
        %2047 = vmatprep.subr.bf16.mxu0 0
        %2048 = vmatpush1.bf16.msra.mxu0 0
        %2049 = vmatprep.subr.bf16.mxu0 0
        %2050 = vmatpush1.bf16.msra.mxu0 0
        %2051 = vmatprep.subr.bf16.mxu0 0
        %2052 = vmatpush1.bf16.msra.mxu0 0
        %2053 = vmatprep.subr.bf16.mxu0 %v1636
        %2054 = vmatpush1.bf16.msra.mxu0 %v1635
        %2055 = vmatprep.subr.bf16.mxu0 %v1594
        %2056 = vmatpush1.bf16.msra.mxu0 %v1593
        %2057 = vmatprep.subr.bf16.mxu0 %v1552
        %2058 = vmatpush1.bf16.msra.mxu0 %v1551
        %2059 = vmatprep.subr.bf16.mxu0 %v1510
        %2060 = vmatpush1.bf16.msra.mxu0 %v1509
        %2061 = vmatprep.subr.bf16.mxu0 %v1468
        %2062 = vmatpush1.bf16.msra.mxu0 %v1467
        %2063 = vmatprep.subr.bf16.mxu0 0
        %2064 = vmatpush2.bf16.msra.mxu0 0
        %2065 = vmatprep.subr.bf16.mxu0 0
        %2066 = vmatpush2.bf16.msra.mxu0 0
        %2067 = vmatprep.subr.bf16.mxu0 0
        %2068 = vmatpush2.bf16.msra.mxu0 0
        %2069 = vmatprep.subr.bf16.mxu0 0
        %2070 = vmatpush2.bf16.msra.mxu0 0
        %2071 = vmatprep.subr.bf16.mxu0 0
        %2072 = vmatpush2.bf16.msra.mxu0 0
        %2073 = vmatprep.subr.bf16.mxu0 0
        %2074 = vmatpush2.bf16.msra.mxu0 0
        %2075 = vmatprep.subr.bf16.mxu0 0
        %2076 = vmatpush2.bf16.msra.mxu0 0
        %2077 = vmatprep.subr.bf16.mxu0 0
        %2078 = vmatpush2.bf16.msra.mxu0 0
        %2079 = vmatprep.mubr.bf16.mxu0 0
        %2080 = vmatmul.mubr.bf16.gmra.mxu0 %v1881
        %v2081 = vpop.f32.mrf.mxu0
        %v2082 = vadd.f32 %v827, %v2081
        %v2083 = vpop.f32.mrf.mxu0
        %v2084 = vadd.f32 %v827, %v2083
        %v2085 = vpop.f32.mrf.mxu0
        %v2086 = vpop.f32.mrf.mxu0
        %2087 = vdwg.mxu0
        %2088 = vmatprep.subr.bf16.mxu0 0
        %2089 = vmatpush1.bf16.msra.mxu0 0
        %2090 = vmatprep.subr.bf16.mxu0 0
        %2091 = vmatpush1.bf16.msra.mxu0 0
        %2092 = vmatprep.subr.bf16.mxu0 0
        %2093 = vmatpush1.bf16.msra.mxu0 0
        %2094 = vmatprep.subr.bf16.mxu0 %v1638
        %2095 = vmatpush1.bf16.msra.mxu0 %v1637
        %2096 = vmatprep.subr.bf16.mxu0 %v1596
        %2097 = vmatpush1.bf16.msra.mxu0 %v1595
        %2098 = vmatprep.subr.bf16.mxu0 %v1554
        %2099 = vmatpush1.bf16.msra.mxu0 %v1553
        %2100 = vmatprep.subr.bf16.mxu0 %v1512
        %2101 = vmatpush1.bf16.msra.mxu0 %v1511
        %2102 = vmatprep.subr.bf16.mxu0 %v1470
        %2103 = vmatpush1.bf16.msra.mxu0 %v1469
        %2104 = vmatprep.subr.bf16.mxu0 0
        %2105 = vmatpush2.bf16.msra.mxu0 0
        %2106 = vmatprep.subr.bf16.mxu0 0
        %2107 = vmatpush2.bf16.msra.mxu0 0
        %2108 = vmatprep.subr.bf16.mxu0 0
        %2109 = vmatpush2.bf16.msra.mxu0 0
        %2110 = vmatprep.subr.bf16.mxu0 0
        %2111 = vmatpush2.bf16.msra.mxu0 0
        %2112 = vmatprep.subr.bf16.mxu0 0
        %2113 = vmatpush2.bf16.msra.mxu0 0
        %2114 = vmatprep.subr.bf16.mxu0 0
        %2115 = vmatpush2.bf16.msra.mxu0 0
        %2116 = vmatprep.subr.bf16.mxu0 0
        %2117 = vmatpush2.bf16.msra.mxu0 0
        %2118 = vmatprep.subr.bf16.mxu0 0
        %2119 = vmatpush2.bf16.msra.mxu0 0
        %2120 = vmatprep.mubr.bf16.mxu0 0
        %2121 = vmatmul.mubr.bf16.gmra.mxu0 %v1881
        %v2122 = vpop.f32.mrf.mxu0
        %v2123 = vadd.f32 %v827, %v2122
        %v2124 = vpop.f32.mrf.mxu0
        %v2125 = vadd.f32 %v827, %v2124
        %v2126 = vpop.f32.mrf.mxu0
        %v2127 = vpop.f32.mrf.mxu0
        %2128 = vdwg.mxu0
        %2129 = vmatprep.subr.bf16.mxu0 0
        %2130 = vmatpush1.bf16.msra.mxu0 0
        %2131 = vmatprep.subr.bf16.mxu0 0
        %2132 = vmatpush1.bf16.msra.mxu0 0
        %2133 = vmatprep.subr.bf16.mxu0 0
        %2134 = vmatpush1.bf16.msra.mxu0 0
        %2135 = vmatprep.subr.bf16.mxu0 %v1640
        %2136 = vmatpush1.bf16.msra.mxu0 %v1639
        %2137 = vmatprep.subr.bf16.mxu0 %v1598
        %2138 = vmatpush1.bf16.msra.mxu0 %v1597
        %2139 = vmatprep.subr.bf16.mxu0 %v1556
        %2140 = vmatpush1.bf16.msra.mxu0 %v1555
        %2141 = vmatprep.subr.bf16.mxu0 %v1514
        %2142 = vmatpush1.bf16.msra.mxu0 %v1513
        %2143 = vmatprep.subr.bf16.mxu0 %v1472
        %2144 = vmatpush1.bf16.msra.mxu0 %v1471
        %2145 = vmatprep.subr.bf16.mxu0 0
        %2146 = vmatpush2.bf16.msra.mxu0 0
        %2147 = vmatprep.subr.bf16.mxu0 0
        %2148 = vmatpush2.bf16.msra.mxu0 0
        %2149 = vmatprep.subr.bf16.mxu0 0
        %2150 = vmatpush2.bf16.msra.mxu0 0
        %2151 = vmatprep.subr.bf16.mxu0 0
        %2152 = vmatpush2.bf16.msra.mxu0 0
        %2153 = vmatprep.subr.bf16.mxu0 0
        %2154 = vmatpush2.bf16.msra.mxu0 0
        %2155 = vmatprep.subr.bf16.mxu0 0
        %2156 = vmatpush2.bf16.msra.mxu0 0
        %2157 = vmatprep.subr.bf16.mxu0 0
        %2158 = vmatpush2.bf16.msra.mxu0 0
        %2159 = vmatprep.subr.bf16.mxu0 0
        %2160 = vmatpush2.bf16.msra.mxu0 0
        %2161 = vmatprep.mubr.bf16.mxu0 0
        %2162 = vmatmul.mubr.bf16.gmra.mxu0 %v1881
        %v2163 = vpop.f32.mrf.mxu0
        %v2164 = vadd.f32 %v827, %v2163
        %v2165 = vpop.f32.mrf.mxu0
        %v2166 = vadd.f32 %v827, %v2165
        %v2167 = vpop.f32.mrf.mxu0
        %v2168 = vpop.f32.mrf.mxu0
        %2169 = vdwg.mxu0
        %2170 = vmatprep.subr.bf16.mxu0 0
        %2171 = vmatpush1.bf16.msra.mxu0 0
        %2172 = vmatprep.subr.bf16.mxu0 0
        %2173 = vmatpush1.bf16.msra.mxu0 0
        %2174 = vmatprep.subr.bf16.mxu0 0
        %2175 = vmatpush1.bf16.msra.mxu0 0
        %2176 = vmatprep.subr.bf16.mxu0 %v1642
        %2177 = vmatpush1.bf16.msra.mxu0 %v1641
        %2178 = vmatprep.subr.bf16.mxu0 %v1600
        %2179 = vmatpush1.bf16.msra.mxu0 %v1599
        %2180 = vmatprep.subr.bf16.mxu0 %v1558
        %2181 = vmatpush1.bf16.msra.mxu0 %v1557
        %2182 = vmatprep.subr.bf16.mxu0 %v1516
        %2183 = vmatpush1.bf16.msra.mxu0 %v1515
        %2184 = vmatprep.subr.bf16.mxu0 %v1474
        %2185 = vmatpush1.bf16.msra.mxu0 %v1473
        %2186 = vmatprep.subr.bf16.mxu0 0
        %2187 = vmatpush2.bf16.msra.mxu0 0
        %2188 = vmatprep.subr.bf16.mxu0 0
        %2189 = vmatpush2.bf16.msra.mxu0 0
        %2190 = vmatprep.subr.bf16.mxu0 0
        %2191 = vmatpush2.bf16.msra.mxu0 0
        %2192 = vmatprep.subr.bf16.mxu0 0
        %2193 = vmatpush2.bf16.msra.mxu0 0
        %2194 = vmatprep.subr.bf16.mxu0 0
        %2195 = vmatpush2.bf16.msra.mxu0 0
        %2196 = vmatprep.subr.bf16.mxu0 0
        %2197 = vmatpush2.bf16.msra.mxu0 0
        %2198 = vmatprep.subr.bf16.mxu0 0
        %2199 = vmatpush2.bf16.msra.mxu0 0
        %2200 = vmatprep.subr.bf16.mxu0 0
        %2201 = vmatpush2.bf16.msra.mxu0 0
        %2202 = vmatprep.mubr.bf16.mxu0 0
        %2203 = vmatmul.mubr.bf16.gmra.mxu0 %v1881
        %v2204 = vpop.f32.mrf.mxu0
        %v2205 = vadd.f32 %v827, %v2204
        %v2206 = vpop.f32.mrf.mxu0
        %v2207 = vadd.f32 %v827, %v2206
        %v2208 = vpop.f32.mrf.mxu0
        %v2209 = vpop.f32.mrf.mxu0
        %2210 = vdwg.mxu0
        %2211 = vmatprep.subr.bf16.mxu0 0
        %2212 = vmatpush1.bf16.msra.mxu0 0
        %2213 = vmatprep.subr.bf16.mxu0 0
        %2214 = vmatpush1.bf16.msra.mxu0 0
        %2215 = vmatprep.subr.bf16.mxu0 0
        %2216 = vmatpush1.bf16.msra.mxu0 0
        %2217 = vmatprep.subr.bf16.mxu0 %v1644
        %2218 = vmatpush1.bf16.msra.mxu0 %v1643
        %2219 = vmatprep.subr.bf16.mxu0 %v1602
        %2220 = vmatpush1.bf16.msra.mxu0 %v1601
        %2221 = vmatprep.subr.bf16.mxu0 %v1560
        %2222 = vmatpush1.bf16.msra.mxu0 %v1559
        %2223 = vmatprep.subr.bf16.mxu0 %v1518
        %2224 = vmatpush1.bf16.msra.mxu0 %v1517
        %2225 = vmatprep.subr.bf16.mxu0 %v1476
        %2226 = vmatpush1.bf16.msra.mxu0 %v1475
        %2227 = vmatprep.subr.bf16.mxu0 0
        %2228 = vmatpush2.bf16.msra.mxu0 0
        %2229 = vmatprep.subr.bf16.mxu0 0
        %2230 = vmatpush2.bf16.msra.mxu0 0
        %2231 = vmatprep.subr.bf16.mxu0 0
        %2232 = vmatpush2.bf16.msra.mxu0 0
        %2233 = vmatprep.subr.bf16.mxu0 0
        %2234 = vmatpush2.bf16.msra.mxu0 0
        %2235 = vmatprep.subr.bf16.mxu0 0
        %2236 = vmatpush2.bf16.msra.mxu0 0
        %2237 = vmatprep.subr.bf16.mxu0 0
        %2238 = vmatpush2.bf16.msra.mxu0 0
        %2239 = vmatprep.subr.bf16.mxu0 0
        %2240 = vmatpush2.bf16.msra.mxu0 0
        %2241 = vmatprep.subr.bf16.mxu0 0
        %2242 = vmatpush2.bf16.msra.mxu0 0
        %2243 = vmatprep.mubr.bf16.mxu0 0
        %2244 = vmatmul.mubr.bf16.gmra.mxu0 %v1881
        %v2245 = vpop.f32.mrf.mxu0
        %v2246 = vadd.f32 %v827, %v2245
        %v2247 = vpop.f32.mrf.mxu0
        %v2248 = vadd.f32 %v827, %v2247
        %v2249 = vpop.f32.mrf.mxu0
        %v2250 = vpop.f32.mrf.mxu0
        %2251 = vdwg.mxu0
        %2252 = vmatprep.subr.bf16.mxu0 0
        %2253 = vmatpush1.bf16.msra.mxu0 0
        %2254 = vmatprep.subr.bf16.mxu0 0
        %2255 = vmatpush1.bf16.msra.mxu0 0
        %2256 = vmatprep.subr.bf16.mxu0 0
        %2257 = vmatpush1.bf16.msra.mxu0 0
        %2258 = vmatprep.subr.bf16.mxu0 %v1646
        %2259 = vmatpush1.bf16.msra.mxu0 %v1645
        %2260 = vmatprep.subr.bf16.mxu0 %v1604
        %2261 = vmatpush1.bf16.msra.mxu0 %v1603
        %2262 = vmatprep.subr.bf16.mxu0 %v1562
        %2263 = vmatpush1.bf16.msra.mxu0 %v1561
        %2264 = vmatprep.subr.bf16.mxu0 %v1520
        %2265 = vmatpush1.bf16.msra.mxu0 %v1519
        %2266 = vmatprep.subr.bf16.mxu0 %v1478
        %2267 = vmatpush1.bf16.msra.mxu0 %v1477
        %2268 = vmatprep.subr.bf16.mxu0 0
        %2269 = vmatpush2.bf16.msra.mxu0 0
        %2270 = vmatprep.subr.bf16.mxu0 0
        %2271 = vmatpush2.bf16.msra.mxu0 0
        %2272 = vmatprep.subr.bf16.mxu0 0
        %2273 = vmatpush2.bf16.msra.mxu0 0
        %2274 = vmatprep.subr.bf16.mxu0 0
        %2275 = vmatpush2.bf16.msra.mxu0 0
        %2276 = vmatprep.subr.bf16.mxu0 0
        %2277 = vmatpush2.bf16.msra.mxu0 0
        %2278 = vmatprep.subr.bf16.mxu0 0
        %2279 = vmatpush2.bf16.msra.mxu0 0
        %2280 = vmatprep.subr.bf16.mxu0 0
        %2281 = vmatpush2.bf16.msra.mxu0 0
        %2282 = vmatprep.subr.bf16.mxu0 0
        %2283 = vmatpush2.bf16.msra.mxu0 0
        %2284 = vmatprep.mubr.bf16.mxu0 0
        %2285 = vmatmul.mubr.bf16.gmra.mxu0 %v1881
        %v2286 = vpop.f32.mrf.mxu0
        %v2287 = vadd.f32 %v827, %v2286
        %v2288 = vpop.f32.mrf.mxu0
        %v2289 = vadd.f32 %v827, %v2288
        %v2290 = vpop.f32.mrf.mxu0
        %v2291 = vpop.f32.mrf.mxu0
        %2292 = vdwg.mxu0
        %2293 = vmatprep.subr.bf16.mxu0 0
        %2294 = vmatpush1.bf16.msra.mxu0 0
        %2295 = vmatprep.subr.bf16.mxu0 0
        %2296 = vmatpush1.bf16.msra.mxu0 0
        %2297 = vmatprep.subr.bf16.mxu0 0
        %2298 = vmatpush1.bf16.msra.mxu0 0
        %2299 = vmatprep.subr.bf16.mxu0 %v1648
        %2300 = vmatpush1.bf16.msra.mxu0 %v1647
        %2301 = vmatprep.subr.bf16.mxu0 %v1606
        %2302 = vmatpush1.bf16.msra.mxu0 %v1605
        %2303 = vmatprep.subr.bf16.mxu0 %v1564
        %2304 = vmatpush1.bf16.msra.mxu0 %v1563
        %2305 = vmatprep.subr.bf16.mxu0 %v1522
        %2306 = vmatpush1.bf16.msra.mxu0 %v1521
        %2307 = vmatprep.subr.bf16.mxu0 %v1480
        %2308 = vmatpush1.bf16.msra.mxu0 %v1479
        %2309 = vmatprep.subr.bf16.mxu0 0
        %2310 = vmatpush2.bf16.msra.mxu0 0
        %2311 = vmatprep.subr.bf16.mxu0 0
        %2312 = vmatpush2.bf16.msra.mxu0 0
        %2313 = vmatprep.subr.bf16.mxu0 0
        %2314 = vmatpush2.bf16.msra.mxu0 0
        %2315 = vmatprep.subr.bf16.mxu0 0
        %2316 = vmatpush2.bf16.msra.mxu0 0
        %2317 = vmatprep.subr.bf16.mxu0 0
        %2318 = vmatpush2.bf16.msra.mxu0 0
        %2319 = vmatprep.subr.bf16.mxu0 0
        %2320 = vmatpush2.bf16.msra.mxu0 0
        %2321 = vmatprep.subr.bf16.mxu0 0
        %2322 = vmatpush2.bf16.msra.mxu0 0
        %2323 = vmatprep.subr.bf16.mxu0 0
        %2324 = vmatpush2.bf16.msra.mxu0 0
        %2325 = vmatprep.mubr.bf16.mxu0 0
        %2326 = vmatmul.mubr.bf16.gmra.mxu0 %v1881
        %v2327 = vpop.f32.mrf.mxu0
        %v2328 = vadd.f32 %v827, %v2327
        %v2329 = vpop.f32.mrf.mxu0
        %v2330 = vadd.f32 %v827, %v2329
        %v2331 = vpop.f32.mrf.mxu0
        %v2332 = vpop.f32.mrf.mxu0
        %2333 = vdwg.mxu0
        %2334 = vmatprep.subr.bf16.mxu0 0
        %2335 = vmatpush1.bf16.msra.mxu0 0
        %2336 = vmatprep.subr.bf16.mxu0 0
        %2337 = vmatpush1.bf16.msra.mxu0 0
        %2338 = vmatprep.subr.bf16.mxu0 0
        %2339 = vmatpush1.bf16.msra.mxu0 0
        %2340 = vmatprep.subr.bf16.mxu0 %v1650
        %2341 = vmatpush1.bf16.msra.mxu0 %v1649
        %2342 = vmatprep.subr.bf16.mxu0 %v1608
        %2343 = vmatpush1.bf16.msra.mxu0 %v1607
        %2344 = vmatprep.subr.bf16.mxu0 %v1566
        %2345 = vmatpush1.bf16.msra.mxu0 %v1565
        %2346 = vmatprep.subr.bf16.mxu0 %v1524
        %2347 = vmatpush1.bf16.msra.mxu0 %v1523
        %2348 = vmatprep.subr.bf16.mxu0 %v1482
        %2349 = vmatpush1.bf16.msra.mxu0 %v1481
        %2350 = vmatprep.subr.bf16.mxu0 0
        %2351 = vmatpush2.bf16.msra.mxu0 0
        %2352 = vmatprep.subr.bf16.mxu0 0
        %2353 = vmatpush2.bf16.msra.mxu0 0
        %2354 = vmatprep.subr.bf16.mxu0 0
        %2355 = vmatpush2.bf16.msra.mxu0 0
        %2356 = vmatprep.subr.bf16.mxu0 0
        %2357 = vmatpush2.bf16.msra.mxu0 0
        %2358 = vmatprep.subr.bf16.mxu0 0
        %2359 = vmatpush2.bf16.msra.mxu0 0
        %2360 = vmatprep.subr.bf16.mxu0 0
        %2361 = vmatpush2.bf16.msra.mxu0 0
        %2362 = vmatprep.subr.bf16.mxu0 0
        %2363 = vmatpush2.bf16.msra.mxu0 0
        %2364 = vmatprep.subr.bf16.mxu0 0
        %2365 = vmatpush2.bf16.msra.mxu0 0
        %2366 = vmatprep.mubr.bf16.mxu0 0
        %2367 = vmatmul.mubr.bf16.gmra.mxu0 %v1881
        %v2368 = vpop.f32.mrf.mxu0
        %v2369 = vadd.f32 %v827, %v2368
        %v2370 = vpop.f32.mrf.mxu0
        %v2371 = vadd.f32 %v827, %v2370
        %v2372 = vpop.f32.mrf.mxu0
        %v2373 = vpop.f32.mrf.mxu0
        %2374 = vdwg.mxu0
        %2375 = vmatprep.subr.bf16.mxu0 0
        %2376 = vmatpush1.bf16.msra.mxu0 0
        %2377 = vmatprep.subr.bf16.mxu0 0
        %2378 = vmatpush1.bf16.msra.mxu0 0
        %2379 = vmatprep.subr.bf16.mxu0 0
        %2380 = vmatpush1.bf16.msra.mxu0 0
        %2381 = vmatprep.subr.bf16.mxu0 %v1652
        %2382 = vmatpush1.bf16.msra.mxu0 %v1651
        %2383 = vmatprep.subr.bf16.mxu0 %v1610
        %2384 = vmatpush1.bf16.msra.mxu0 %v1609
        %2385 = vmatprep.subr.bf16.mxu0 %v1568
        %2386 = vmatpush1.bf16.msra.mxu0 %v1567
        %2387 = vmatprep.subr.bf16.mxu0 %v1526
        %2388 = vmatpush1.bf16.msra.mxu0 %v1525
        %2389 = vmatprep.subr.bf16.mxu0 %v1484
        %2390 = vmatpush1.bf16.msra.mxu0 %v1483
        %2391 = vmatprep.subr.bf16.mxu0 0
        %2392 = vmatpush2.bf16.msra.mxu0 0
        %2393 = vmatprep.subr.bf16.mxu0 0
        %2394 = vmatpush2.bf16.msra.mxu0 0
        %2395 = vmatprep.subr.bf16.mxu0 0
        %2396 = vmatpush2.bf16.msra.mxu0 0
        %2397 = vmatprep.subr.bf16.mxu0 0
        %2398 = vmatpush2.bf16.msra.mxu0 0
        %2399 = vmatprep.subr.bf16.mxu0 0
        %2400 = vmatpush2.bf16.msra.mxu0 0
        %2401 = vmatprep.subr.bf16.mxu0 0
        %2402 = vmatpush2.bf16.msra.mxu0 0
        %2403 = vmatprep.subr.bf16.mxu0 0
        %2404 = vmatpush2.bf16.msra.mxu0 0
        %2405 = vmatprep.subr.bf16.mxu0 0
        %2406 = vmatpush2.bf16.msra.mxu0 0
        %2407 = vmatprep.mubr.bf16.mxu0 0
        %2408 = vmatmul.mubr.bf16.gmra.mxu0 %v1881
        %v2409 = vpop.f32.mrf.mxu0
        %v2410 = vadd.f32 %v827, %v2409
        %v2411 = vpop.f32.mrf.mxu0
        %v2412 = vadd.f32 %v827, %v2411
        %v2413 = vpop.f32.mrf.mxu0
        %v2414 = vpop.f32.mrf.mxu0
        %2415 = vdwg.mxu0
        %2416 = vmatprep.subr.bf16.mxu0 0
        %2417 = vmatpush1.bf16.msra.mxu0 0
        %2418 = vmatprep.subr.bf16.mxu0 0
        %2419 = vmatpush1.bf16.msra.mxu0 0
        %2420 = vmatprep.subr.bf16.mxu0 0
        %2421 = vmatpush1.bf16.msra.mxu0 0
        %2422 = vmatprep.subr.bf16.mxu0 %v1654
        %2423 = vmatpush1.bf16.msra.mxu0 %v1653
        %2424 = vmatprep.subr.bf16.mxu0 %v1612
        %2425 = vmatpush1.bf16.msra.mxu0 %v1611
        %2426 = vmatprep.subr.bf16.mxu0 %v1570
        %2427 = vmatpush1.bf16.msra.mxu0 %v1569
        %2428 = vmatprep.subr.bf16.mxu0 %v1528
        %2429 = vmatpush1.bf16.msra.mxu0 %v1527
        %2430 = vmatprep.subr.bf16.mxu0 %v1486
        %2431 = vmatpush1.bf16.msra.mxu0 %v1485
        %2432 = vmatprep.subr.bf16.mxu0 0
        %2433 = vmatpush2.bf16.msra.mxu0 0
        %2434 = vmatprep.subr.bf16.mxu0 0
        %2435 = vmatpush2.bf16.msra.mxu0 0
        %2436 = vmatprep.subr.bf16.mxu0 0
        %2437 = vmatpush2.bf16.msra.mxu0 0
        %2438 = vmatprep.subr.bf16.mxu0 0
        %2439 = vmatpush2.bf16.msra.mxu0 0
        %2440 = vmatprep.subr.bf16.mxu0 0
        %2441 = vmatpush2.bf16.msra.mxu0 0
        %2442 = vmatprep.subr.bf16.mxu0 0
        %2443 = vmatpush2.bf16.msra.mxu0 0
        %2444 = vmatprep.subr.bf16.mxu0 0
        %2445 = vmatpush2.bf16.msra.mxu0 0
        %2446 = vmatprep.subr.bf16.mxu0 0
        %2447 = vmatpush2.bf16.msra.mxu0 0
        %2448 = vmatprep.mubr.bf16.mxu0 0
        %2449 = vmatmul.mubr.bf16.gmra.mxu0 %v1881
        %v2450 = vpop.f32.mrf.mxu0
        %v2451 = vadd.f32 %v827, %v2450
        %v2452 = vpop.f32.mrf.mxu0
        %v2453 = vadd.f32 %v827, %v2452
        %v2454 = vpop.f32.mrf.mxu0
        %v2455 = vpop.f32.mrf.mxu0
        %2456 = vdwg.mxu0
        %2457 = vmatprep.subr.bf16.mxu0 0
        %2458 = vmatpush1.bf16.msra.mxu0 0
        %2459 = vmatprep.subr.bf16.mxu0 0
        %2460 = vmatpush1.bf16.msra.mxu0 0
        %2461 = vmatprep.subr.bf16.mxu0 0
        %2462 = vmatpush1.bf16.msra.mxu0 0
        %2463 = vmatprep.subr.bf16.mxu0 %v1656
        %2464 = vmatpush1.bf16.msra.mxu0 %v1655
        %2465 = vmatprep.subr.bf16.mxu0 %v1614
        %2466 = vmatpush1.bf16.msra.mxu0 %v1613
        %2467 = vmatprep.subr.bf16.mxu0 %v1572
        %2468 = vmatpush1.bf16.msra.mxu0 %v1571
        %2469 = vmatprep.subr.bf16.mxu0 %v1530
        %2470 = vmatpush1.bf16.msra.mxu0 %v1529
        %2471 = vmatprep.subr.bf16.mxu0 %v1488
        %2472 = vmatpush1.bf16.msra.mxu0 %v1487
        %2473 = vmatprep.subr.bf16.mxu0 0
        %2474 = vmatpush2.bf16.msra.mxu0 0
        %2475 = vmatprep.subr.bf16.mxu0 0
        %2476 = vmatpush2.bf16.msra.mxu0 0
        %2477 = vmatprep.subr.bf16.mxu0 0
        %2478 = vmatpush2.bf16.msra.mxu0 0
        %2479 = vmatprep.subr.bf16.mxu0 0
        %2480 = vmatpush2.bf16.msra.mxu0 0
        %2481 = vmatprep.subr.bf16.mxu0 0
        %2482 = vmatpush2.bf16.msra.mxu0 0
        %2483 = vmatprep.subr.bf16.mxu0 0
        %2484 = vmatpush2.bf16.msra.mxu0 0
        %2485 = vmatprep.subr.bf16.mxu0 0
        %2486 = vmatpush2.bf16.msra.mxu0 0
        %2487 = vmatprep.subr.bf16.mxu0 0
        %2488 = vmatpush2.bf16.msra.mxu0 0
        %2489 = vmatprep.mubr.bf16.mxu0 0
        %2490 = vmatmul.mubr.bf16.gmra.mxu0 %v1881
        %v2491 = vpop.f32.mrf.mxu0
        %v2492 = vadd.f32 %v827, %v2491
        %v2493 = vpop.f32.mrf.mxu0
        %v2494 = vadd.f32 %v827, %v2493
        %v2495 = vpop.f32.mrf.mxu0
        %v2496 = vpop.f32.mrf.mxu0
        %2497 = vdwg.mxu0
        %2498 = vmatprep.subr.bf16.mxu0 0
        %2499 = vmatpush1.bf16.msra.mxu0 0
        %2500 = vmatprep.subr.bf16.mxu0 0
        %2501 = vmatpush1.bf16.msra.mxu0 0
        %2502 = vmatprep.subr.bf16.mxu0 0
        %2503 = vmatpush1.bf16.msra.mxu0 0
        %2504 = vmatprep.subr.bf16.mxu0 %v1658
        %2505 = vmatpush1.bf16.msra.mxu0 %v1657
        %2506 = vmatprep.subr.bf16.mxu0 %v1616
        %2507 = vmatpush1.bf16.msra.mxu0 %v1615
        %2508 = vmatprep.subr.bf16.mxu0 %v1574
        %2509 = vmatpush1.bf16.msra.mxu0 %v1573
        %2510 = vmatprep.subr.bf16.mxu0 %v1532
        %2511 = vmatpush1.bf16.msra.mxu0 %v1531
        %2512 = vmatprep.subr.bf16.mxu0 %v1490
        %2513 = vmatpush1.bf16.msra.mxu0 %v1489
        %2514 = vmatprep.subr.bf16.mxu0 0
        %2515 = vmatpush2.bf16.msra.mxu0 0
        %2516 = vmatprep.subr.bf16.mxu0 0
        %2517 = vmatpush2.bf16.msra.mxu0 0
        %2518 = vmatprep.subr.bf16.mxu0 0
        %2519 = vmatpush2.bf16.msra.mxu0 0
        %2520 = vmatprep.subr.bf16.mxu0 0
        %2521 = vmatpush2.bf16.msra.mxu0 0
        %2522 = vmatprep.subr.bf16.mxu0 0
        %2523 = vmatpush2.bf16.msra.mxu0 0
        %2524 = vmatprep.subr.bf16.mxu0 0
        %2525 = vmatpush2.bf16.msra.mxu0 0
        %2526 = vmatprep.subr.bf16.mxu0 0
        %2527 = vmatpush2.bf16.msra.mxu0 0
        %2528 = vmatprep.subr.bf16.mxu0 0
        %2529 = vmatpush2.bf16.msra.mxu0 0
        %2530 = vmatprep.mubr.bf16.mxu0 0
        %2531 = vmatmul.mubr.bf16.gmra.mxu0 %v1881
        %v2532 = vpop.f32.mrf.mxu0
        %v2533 = vadd.f32 %v827, %v2532
        %v2534 = vpop.f32.mrf.mxu0
        %v2535 = vadd.f32 %v827, %v2534
        %v2536 = vpop.f32.mrf.mxu0
        %v2537 = vpop.f32.mrf.mxu0
        %2538 = vdwg.mxu0
        %2539 = vmatprep.subr.bf16.mxu0 0
        %2540 = vmatpush1.bf16.msra.mxu0 0
        %2541 = vmatprep.subr.bf16.mxu0 0
        %2542 = vmatpush1.bf16.msra.mxu0 0
        %2543 = vmatprep.subr.bf16.mxu0 0
        %2544 = vmatpush1.bf16.msra.mxu0 0
        %2545 = vmatprep.subr.bf16.mxu0 %v1660
        %2546 = vmatpush1.bf16.msra.mxu0 %v1659
        %2547 = vmatprep.subr.bf16.mxu0 %v1618
        %2548 = vmatpush1.bf16.msra.mxu0 %v1617
        %2549 = vmatprep.subr.bf16.mxu0 %v1576
        %2550 = vmatpush1.bf16.msra.mxu0 %v1575
        %2551 = vmatprep.subr.bf16.mxu0 %v1534
        %2552 = vmatpush1.bf16.msra.mxu0 %v1533
        %2553 = vmatprep.subr.bf16.mxu0 %v1492
        %2554 = vmatpush1.bf16.msra.mxu0 %v1491
        %2555 = vmatprep.subr.bf16.mxu0 0
        %2556 = vmatpush2.bf16.msra.mxu0 0
        %2557 = vmatprep.subr.bf16.mxu0 0
        %2558 = vmatpush2.bf16.msra.mxu0 0
        %2559 = vmatprep.subr.bf16.mxu0 0
        %2560 = vmatpush2.bf16.msra.mxu0 0
        %2561 = vmatprep.subr.bf16.mxu0 0
        %2562 = vmatpush2.bf16.msra.mxu0 0
        %2563 = vmatprep.subr.bf16.mxu0 0
        %2564 = vmatpush2.bf16.msra.mxu0 0
        %2565 = vmatprep.subr.bf16.mxu0 0
        %2566 = vmatpush2.bf16.msra.mxu0 0
        %2567 = vmatprep.subr.bf16.mxu0 0
        %2568 = vmatpush2.bf16.msra.mxu0 0
        %2569 = vmatprep.subr.bf16.mxu0 0
        %2570 = vmatpush2.bf16.msra.mxu0 0
        %2571 = vmatprep.mubr.bf16.mxu0 0
        %2572 = vmatmul.mubr.bf16.gmra.mxu0 %v1881
        %v2573 = vpop.f32.mrf.mxu0
        %v2574 = vadd.f32 %v827, %v2573
        %v2575 = vpop.f32.mrf.mxu0
        %v2576 = vadd.f32 %v827, %v2575
        %v2577 = vpop.f32.mrf.mxu0
        %v2578 = vpop.f32.mrf.mxu0
        %2579 = vdwg.mxu0
        %2580 = vmatprep.subr.bf16.mxu0 0
        %2581 = vmatpush1.bf16.msra.mxu0 0
        %2582 = vmatprep.subr.bf16.mxu0 0
        %2583 = vmatpush1.bf16.msra.mxu0 0
        %2584 = vmatprep.subr.bf16.mxu0 0
        %2585 = vmatpush1.bf16.msra.mxu0 0
        %2586 = vmatprep.subr.bf16.mxu0 %v1662
        %2587 = vmatpush1.bf16.msra.mxu0 %v1661
        %2588 = vmatprep.subr.bf16.mxu0 %v1620
        %2589 = vmatpush1.bf16.msra.mxu0 %v1619
        %2590 = vmatprep.subr.bf16.mxu0 %v1578
        %2591 = vmatpush1.bf16.msra.mxu0 %v1577
        %2592 = vmatprep.subr.bf16.mxu0 %v1536
        %2593 = vmatpush1.bf16.msra.mxu0 %v1535
        %2594 = vmatprep.subr.bf16.mxu0 %v1494
        %2595 = vmatpush1.bf16.msra.mxu0 %v1493
        %2596 = vmatprep.subr.bf16.mxu0 0
        %2597 = vmatpush2.bf16.msra.mxu0 0
        %2598 = vmatprep.subr.bf16.mxu0 0
        %2599 = vmatpush2.bf16.msra.mxu0 0
        %2600 = vmatprep.subr.bf16.mxu0 0
        %2601 = vmatpush2.bf16.msra.mxu0 0
        %2602 = vmatprep.subr.bf16.mxu0 0
        %2603 = vmatpush2.bf16.msra.mxu0 0
        %2604 = vmatprep.subr.bf16.mxu0 0
        %2605 = vmatpush2.bf16.msra.mxu0 0
        %2606 = vmatprep.subr.bf16.mxu0 0
        %2607 = vmatpush2.bf16.msra.mxu0 0
        %2608 = vmatprep.subr.bf16.mxu0 0
        %2609 = vmatpush2.bf16.msra.mxu0 0
        %2610 = vmatprep.subr.bf16.mxu0 0
        %2611 = vmatpush2.bf16.msra.mxu0 0
        %2612 = vmatprep.mubr.bf16.mxu0 0
        %2613 = vmatmul.mubr.bf16.gmra.mxu0 %v1881
        %v2614 = vpop.f32.mrf.mxu0
        %v2615 = vadd.f32 %v827, %v2614
        %v2616 = vpop.f32.mrf.mxu0
        %v2617 = vadd.f32 %v827, %v2616
        %v2618 = vpop.f32.mrf.mxu0
        %v2619 = vpop.f32.mrf.mxu0
        %2620 = vdwg.mxu0
        %2621 = vmatprep.subr.bf16.mxu0 0
        %2622 = vmatpush1.bf16.msra.mxu0 0
        %2623 = vmatprep.subr.bf16.mxu0 0
        %2624 = vmatpush1.bf16.msra.mxu0 0
        %2625 = vmatprep.subr.bf16.mxu0 0
        %2626 = vmatpush1.bf16.msra.mxu0 0
        %2627 = vmatprep.subr.bf16.mxu0 %v1664
        %2628 = vmatpush1.bf16.msra.mxu0 %v1663
        %2629 = vmatprep.subr.bf16.mxu0 %v1622
        %2630 = vmatpush1.bf16.msra.mxu0 %v1621
        %2631 = vmatprep.subr.bf16.mxu0 %v1580
        %2632 = vmatpush1.bf16.msra.mxu0 %v1579
        %2633 = vmatprep.subr.bf16.mxu0 %v1538
        %2634 = vmatpush1.bf16.msra.mxu0 %v1537
        %2635 = vmatprep.subr.bf16.mxu0 %v1496
        %2636 = vmatpush1.bf16.msra.mxu0 %v1495
        %2637 = vmatprep.subr.bf16.mxu0 0
        %2638 = vmatpush2.bf16.msra.mxu0 0
        %2639 = vmatprep.subr.bf16.mxu0 0
        %2640 = vmatpush2.bf16.msra.mxu0 0
        %2641 = vmatprep.subr.bf16.mxu0 0
        %2642 = vmatpush2.bf16.msra.mxu0 0
        %2643 = vmatprep.subr.bf16.mxu0 0
        %2644 = vmatpush2.bf16.msra.mxu0 0
        %2645 = vmatprep.subr.bf16.mxu0 0
        %2646 = vmatpush2.bf16.msra.mxu0 0
        %2647 = vmatprep.subr.bf16.mxu0 0
        %2648 = vmatpush2.bf16.msra.mxu0 0
        %2649 = vmatprep.subr.bf16.mxu0 0
        %2650 = vmatpush2.bf16.msra.mxu0 0
        %2651 = vmatprep.subr.bf16.mxu0 0
        %2652 = vmatpush2.bf16.msra.mxu0 0
        %2653 = vmatprep.mubr.bf16.mxu0 0
        %2654 = vmatmul.mubr.bf16.gmra.mxu0 %v1881
        %v2655 = vpop.f32.mrf.mxu0
        %v2656 = vadd.f32 %v827, %v2655
        %v2657 = vpop.f32.mrf.mxu0
        %v2658 = vadd.f32 %v827, %v2657
        %v2659 = vpop.f32.mrf.mxu0
        %v2660 = vpop.f32.mrf.mxu0
        %2661 = vdwg.mxu0
        %2662 = vmatprep.subr.bf16.mxu0 0
        %2663 = vmatpush1.bf16.msra.mxu0 0
        %2664 = vmatprep.subr.bf16.mxu0 0
        %2665 = vmatpush1.bf16.msra.mxu0 0
        %2666 = vmatprep.subr.bf16.mxu0 0
        %2667 = vmatpush1.bf16.msra.mxu0 0
        %2668 = vmatprep.subr.bf16.mxu0 %v1666
        %2669 = vmatpush1.bf16.msra.mxu0 %v1665
        %2670 = vmatprep.subr.bf16.mxu0 %v1624
        %2671 = vmatpush1.bf16.msra.mxu0 %v1623
        %2672 = vmatprep.subr.bf16.mxu0 %v1582
        %2673 = vmatpush1.bf16.msra.mxu0 %v1581
        %2674 = vmatprep.subr.bf16.mxu0 %v1540
        %2675 = vmatpush1.bf16.msra.mxu0 %v1539
        %2676 = vmatprep.subr.bf16.mxu0 %v1498
        %2677 = vmatpush1.bf16.msra.mxu0 %v1497
        %2678 = vmatprep.subr.bf16.mxu0 0
        %2679 = vmatpush2.bf16.msra.mxu0 0
        %2680 = vmatprep.subr.bf16.mxu0 0
        %2681 = vmatpush2.bf16.msra.mxu0 0
        %2682 = vmatprep.subr.bf16.mxu0 0
        %2683 = vmatpush2.bf16.msra.mxu0 0
        %2684 = vmatprep.subr.bf16.mxu0 0
        %2685 = vmatpush2.bf16.msra.mxu0 0
        %2686 = vmatprep.subr.bf16.mxu0 0
        %2687 = vmatpush2.bf16.msra.mxu0 0
        %2688 = vmatprep.subr.bf16.mxu0 0
        %2689 = vmatpush2.bf16.msra.mxu0 0
        %2690 = vmatprep.subr.bf16.mxu0 0
        %2691 = vmatpush2.bf16.msra.mxu0 0
        %2692 = vmatprep.subr.bf16.mxu0 0
        %2693 = vmatpush2.bf16.msra.mxu0 0
        %2694 = vmatprep.mubr.bf16.mxu0 0
        %2695 = vmatmul.mubr.bf16.gmra.mxu0 %v1881
        %v2696 = vpop.f32.mrf.mxu0
        %v2697 = vadd.f32 %v827, %v2696
        %v2698 = vpop.f32.mrf.mxu0
        %v2699 = vadd.f32 %v827, %v2698
        %v2700 = vpop.f32.mrf.mxu0
        %v2701 = vpop.f32.mrf.mxu0
        %2702 = vdwg.mxu0
        %2703 = vmatprep.subr.bf16.mxu0 0
        %2704 = vmatpush1.bf16.msra.mxu0 0
        %2705 = vmatprep.subr.bf16.mxu0 0
        %2706 = vmatpush1.bf16.msra.mxu0 0
        %2707 = vmatprep.subr.bf16.mxu0 0
        %2708 = vmatpush1.bf16.msra.mxu0 0
        %2709 = vmatprep.subr.bf16.mxu0 %v1668
        %2710 = vmatpush1.bf16.msra.mxu0 %v1667
        %2711 = vmatprep.subr.bf16.mxu0 %v1626
        %2712 = vmatpush1.bf16.msra.mxu0 %v1625
        %2713 = vmatprep.subr.bf16.mxu0 %v1584
        %2714 = vmatpush1.bf16.msra.mxu0 %v1583
        %2715 = vmatprep.subr.bf16.mxu0 %v1542
        %2716 = vmatpush1.bf16.msra.mxu0 %v1541
        %2717 = vmatprep.subr.bf16.mxu0 %v1500
        %2718 = vmatpush1.bf16.msra.mxu0 %v1499
        %2719 = vmatprep.subr.bf16.mxu0 0
        %2720 = vmatpush2.bf16.msra.mxu0 0
        %2721 = vmatprep.subr.bf16.mxu0 0
        %2722 = vmatpush2.bf16.msra.mxu0 0
        %2723 = vmatprep.subr.bf16.mxu0 0
        %2724 = vmatpush2.bf16.msra.mxu0 0
        %2725 = vmatprep.subr.bf16.mxu0 0
        %2726 = vmatpush2.bf16.msra.mxu0 0
        %2727 = vmatprep.subr.bf16.mxu0 0
        %2728 = vmatpush2.bf16.msra.mxu0 0
        %2729 = vmatprep.subr.bf16.mxu0 0
        %2730 = vmatpush2.bf16.msra.mxu0 0
        %2731 = vmatprep.subr.bf16.mxu0 0
        %2732 = vmatpush2.bf16.msra.mxu0 0
        %2733 = vmatprep.subr.bf16.mxu0 0
        %2734 = vmatpush2.bf16.msra.mxu0 0
        %2735 = vmatprep.mubr.bf16.mxu0 0
        %2736 = vmatmul.mubr.bf16.gmra.mxu0 %v1881
        %v2737 = vpop.f32.mrf.mxu0
        %v2738 = vadd.f32 %v827, %v2737
        %v2739 = vpop.f32.mrf.mxu0
        %v2740 = vadd.f32 %v827, %v2739
        %v2741 = vpop.f32.mrf.mxu0
        %v2742 = vpop.f32.mrf.mxu0
        %2743 = vdwg.mxu0
        %v2744 = vmax.f32 %v1918, 0.0
        %v2745 = vmax.f32 %v1920, 0.0
        %v2746 = vmax.f32 %v1959, 0.0
        %v2747 = vmax.f32 %v1961, 0.0
        %v2748 = vmax.f32 %v2000, 0.0
        %v2749 = vmax.f32 %v2002, 0.0
        %v2750 = vmax.f32 %v2041, 0.0
        %v2751 = vmax.f32 %v2043, 0.0
        %v2752 = vmax.f32 %v2082, 0.0
        %v2753 = vmax.f32 %v2084, 0.0
        %v2754 = vmax.f32 %v2123, 0.0
        %v2755 = vmax.f32 %v2125, 0.0
        %v2756 = vmax.f32 %v2164, 0.0
        %v2757 = vmax.f32 %v2166, 0.0
        %v2758 = vmax.f32 %v2205, 0.0
        %v2759 = vmax.f32 %v2207, 0.0
        %v2760 = vmax.f32 %v2246, 0.0
        %v2761 = vmax.f32 %v2248, 0.0
        %v2762 = vmax.f32 %v2287, 0.0
        %v2763 = vmax.f32 %v2289, 0.0
        %v2764 = vmax.f32 %v2328, 0.0
        %v2765 = vmax.f32 %v2330, 0.0
        %v2766 = vmax.f32 %v2369, 0.0
        %v2767 = vmax.f32 %v2371, 0.0
        %v2768 = vmax.f32 %v2410, 0.0
        %v2769 = vmax.f32 %v2412, 0.0
        %v2770 = vmax.f32 %v2451, 0.0
        %v2771 = vmax.f32 %v2453, 0.0
        %v2772 = vmax.f32 %v2492, 0.0
        %v2773 = vmax.f32 %v2494, 0.0
        %v2774 = vmax.f32 %v2533, 0.0
        %v2775 = vmax.f32 %v2535, 0.0
        %v2776 = vmax.f32 %v2574, 0.0
        %v2777 = vmax.f32 %v2576, 0.0
        %v2778 = vmax.f32 %v2615, 0.0
        %v2779 = vmax.f32 %v2617, 0.0
        %v2780 = vmax.f32 %v2656, 0.0
        %v2781 = vmax.f32 %v2658, 0.0
        %v2782 = vmax.f32 %v2697, 0.0
        %v2783 = vmax.f32 %v2699, 0.0
        %v2784 = vmax.f32 %v2738, 0.0
        %v2785 = vmax.f32 %v2740, 0.0
        %v2786 = vpack.c.bf16 %v2744, %v2744
        %v2787 = vpack.c.bf16 %v2745, %v2745
        %v2788 = vpack.c.bf16 %v2746, %v2746
        %v2789 = vpack.c.bf16 %v2747, %v2747
        %v2790 = vpack.c.bf16 %v2748, %v2748
        %v2791 = vpack.c.bf16 %v2749, %v2749
        %v2792 = vpack.c.bf16 %v2750, %v2750
        %v2793 = vpack.c.bf16 %v2751, %v2751
        %v2794 = vpack.c.bf16 %v2752, %v2752
        %v2795 = vpack.c.bf16 %v2753, %v2753
        %v2796 = vpack.c.bf16 %v2754, %v2754
        %v2797 = vpack.c.bf16 %v2755, %v2755
        %v2798 = vpack.c.bf16 %v2756, %v2756
        %v2799 = vpack.c.bf16 %v2757, %v2757
        %v2800 = vpack.c.bf16 %v2758, %v2758
        %v2801 = vpack.c.bf16 %v2759, %v2759
        %v2802 = vpack.c.bf16 %v2760, %v2760
        %v2803 = vpack.c.bf16 %v2761, %v2761
        %v2804 = vpack.c.bf16 %v2762, %v2762
        %v2805 = vpack.c.bf16 %v2763, %v2763
        %v2806 = vpack.c.bf16 %v2764, %v2764
        %v2807 = vpack.c.bf16 %v2765, %v2765
        %v2808 = vpack.c.bf16 %v2766, %v2766
        %v2809 = vpack.c.bf16 %v2767, %v2767
        %v2810 = vpack.c.bf16 %v2768, %v2768
        %v2811 = vpack.c.bf16 %v2769, %v2769
        %v2812 = vpack.c.bf16 %v2770, %v2770
        %v2813 = vpack.c.bf16 %v2771, %v2771
        %v2814 = vpack.c.bf16 %v2772, %v2772
        %v2815 = vpack.c.bf16 %v2773, %v2773
        %v2816 = vpack.c.bf16 %v2774, %v2774
        %v2817 = vpack.c.bf16 %v2775, %v2775
        %v2818 = vpack.c.bf16 %v2776, %v2776
        %v2819 = vpack.c.bf16 %v2777, %v2777
        %v2820 = vpack.c.bf16 %v2778, %v2778
        %v2821 = vpack.c.bf16 %v2779, %v2779
        %v2822 = vpack.c.bf16 %v2780, %v2780
        %v2823 = vpack.c.bf16 %v2781, %v2781
        %v2824 = vpack.c.bf16 %v2782, %v2782
        %v2825 = vpack.c.bf16 %v2783, %v2783
        %v2826 = vpack.c.bf16 %v2784, %v2784
        %v2827 = vpack.c.bf16 %v2785, %v2785
        %v2870 = vunpack.c.l.b16 %v2786
        %v2871 = vunpack.c.l.b16 %v2787
        %v2872 = vunpack.c.l.b16 %v2788
        %v2873 = vunpack.c.l.b16 %v2789
        %v2874 = vunpack.c.l.b16 %v2790
        %v2875 = vunpack.c.l.b16 %v2791
        %v2876 = vunpack.c.l.b16 %v2792
        %v2877 = vunpack.c.l.b16 %v2793
        %v2878 = vunpack.c.l.b16 %v2794
        %v2879 = vunpack.c.l.b16 %v2795
        %v2880 = vunpack.c.l.b16 %v2796
        %v2881 = vunpack.c.l.b16 %v2797
        %v2882 = vunpack.c.l.b16 %v2798
        %v2883 = vunpack.c.l.b16 %v2799
        %v2884 = vunpack.c.l.b16 %v2800
        %v2885 = vunpack.c.l.b16 %v2801
        %v2886 = vunpack.c.l.b16 %v2802
        %v2887 = vunpack.c.l.b16 %v2803
        %v2888 = vunpack.c.l.b16 %v2804
        %v2889 = vunpack.c.l.b16 %v2805
        %v2890 = vunpack.c.l.b16 %v2806
        %v2891 = vunpack.c.l.b16 %v2807
        %v2892 = vunpack.c.l.b16 %v2808
        %v2893 = vunpack.c.l.b16 %v2809
        %v2894 = vunpack.c.l.b16 %v2810
        %v2895 = vunpack.c.l.b16 %v2811
        %v2896 = vunpack.c.l.b16 %v2812
        %v2897 = vunpack.c.l.b16 %v2813
        %v2898 = vunpack.c.l.b16 %v2814
        %v2899 = vunpack.c.l.b16 %v2815
        %v2900 = vunpack.c.l.b16 %v2816
        %v2901 = vunpack.c.l.b16 %v2817
        %v2902 = vunpack.c.l.b16 %v2818
        %v2903 = vunpack.c.l.b16 %v2819
        %v2904 = vunpack.c.l.b16 %v2820
        %v2905 = vunpack.c.l.b16 %v2821
        %v2906 = vunpack.c.l.b16 %v2822
        %v2907 = vunpack.c.l.b16 %v2823
        %v2908 = vunpack.c.l.b16 %v2824
        %v2909 = vunpack.c.l.b16 %v2825
        %v2910 = vunpack.c.l.b16 %v2826
        %v2911 = vunpack.c.l.b16 %v2827
        %v2912 = vpack.c.b16 %v2871, %v2870
        %v2913 = vpack.c.b16 %v2873, %v2872
        %v2914 = vpack.c.b16 %v2875, %v2874
        %v2915 = vpack.c.b16 %v2877, %v2876
        %v2916 = vpack.c.b16 %v2879, %v2878
        %v2917 = vpack.c.b16 %v2881, %v2880
        %v2918 = vpack.c.b16 %v2883, %v2882
        %v2919 = vpack.c.b16 %v2885, %v2884
        %v2920 = vpack.c.b16 %v2887, %v2886
        %v2921 = vpack.c.b16 %v2889, %v2888
        %v2922 = vpack.c.b16 %v2891, %v2890
        %v2923 = vpack.c.b16 %v2893, %v2892
        %v2924 = vpack.c.b16 %v2895, %v2894
        %v2925 = vpack.c.b16 %v2897, %v2896
        %v2926 = vpack.c.b16 %v2899, %v2898
        %v2927 = vpack.c.b16 %v2901, %v2900
        %v2928 = vpack.c.b16 %v2903, %v2902
        %v2929 = vpack.c.b16 %v2905, %v2904
        %v2930 = vpack.c.b16 %v2907, %v2906
        %v2931 = vpack.c.b16 %v2909, %v2908
        %v2932 = vpack.c.b16 %v2911, %v2910
        %2954 = vst [vmem:[%s609] sm:$0xff] %v2912
        %2955 = vst [vmem:[%s609 + $0x8] sm:$0xff] %v2913
        %2956 = vst [vmem:[%s609 + $0x10] sm:$0xff] %v2914
        %2957 = vst [vmem:[%s609 + $0x18] sm:$0xff] %v2915
        %2958 = vst [vmem:[%s609 + $0x20] sm:$0xff] %v2916
        %2959 = vst [vmem:[%s609 + $0x28] sm:$0xff] %v2917
        %2960 = vst [vmem:[%s609 + $0x30] sm:$0xff] %v2918
        %2961 = vst [vmem:[%s609 + $0x38] sm:$0xff] %v2919
        %2962 = vst [vmem:[%s609 + $0x40] sm:$0xff] %v2920
        %2963 = vst [vmem:[%s609 + $0x48] sm:$0xff] %v2921
        %2964 = vst [vmem:[%s609 + $0x50] sm:$0xff] %v2922
        %2965 = vst [vmem:[%s609 + $0x58] sm:$0xff] %v2923
        %2966 = vst [vmem:[%s609 + $0x60] sm:$0xff] %v2924
        %2967 = vst [vmem:[%s609 + $0x68] sm:$0xff] %v2925
        %2968 = vst [vmem:[%s609 + $0x70] sm:$0xff] %v2926
        %2969 = vst [vmem:[%s609 + $0x78] sm:$0xff] %v2927
        %2970 = vst [vmem:[%s609 + $0x80] sm:$0xff] %v2928
        %2971 = vst [vmem:[%s609 + $0x88] sm:$0xff] %v2929
        %2972 = vst [vmem:[%s609 + $0x90] sm:$0xff] %v2930
        %2973 = vst [vmem:[%s609 + $0x98] sm:$0xff] %v2931
        %2974 = vst [vmem:[%s609 + $0xa0] sm:$0xff] %v2932
        %s2975 = smul.u32 42, %s14
        %p2976 = scmp.lt.s32.totalorder %s2975, 881
        %s2977 = scalar_select %p2976, %s2975, 881
        %s2978 = smul.addr %s2977, 4
        %s2979 = scalar_lea.vmem %s3, %s2978
        // Predicated region
        $region56: #{simple_cnn_forward.6} parent=50 // pred_check
          %p2980 = pneg %p100
        $region57: #{simple_cnn_forward.6} parent=50 // pred_check_branch
          %2982 = sbr.rel (%p2980) target = $region59
        $region58: #{simple_cnn_forward.6} parent=50 // pred_region
          %s2983 = smul.u32 42, %s14
        $region59: #{simple_cnn_forward.6} parent=50 // pred_fallthru
          _
      $region51: #{simple_cnn_forward.6} parent=5 // pred_fallthru
        _
      %p2984 = scmp.le.s32.totalorder 2, %s9
      // Predicated region
      $region60: #{simple_cnn_forward.6} parent=5 // pred_check
        %p2985 = pneg %p2984
      $region61: #{simple_cnn_forward.6} parent=5 // pred_check_branch
        %2987 = sbr.rel (%p2985) target = $region63
      $region62: #{simple_cnn_forward.6} parent=5 // pred_region
        %s2988 = ssub.s32 %s9, 2
        // Predicated region
        $region64: #{simple_cnn_forward.6} parent=62 // pred_check
          %p2989 = pneg %p106
        $region65: #{simple_cnn_forward.6} parent=62 // pred_check_branch
          %2991 = sbr.rel (%p2989) target = $region67
        $region66: #{simple_cnn_forward.6} parent=62 // pred_region
          %s2992 = smul.u32 42, %s15
          %p2993 = scmp.lt.s32.totalorder %s2992, 881
          %s2994 = scalar_select %p2993, %s2992, 881
          %s2995 = smul.addr %s2994, 4
          %s2996 = scalar_lea.vmem %s3, %s2995
        $region67: #{simple_cnn_forward.6} parent=62 // pred_fallthru
          _
      $region63: #{simple_cnn_forward.6} parent=5 // pred_fallthru
        _
    $region6: #{simple_cnn_forward.6} parent=1 // loop_footer
      %s13 = sadd.s32 1, %s9
    $region7: #{simple_cnn_forward.6} parent=1 // loop_footer_branch
      %8 = sbr.rel target = $region3
    $region8: #{simple_cnn_forward.6} parent=1 // loop_exit
      _

// kernel: simple_cnn_forward.7
$region0: #{simple_cnn_forward.7}
  #allocation0 [shape = 'u32[]', space=smem, size = 0x4, offset = 0x4, fixed_abs, tag = 'smem constant byte address 0x4 - core index']
  #allocation1 [shape = 'u32[144,128]{1,0:T(1,128)}', space=vmem, size = 0x12000, scoped, tag = 'internal scratch']
  %s0 = inlined_call_operand.vmem [shape: bf16[6,126,224], index: 0, kind: input, shape index: {}]
  %s1 = inlined_call_operand.vmem [shape: bf16[6,126,224], index: 1, kind: input, shape index: {}]
  %s2 = inlined_call_operand.vmem [shape: bf16[6,126,224], index: 2, kind: input, shape index: {}]
  %s3 = inlined_call_operand.vmem [shape: bf16[6,126,224], index: 3, kind: input, shape index: {}]
  %s4 = inlined_call_operand.vmem [shape: bf16[6,126,224], index: 4, kind: output, shape index: {}]
  %s5 = sld [smem:[#allocation0]]
  $region49: #{simple_cnn_forward.7} parent=0
    _
  %s7 = ssub.s32 1, %s5
  %s8 = scalar_select 0, %s7, %s5
  loop: start=0, step=1, limit=8
  $region2: #{simple_cnn_forward.7} parent=0 // loop_pre_header
    _
  $region3: #{simple_cnn_forward.7} parent=0 // loop_header
    %s10 = sphi 0, %s14
    %p11 = scmp.ge.s32.totalorder %s10, 8
    %s20 = sphi 0, %s22
    %s23 = sphi 0, %s20
    %s24 = sphi 0, %s23
    %s40 = sphi 0, %s24
    %s46 = sphi 0, %s48
    %s49 = sphi 0, %s46
    %s50 = sphi 0, %s49
    %s66 = sphi 0, %s50
    %s72 = sphi 0, %s74
    %s75 = sphi 0, %s72
    %s76 = sphi 0, %s75
    %s92 = sphi 0, %s76
    %s98 = sphi 0, %s100
    %s101 = sphi 0, %s98
    %s102 = sphi 0, %s101
    %s118 = sphi 0, %s102
    %s124 = sphi 0, %s126
    %s127 = sphi 0, %s124
    %s128 = sphi 0, %s127
    %s144 = sphi 0, %s128
  $region4: #{simple_cnn_forward.7} parent=0 // loop_header_branch
    %13 = sbr.rel (%p11) target = $region8
  $region5: #{simple_cnn_forward.7} parent=0 // loop_body
    %s15 = ssub.s32 %s10, 1
    %s16 = ssub.s32 %s10, 2
    %s17 = sadd.s32 %s10, 1
    %s18 = ssub.s32 %s10, %s17
    %p19 = scmp.eq.s32.totalorder %s18, 0
    %s21 = sadd.s32 %s20, 1
    %s22 = scalar_select %p19, %s20, %s21
    %p25 = pneg %p19
    %p26 = scmp.eq.s32.totalorder %s10, 5
    %p27 = por %p25, %p26
    %p28 = scmp.ne.s32.totalorder %s20, %s23
    %p29 = scmp.eq.s32.totalorder %s10, 0
    %p30 = por %p28, %p29
    %p31 = scmp.ne.s32.totalorder %s20, %s23
    %p32 = scmp.eq.s32.totalorder %s15, 5
    %p33 = por %p31, %p32
    %p34 = scmp.ne.s32.totalorder %s23, %s24
    %p35 = scmp.eq.s32.totalorder %s15, 0
    %p36 = por %p34, %p35
    %p37 = scmp.ne.s32.totalorder %s23, %s24
    %p38 = scmp.eq.s32.totalorder %s16, 5
    %p39 = por %p37, %p38
    %p41 = scmp.ne.s32.totalorder %s24, %s40
    %p42 = scmp.eq.s32.totalorder %s16, 0
    %p43 = por %p41, %p42
    %s44 = ssub.s32 %s10, %s17
    %p45 = scmp.eq.s32.totalorder %s44, 0
    %s47 = sadd.s32 %s46, 1
    %s48 = scalar_select %p45, %s46, %s47
    %p51 = pneg %p45
    %p52 = scmp.eq.s32.totalorder %s10, 5
    %p53 = por %p51, %p52
    %p54 = scmp.ne.s32.totalorder %s46, %s49
    %p55 = scmp.eq.s32.totalorder %s10, 0
    %p56 = por %p54, %p55
    %p57 = scmp.ne.s32.totalorder %s46, %s49
    %p58 = scmp.eq.s32.totalorder %s15, 5
    %p59 = por %p57, %p58
    %p60 = scmp.ne.s32.totalorder %s49, %s50
    %p61 = scmp.eq.s32.totalorder %s15, 0
    %p62 = por %p60, %p61
    %p63 = scmp.ne.s32.totalorder %s49, %s50
    %p64 = scmp.eq.s32.totalorder %s16, 5
    %p65 = por %p63, %p64
    %p67 = scmp.ne.s32.totalorder %s50, %s66
    %p68 = scmp.eq.s32.totalorder %s16, 0
    %p69 = por %p67, %p68
    %s70 = ssub.s32 %s10, %s17
    %p71 = scmp.eq.s32.totalorder %s70, 0
    %s73 = sadd.s32 %s72, 1
    %s74 = scalar_select %p71, %s72, %s73
    %p77 = pneg %p71
    %p78 = scmp.eq.s32.totalorder %s10, 5
    %p79 = por %p77, %p78
    %p80 = scmp.ne.s32.totalorder %s72, %s75
    %p81 = scmp.eq.s32.totalorder %s10, 0
    %p82 = por %p80, %p81
    %p83 = scmp.ne.s32.totalorder %s72, %s75
    %p84 = scmp.eq.s32.totalorder %s15, 5
    %p85 = por %p83, %p84
    %p86 = scmp.ne.s32.totalorder %s75, %s76
    %p87 = scmp.eq.s32.totalorder %s15, 0
    %p88 = por %p86, %p87
    %p89 = scmp.ne.s32.totalorder %s75, %s76
    %p90 = scmp.eq.s32.totalorder %s16, 5
    %p91 = por %p89, %p90
    %p93 = scmp.ne.s32.totalorder %s76, %s92
    %p94 = scmp.eq.s32.totalorder %s16, 0
    %p95 = por %p93, %p94
    %s96 = ssub.s32 %s10, %s17
    %p97 = scmp.eq.s32.totalorder %s96, 0
    %s99 = sadd.s32 %s98, 1
    %s100 = scalar_select %p97, %s98, %s99
    %p103 = pneg %p97
    %p104 = scmp.eq.s32.totalorder %s10, 5
    %p105 = por %p103, %p104
    %p106 = scmp.ne.s32.totalorder %s98, %s101
    %p107 = scmp.eq.s32.totalorder %s10, 0
    %p108 = por %p106, %p107
    %p109 = scmp.ne.s32.totalorder %s98, %s101
    %p110 = scmp.eq.s32.totalorder %s15, 5
    %p111 = por %p109, %p110
    %p112 = scmp.ne.s32.totalorder %s101, %s102
    %p113 = scmp.eq.s32.totalorder %s15, 0
    %p114 = por %p112, %p113
    %p115 = scmp.ne.s32.totalorder %s101, %s102
    %p116 = scmp.eq.s32.totalorder %s16, 5
    %p117 = por %p115, %p116
    %p119 = scmp.ne.s32.totalorder %s102, %s118
    %p120 = scmp.eq.s32.totalorder %s16, 0
    %p121 = por %p119, %p120
    %s122 = ssub.s32 %s10, %s17
    %p123 = scmp.eq.s32.totalorder %s122, 0
    %s125 = sadd.s32 %s124, 1
    %s126 = scalar_select %p123, %s124, %s125
    %p129 = pneg %p123
    %p130 = scmp.eq.s32.totalorder %s10, 5
    %p131 = por %p129, %p130
    %p132 = scmp.ne.s32.totalorder %s124, %s127
    %p133 = scmp.eq.s32.totalorder %s10, 0
    %p134 = por %p132, %p133
    %p135 = scmp.ne.s32.totalorder %s124, %s127
    %p136 = scmp.eq.s32.totalorder %s15, 5
    %p137 = por %p135, %p136
    %p138 = scmp.ne.s32.totalorder %s127, %s128
    %p139 = scmp.eq.s32.totalorder %s15, 0
    %p140 = por %p138, %p139
    %p141 = scmp.ne.s32.totalorder %s127, %s128
    %p142 = scmp.eq.s32.totalorder %s16, 5
    %p143 = por %p141, %p142
    %p145 = scmp.ne.s32.totalorder %s128, %s144
    %p146 = scmp.eq.s32.totalorder %s16, 0
    %p147 = por %p145, %p146
    %p148 = scmp.le.s32.totalorder 1, %s10
    %p149 = scmp.lt.s32.totalorder %s10, 7
    %p150 = pnand %p148, %p149
    %p151 = pneg %p150
    // Predicated region
    $region9: #{simple_cnn_forward.7} parent=5 // pred_check
      _
    $region10: #{simple_cnn_forward.7} parent=5 // pred_check_branch
      %153 = sbr.rel (%p150) target = $region12
    $region11: #{simple_cnn_forward.7} parent=5 // pred_region
      %s154 = ssub.s32 %s10, 1
    $region12: #{simple_cnn_forward.7} parent=5 // pred_fallthru
      _
    %p155 = scmp.lt.s32.totalorder %s10, 6
    // Predicated region
    $region13: #{simple_cnn_forward.7} parent=5 // pred_check
      %p156 = pneg %p155
    $region14: #{simple_cnn_forward.7} parent=5 // pred_check_branch
      %158 = sbr.rel (%p156) target = $region16
    $region15: #{simple_cnn_forward.7} parent=5 // pred_region
      // Predicated region
      $region17: #{simple_cnn_forward.7} parent=15 // pred_check
        %p159 = pneg %p30
      $region18: #{simple_cnn_forward.7} parent=15 // pred_check_branch
        %161 = sbr.rel (%p159) target = $region20
      $region19: #{simple_cnn_forward.7} parent=15 // pred_region
        %p162 = scmp.lt.s32.totalorder %s10, 5
        %s163 = scalar_select %p162, %s10, 5
        %s164 = smul.addr %s163, 32
        %s165 = smul.addr %s164, 4
        %s166 = scalar_lea.vmem %s0, %s165
      $region20: #{simple_cnn_forward.7} parent=15 // pred_fallthru
        _
      // Predicated region
      $region21: #{simple_cnn_forward.7} parent=15 // pred_check
        %p167 = pneg %p56
      $region22: #{simple_cnn_forward.7} parent=15 // pred_check_branch
        %169 = sbr.rel (%p167) target = $region24
      $region23: #{simple_cnn_forward.7} parent=15 // pred_region
        %p170 = scmp.lt.s32.totalorder %s10, 5
        %s171 = scalar_select %p170, %s10, 5
        %s172 = smul.addr %s171, 32
        %s173 = smul.addr %s172, 4
        %s174 = scalar_lea.vmem %s1, %s173
      $region24: #{simple_cnn_forward.7} parent=15 // pred_fallthru
        _
      // Predicated region
      $region25: #{simple_cnn_forward.7} parent=15 // pred_check
        %p175 = pneg %p82
      $region26: #{simple_cnn_forward.7} parent=15 // pred_check_branch
        %177 = sbr.rel (%p175) target = $region28
      $region27: #{simple_cnn_forward.7} parent=15 // pred_region
        %p178 = scmp.lt.s32.totalorder %s10, 5
        %s179 = scalar_select %p178, %s10, 5
        %s180 = smul.addr %s179, 32
        %s181 = smul.addr %s180, 4
        %s182 = scalar_lea.vmem %s2, %s181
      $region28: #{simple_cnn_forward.7} parent=15 // pred_fallthru
        _
      // Predicated region
      $region29: #{simple_cnn_forward.7} parent=15 // pred_check
        %p183 = pneg %p108
      $region30: #{simple_cnn_forward.7} parent=15 // pred_check_branch
        %185 = sbr.rel (%p183) target = $region32
      $region31: #{simple_cnn_forward.7} parent=15 // pred_region
        %p186 = scmp.lt.s32.totalorder %s10, 5
        %s187 = scalar_select %p186, %s10, 5
        %s188 = smul.addr %s187, 32
        %s189 = smul.addr %s188, 4
        %s190 = scalar_lea.vmem %s3, %s189
      $region32: #{simple_cnn_forward.7} parent=15 // pred_fallthru
        _
    $region16: #{simple_cnn_forward.7} parent=5 // pred_fallthru
      _
    %p191 = scmp.le.s32.totalorder 1, %s10
    %p192 = scmp.lt.s32.totalorder %s10, 7
    %p193 = pnand %p191, %p192
    %p194 = pneg %p193
    // Predicated region
    $region33: #{simple_cnn_forward.7} parent=5 // pred_check
      _
    $region34: #{simple_cnn_forward.7} parent=5 // pred_check_branch
      %196 = sbr.rel (%p193) target = $region36
    $region35: #{simple_cnn_forward.7} parent=5 // pred_region
      %s197 = ssub.s32 %s10, 1
      %p198 = scmp.lt.s32.totalorder %s15, 5
      %s199 = scalar_select %p198, %s15, 5
      %s200 = smul.addr %s199, 32
      %s201 = smul.addr %s200, 4
      %s202 = scalar_lea.vmem %s0, %s201
      %p203 = pneg %p36
      %p204 = pneg %p33
      %p205 = scmp.lt.s32.totalorder %s15, 5
      %s206 = scalar_select %p205, %s15, 5
      %s207 = smul.addr %s206, 32
      %s208 = smul.addr %s207, 4
      %s209 = scalar_lea.vmem %s1, %s208
      %p210 = pneg %p62
      %p211 = pneg %p59
      %p212 = scmp.lt.s32.totalorder %s15, 5
      %s213 = scalar_select %p212, %s15, 5
      %s214 = smul.addr %s213, 32
      %s215 = smul.addr %s214, 4
      %s216 = scalar_lea.vmem %s2, %s215
      %p217 = pneg %p88
      %p218 = pneg %p85
      %p219 = scmp.lt.s32.totalorder %s15, 5
      %s220 = scalar_select %p219, %s15, 5
      %s221 = smul.addr %s220, 32
      %s222 = smul.addr %s221, 4
      %s223 = scalar_lea.vmem %s3, %s222
      %p224 = pneg %p114
      %p225 = pneg %p111
      %p226 = pneg %p140
      %p227 = pneg %p137
      %p228 = scmp.lt.s32.totalorder %s15, 5
      %s229 = scalar_select %p228, %s15, 5
      %s230 = smul.addr %s229, 32
      %s231 = smul.addr %s230, 4
      %s232 = scalar_lea.vmem %s4, %s231
      %p233 = scmp.lt.s32.totalorder %s15, 5
      %s234 = scalar_select %p233, %s15, 5
      %s235 = smul.addr %s234, 32
      %s236 = smul.addr %s235, 4
      %s237 = scalar_lea.vmem %s0, %s236
      %p238 = scmp.lt.s32.totalorder %s15, 5
      %s239 = scalar_select %p238, %s15, 5
      %s240 = smul.addr %s239, 32
      %s241 = smul.addr %s240, 4
      %s242 = scalar_lea.vmem %s1, %s241
      %p243 = scmp.lt.s32.totalorder %s15, 5
      %s244 = scalar_select %p243, %s15, 5
      %s245 = smul.addr %s244, 32
      %s246 = smul.addr %s245, 4
      %s247 = scalar_lea.vmem %s2, %s246
      %p248 = scmp.lt.s32.totalorder %s15, 5
      %s249 = scalar_select %p248, %s15, 5
      %s250 = smul.addr %s249, 32
      %s251 = smul.addr %s250, 4
      %s252 = scalar_lea.vmem %s3, %s251
      %p253 = scmp.lt.s32.totalorder %s15, 5
      %s254 = scalar_select %p253, %s15, 5
      %s255 = smul.addr %s254, 32
      %s256 = smul.addr %s255, 4
      %s257 = scalar_lea.vmem %s4, %s256
      %v258 = vld [vmem:[%s237] sm:$0xff]
      %v259 = vld [vmem:[%s237 + $0x8] sm:$0xff]
      %v260 = vld [vmem:[%s237 + $0x10] sm:$0xff]
      %v261 = vld [vmem:[%s237 + $0x18] sm:$0xff]
      %v262 = vld [vmem:[%s237 + $0x20] sm:$0xff]
      %v263 = vld [vmem:[%s237 + $0x28] sm:$0xff]
      %v264 = vld [vmem:[%s237 + $0x30] sm:$0xff]
      %v265 = vld [vmem:[%s237 + $0x38] sm:$0xff]
      %v266 = vld [vmem:[%s237 + $0x40] sm:$0xff]
      %v267 = vld [vmem:[%s237 + $0x48] sm:$0xff]
      %v268 = vld [vmem:[%s237 + $0x50] sm:$0xff]
      %v269 = vld [vmem:[%s237 + $0x58] sm:$0xff]
      %v270 = vld [vmem:[%s237 + $0x60] sm:$0xff]
      %v271 = vld [vmem:[%s237 + $0x68] sm:$0xff]
      %v272 = vld [vmem:[%s237 + $0x70] sm:$0xff]
      %v273 = vld [vmem:[%s237 + $0x78] sm:$0x77]
      %v274 = vld [vmem:[%s242] sm:$0xff]
      %v275 = vld [vmem:[%s242 + $0x8] sm:$0xff]
      %v276 = vld [vmem:[%s242 + $0x10] sm:$0xff]
      %v277 = vld [vmem:[%s242 + $0x18] sm:$0xff]
      %v278 = vld [vmem:[%s242 + $0x20] sm:$0xff]
      %v279 = vld [vmem:[%s242 + $0x28] sm:$0xff]
      %v280 = vld [vmem:[%s242 + $0x30] sm:$0xff]
      %v281 = vld [vmem:[%s242 + $0x38] sm:$0xff]
      %v282 = vld [vmem:[%s242 + $0x40] sm:$0xff]
      %v283 = vld [vmem:[%s242 + $0x48] sm:$0xff]
      %v284 = vld [vmem:[%s242 + $0x50] sm:$0xff]
      %v285 = vld [vmem:[%s242 + $0x58] sm:$0xff]
      %v286 = vld [vmem:[%s242 + $0x60] sm:$0xff]
      %v287 = vld [vmem:[%s242 + $0x68] sm:$0xff]
      %v288 = vld [vmem:[%s242 + $0x70] sm:$0xff]
      %v289 = vld [vmem:[%s242 + $0x78] sm:$0x77]
      %v290 = vmax.bf16 %v258, %v274
      %v291 = vmax.bf16 %v259, %v275
      %v292 = vmax.bf16 %v260, %v276
      %v293 = vmax.bf16 %v261, %v277
      %v294 = vmax.bf16 %v262, %v278
      %v295 = vmax.bf16 %v263, %v279
      %v296 = vmax.bf16 %v264, %v280
      %v297 = vmax.bf16 %v265, %v281
      %v298 = vmax.bf16 %v266, %v282
      %v299 = vmax.bf16 %v267, %v283
      %v300 = vmax.bf16 %v268, %v284
      %v301 = vmax.bf16 %v269, %v285
      %v302 = vmax.bf16 %v270, %v286
      %v303 = vmax.bf16 %v271, %v287
      %v304 = vmax.bf16 %v272, %v288
      %v305 = vmax.bf16 %v273, %v289
      %v306 = vld [vmem:[%s247] sm:$0xff]
      %v307 = vld [vmem:[%s247 + $0x8] sm:$0xff]
      %v308 = vld [vmem:[%s247 + $0x10] sm:$0xff]
      %v309 = vld [vmem:[%s247 + $0x18] sm:$0xff]
      %v310 = vld [vmem:[%s247 + $0x20] sm:$0xff]
      %v311 = vld [vmem:[%s247 + $0x28] sm:$0xff]
      %v312 = vld [vmem:[%s247 + $0x30] sm:$0xff]
      %v313 = vld [vmem:[%s247 + $0x38] sm:$0xff]
      %v314 = vld [vmem:[%s247 + $0x40] sm:$0xff]
      %v315 = vld [vmem:[%s247 + $0x48] sm:$0xff]
      %v316 = vld [vmem:[%s247 + $0x50] sm:$0xff]
      %v317 = vld [vmem:[%s247 + $0x58] sm:$0xff]
      %v318 = vld [vmem:[%s247 + $0x60] sm:$0xff]
      %v319 = vld [vmem:[%s247 + $0x68] sm:$0xff]
      %v320 = vld [vmem:[%s247 + $0x70] sm:$0xff]
      %v321 = vld [vmem:[%s247 + $0x78] sm:$0x77]
      %v322 = vld [vmem:[%s252] sm:$0xff]
      %v323 = vld [vmem:[%s252 + $0x8] sm:$0xff]
      %v324 = vld [vmem:[%s252 + $0x10] sm:$0xff]
      %v325 = vld [vmem:[%s252 + $0x18] sm:$0xff]
      %v326 = vld [vmem:[%s252 + $0x20] sm:$0xff]
      %v327 = vld [vmem:[%s252 + $0x28] sm:$0xff]
      %v328 = vld [vmem:[%s252 + $0x30] sm:$0xff]
      %v329 = vld [vmem:[%s252 + $0x38] sm:$0xff]
      %v330 = vld [vmem:[%s252 + $0x40] sm:$0xff]
      %v331 = vld [vmem:[%s252 + $0x48] sm:$0xff]
      %v332 = vld [vmem:[%s252 + $0x50] sm:$0xff]
      %v333 = vld [vmem:[%s252 + $0x58] sm:$0xff]
      %v334 = vld [vmem:[%s252 + $0x60] sm:$0xff]
      %v335 = vld [vmem:[%s252 + $0x68] sm:$0xff]
      %v336 = vld [vmem:[%s252 + $0x70] sm:$0xff]
      %v337 = vld [vmem:[%s252 + $0x78] sm:$0x77]
      %v338 = vmax.bf16 %v306, %v322
      %v339 = vmax.bf16 %v307, %v323
      %v340 = vmax.bf16 %v308, %v324
      %v341 = vmax.bf16 %v309, %v325
      %v342 = vmax.bf16 %v310, %v326
      %v343 = vmax.bf16 %v311, %v327
      %v344 = vmax.bf16 %v312, %v328
      %v345 = vmax.bf16 %v313, %v329
      %v346 = vmax.bf16 %v314, %v330
      %v347 = vmax.bf16 %v315, %v331
      %v348 = vmax.bf16 %v316, %v332
      %v349 = vmax.bf16 %v317, %v333
      %v350 = vmax.bf16 %v318, %v334
      %v351 = vmax.bf16 %v319, %v335
      %v352 = vmax.bf16 %v320, %v336
      %v353 = vmax.bf16 %v321, %v337
      %v354 = vmax.bf16 %v290, %v338
      %v355 = vmax.bf16 %v291, %v339
      %v356 = vmax.bf16 %v292, %v340
      %v357 = vmax.bf16 %v293, %v341
      %v358 = vmax.bf16 %v294, %v342
      %v359 = vmax.bf16 %v295, %v343
      %v360 = vmax.bf16 %v296, %v344
      %v361 = vmax.bf16 %v297, %v345
      %v362 = vmax.bf16 %v298, %v346
      %v363 = vmax.bf16 %v299, %v347
      %v364 = vmax.bf16 %v300, %v348
      %v365 = vmax.bf16 %v301, %v349
      %v366 = vmax.bf16 %v302, %v350
      %v367 = vmax.bf16 %v303, %v351
      %v368 = vmax.bf16 %v304, %v352
      %v369 = vmax.bf16 %v305, %v353
      %vm370 = vcmask 1043456
      %vm371 = vcmask 785412
      %vm372 = vmor %vm371, %vm370
      %373 = vst.msk [vmem:[%s257] sm:$0xff] %vm372, %v354
      %374 = vst.msk [vmem:[%s257 + $0x8] sm:$0xff] %vm372, %v355
      %375 = vst.msk [vmem:[%s257 + $0x10] sm:$0xff] %vm372, %v356
      %376 = vst.msk [vmem:[%s257 + $0x18] sm:$0xff] %vm372, %v357
      %377 = vst.msk [vmem:[%s257 + $0x20] sm:$0xff] %vm372, %v358
      %378 = vst.msk [vmem:[%s257 + $0x28] sm:$0xff] %vm372, %v359
      %379 = vst.msk [vmem:[%s257 + $0x30] sm:$0xff] %vm372, %v360
      %380 = vst.msk [vmem:[%s257 + $0x38] sm:$0xff] %vm372, %v361
      %381 = vst.msk [vmem:[%s257 + $0x40] sm:$0xff] %vm372, %v362
      %382 = vst.msk [vmem:[%s257 + $0x48] sm:$0xff] %vm372, %v363
      %383 = vst.msk [vmem:[%s257 + $0x50] sm:$0xff] %vm372, %v364
      %384 = vst.msk [vmem:[%s257 + $0x58] sm:$0xff] %vm372, %v365
      %385 = vst.msk [vmem:[%s257 + $0x60] sm:$0xff] %vm372, %v366
      %386 = vst.msk [vmem:[%s257 + $0x68] sm:$0xff] %vm372, %v367
      %387 = vst.msk [vmem:[%s257 + $0x70] sm:$0xff] %vm372, %v368
      %vm388 = vcmask 1042432
      %vm389 = vcmask 784388
      %vm390 = vmor %vm389, %vm388
      %391 = vst.msk [vmem:[%s257 + $0x78] sm:$0x77] %vm390, %v369
      %p392 = scmp.lt.s32.totalorder %s15, 5
      %s393 = scalar_select %p392, %s15, 5
      %s394 = smul.addr %s393, 32
      %s395 = smul.addr %s394, 4
      %s396 = scalar_lea.vmem %s4, %s395
      // Predicated region
      $region37: #{simple_cnn_forward.7} parent=35 // pred_check
        %p397 = pneg %p137
      $region38: #{simple_cnn_forward.7} parent=35 // pred_check_branch
        %399 = sbr.rel (%p397) target = $region40
      $region39: #{simple_cnn_forward.7} parent=35 // pred_region
        _
      $region40: #{simple_cnn_forward.7} parent=35 // pred_fallthru
        _
    $region36: #{simple_cnn_forward.7} parent=5 // pred_fallthru
      _
    %p400 = scmp.le.s32.totalorder 2, %s10
    // Predicated region
    $region41: #{simple_cnn_forward.7} parent=5 // pred_check
      %p401 = pneg %p400
    $region42: #{simple_cnn_forward.7} parent=5 // pred_check_branch
      %403 = sbr.rel (%p401) target = $region44
    $region43: #{simple_cnn_forward.7} parent=5 // pred_region
      %s404 = ssub.s32 %s10, 2
      // Predicated region
      $region45: #{simple_cnn_forward.7} parent=43 // pred_check
        %p405 = pneg %p143
      $region46: #{simple_cnn_forward.7} parent=43 // pred_check_branch
        %407 = sbr.rel (%p405) target = $region48
      $region47: #{simple_cnn_forward.7} parent=43 // pred_region
        %p408 = scmp.lt.s32.totalorder %s16, 5
        %s409 = scalar_select %p408, %s16, 5
        %s410 = smul.addr %s409, 32
        %s411 = smul.addr %s410, 4
        %s412 = scalar_lea.vmem %s4, %s411
      $region48: #{simple_cnn_forward.7} parent=43 // pred_fallthru
        _
    $region44: #{simple_cnn_forward.7} parent=5 // pred_fallthru
      _
  $region6: #{simple_cnn_forward.7} parent=0 // loop_footer
    %s14 = sadd.s32 1, %s10
  $region7: #{simple_cnn_forward.7} parent=0 // loop_footer_branch
    %9 = sbr.rel target = $region3
  $region8: #{simple_cnn_forward.7} parent=0 // loop_exit
    _

// kernel: simple_cnn_forward.8
$region0: #{simple_cnn_forward.8}
  #allocation0 [shape = 'u32[]', space=smem, size = 0x4, offset = 0x4, fixed_abs, tag = 'smem constant byte address 0x4 - core index']
  #allocation1 [shape = 'u32[144,128]{1,0:T(1,128)}', space=vmem, size = 0x12000, scoped, tag = 'internal scratch']
  %s0 = inlined_call_operand.vmem [shape: bf16[16,160], index: 0, kind: input, shape index: {}]
  %s1 = inlined_call_operand.vmem [shape: bf16[160,28672], index: 1, kind: input, shape index: {}]
  %s2 = inlined_call_operand.vmem [shape: f32[16,1], index: 2, kind: input, shape index: {}]
  %s3 = inlined_call_operand.vmem [shape: bf16[16,28672], index: 3, kind: output, shape index: {}]
  %s4 = sld [smem:[#allocation0]]
  $region87: #{simple_cnn_forward.8} parent=0
    _
  %s6 = ssub.s32 1, %s4
  %s7 = scalar_select 0, %s6, %s4
  $region1: #{simple_cnn_forward.8} parent=0
    #allocation2 [shape = 'u8[1310720]{0}', space=vmem, size = 0x140000, scoped, tag = 'input window, operand 1']
    #allocation3 [shape = 'u8[131072]{0}', space=vmem, size = 0x20000, scoped, tag = 'output window, operand 0']
    loop: start=0, step=1, limit=16
    $region2: #{simple_cnn_forward.8} parent=1 // loop_pre_header
      _
    $region3: #{simple_cnn_forward.8} parent=1 // loop_header
      %s9 = sphi 0, %s13
      %p10 = scmp.ge.s32.totalorder %s9, 16
      %s17 = sphi 0, %s17
      %s19 = sphi 0, %s17
      %s20 = sphi 0, %s19
      %s34 = sphi 0, %s20
      %s40 = sphi 0, %s42
      %s43 = sphi 0, %s40
      %s44 = sphi 0, %s43
      %s60 = sphi 0, %s44
      %s64 = sphi 0, %s64
      %s66 = sphi 0, %s64
      %s67 = sphi 0, %s66
      %s81 = sphi 0, %s67
      %s87 = sphi 0, %s89
      %s90 = sphi 0, %s87
      %s91 = sphi 0, %s90
      %s107 = sphi 0, %s91
    $region4: #{simple_cnn_forward.8} parent=1 // loop_header_branch
      %12 = sbr.rel (%p10) target = $region8
    $region5: #{simple_cnn_forward.8} parent=1 // loop_body
      %s14 = ssub.s32 %s9, 1
      %s15 = ssub.s32 %s9, 2
      %s16 = sadd.s32 %s9, 1
      %s18 = sadd.s32 %s17, 1
      %p21 = scmp.eq.s32.totalorder %s9, 13
      %p22 = scmp.ne.s32.totalorder %s17, %s19
      %p23 = scmp.eq.s32.totalorder %s9, 0
      %p24 = por %p22, %p23
      %p25 = scmp.ne.s32.totalorder %s17, %s19
      %p26 = scmp.eq.s32.totalorder %s14, 13
      %p27 = por %p25, %p26
      %p28 = scmp.ne.s32.totalorder %s19, %s20
      %p29 = scmp.eq.s32.totalorder %s14, 0
      %p30 = por %p28, %p29
      %p31 = scmp.ne.s32.totalorder %s19, %s20
      %p32 = scmp.eq.s32.totalorder %s15, 13
      %p33 = por %p31, %p32
      %p35 = scmp.ne.s32.totalorder %s20, %s34
      %p36 = scmp.eq.s32.totalorder %s15, 0
      %p37 = por %p35, %p36
      %s38 = ssub.s32 %s9, %s16
      %p39 = scmp.eq.s32.totalorder %s38, 0
      %s41 = sadd.s32 %s40, 1
      %s42 = scalar_select %p39, %s40, %s41
      %p45 = pneg %p39
      %p46 = scmp.eq.s32.totalorder %s9, 13
      %p47 = por %p45, %p46
      %p48 = scmp.ne.s32.totalorder %s40, %s43
      %p49 = scmp.eq.s32.totalorder %s9, 0
      %p50 = por %p48, %p49
      %p51 = scmp.ne.s32.totalorder %s40, %s43
      %p52 = scmp.eq.s32.totalorder %s14, 13
      %p53 = por %p51, %p52
      %p54 = scmp.ne.s32.totalorder %s43, %s44
      %p55 = scmp.eq.s32.totalorder %s14, 0
      %p56 = por %p54, %p55
      %p57 = scmp.ne.s32.totalorder %s43, %s44
      %p58 = scmp.eq.s32.totalorder %s15, 13
      %p59 = por %p57, %p58
      %p61 = scmp.ne.s32.totalorder %s44, %s60
      %p62 = scmp.eq.s32.totalorder %s15, 0
      %p63 = por %p61, %p62
      %s65 = sadd.s32 %s64, 1
      %p68 = scmp.eq.s32.totalorder %s9, 13
      %p69 = scmp.ne.s32.totalorder %s64, %s66
      %p70 = scmp.eq.s32.totalorder %s9, 0
      %p71 = por %p69, %p70
      %p72 = scmp.ne.s32.totalorder %s64, %s66
      %p73 = scmp.eq.s32.totalorder %s14, 13
      %p74 = por %p72, %p73
      %p75 = scmp.ne.s32.totalorder %s66, %s67
      %p76 = scmp.eq.s32.totalorder %s14, 0
      %p77 = por %p75, %p76
      %p78 = scmp.ne.s32.totalorder %s66, %s67
      %p79 = scmp.eq.s32.totalorder %s15, 13
      %p80 = por %p78, %p79
      %p82 = scmp.ne.s32.totalorder %s67, %s81
      %p83 = scmp.eq.s32.totalorder %s15, 0
      %p84 = por %p82, %p83
      %s85 = ssub.s32 %s9, %s16
      %p86 = scmp.eq.s32.totalorder %s85, 0
      %s88 = sadd.s32 %s87, 1
      %s89 = scalar_select %p86, %s87, %s88
      %p92 = pneg %p86
      %p93 = scmp.eq.s32.totalorder %s9, 13
      %p94 = por %p92, %p93
      %p95 = scmp.ne.s32.totalorder %s87, %s90
      %p96 = scmp.eq.s32.totalorder %s9, 0
      %p97 = por %p95, %p96
      %p98 = scmp.ne.s32.totalorder %s87, %s90
      %p99 = scmp.eq.s32.totalorder %s14, 13
      %p100 = por %p98, %p99
      %p101 = scmp.ne.s32.totalorder %s90, %s91
      %p102 = scmp.eq.s32.totalorder %s14, 0
      %p103 = por %p101, %p102
      %p104 = scmp.ne.s32.totalorder %s90, %s91
      %p105 = scmp.eq.s32.totalorder %s15, 13
      %p106 = por %p104, %p105
      %p108 = scmp.ne.s32.totalorder %s91, %s107
      %p109 = scmp.eq.s32.totalorder %s15, 0
      %p110 = por %p108, %p109
      %p111 = scmp.le.s32.totalorder 1, %s9
      %p112 = scmp.lt.s32.totalorder %s9, 15
      %p113 = pnand %p111, %p112
      %p114 = pneg %p113
      // Predicated region
      $region9: #{simple_cnn_forward.8} parent=5 // pred_check
        _
      $region10: #{simple_cnn_forward.8} parent=5 // pred_check_branch
        %116 = sbr.rel (%p113) target = $region12
      $region11: #{simple_cnn_forward.8} parent=5 // pred_region
        %s117 = ssub.s32 %s9, 1
        // Predicated region
        $region13: #{simple_cnn_forward.8} parent=11 // pred_check
          %p118 = pneg %p30
        $region14: #{simple_cnn_forward.8} parent=11 // pred_check_branch
          %120 = sbr.rel (%p118) target = $region16
        $region15: #{simple_cnn_forward.8} parent=11 // pred_region
          _
        $region16: #{simple_cnn_forward.8} parent=11 // pred_fallthru
          _
        // Predicated region
        $region17: #{simple_cnn_forward.8} parent=11 // pred_check
          %p121 = pneg %p77
        $region18: #{simple_cnn_forward.8} parent=11 // pred_check_branch
          %123 = sbr.rel (%p121) target = $region20
        $region19: #{simple_cnn_forward.8} parent=11 // pred_region
          _
        $region20: #{simple_cnn_forward.8} parent=11 // pred_fallthru
          _
      $region12: #{simple_cnn_forward.8} parent=5 // pred_fallthru
        _
      %p124 = scmp.lt.s32.totalorder %s9, 14
      // Predicated region
      $region21: #{simple_cnn_forward.8} parent=5 // pred_check
        %p125 = pneg %p124
      $region22: #{simple_cnn_forward.8} parent=5 // pred_check_branch
        %127 = sbr.rel (%p125) target = $region24
      $region23: #{simple_cnn_forward.8} parent=5 // pred_region
        // Predicated region
        $region25: #{simple_cnn_forward.8} parent=23 // pred_check
          %p128 = pneg %p50
        $region26: #{simple_cnn_forward.8} parent=23 // pred_check_branch
          %130 = sbr.rel (%p128) target = $region28
        $region27: #{simple_cnn_forward.8} parent=23 // pred_region
          %s131 = sand.u32 %s40, 1
          %s132 = sand.u32 %s40, 1
          %s133 = smul.addr %s132, 1280
          %s134 = scalar_lea.vmem [#allocation2], %s133
          %s135 = smul.u32 16, %s9
          %s136 = smul.addr %s135, 4
          %s137 = scalar_lea.vmem %s1, %s136
          // Predicated region
          $region29: #{simple_cnn_forward.8} parent=27 // pred_check
            _
          $region30: #{simple_cnn_forward.8} parent=27 // pred_check_branch
            %139 = sbr.rel (0) target = $region32
          $region31: #{simple_cnn_forward.8} parent=27 // pred_region
            // Predicated region
            $region33: #{simple_cnn_forward.8} parent=31 // pred_check
              _
            $region34: #{simple_cnn_forward.8} parent=31 // pred_check_branch
              %141 = sbr.rel (0) target = $region36
            $region35: #{simple_cnn_forward.8} parent=31 // pred_region
              loop: start=0, step=1, limit=1
              $region37: #{simple_cnn_forward.8} parent=35 // loop_pre_header
                _
              $region38: #{simple_cnn_forward.8} parent=35 // loop_header
                %s143 = sphi 0, %s147
                %p144 = scmp.ge.s32.totalorder %s143, 1
                %s148 = sphi %s137, %s137
                %s149 = sphi %s134, %s134
              $region39: #{simple_cnn_forward.8} parent=35 // loop_header_branch
                %146 = sbr.rel (%p144) target = $region43
              $region40: #{simple_cnn_forward.8} parent=35 // loop_body
                %v150 = vld [vmem:[%s148] sm:$0xff]
                %151 = vst [vmem:[%s149] sm:$0xff] %v150
                %v152 = vld [vmem:[%s148 + $0x8] sm:$0xff]
                %153 = vst [vmem:[%s149 + $0x8] sm:$0xff] %v152
                %v154 = vld [vmem:[%s148 + $0x10] sm:$0xff]
                %155 = vst [vmem:[%s149 + $0x10] sm:$0xff] %v154
                %v156 = vld [vmem:[%s148 + $0x18] sm:$0xff]
                %157 = vst [vmem:[%s149 + $0x18] sm:$0xff] %v156
                %v158 = vld [vmem:[%s148 + $0x20] sm:$0xff]
                %159 = vst [vmem:[%s149 + $0x20] sm:$0xff] %v158
                %v160 = vld [vmem:[%s148 + $0x28] sm:$0xff]
                %161 = vst [vmem:[%s149 + $0x28] sm:$0xff] %v160
                %v162 = vld [vmem:[%s148 + $0x30] sm:$0xff]
                %163 = vst [vmem:[%s149 + $0x30] sm:$0xff] %v162
                %v164 = vld [vmem:[%s148 + $0x38] sm:$0xff]
                %165 = vst [vmem:[%s149 + $0x38] sm:$0xff] %v164
                %v166 = vld [vmem:[%s148 + $0x380] sm:$0xff]
                %167 = vst [vmem:[%s149 + $0x40] sm:$0xff] %v166
                %v168 = vld [vmem:[%s148 + $0x388] sm:$0xff]
                %169 = vst [vmem:[%s149 + $0x48] sm:$0xff] %v168
                %v170 = vld [vmem:[%s148 + $0x390] sm:$0xff]
                %171 = vst [vmem:[%s149 + $0x50] sm:$0xff] %v170
                %v172 = vld [vmem:[%s148 + $0x398] sm:$0xff]
                %173 = vst [vmem:[%s149 + $0x58] sm:$0xff] %v172
                %v174 = vld [vmem:[%s148 + $0x3a0] sm:$0xff]
                %175 = vst [vmem:[%s149 + $0x60] sm:$0xff] %v174
                %v176 = vld [vmem:[%s148 + $0x3a8] sm:$0xff]
                %177 = vst [vmem:[%s149 + $0x68] sm:$0xff] %v176
                %v178 = vld [vmem:[%s148 + $0x3b0] sm:$0xff]
                %179 = vst [vmem:[%s149 + $0x70] sm:$0xff] %v178
                %v180 = vld [vmem:[%s148 + $0x3b8] sm:$0xff]
                %181 = vst [vmem:[%s149 + $0x78] sm:$0xff] %v180
                %v182 = vld [vmem:[%s148 + $0x700] sm:$0xff]
                %183 = vst [vmem:[%s149 + $0x80] sm:$0xff] %v182
                %v184 = vld [vmem:[%s148 + $0x708] sm:$0xff]
                %185 = vst [vmem:[%s149 + $0x88] sm:$0xff] %v184
                %v186 = vld [vmem:[%s148 + $0x710] sm:$0xff]
                %187 = vst [vmem:[%s149 + $0x90] sm:$0xff] %v186
                %v188 = vld [vmem:[%s148 + $0x718] sm:$0xff]
                %189 = vst [vmem:[%s149 + $0x98] sm:$0xff] %v188
                %v190 = vld [vmem:[%s148 + $0x720] sm:$0xff]
                %191 = vst [vmem:[%s149 + $0xa0] sm:$0xff] %v190
                %v192 = vld [vmem:[%s148 + $0x728] sm:$0xff]
                %193 = vst [vmem:[%s149 + $0xa8] sm:$0xff] %v192
                %v194 = vld [vmem:[%s148 + $0x730] sm:$0xff]
                %195 = vst [vmem:[%s149 + $0xb0] sm:$0xff] %v194
                %v196 = vld [vmem:[%s148 + $0x738] sm:$0xff]
                %197 = vst [vmem:[%s149 + $0xb8] sm:$0xff] %v196
                %v198 = vld [vmem:[%s148 + $0xa80] sm:$0xff]
                %199 = vst [vmem:[%s149 + $0xc0] sm:$0xff] %v198
                %v200 = vld [vmem:[%s148 + $0xa88] sm:$0xff]
                %201 = vst [vmem:[%s149 + $0xc8] sm:$0xff] %v200
                %v202 = vld [vmem:[%s148 + $0xa90] sm:$0xff]
                %203 = vst [vmem:[%s149 + $0xd0] sm:$0xff] %v202
                %v204 = vld [vmem:[%s148 + $0xa98] sm:$0xff]
                %205 = vst [vmem:[%s149 + $0xd8] sm:$0xff] %v204
                %v206 = vld [vmem:[%s148 + $0xaa0] sm:$0xff]
                %207 = vst [vmem:[%s149 + $0xe0] sm:$0xff] %v206
                %v208 = vld [vmem:[%s148 + $0xaa8] sm:$0xff]
                %209 = vst [vmem:[%s149 + $0xe8] sm:$0xff] %v208
                %v210 = vld [vmem:[%s148 + $0xab0] sm:$0xff]
                %211 = vst [vmem:[%s149 + $0xf0] sm:$0xff] %v210
                %v212 = vld [vmem:[%s148 + $0xab8] sm:$0xff]
                %213 = vst [vmem:[%s149 + $0xf8] sm:$0xff] %v212
                %v214 = vld [vmem:[%s148 + $0xe00] sm:$0xff]
                %215 = vst [vmem:[%s149 + $0x100] sm:$0xff] %v214
                %v216 = vld [vmem:[%s148 + $0xe08] sm:$0xff]
                %217 = vst [vmem:[%s149 + $0x108] sm:$0xff] %v216
                %v218 = vld [vmem:[%s148 + $0xe10] sm:$0xff]
                %219 = vst [vmem:[%s149 + $0x110] sm:$0xff] %v218
                %v220 = vld [vmem:[%s148 + $0xe18] sm:$0xff]
                %221 = vst [vmem:[%s149 + $0x118] sm:$0xff] %v220
                %v222 = vld [vmem:[%s148 + $0xe20] sm:$0xff]
                %223 = vst [vmem:[%s149 + $0x120] sm:$0xff] %v222
                %v224 = vld [vmem:[%s148 + $0xe28] sm:$0xff]
                %225 = vst [vmem:[%s149 + $0x128] sm:$0xff] %v224
                %v226 = vld [vmem:[%s148 + $0xe30] sm:$0xff]
                %227 = vst [vmem:[%s149 + $0x130] sm:$0xff] %v226
                %v228 = vld [vmem:[%s148 + $0xe38] sm:$0xff]
                %229 = vst [vmem:[%s149 + $0x138] sm:$0xff] %v228
                %v230 = vld [vmem:[%s148 + $0x1180] sm:$0xff]
                %231 = vst [vmem:[%s149 + $0x140] sm:$0xff] %v230
                %v232 = vld [vmem:[%s148 + $0x1188] sm:$0xff]
                %233 = vst [vmem:[%s149 + $0x148] sm:$0xff] %v232
                %v234 = vld [vmem:[%s148 + $0x1190] sm:$0xff]
                %235 = vst [vmem:[%s149 + $0x150] sm:$0xff] %v234
                %v236 = vld [vmem:[%s148 + $0x1198] sm:$0xff]
                %237 = vst [vmem:[%s149 + $0x158] sm:$0xff] %v236
                %v238 = vld [vmem:[%s148 + $0x11a0] sm:$0xff]
                %239 = vst [vmem:[%s149 + $0x160] sm:$0xff] %v238
                %v240 = vld [vmem:[%s148 + $0x11a8] sm:$0xff]
                %241 = vst [vmem:[%s149 + $0x168] sm:$0xff] %v240
                %v242 = vld [vmem:[%s148 + $0x11b0] sm:$0xff]
                %243 = vst [vmem:[%s149 + $0x170] sm:$0xff] %v242
                %v244 = vld [vmem:[%s148 + $0x11b8] sm:$0xff]
                %245 = vst [vmem:[%s149 + $0x178] sm:$0xff] %v244
                %v246 = vld [vmem:[%s148 + $0x1500] sm:$0xff]
                %247 = vst [vmem:[%s149 + $0x180] sm:$0xff] %v246
                %v248 = vld [vmem:[%s148 + $0x1508] sm:$0xff]
                %249 = vst [vmem:[%s149 + $0x188] sm:$0xff] %v248
                %v250 = vld [vmem:[%s148 + $0x1510] sm:$0xff]
                %251 = vst [vmem:[%s149 + $0x190] sm:$0xff] %v250
                %v252 = vld [vmem:[%s148 + $0x1518] sm:$0xff]
                %253 = vst [vmem:[%s149 + $0x198] sm:$0xff] %v252
                %v254 = vld [vmem:[%s148 + $0x1520] sm:$0xff]
                %255 = vst [vmem:[%s149 + $0x1a0] sm:$0xff] %v254
                %v256 = vld [vmem:[%s148 + $0x1528] sm:$0xff]
                %257 = vst [vmem:[%s149 + $0x1a8] sm:$0xff] %v256
                %v258 = vld [vmem:[%s148 + $0x1530] sm:$0xff]
                %259 = vst [vmem:[%s149 + $0x1b0] sm:$0xff] %v258
                %v260 = vld [vmem:[%s148 + $0x1538] sm:$0xff]
                %261 = vst [vmem:[%s149 + $0x1b8] sm:$0xff] %v260
                %v262 = vld [vmem:[%s148 + $0x1880] sm:$0xff]
                %263 = vst [vmem:[%s149 + $0x1c0] sm:$0xff] %v262
                %v264 = vld [vmem:[%s148 + $0x1888] sm:$0xff]
                %265 = vst [vmem:[%s149 + $0x1c8] sm:$0xff] %v264
                %v266 = vld [vmem:[%s148 + $0x1890] sm:$0xff]
                %267 = vst [vmem:[%s149 + $0x1d0] sm:$0xff] %v266
                %v268 = vld [vmem:[%s148 + $0x1898] sm:$0xff]
                %269 = vst [vmem:[%s149 + $0x1d8] sm:$0xff] %v268
                %v270 = vld [vmem:[%s148 + $0x18a0] sm:$0xff]
                %271 = vst [vmem:[%s149 + $0x1e0] sm:$0xff] %v270
                %v272 = vld [vmem:[%s148 + $0x18a8] sm:$0xff]
                %273 = vst [vmem:[%s149 + $0x1e8] sm:$0xff] %v272
                %v274 = vld [vmem:[%s148 + $0x18b0] sm:$0xff]
                %275 = vst [vmem:[%s149 + $0x1f0] sm:$0xff] %v274
                %v276 = vld [vmem:[%s148 + $0x18b8] sm:$0xff]
                %277 = vst [vmem:[%s149 + $0x1f8] sm:$0xff] %v276
                %v278 = vld [vmem:[%s148 + $0x1c00] sm:$0xff]
                %279 = vst [vmem:[%s149 + $0x200] sm:$0xff] %v278
                %v280 = vld [vmem:[%s148 + $0x1c08] sm:$0xff]
                %281 = vst [vmem:[%s149 + $0x208] sm:$0xff] %v280
                %v282 = vld [vmem:[%s148 + $0x1c10] sm:$0xff]
                %283 = vst [vmem:[%s149 + $0x210] sm:$0xff] %v282
                %v284 = vld [vmem:[%s148 + $0x1c18] sm:$0xff]
                %285 = vst [vmem:[%s149 + $0x218] sm:$0xff] %v284
                %v286 = vld [vmem:[%s148 + $0x1c20] sm:$0xff]
                %287 = vst [vmem:[%s149 + $0x220] sm:$0xff] %v286
                %v288 = vld [vmem:[%s148 + $0x1c28] sm:$0xff]
                %289 = vst [vmem:[%s149 + $0x228] sm:$0xff] %v288
                %v290 = vld [vmem:[%s148 + $0x1c30] sm:$0xff]
                %291 = vst [vmem:[%s149 + $0x230] sm:$0xff] %v290
                %v292 = vld [vmem:[%s148 + $0x1c38] sm:$0xff]
                %293 = vst [vmem:[%s149 + $0x238] sm:$0xff] %v292
                %v294 = vld [vmem:[%s148 + $0x1f80] sm:$0xff]
                %295 = vst [vmem:[%s149 + $0x240] sm:$0xff] %v294
                %v296 = vld [vmem:[%s148 + $0x1f88] sm:$0xff]
                %297 = vst [vmem:[%s149 + $0x248] sm:$0xff] %v296
                %v298 = vld [vmem:[%s148 + $0x1f90] sm:$0xff]
                %299 = vst [vmem:[%s149 + $0x250] sm:$0xff] %v298
                %v300 = vld [vmem:[%s148 + $0x1f98] sm:$0xff]
                %301 = vst [vmem:[%s149 + $0x258] sm:$0xff] %v300
                %v302 = vld [vmem:[%s148 + $0x1fa0] sm:$0xff]
                %303 = vst [vmem:[%s149 + $0x260] sm:$0xff] %v302
                %v304 = vld [vmem:[%s148 + $0x1fa8] sm:$0xff]
                %305 = vst [vmem:[%s149 + $0x268] sm:$0xff] %v304
                %v306 = vld [vmem:[%s148 + $0x1fb0] sm:$0xff]
                %307 = vst [vmem:[%s149 + $0x270] sm:$0xff] %v306
                %v308 = vld [vmem:[%s148 + $0x1fb8] sm:$0xff]
                %309 = vst [vmem:[%s149 + $0x278] sm:$0xff] %v308
                %v310 = vld [vmem:[%s148 + $0x2300] sm:$0xff]
                %311 = vst [vmem:[%s149 + $0x280] sm:$0xff] %v310
                %v312 = vld [vmem:[%s148 + $0x2308] sm:$0xff]
                %313 = vst [vmem:[%s149 + $0x288] sm:$0xff] %v312
                %v314 = vld [vmem:[%s148 + $0x2310] sm:$0xff]
                %315 = vst [vmem:[%s149 + $0x290] sm:$0xff] %v314
                %v316 = vld [vmem:[%s148 + $0x2318] sm:$0xff]
                %317 = vst [vmem:[%s149 + $0x298] sm:$0xff] %v316
                %v318 = vld [vmem:[%s148 + $0x2320] sm:$0xff]
                %319 = vst [vmem:[%s149 + $0x2a0] sm:$0xff] %v318
                %v320 = vld [vmem:[%s148 + $0x2328] sm:$0xff]
                %321 = vst [vmem:[%s149 + $0x2a8] sm:$0xff] %v320
                %v322 = vld [vmem:[%s148 + $0x2330] sm:$0xff]
                %323 = vst [vmem:[%s149 + $0x2b0] sm:$0xff] %v322
                %v324 = vld [vmem:[%s148 + $0x2338] sm:$0xff]
                %325 = vst [vmem:[%s149 + $0x2b8] sm:$0xff] %v324
                %v326 = vld [vmem:[%s148 + $0x2680] sm:$0xff]
                %327 = vst [vmem:[%s149 + $0x2c0] sm:$0xff] %v326
                %v328 = vld [vmem:[%s148 + $0x2688] sm:$0xff]
                %329 = vst [vmem:[%s149 + $0x2c8] sm:$0xff] %v328
                %v330 = vld [vmem:[%s148 + $0x2690] sm:$0xff]
                %331 = vst [vmem:[%s149 + $0x2d0] sm:$0xff] %v330
                %v332 = vld [vmem:[%s148 + $0x2698] sm:$0xff]
                %333 = vst [vmem:[%s149 + $0x2d8] sm:$0xff] %v332
                %v334 = vld [vmem:[%s148 + $0x26a0] sm:$0xff]
                %335 = vst [vmem:[%s149 + $0x2e0] sm:$0xff] %v334
                %v336 = vld [vmem:[%s148 + $0x26a8] sm:$0xff]
                %337 = vst [vmem:[%s149 + $0x2e8] sm:$0xff] %v336
                %v338 = vld [vmem:[%s148 + $0x26b0] sm:$0xff]
                %339 = vst [vmem:[%s149 + $0x2f0] sm:$0xff] %v338
                %v340 = vld [vmem:[%s148 + $0x26b8] sm:$0xff]
                %341 = vst [vmem:[%s149 + $0x2f8] sm:$0xff] %v340
                %v342 = vld [vmem:[%s148 + $0x2a00] sm:$0xff]
                %343 = vst [vmem:[%s149 + $0x300] sm:$0xff] %v342
                %v344 = vld [vmem:[%s148 + $0x2a08] sm:$0xff]
                %345 = vst [vmem:[%s149 + $0x308] sm:$0xff] %v344
                %v346 = vld [vmem:[%s148 + $0x2a10] sm:$0xff]
                %347 = vst [vmem:[%s149 + $0x310] sm:$0xff] %v346
                %v348 = vld [vmem:[%s148 + $0x2a18] sm:$0xff]
                %349 = vst [vmem:[%s149 + $0x318] sm:$0xff] %v348
                %v350 = vld [vmem:[%s148 + $0x2a20] sm:$0xff]
                %351 = vst [vmem:[%s149 + $0x320] sm:$0xff] %v350
                %v352 = vld [vmem:[%s148 + $0x2a28] sm:$0xff]
                %353 = vst [vmem:[%s149 + $0x328] sm:$0xff] %v352
                %v354 = vld [vmem:[%s148 + $0x2a30] sm:$0xff]
                %355 = vst [vmem:[%s149 + $0x330] sm:$0xff] %v354
                %v356 = vld [vmem:[%s148 + $0x2a38] sm:$0xff]
                %357 = vst [vmem:[%s149 + $0x338] sm:$0xff] %v356
                %v358 = vld [vmem:[%s148 + $0x2d80] sm:$0xff]
                %359 = vst [vmem:[%s149 + $0x340] sm:$0xff] %v358
                %v360 = vld [vmem:[%s148 + $0x2d88] sm:$0xff]
                %361 = vst [vmem:[%s149 + $0x348] sm:$0xff] %v360
                %v362 = vld [vmem:[%s148 + $0x2d90] sm:$0xff]
                %363 = vst [vmem:[%s149 + $0x350] sm:$0xff] %v362
                %v364 = vld [vmem:[%s148 + $0x2d98] sm:$0xff]
                %365 = vst [vmem:[%s149 + $0x358] sm:$0xff] %v364
                %v366 = vld [vmem:[%s148 + $0x2da0] sm:$0xff]
                %367 = vst [vmem:[%s149 + $0x360] sm:$0xff] %v366
                %v368 = vld [vmem:[%s148 + $0x2da8] sm:$0xff]
                %369 = vst [vmem:[%s149 + $0x368] sm:$0xff] %v368
                %v370 = vld [vmem:[%s148 + $0x2db0] sm:$0xff]
                %371 = vst [vmem:[%s149 + $0x370] sm:$0xff] %v370
                %v372 = vld [vmem:[%s148 + $0x2db8] sm:$0xff]
                %373 = vst [vmem:[%s149 + $0x378] sm:$0xff] %v372
                %v374 = vld [vmem:[%s148 + $0x3100] sm:$0xff]
                %375 = vst [vmem:[%s149 + $0x380] sm:$0xff] %v374
                %v376 = vld [vmem:[%s148 + $0x3108] sm:$0xff]
                %377 = vst [vmem:[%s149 + $0x388] sm:$0xff] %v376
                %v378 = vld [vmem:[%s148 + $0x3110] sm:$0xff]
                %379 = vst [vmem:[%s149 + $0x390] sm:$0xff] %v378
                %v380 = vld [vmem:[%s148 + $0x3118] sm:$0xff]
                %381 = vst [vmem:[%s149 + $0x398] sm:$0xff] %v380
                %v382 = vld [vmem:[%s148 + $0x3120] sm:$0xff]
                %383 = vst [vmem:[%s149 + $0x3a0] sm:$0xff] %v382
                %v384 = vld [vmem:[%s148 + $0x3128] sm:$0xff]
                %385 = vst [vmem:[%s149 + $0x3a8] sm:$0xff] %v384
                %v386 = vld [vmem:[%s148 + $0x3130] sm:$0xff]
                %387 = vst [vmem:[%s149 + $0x3b0] sm:$0xff] %v386
                %v388 = vld [vmem:[%s148 + $0x3138] sm:$0xff]
                %389 = vst [vmem:[%s149 + $0x3b8] sm:$0xff] %v388
                %v390 = vld [vmem:[%s148 + $0x3480] sm:$0xff]
                %391 = vst [vmem:[%s149 + $0x3c0] sm:$0xff] %v390
                %v392 = vld [vmem:[%s148 + $0x3488] sm:$0xff]
                %393 = vst [vmem:[%s149 + $0x3c8] sm:$0xff] %v392
                %v394 = vld [vmem:[%s148 + $0x3490] sm:$0xff]
                %395 = vst [vmem:[%s149 + $0x3d0] sm:$0xff] %v394
                %v396 = vld [vmem:[%s148 + $0x3498] sm:$0xff]
                %397 = vst [vmem:[%s149 + $0x3d8] sm:$0xff] %v396
                %v398 = vld [vmem:[%s148 + $0x34a0] sm:$0xff]
                %399 = vst [vmem:[%s149 + $0x3e0] sm:$0xff] %v398
                %v400 = vld [vmem:[%s148 + $0x34a8] sm:$0xff]
                %401 = vst [vmem:[%s149 + $0x3e8] sm:$0xff] %v400
                %v402 = vld [vmem:[%s148 + $0x34b0] sm:$0xff]
                %403 = vst [vmem:[%s149 + $0x3f0] sm:$0xff] %v402
                %v404 = vld [vmem:[%s148 + $0x34b8] sm:$0xff]
                %405 = vst [vmem:[%s149 + $0x3f8] sm:$0xff] %v404
                %v406 = vld [vmem:[%s148 + $0x3800] sm:$0xff]
                %407 = vst [vmem:[%s149 + $0x400] sm:$0xff] %v406
                %v408 = vld [vmem:[%s148 + $0x3808] sm:$0xff]
                %409 = vst [vmem:[%s149 + $0x408] sm:$0xff] %v408
                %v410 = vld [vmem:[%s148 + $0x3810] sm:$0xff]
                %411 = vst [vmem:[%s149 + $0x410] sm:$0xff] %v410
                %v412 = vld [vmem:[%s148 + $0x3818] sm:$0xff]
                %413 = vst [vmem:[%s149 + $0x418] sm:$0xff] %v412
                %v414 = vld [vmem:[%s148 + $0x3820] sm:$0xff]
                %415 = vst [vmem:[%s149 + $0x420] sm:$0xff] %v414
                %v416 = vld [vmem:[%s148 + $0x3828] sm:$0xff]
                %417 = vst [vmem:[%s149 + $0x428] sm:$0xff] %v416
                %v418 = vld [vmem:[%s148 + $0x3830] sm:$0xff]
                %419 = vst [vmem:[%s149 + $0x430] sm:$0xff] %v418
                %v420 = vld [vmem:[%s148 + $0x3838] sm:$0xff]
                %421 = vst [vmem:[%s149 + $0x438] sm:$0xff] %v420
                %v422 = vld [vmem:[%s148 + $0x3b80] sm:$0xff]
                %423 = vst [vmem:[%s149 + $0x440] sm:$0xff] %v422
                %v424 = vld [vmem:[%s148 + $0x3b88] sm:$0xff]
                %425 = vst [vmem:[%s149 + $0x448] sm:$0xff] %v424
                %v426 = vld [vmem:[%s148 + $0x3b90] sm:$0xff]
                %427 = vst [vmem:[%s149 + $0x450] sm:$0xff] %v426
                %v428 = vld [vmem:[%s148 + $0x3b98] sm:$0xff]
                %429 = vst [vmem:[%s149 + $0x458] sm:$0xff] %v428
                %v430 = vld [vmem:[%s148 + $0x3ba0] sm:$0xff]
                %431 = vst [vmem:[%s149 + $0x460] sm:$0xff] %v430
                %v432 = vld [vmem:[%s148 + $0x3ba8] sm:$0xff]
                %433 = vst [vmem:[%s149 + $0x468] sm:$0xff] %v432
                %v434 = vld [vmem:[%s148 + $0x3bb0] sm:$0xff]
                %435 = vst [vmem:[%s149 + $0x470] sm:$0xff] %v434
                %v436 = vld [vmem:[%s148 + $0x3bb8] sm:$0xff]
                %437 = vst [vmem:[%s149 + $0x478] sm:$0xff] %v436
                %v438 = vld [vmem:[%s148 + $0x3f00] sm:$0xff]
                %439 = vst [vmem:[%s149 + $0x480] sm:$0xff] %v438
                %v440 = vld [vmem:[%s148 + $0x3f08] sm:$0xff]
                %441 = vst [vmem:[%s149 + $0x488] sm:$0xff] %v440
                %v442 = vld [vmem:[%s148 + $0x3f10] sm:$0xff]
                %443 = vst [vmem:[%s149 + $0x490] sm:$0xff] %v442
                %v444 = vld [vmem:[%s148 + $0x3f18] sm:$0xff]
                %445 = vst [vmem:[%s149 + $0x498] sm:$0xff] %v444
                %v446 = vld [vmem:[%s148 + $0x3f20] sm:$0xff]
                %447 = vst [vmem:[%s149 + $0x4a0] sm:$0xff] %v446
                %v448 = vld [vmem:[%s148 + $0x3f28] sm:$0xff]
                %449 = vst [vmem:[%s149 + $0x4a8] sm:$0xff] %v448
                %v450 = vld [vmem:[%s148 + $0x3f30] sm:$0xff]
                %451 = vst [vmem:[%s149 + $0x4b0] sm:$0xff] %v450
                %v452 = vld [vmem:[%s148 + $0x3f38] sm:$0xff]
                %453 = vst [vmem:[%s149 + $0x4b8] sm:$0xff] %v452
                %v454 = vld [vmem:[%s148 + $0x4280] sm:$0xff]
                %455 = vst [vmem:[%s149 + $0x4c0] sm:$0xff] %v454
                %v456 = vld [vmem:[%s148 + $0x4288] sm:$0xff]
                %457 = vst [vmem:[%s149 + $0x4c8] sm:$0xff] %v456
                %v458 = vld [vmem:[%s148 + $0x4290] sm:$0xff]
                %459 = vst [vmem:[%s149 + $0x4d0] sm:$0xff] %v458
                %v460 = vld [vmem:[%s148 + $0x4298] sm:$0xff]
                %461 = vst [vmem:[%s149 + $0x4d8] sm:$0xff] %v460
                %v462 = vld [vmem:[%s148 + $0x42a0] sm:$0xff]
                %463 = vst [vmem:[%s149 + $0x4e0] sm:$0xff] %v462
                %v464 = vld [vmem:[%s148 + $0x42a8] sm:$0xff]
                %465 = vst [vmem:[%s149 + $0x4e8] sm:$0xff] %v464
                %v466 = vld [vmem:[%s148 + $0x42b0] sm:$0xff]
                %467 = vst [vmem:[%s149 + $0x4f0] sm:$0xff] %v466
                %v468 = vld [vmem:[%s148 + $0x42b8] sm:$0xff]
                %469 = vst [vmem:[%s149 + $0x4f8] sm:$0xff] %v468
              $region41: #{simple_cnn_forward.8} parent=35 // loop_footer
                %s147 = sadd.s32 1, %s143
              $region42: #{simple_cnn_forward.8} parent=35 // loop_footer_branch
                %142 = sbr.rel target = $region38
              $region43: #{simple_cnn_forward.8} parent=35 // loop_exit
                _
            $region36: #{simple_cnn_forward.8} parent=31 // pred_fallthru
              _
            // Predicated region
            $region44: #{simple_cnn_forward.8} parent=31 // pred_check
              _
            $region45: #{simple_cnn_forward.8} parent=31 // pred_check_branch
              %471 = sbr.rel target = $region47
            $region46: #{simple_cnn_forward.8} parent=31 // pred_region
              _
            $region47: #{simple_cnn_forward.8} parent=31 // pred_fallthru
              _
          $region32: #{simple_cnn_forward.8} parent=27 // pred_fallthru
            _
          %472 = vnop
        $region28: #{simple_cnn_forward.8} parent=23 // pred_fallthru
          _
      $region24: #{simple_cnn_forward.8} parent=5 // pred_fallthru
        _
      %p473 = scmp.le.s32.totalorder 1, %s9
      %p474 = scmp.lt.s32.totalorder %s9, 15
      %p475 = pnand %p473, %p474
      %p476 = pneg %p475
      // Predicated region
      $region48: #{simple_cnn_forward.8} parent=5 // pred_check
        _
      $region49: #{simple_cnn_forward.8} parent=5 // pred_check_branch
        %478 = sbr.rel (%p475) target = $region51
      $region50: #{simple_cnn_forward.8} parent=5 // pred_region
        %s479 = ssub.s32 %s9, 1
        %s480 = sand.u32 %s43, 1
        %s481 = sand.u32 %s43, 1
        %s482 = smul.addr %s481, 1280
        %s483 = scalar_lea.vmem [#allocation2], %s482
        // Predicated region
        $region52: #{simple_cnn_forward.8} parent=50 // pred_check
          %p484 = pneg %p56
        $region53: #{simple_cnn_forward.8} parent=50 // pred_check_branch
          %486 = sbr.rel (%p484) target = $region55
        $region54: #{simple_cnn_forward.8} parent=50 // pred_region
          _
        $region55: #{simple_cnn_forward.8} parent=50 // pred_fallthru
          _
        %p487 = pneg %p30
        %p488 = pneg %p27
        %s489 = sand.u32 %s43, 1
        %s490 = sand.u32 %s43, 1
        %s491 = smul.addr %s490, 1280
        %s492 = scalar_lea.vmem [#allocation2], %s491
        %p493 = pneg %p56
        %p494 = pneg %p53
        %p495 = pneg %p77
        %p496 = pneg %p74
        %p497 = pneg %p103
        %p498 = pneg %p100
        %s499 = sand.u32 %s90, 1
        %s500 = sand.u32 %s90, 1
        %s501 = smul.addr %s500, 128
        %s502 = scalar_lea.vmem [#allocation3], %s501
        %s503 = smul.u32 16, %s14
        %s504 = smul.u32 16, %s14
        %v506 = vld [vmem:[%s0] sm:$0xff]
        %v507 = vld [vmem:[%s0 + $0x8] sm:$0xff]
        %v508 = vld [vmem:[%s483] sm:$0xff]
        %v509 = vld [vmem:[%s483 + $0x8] sm:$0xff]
        %v510 = vld [vmem:[%s483 + $0x10] sm:$0xff]
        %v511 = vld [vmem:[%s483 + $0x18] sm:$0xff]
        %v512 = vld [vmem:[%s483 + $0x20] sm:$0xff]
        %v513 = vld [vmem:[%s483 + $0x28] sm:$0xff]
        %v514 = vld [vmem:[%s483 + $0x30] sm:$0xff]
        %v515 = vld [vmem:[%s483 + $0x38] sm:$0xff]
        %v516 = vld [vmem:[%s483 + $0x40] sm:$0xff]
        %v517 = vld [vmem:[%s483 + $0x48] sm:$0xff]
        %v518 = vld [vmem:[%s483 + $0x50] sm:$0xff]
        %v519 = vld [vmem:[%s483 + $0x58] sm:$0xff]
        %v520 = vld [vmem:[%s483 + $0x60] sm:$0xff]
        %v521 = vld [vmem:[%s483 + $0x68] sm:$0xff]
        %v522 = vld [vmem:[%s483 + $0x70] sm:$0xff]
        %v523 = vld [vmem:[%s483 + $0x78] sm:$0xff]
        %v524 = vld [vmem:[%s483 + $0x80] sm:$0xff]
        %v525 = vld [vmem:[%s483 + $0x88] sm:$0xff]
        %v526 = vld [vmem:[%s483 + $0x90] sm:$0xff]
        %v527 = vld [vmem:[%s483 + $0x98] sm:$0xff]
        %v528 = vld [vmem:[%s483 + $0xa0] sm:$0xff]
        %v529 = vld [vmem:[%s483 + $0xa8] sm:$0xff]
        %v530 = vld [vmem:[%s483 + $0xb0] sm:$0xff]
        %v531 = vld [vmem:[%s483 + $0xb8] sm:$0xff]
        %v532 = vld [vmem:[%s483 + $0xc0] sm:$0xff]
        %v533 = vld [vmem:[%s483 + $0xc8] sm:$0xff]
        %v534 = vld [vmem:[%s483 + $0xd0] sm:$0xff]
        %v535 = vld [vmem:[%s483 + $0xd8] sm:$0xff]
        %v536 = vld [vmem:[%s483 + $0xe0] sm:$0xff]
        %v537 = vld [vmem:[%s483 + $0xe8] sm:$0xff]
        %v538 = vld [vmem:[%s483 + $0xf0] sm:$0xff]
        %v539 = vld [vmem:[%s483 + $0xf8] sm:$0xff]
        %v540 = vld [vmem:[%s483 + $0x100] sm:$0xff]
        %v541 = vld [vmem:[%s483 + $0x108] sm:$0xff]
        %v542 = vld [vmem:[%s483 + $0x110] sm:$0xff]
        %v543 = vld [vmem:[%s483 + $0x118] sm:$0xff]
        %v544 = vld [vmem:[%s483 + $0x120] sm:$0xff]
        %v545 = vld [vmem:[%s483 + $0x128] sm:$0xff]
        %v546 = vld [vmem:[%s483 + $0x130] sm:$0xff]
        %v547 = vld [vmem:[%s483 + $0x138] sm:$0xff]
        %v548 = vld [vmem:[%s483 + $0x140] sm:$0xff]
        %v549 = vld [vmem:[%s483 + $0x148] sm:$0xff]
        %v550 = vld [vmem:[%s483 + $0x150] sm:$0xff]
        %v551 = vld [vmem:[%s483 + $0x158] sm:$0xff]
        %v552 = vld [vmem:[%s483 + $0x160] sm:$0xff]
        %v553 = vld [vmem:[%s483 + $0x168] sm:$0xff]
        %v554 = vld [vmem:[%s483 + $0x170] sm:$0xff]
        %v555 = vld [vmem:[%s483 + $0x178] sm:$0xff]
        %v556 = vld [vmem:[%s483 + $0x180] sm:$0xff]
        %v557 = vld [vmem:[%s483 + $0x188] sm:$0xff]
        %v558 = vld [vmem:[%s483 + $0x190] sm:$0xff]
        %v559 = vld [vmem:[%s483 + $0x198] sm:$0xff]
        %v560 = vld [vmem:[%s483 + $0x1a0] sm:$0xff]
        %v561 = vld [vmem:[%s483 + $0x1a8] sm:$0xff]
        %v562 = vld [vmem:[%s483 + $0x1b0] sm:$0xff]
        %v563 = vld [vmem:[%s483 + $0x1b8] sm:$0xff]
        %v564 = vld [vmem:[%s483 + $0x1c0] sm:$0xff]
        %v565 = vld [vmem:[%s483 + $0x1c8] sm:$0xff]
        %v566 = vld [vmem:[%s483 + $0x1d0] sm:$0xff]
        %v567 = vld [vmem:[%s483 + $0x1d8] sm:$0xff]
        %v568 = vld [vmem:[%s483 + $0x1e0] sm:$0xff]
        %v569 = vld [vmem:[%s483 + $0x1e8] sm:$0xff]
        %v570 = vld [vmem:[%s483 + $0x1f0] sm:$0xff]
        %v571 = vld [vmem:[%s483 + $0x1f8] sm:$0xff]
        %v572 = vld [vmem:[%s483 + $0x200] sm:$0xff]
        %v573 = vld [vmem:[%s483 + $0x208] sm:$0xff]
        %v574 = vld [vmem:[%s483 + $0x210] sm:$0xff]
        %v575 = vld [vmem:[%s483 + $0x218] sm:$0xff]
        %v576 = vld [vmem:[%s483 + $0x220] sm:$0xff]
        %v577 = vld [vmem:[%s483 + $0x228] sm:$0xff]
        %v578 = vld [vmem:[%s483 + $0x230] sm:$0xff]
        %v579 = vld [vmem:[%s483 + $0x238] sm:$0xff]
        %v580 = vld [vmem:[%s483 + $0x240] sm:$0xff]
        %v581 = vld [vmem:[%s483 + $0x248] sm:$0xff]
        %v582 = vld [vmem:[%s483 + $0x250] sm:$0xff]
        %v583 = vld [vmem:[%s483 + $0x258] sm:$0xff]
        %v584 = vld [vmem:[%s483 + $0x260] sm:$0xff]
        %v585 = vld [vmem:[%s483 + $0x268] sm:$0xff]
        %v586 = vld [vmem:[%s483 + $0x270] sm:$0xff]
        %v587 = vld [vmem:[%s483 + $0x278] sm:$0xff]
        %v588 = vld [vmem:[%s483 + $0x280] sm:$0xff]
        %v589 = vld [vmem:[%s483 + $0x288] sm:$0xff]
        %v590 = vld [vmem:[%s483 + $0x290] sm:$0xff]
        %v591 = vld [vmem:[%s483 + $0x298] sm:$0xff]
        %v592 = vld [vmem:[%s483 + $0x2a0] sm:$0xff]
        %v593 = vld [vmem:[%s483 + $0x2a8] sm:$0xff]
        %v594 = vld [vmem:[%s483 + $0x2b0] sm:$0xff]
        %v595 = vld [vmem:[%s483 + $0x2b8] sm:$0xff]
        %v596 = vld [vmem:[%s483 + $0x2c0] sm:$0xff]
        %v597 = vld [vmem:[%s483 + $0x2c8] sm:$0xff]
        %v598 = vld [vmem:[%s483 + $0x2d0] sm:$0xff]
        %v599 = vld [vmem:[%s483 + $0x2d8] sm:$0xff]
        %v600 = vld [vmem:[%s483 + $0x2e0] sm:$0xff]
        %v601 = vld [vmem:[%s483 + $0x2e8] sm:$0xff]
        %v602 = vld [vmem:[%s483 + $0x2f0] sm:$0xff]
        %v603 = vld [vmem:[%s483 + $0x2f8] sm:$0xff]
        %v604 = vld [vmem:[%s483 + $0x300] sm:$0xff]
        %v605 = vld [vmem:[%s483 + $0x308] sm:$0xff]
        %v606 = vld [vmem:[%s483 + $0x310] sm:$0xff]
        %v607 = vld [vmem:[%s483 + $0x318] sm:$0xff]
        %v608 = vld [vmem:[%s483 + $0x320] sm:$0xff]
        %v609 = vld [vmem:[%s483 + $0x328] sm:$0xff]
        %v610 = vld [vmem:[%s483 + $0x330] sm:$0xff]
        %v611 = vld [vmem:[%s483 + $0x338] sm:$0xff]
        %v612 = vld [vmem:[%s483 + $0x340] sm:$0xff]
        %v613 = vld [vmem:[%s483 + $0x348] sm:$0xff]
        %v614 = vld [vmem:[%s483 + $0x350] sm:$0xff]
        %v615 = vld [vmem:[%s483 + $0x358] sm:$0xff]
        %v616 = vld [vmem:[%s483 + $0x360] sm:$0xff]
        %v617 = vld [vmem:[%s483 + $0x368] sm:$0xff]
        %v618 = vld [vmem:[%s483 + $0x370] sm:$0xff]
        %v619 = vld [vmem:[%s483 + $0x378] sm:$0xff]
        %v620 = vld [vmem:[%s483 + $0x380] sm:$0xff]
        %v621 = vld [vmem:[%s483 + $0x388] sm:$0xff]
        %v622 = vld [vmem:[%s483 + $0x390] sm:$0xff]
        %v623 = vld [vmem:[%s483 + $0x398] sm:$0xff]
        %v624 = vld [vmem:[%s483 + $0x3a0] sm:$0xff]
        %v625 = vld [vmem:[%s483 + $0x3a8] sm:$0xff]
        %v626 = vld [vmem:[%s483 + $0x3b0] sm:$0xff]
        %v627 = vld [vmem:[%s483 + $0x3b8] sm:$0xff]
        %v628 = vld [vmem:[%s483 + $0x3c0] sm:$0xff]
        %v629 = vld [vmem:[%s483 + $0x3c8] sm:$0xff]
        %v630 = vld [vmem:[%s483 + $0x3d0] sm:$0xff]
        %v631 = vld [vmem:[%s483 + $0x3d8] sm:$0xff]
        %v632 = vld [vmem:[%s483 + $0x3e0] sm:$0xff]
        %v633 = vld [vmem:[%s483 + $0x3e8] sm:$0xff]
        %v634 = vld [vmem:[%s483 + $0x3f0] sm:$0xff]
        %v635 = vld [vmem:[%s483 + $0x3f8] sm:$0xff]
        %v636 = vld [vmem:[%s483 + $0x400] sm:$0xff]
        %v637 = vld [vmem:[%s483 + $0x408] sm:$0xff]
        %v638 = vld [vmem:[%s483 + $0x410] sm:$0xff]
        %v639 = vld [vmem:[%s483 + $0x418] sm:$0xff]
        %v640 = vld [vmem:[%s483 + $0x420] sm:$0xff]
        %v641 = vld [vmem:[%s483 + $0x428] sm:$0xff]
        %v642 = vld [vmem:[%s483 + $0x430] sm:$0xff]
        %v643 = vld [vmem:[%s483 + $0x438] sm:$0xff]
        %v644 = vld [vmem:[%s483 + $0x440] sm:$0xff]
        %v645 = vld [vmem:[%s483 + $0x448] sm:$0xff]
        %v646 = vld [vmem:[%s483 + $0x450] sm:$0xff]
        %v647 = vld [vmem:[%s483 + $0x458] sm:$0xff]
        %v648 = vld [vmem:[%s483 + $0x460] sm:$0xff]
        %v649 = vld [vmem:[%s483 + $0x468] sm:$0xff]
        %v650 = vld [vmem:[%s483 + $0x470] sm:$0xff]
        %v651 = vld [vmem:[%s483 + $0x478] sm:$0xff]
        %v652 = vld [vmem:[%s483 + $0x480] sm:$0xff]
        %v653 = vld [vmem:[%s483 + $0x488] sm:$0xff]
        %v654 = vld [vmem:[%s483 + $0x490] sm:$0xff]
        %v655 = vld [vmem:[%s483 + $0x498] sm:$0xff]
        %v656 = vld [vmem:[%s483 + $0x4a0] sm:$0xff]
        %v657 = vld [vmem:[%s483 + $0x4a8] sm:$0xff]
        %v658 = vld [vmem:[%s483 + $0x4b0] sm:$0xff]
        %v659 = vld [vmem:[%s483 + $0x4b8] sm:$0xff]
        %v660 = vld [vmem:[%s483 + $0x4c0] sm:$0xff]
        %v661 = vld [vmem:[%s483 + $0x4c8] sm:$0xff]
        %v662 = vld [vmem:[%s483 + $0x4d0] sm:$0xff]
        %v663 = vld [vmem:[%s483 + $0x4d8] sm:$0xff]
        %v664 = vld [vmem:[%s483 + $0x4e0] sm:$0xff]
        %v665 = vld [vmem:[%s483 + $0x4e8] sm:$0xff]
        %v666 = vld [vmem:[%s483 + $0x4f0] sm:$0xff]
        %v667 = vld [vmem:[%s483 + $0x4f8] sm:$0xff]
        %v668 = vld [vmem:[%s2] sm:$0xff]
        %v669 = vld [vmem:[%s2 + $0x8] sm:$0xff]
        %671 = vset.pattern.permute.xlu0 0
        %672 = vperm.xlu0 %671, %v668
        %v673 = vpop.permute.xlu0 %672
        %676 = vset.pattern.permute.xlu0 0
        %677 = vperm.xlu0 %676, %v669
        %v678 = vpop.permute.xlu0 %677
        %v682 = vunpack.c.l.b16 %v506
        %v683 = vunpack.c.h.b16 %v506
        %v684 = vunpack.c.l.b16 %v507
        %v685 = vunpack.c.h.b16 %v507
        %v686 = vpack.c.b16 %v684, %v682
        %v687 = vpack.c.b16 %v685, %v683
        %v849 = vunpack.c.l.b16 %v508
        %v850 = vunpack.c.h.b16 %v508
        %v851 = vunpack.c.l.b16 %v509
        %v852 = vunpack.c.h.b16 %v509
        %v853 = vunpack.c.l.b16 %v510
        %v854 = vunpack.c.h.b16 %v510
        %v855 = vunpack.c.l.b16 %v511
        %v856 = vunpack.c.h.b16 %v511
        %v857 = vunpack.c.l.b16 %v512
        %v858 = vunpack.c.h.b16 %v512
        %v859 = vunpack.c.l.b16 %v513
        %v860 = vunpack.c.h.b16 %v513
        %v861 = vunpack.c.l.b16 %v514
        %v862 = vunpack.c.h.b16 %v514
        %v863 = vunpack.c.l.b16 %v515
        %v864 = vunpack.c.h.b16 %v515
        %v865 = vunpack.c.l.b16 %v516
        %v866 = vunpack.c.h.b16 %v516
        %v867 = vunpack.c.l.b16 %v517
        %v868 = vunpack.c.h.b16 %v517
        %v869 = vunpack.c.l.b16 %v518
        %v870 = vunpack.c.h.b16 %v518
        %v871 = vunpack.c.l.b16 %v519
        %v872 = vunpack.c.h.b16 %v519
        %v873 = vunpack.c.l.b16 %v520
        %v874 = vunpack.c.h.b16 %v520
        %v875 = vunpack.c.l.b16 %v521
        %v876 = vunpack.c.h.b16 %v521
        %v877 = vunpack.c.l.b16 %v522
        %v878 = vunpack.c.h.b16 %v522
        %v879 = vunpack.c.l.b16 %v523
        %v880 = vunpack.c.h.b16 %v523
        %v881 = vunpack.c.l.b16 %v524
        %v882 = vunpack.c.h.b16 %v524
        %v883 = vunpack.c.l.b16 %v525
        %v884 = vunpack.c.h.b16 %v525
        %v885 = vunpack.c.l.b16 %v526
        %v886 = vunpack.c.h.b16 %v526
        %v887 = vunpack.c.l.b16 %v527
        %v888 = vunpack.c.h.b16 %v527
        %v889 = vunpack.c.l.b16 %v528
        %v890 = vunpack.c.h.b16 %v528
        %v891 = vunpack.c.l.b16 %v529
        %v892 = vunpack.c.h.b16 %v529
        %v893 = vunpack.c.l.b16 %v530
        %v894 = vunpack.c.h.b16 %v530
        %v895 = vunpack.c.l.b16 %v531
        %v896 = vunpack.c.h.b16 %v531
        %v897 = vunpack.c.l.b16 %v532
        %v898 = vunpack.c.h.b16 %v532
        %v899 = vunpack.c.l.b16 %v533
        %v900 = vunpack.c.h.b16 %v533
        %v901 = vunpack.c.l.b16 %v534
        %v902 = vunpack.c.h.b16 %v534
        %v903 = vunpack.c.l.b16 %v535
        %v904 = vunpack.c.h.b16 %v535
        %v905 = vunpack.c.l.b16 %v536
        %v906 = vunpack.c.h.b16 %v536
        %v907 = vunpack.c.l.b16 %v537
        %v908 = vunpack.c.h.b16 %v537
        %v909 = vunpack.c.l.b16 %v538
        %v910 = vunpack.c.h.b16 %v538
        %v911 = vunpack.c.l.b16 %v539
        %v912 = vunpack.c.h.b16 %v539
        %v913 = vunpack.c.l.b16 %v540
        %v914 = vunpack.c.h.b16 %v540
        %v915 = vunpack.c.l.b16 %v541
        %v916 = vunpack.c.h.b16 %v541
        %v917 = vunpack.c.l.b16 %v542
        %v918 = vunpack.c.h.b16 %v542
        %v919 = vunpack.c.l.b16 %v543
        %v920 = vunpack.c.h.b16 %v543
        %v921 = vunpack.c.l.b16 %v544
        %v922 = vunpack.c.h.b16 %v544
        %v923 = vunpack.c.l.b16 %v545
        %v924 = vunpack.c.h.b16 %v545
        %v925 = vunpack.c.l.b16 %v546
        %v926 = vunpack.c.h.b16 %v546
        %v927 = vunpack.c.l.b16 %v547
        %v928 = vunpack.c.h.b16 %v547
        %v929 = vunpack.c.l.b16 %v548
        %v930 = vunpack.c.h.b16 %v548
        %v931 = vunpack.c.l.b16 %v549
        %v932 = vunpack.c.h.b16 %v549
        %v933 = vunpack.c.l.b16 %v550
        %v934 = vunpack.c.h.b16 %v550
        %v935 = vunpack.c.l.b16 %v551
        %v936 = vunpack.c.h.b16 %v551
        %v937 = vunpack.c.l.b16 %v552
        %v938 = vunpack.c.h.b16 %v552
        %v939 = vunpack.c.l.b16 %v553
        %v940 = vunpack.c.h.b16 %v553
        %v941 = vunpack.c.l.b16 %v554
        %v942 = vunpack.c.h.b16 %v554
        %v943 = vunpack.c.l.b16 %v555
        %v944 = vunpack.c.h.b16 %v555
        %v945 = vunpack.c.l.b16 %v556
        %v946 = vunpack.c.h.b16 %v556
        %v947 = vunpack.c.l.b16 %v557
        %v948 = vunpack.c.h.b16 %v557
        %v949 = vunpack.c.l.b16 %v558
        %v950 = vunpack.c.h.b16 %v558
        %v951 = vunpack.c.l.b16 %v559
        %v952 = vunpack.c.h.b16 %v559
        %v953 = vunpack.c.l.b16 %v560
        %v954 = vunpack.c.h.b16 %v560
        %v955 = vunpack.c.l.b16 %v561
        %v956 = vunpack.c.h.b16 %v561
        %v957 = vunpack.c.l.b16 %v562
        %v958 = vunpack.c.h.b16 %v562
        %v959 = vunpack.c.l.b16 %v563
        %v960 = vunpack.c.h.b16 %v563
        %v961 = vunpack.c.l.b16 %v564
        %v962 = vunpack.c.h.b16 %v564
        %v963 = vunpack.c.l.b16 %v565
        %v964 = vunpack.c.h.b16 %v565
        %v965 = vunpack.c.l.b16 %v566
        %v966 = vunpack.c.h.b16 %v566
        %v967 = vunpack.c.l.b16 %v567
        %v968 = vunpack.c.h.b16 %v567
        %v969 = vunpack.c.l.b16 %v568
        %v970 = vunpack.c.h.b16 %v568
        %v971 = vunpack.c.l.b16 %v569
        %v972 = vunpack.c.h.b16 %v569
        %v973 = vunpack.c.l.b16 %v570
        %v974 = vunpack.c.h.b16 %v570
        %v975 = vunpack.c.l.b16 %v571
        %v976 = vunpack.c.h.b16 %v571
        %v977 = vunpack.c.l.b16 %v572
        %v978 = vunpack.c.h.b16 %v572
        %v979 = vunpack.c.l.b16 %v573
        %v980 = vunpack.c.h.b16 %v573
        %v981 = vunpack.c.l.b16 %v574
        %v982 = vunpack.c.h.b16 %v574
        %v983 = vunpack.c.l.b16 %v575
        %v984 = vunpack.c.h.b16 %v575
        %v985 = vunpack.c.l.b16 %v576
        %v986 = vunpack.c.h.b16 %v576
        %v987 = vunpack.c.l.b16 %v577
        %v988 = vunpack.c.h.b16 %v577
        %v989 = vunpack.c.l.b16 %v578
        %v990 = vunpack.c.h.b16 %v578
        %v991 = vunpack.c.l.b16 %v579
        %v992 = vunpack.c.h.b16 %v579
        %v993 = vunpack.c.l.b16 %v580
        %v994 = vunpack.c.h.b16 %v580
        %v995 = vunpack.c.l.b16 %v581
        %v996 = vunpack.c.h.b16 %v581
        %v997 = vunpack.c.l.b16 %v582
        %v998 = vunpack.c.h.b16 %v582
        %v999 = vunpack.c.l.b16 %v583
        %v1000 = vunpack.c.h.b16 %v583
        %v1001 = vunpack.c.l.b16 %v584
        %v1002 = vunpack.c.h.b16 %v584
        %v1003 = vunpack.c.l.b16 %v585
        %v1004 = vunpack.c.h.b16 %v585
        %v1005 = vunpack.c.l.b16 %v586
        %v1006 = vunpack.c.h.b16 %v586
        %v1007 = vunpack.c.l.b16 %v587
        %v1008 = vunpack.c.h.b16 %v587
        %v1009 = vunpack.c.l.b16 %v588
        %v1010 = vunpack.c.h.b16 %v588
        %v1011 = vunpack.c.l.b16 %v589
        %v1012 = vunpack.c.h.b16 %v589
        %v1013 = vunpack.c.l.b16 %v590
        %v1014 = vunpack.c.h.b16 %v590
        %v1015 = vunpack.c.l.b16 %v591
        %v1016 = vunpack.c.h.b16 %v591
        %v1017 = vunpack.c.l.b16 %v592
        %v1018 = vunpack.c.h.b16 %v592
        %v1019 = vunpack.c.l.b16 %v593
        %v1020 = vunpack.c.h.b16 %v593
        %v1021 = vunpack.c.l.b16 %v594
        %v1022 = vunpack.c.h.b16 %v594
        %v1023 = vunpack.c.l.b16 %v595
        %v1024 = vunpack.c.h.b16 %v595
        %v1025 = vunpack.c.l.b16 %v596
        %v1026 = vunpack.c.h.b16 %v596
        %v1027 = vunpack.c.l.b16 %v597
        %v1028 = vunpack.c.h.b16 %v597
        %v1029 = vunpack.c.l.b16 %v598
        %v1030 = vunpack.c.h.b16 %v598
        %v1031 = vunpack.c.l.b16 %v599
        %v1032 = vunpack.c.h.b16 %v599
        %v1033 = vunpack.c.l.b16 %v600
        %v1034 = vunpack.c.h.b16 %v600
        %v1035 = vunpack.c.l.b16 %v601
        %v1036 = vunpack.c.h.b16 %v601
        %v1037 = vunpack.c.l.b16 %v602
        %v1038 = vunpack.c.h.b16 %v602
        %v1039 = vunpack.c.l.b16 %v603
        %v1040 = vunpack.c.h.b16 %v603
        %v1041 = vunpack.c.l.b16 %v604
        %v1042 = vunpack.c.h.b16 %v604
        %v1043 = vunpack.c.l.b16 %v605
        %v1044 = vunpack.c.h.b16 %v605
        %v1045 = vunpack.c.l.b16 %v606
        %v1046 = vunpack.c.h.b16 %v606
        %v1047 = vunpack.c.l.b16 %v607
        %v1048 = vunpack.c.h.b16 %v607
        %v1049 = vunpack.c.l.b16 %v608
        %v1050 = vunpack.c.h.b16 %v608
        %v1051 = vunpack.c.l.b16 %v609
        %v1052 = vunpack.c.h.b16 %v609
        %v1053 = vunpack.c.l.b16 %v610
        %v1054 = vunpack.c.h.b16 %v610
        %v1055 = vunpack.c.l.b16 %v611
        %v1056 = vunpack.c.h.b16 %v611
        %v1057 = vunpack.c.l.b16 %v612
        %v1058 = vunpack.c.h.b16 %v612
        %v1059 = vunpack.c.l.b16 %v613
        %v1060 = vunpack.c.h.b16 %v613
        %v1061 = vunpack.c.l.b16 %v614
        %v1062 = vunpack.c.h.b16 %v614
        %v1063 = vunpack.c.l.b16 %v615
        %v1064 = vunpack.c.h.b16 %v615
        %v1065 = vunpack.c.l.b16 %v616
        %v1066 = vunpack.c.h.b16 %v616
        %v1067 = vunpack.c.l.b16 %v617
        %v1068 = vunpack.c.h.b16 %v617
        %v1069 = vunpack.c.l.b16 %v618
        %v1070 = vunpack.c.h.b16 %v618
        %v1071 = vunpack.c.l.b16 %v619
        %v1072 = vunpack.c.h.b16 %v619
        %v1073 = vunpack.c.l.b16 %v620
        %v1074 = vunpack.c.h.b16 %v620
        %v1075 = vunpack.c.l.b16 %v621
        %v1076 = vunpack.c.h.b16 %v621
        %v1077 = vunpack.c.l.b16 %v622
        %v1078 = vunpack.c.h.b16 %v622
        %v1079 = vunpack.c.l.b16 %v623
        %v1080 = vunpack.c.h.b16 %v623
        %v1081 = vunpack.c.l.b16 %v624
        %v1082 = vunpack.c.h.b16 %v624
        %v1083 = vunpack.c.l.b16 %v625
        %v1084 = vunpack.c.h.b16 %v625
        %v1085 = vunpack.c.l.b16 %v626
        %v1086 = vunpack.c.h.b16 %v626
        %v1087 = vunpack.c.l.b16 %v627
        %v1088 = vunpack.c.h.b16 %v627
        %v1089 = vunpack.c.l.b16 %v628
        %v1090 = vunpack.c.h.b16 %v628
        %v1091 = vunpack.c.l.b16 %v629
        %v1092 = vunpack.c.h.b16 %v629
        %v1093 = vunpack.c.l.b16 %v630
        %v1094 = vunpack.c.h.b16 %v630
        %v1095 = vunpack.c.l.b16 %v631
        %v1096 = vunpack.c.h.b16 %v631
        %v1097 = vunpack.c.l.b16 %v632
        %v1098 = vunpack.c.h.b16 %v632
        %v1099 = vunpack.c.l.b16 %v633
        %v1100 = vunpack.c.h.b16 %v633
        %v1101 = vunpack.c.l.b16 %v634
        %v1102 = vunpack.c.h.b16 %v634
        %v1103 = vunpack.c.l.b16 %v635
        %v1104 = vunpack.c.h.b16 %v635
        %v1105 = vunpack.c.l.b16 %v636
        %v1106 = vunpack.c.h.b16 %v636
        %v1107 = vunpack.c.l.b16 %v637
        %v1108 = vunpack.c.h.b16 %v637
        %v1109 = vunpack.c.l.b16 %v638
        %v1110 = vunpack.c.h.b16 %v638
        %v1111 = vunpack.c.l.b16 %v639
        %v1112 = vunpack.c.h.b16 %v639
        %v1113 = vunpack.c.l.b16 %v640
        %v1114 = vunpack.c.h.b16 %v640
        %v1115 = vunpack.c.l.b16 %v641
        %v1116 = vunpack.c.h.b16 %v641
        %v1117 = vunpack.c.l.b16 %v642
        %v1118 = vunpack.c.h.b16 %v642
        %v1119 = vunpack.c.l.b16 %v643
        %v1120 = vunpack.c.h.b16 %v643
        %v1121 = vunpack.c.l.b16 %v644
        %v1122 = vunpack.c.h.b16 %v644
        %v1123 = vunpack.c.l.b16 %v645
        %v1124 = vunpack.c.h.b16 %v645
        %v1125 = vunpack.c.l.b16 %v646
        %v1126 = vunpack.c.h.b16 %v646
        %v1127 = vunpack.c.l.b16 %v647
        %v1128 = vunpack.c.h.b16 %v647
        %v1129 = vunpack.c.l.b16 %v648
        %v1130 = vunpack.c.h.b16 %v648
        %v1131 = vunpack.c.l.b16 %v649
        %v1132 = vunpack.c.h.b16 %v649
        %v1133 = vunpack.c.l.b16 %v650
        %v1134 = vunpack.c.h.b16 %v650
        %v1135 = vunpack.c.l.b16 %v651
        %v1136 = vunpack.c.h.b16 %v651
        %v1137 = vunpack.c.l.b16 %v652
        %v1138 = vunpack.c.h.b16 %v652
        %v1139 = vunpack.c.l.b16 %v653
        %v1140 = vunpack.c.h.b16 %v653
        %v1141 = vunpack.c.l.b16 %v654
        %v1142 = vunpack.c.h.b16 %v654
        %v1143 = vunpack.c.l.b16 %v655
        %v1144 = vunpack.c.h.b16 %v655
        %v1145 = vunpack.c.l.b16 %v656
        %v1146 = vunpack.c.h.b16 %v656
        %v1147 = vunpack.c.l.b16 %v657
        %v1148 = vunpack.c.h.b16 %v657
        %v1149 = vunpack.c.l.b16 %v658
        %v1150 = vunpack.c.h.b16 %v658
        %v1151 = vunpack.c.l.b16 %v659
        %v1152 = vunpack.c.h.b16 %v659
        %v1153 = vunpack.c.l.b16 %v660
        %v1154 = vunpack.c.h.b16 %v660
        %v1155 = vunpack.c.l.b16 %v661
        %v1156 = vunpack.c.h.b16 %v661
        %v1157 = vunpack.c.l.b16 %v662
        %v1158 = vunpack.c.h.b16 %v662
        %v1159 = vunpack.c.l.b16 %v663
        %v1160 = vunpack.c.h.b16 %v663
        %v1161 = vunpack.c.l.b16 %v664
        %v1162 = vunpack.c.h.b16 %v664
        %v1163 = vunpack.c.l.b16 %v665
        %v1164 = vunpack.c.h.b16 %v665
        %v1165 = vunpack.c.l.b16 %v666
        %v1166 = vunpack.c.h.b16 %v666
        %v1167 = vunpack.c.l.b16 %v667
        %v1168 = vunpack.c.h.b16 %v667
        %v1169 = vpack.c.b16 %v865, %v849
        %v1170 = vpack.c.b16 %v866, %v850
        %v1171 = vpack.c.b16 %v867, %v851
        %v1172 = vpack.c.b16 %v868, %v852
        %v1173 = vpack.c.b16 %v869, %v853
        %v1174 = vpack.c.b16 %v870, %v854
        %v1175 = vpack.c.b16 %v871, %v855
        %v1176 = vpack.c.b16 %v872, %v856
        %v1177 = vpack.c.b16 %v873, %v857
        %v1178 = vpack.c.b16 %v874, %v858
        %v1179 = vpack.c.b16 %v875, %v859
        %v1180 = vpack.c.b16 %v876, %v860
        %v1181 = vpack.c.b16 %v877, %v861
        %v1182 = vpack.c.b16 %v878, %v862
        %v1183 = vpack.c.b16 %v879, %v863
        %v1184 = vpack.c.b16 %v880, %v864
        %v1185 = vpack.c.b16 %v897, %v881
        %v1186 = vpack.c.b16 %v898, %v882
        %v1187 = vpack.c.b16 %v899, %v883
        %v1188 = vpack.c.b16 %v900, %v884
        %v1189 = vpack.c.b16 %v901, %v885
        %v1190 = vpack.c.b16 %v902, %v886
        %v1191 = vpack.c.b16 %v903, %v887
        %v1192 = vpack.c.b16 %v904, %v888
        %v1193 = vpack.c.b16 %v905, %v889
        %v1194 = vpack.c.b16 %v906, %v890
        %v1195 = vpack.c.b16 %v907, %v891
        %v1196 = vpack.c.b16 %v908, %v892
        %v1197 = vpack.c.b16 %v909, %v893
        %v1198 = vpack.c.b16 %v910, %v894
        %v1199 = vpack.c.b16 %v911, %v895
        %v1200 = vpack.c.b16 %v912, %v896
        %v1201 = vpack.c.b16 %v929, %v913
        %v1202 = vpack.c.b16 %v930, %v914
        %v1203 = vpack.c.b16 %v931, %v915
        %v1204 = vpack.c.b16 %v932, %v916
        %v1205 = vpack.c.b16 %v933, %v917
        %v1206 = vpack.c.b16 %v934, %v918
        %v1207 = vpack.c.b16 %v935, %v919
        %v1208 = vpack.c.b16 %v936, %v920
        %v1209 = vpack.c.b16 %v937, %v921
        %v1210 = vpack.c.b16 %v938, %v922
        %v1211 = vpack.c.b16 %v939, %v923
        %v1212 = vpack.c.b16 %v940, %v924
        %v1213 = vpack.c.b16 %v941, %v925
        %v1214 = vpack.c.b16 %v942, %v926
        %v1215 = vpack.c.b16 %v943, %v927
        %v1216 = vpack.c.b16 %v944, %v928
        %v1217 = vpack.c.b16 %v961, %v945
        %v1218 = vpack.c.b16 %v962, %v946
        %v1219 = vpack.c.b16 %v963, %v947
        %v1220 = vpack.c.b16 %v964, %v948
        %v1221 = vpack.c.b16 %v965, %v949
        %v1222 = vpack.c.b16 %v966, %v950
        %v1223 = vpack.c.b16 %v967, %v951
        %v1224 = vpack.c.b16 %v968, %v952
        %v1225 = vpack.c.b16 %v969, %v953
        %v1226 = vpack.c.b16 %v970, %v954
        %v1227 = vpack.c.b16 %v971, %v955
        %v1228 = vpack.c.b16 %v972, %v956
        %v1229 = vpack.c.b16 %v973, %v957
        %v1230 = vpack.c.b16 %v974, %v958
        %v1231 = vpack.c.b16 %v975, %v959
        %v1232 = vpack.c.b16 %v976, %v960
        %v1233 = vpack.c.b16 %v993, %v977
        %v1234 = vpack.c.b16 %v994, %v978
        %v1235 = vpack.c.b16 %v995, %v979
        %v1236 = vpack.c.b16 %v996, %v980
        %v1237 = vpack.c.b16 %v997, %v981
        %v1238 = vpack.c.b16 %v998, %v982
        %v1239 = vpack.c.b16 %v999, %v983
        %v1240 = vpack.c.b16 %v1000, %v984
        %v1241 = vpack.c.b16 %v1001, %v985
        %v1242 = vpack.c.b16 %v1002, %v986
        %v1243 = vpack.c.b16 %v1003, %v987
        %v1244 = vpack.c.b16 %v1004, %v988
        %v1245 = vpack.c.b16 %v1005, %v989
        %v1246 = vpack.c.b16 %v1006, %v990
        %v1247 = vpack.c.b16 %v1007, %v991
        %v1248 = vpack.c.b16 %v1008, %v992
        %v1249 = vpack.c.b16 %v1025, %v1009
        %v1250 = vpack.c.b16 %v1026, %v1010
        %v1251 = vpack.c.b16 %v1027, %v1011
        %v1252 = vpack.c.b16 %v1028, %v1012
        %v1253 = vpack.c.b16 %v1029, %v1013
        %v1254 = vpack.c.b16 %v1030, %v1014
        %v1255 = vpack.c.b16 %v1031, %v1015
        %v1256 = vpack.c.b16 %v1032, %v1016
        %v1257 = vpack.c.b16 %v1033, %v1017
        %v1258 = vpack.c.b16 %v1034, %v1018
        %v1259 = vpack.c.b16 %v1035, %v1019
        %v1260 = vpack.c.b16 %v1036, %v1020
        %v1261 = vpack.c.b16 %v1037, %v1021
        %v1262 = vpack.c.b16 %v1038, %v1022
        %v1263 = vpack.c.b16 %v1039, %v1023
        %v1264 = vpack.c.b16 %v1040, %v1024
        %v1265 = vpack.c.b16 %v1057, %v1041
        %v1266 = vpack.c.b16 %v1058, %v1042
        %v1267 = vpack.c.b16 %v1059, %v1043
        %v1268 = vpack.c.b16 %v1060, %v1044
        %v1269 = vpack.c.b16 %v1061, %v1045
        %v1270 = vpack.c.b16 %v1062, %v1046
        %v1271 = vpack.c.b16 %v1063, %v1047
        %v1272 = vpack.c.b16 %v1064, %v1048
        %v1273 = vpack.c.b16 %v1065, %v1049
        %v1274 = vpack.c.b16 %v1066, %v1050
        %v1275 = vpack.c.b16 %v1067, %v1051
        %v1276 = vpack.c.b16 %v1068, %v1052
        %v1277 = vpack.c.b16 %v1069, %v1053
        %v1278 = vpack.c.b16 %v1070, %v1054
        %v1279 = vpack.c.b16 %v1071, %v1055
        %v1280 = vpack.c.b16 %v1072, %v1056
        %v1281 = vpack.c.b16 %v1089, %v1073
        %v1282 = vpack.c.b16 %v1090, %v1074
        %v1283 = vpack.c.b16 %v1091, %v1075
        %v1284 = vpack.c.b16 %v1092, %v1076
        %v1285 = vpack.c.b16 %v1093, %v1077
        %v1286 = vpack.c.b16 %v1094, %v1078
        %v1287 = vpack.c.b16 %v1095, %v1079
        %v1288 = vpack.c.b16 %v1096, %v1080
        %v1289 = vpack.c.b16 %v1097, %v1081
        %v1290 = vpack.c.b16 %v1098, %v1082
        %v1291 = vpack.c.b16 %v1099, %v1083
        %v1292 = vpack.c.b16 %v1100, %v1084
        %v1293 = vpack.c.b16 %v1101, %v1085
        %v1294 = vpack.c.b16 %v1102, %v1086
        %v1295 = vpack.c.b16 %v1103, %v1087
        %v1296 = vpack.c.b16 %v1104, %v1088
        %v1297 = vpack.c.b16 %v1121, %v1105
        %v1298 = vpack.c.b16 %v1122, %v1106
        %v1299 = vpack.c.b16 %v1123, %v1107
        %v1300 = vpack.c.b16 %v1124, %v1108
        %v1301 = vpack.c.b16 %v1125, %v1109
        %v1302 = vpack.c.b16 %v1126, %v1110
        %v1303 = vpack.c.b16 %v1127, %v1111
        %v1304 = vpack.c.b16 %v1128, %v1112
        %v1305 = vpack.c.b16 %v1129, %v1113
        %v1306 = vpack.c.b16 %v1130, %v1114
        %v1307 = vpack.c.b16 %v1131, %v1115
        %v1308 = vpack.c.b16 %v1132, %v1116
        %v1309 = vpack.c.b16 %v1133, %v1117
        %v1310 = vpack.c.b16 %v1134, %v1118
        %v1311 = vpack.c.b16 %v1135, %v1119
        %v1312 = vpack.c.b16 %v1136, %v1120
        %v1313 = vpack.c.b16 %v1153, %v1137
        %v1314 = vpack.c.b16 %v1154, %v1138
        %v1315 = vpack.c.b16 %v1155, %v1139
        %v1316 = vpack.c.b16 %v1156, %v1140
        %v1317 = vpack.c.b16 %v1157, %v1141
        %v1318 = vpack.c.b16 %v1158, %v1142
        %v1319 = vpack.c.b16 %v1159, %v1143
        %v1320 = vpack.c.b16 %v1160, %v1144
        %v1321 = vpack.c.b16 %v1161, %v1145
        %v1322 = vpack.c.b16 %v1162, %v1146
        %v1323 = vpack.c.b16 %v1163, %v1147
        %v1324 = vpack.c.b16 %v1164, %v1148
        %v1325 = vpack.c.b16 %v1165, %v1149
        %v1326 = vpack.c.b16 %v1166, %v1150
        %v1327 = vpack.c.b16 %v1167, %v1151
        %v1328 = vpack.c.b16 %v1168, %v1152
        %vm1489 = vcmask 261120
        %v1491 = vsel %vm1489, %v687, 0
        %1493 = vmatprep.subr.bf16.mxu0 %v1282
        %1494 = vmatpush1.bf16.msra.mxu0 %v1281
        %1495 = vmatprep.subr.bf16.mxu0 %v1266
        %1496 = vmatpush1.bf16.msra.mxu0 %v1265
        %1497 = vmatprep.subr.bf16.mxu0 %v1250
        %1498 = vmatpush1.bf16.msra.mxu0 %v1249
        %1499 = vmatprep.subr.bf16.mxu0 %v1234
        %1500 = vmatpush1.bf16.msra.mxu0 %v1233
        %1501 = vmatprep.subr.bf16.mxu0 %v1218
        %1502 = vmatpush1.bf16.msra.mxu0 %v1217
        %1503 = vmatprep.subr.bf16.mxu0 %v1202
        %1504 = vmatpush1.bf16.msra.mxu0 %v1201
        %1505 = vmatprep.subr.bf16.mxu0 %v1186
        %1506 = vmatpush1.bf16.msra.mxu0 %v1185
        %1507 = vmatprep.subr.bf16.mxu0 %v1170
        %1508 = vmatpush1.bf16.msra.mxu0 %v1169
        %1509 = vmatprep.subr.bf16.mxu0 0
        %1510 = vmatpush2.bf16.msra.mxu0 0
        %1511 = vmatprep.subr.bf16.mxu0 0
        %1512 = vmatpush2.bf16.msra.mxu0 0
        %1513 = vmatprep.subr.bf16.mxu0 0
        %1514 = vmatpush2.bf16.msra.mxu0 0
        %1515 = vmatprep.subr.bf16.mxu0 0
        %1516 = vmatpush2.bf16.msra.mxu0 0
        %1517 = vmatprep.subr.bf16.mxu0 0
        %1518 = vmatpush2.bf16.msra.mxu0 0
        %1519 = vmatprep.subr.bf16.mxu0 0
        %1520 = vmatpush2.bf16.msra.mxu0 0
        %1521 = vmatprep.subr.bf16.mxu0 %v1314
        %1522 = vmatpush2.bf16.msra.mxu0 %v1313
        %1523 = vmatprep.subr.bf16.mxu0 %v1298
        %1524 = vmatpush2.bf16.msra.mxu0 %v1297
        %1525 = vmatprep.mubr.bf16.mxu0 %v1491
        %1526 = vmatmul.mubr.bf16.gmra.mxu0 %v686
        %v1527 = vpop.f32.mrf.mxu0
        %v1528 = vadd.f32 %v673, %v1527
        %v1529 = vpop.f32.mrf.mxu0
        %v1530 = vadd.f32 %v673, %v1529
        %v1531 = vpop.f32.mrf.mxu0
        %v1532 = vadd.f32 %v678, %v1531
        %v1533 = vpop.f32.mrf.mxu0
        %v1534 = vadd.f32 %v678, %v1533
        %1535 = vdwg.mxu0
        %1536 = vmatprep.subr.bf16.mxu0 %v1284
        %1537 = vmatpush1.bf16.msra.mxu0 %v1283
        %1538 = vmatprep.subr.bf16.mxu0 %v1268
        %1539 = vmatpush1.bf16.msra.mxu0 %v1267
        %1540 = vmatprep.subr.bf16.mxu0 %v1252
        %1541 = vmatpush1.bf16.msra.mxu0 %v1251
        %1542 = vmatprep.subr.bf16.mxu0 %v1236
        %1543 = vmatpush1.bf16.msra.mxu0 %v1235
        %1544 = vmatprep.subr.bf16.mxu0 %v1220
        %1545 = vmatpush1.bf16.msra.mxu0 %v1219
        %1546 = vmatprep.subr.bf16.mxu0 %v1204
        %1547 = vmatpush1.bf16.msra.mxu0 %v1203
        %1548 = vmatprep.subr.bf16.mxu0 %v1188
        %1549 = vmatpush1.bf16.msra.mxu0 %v1187
        %1550 = vmatprep.subr.bf16.mxu0 %v1172
        %1551 = vmatpush1.bf16.msra.mxu0 %v1171
        %1552 = vmatprep.subr.bf16.mxu0 0
        %1553 = vmatpush2.bf16.msra.mxu0 0
        %1554 = vmatprep.subr.bf16.mxu0 0
        %1555 = vmatpush2.bf16.msra.mxu0 0
        %1556 = vmatprep.subr.bf16.mxu0 0
        %1557 = vmatpush2.bf16.msra.mxu0 0
        %1558 = vmatprep.subr.bf16.mxu0 0
        %1559 = vmatpush2.bf16.msra.mxu0 0
        %1560 = vmatprep.subr.bf16.mxu0 0
        %1561 = vmatpush2.bf16.msra.mxu0 0
        %1562 = vmatprep.subr.bf16.mxu0 0
        %1563 = vmatpush2.bf16.msra.mxu0 0
        %1564 = vmatprep.subr.bf16.mxu0 %v1316
        %1565 = vmatpush2.bf16.msra.mxu0 %v1315
        %1566 = vmatprep.subr.bf16.mxu0 %v1300
        %1567 = vmatpush2.bf16.msra.mxu0 %v1299
        %1568 = vmatprep.mubr.bf16.mxu0 %v1491
        %1569 = vmatmul.mubr.bf16.gmra.mxu0 %v686
        %v1570 = vpop.f32.mrf.mxu0
        %v1571 = vadd.f32 %v673, %v1570
        %v1572 = vpop.f32.mrf.mxu0
        %v1573 = vadd.f32 %v673, %v1572
        %v1574 = vpop.f32.mrf.mxu0
        %v1575 = vadd.f32 %v678, %v1574
        %v1576 = vpop.f32.mrf.mxu0
        %v1577 = vadd.f32 %v678, %v1576
        %1578 = vdwg.mxu0
        %1579 = vmatprep.subr.bf16.mxu0 %v1286
        %1580 = vmatpush1.bf16.msra.mxu0 %v1285
        %1581 = vmatprep.subr.bf16.mxu0 %v1270
        %1582 = vmatpush1.bf16.msra.mxu0 %v1269
        %1583 = vmatprep.subr.bf16.mxu0 %v1254
        %1584 = vmatpush1.bf16.msra.mxu0 %v1253
        %1585 = vmatprep.subr.bf16.mxu0 %v1238
        %1586 = vmatpush1.bf16.msra.mxu0 %v1237
        %1587 = vmatprep.subr.bf16.mxu0 %v1222
        %1588 = vmatpush1.bf16.msra.mxu0 %v1221
        %1589 = vmatprep.subr.bf16.mxu0 %v1206
        %1590 = vmatpush1.bf16.msra.mxu0 %v1205
        %1591 = vmatprep.subr.bf16.mxu0 %v1190
        %1592 = vmatpush1.bf16.msra.mxu0 %v1189
        %1593 = vmatprep.subr.bf16.mxu0 %v1174
        %1594 = vmatpush1.bf16.msra.mxu0 %v1173
        %1595 = vmatprep.subr.bf16.mxu0 0
        %1596 = vmatpush2.bf16.msra.mxu0 0
        %1597 = vmatprep.subr.bf16.mxu0 0
        %1598 = vmatpush2.bf16.msra.mxu0 0
        %1599 = vmatprep.subr.bf16.mxu0 0
        %1600 = vmatpush2.bf16.msra.mxu0 0
        %1601 = vmatprep.subr.bf16.mxu0 0
        %1602 = vmatpush2.bf16.msra.mxu0 0
        %1603 = vmatprep.subr.bf16.mxu0 0
        %1604 = vmatpush2.bf16.msra.mxu0 0
        %1605 = vmatprep.subr.bf16.mxu0 0
        %1606 = vmatpush2.bf16.msra.mxu0 0
        %1607 = vmatprep.subr.bf16.mxu0 %v1318
        %1608 = vmatpush2.bf16.msra.mxu0 %v1317
        %1609 = vmatprep.subr.bf16.mxu0 %v1302
        %1610 = vmatpush2.bf16.msra.mxu0 %v1301
        %1611 = vmatprep.mubr.bf16.mxu0 %v1491
        %1612 = vmatmul.mubr.bf16.gmra.mxu0 %v686
        %v1613 = vpop.f32.mrf.mxu0
        %v1614 = vadd.f32 %v673, %v1613
        %v1615 = vpop.f32.mrf.mxu0
        %v1616 = vadd.f32 %v673, %v1615
        %v1617 = vpop.f32.mrf.mxu0
        %v1618 = vadd.f32 %v678, %v1617
        %v1619 = vpop.f32.mrf.mxu0
        %v1620 = vadd.f32 %v678, %v1619
        %1621 = vdwg.mxu0
        %1622 = vmatprep.subr.bf16.mxu0 %v1288
        %1623 = vmatpush1.bf16.msra.mxu0 %v1287
        %1624 = vmatprep.subr.bf16.mxu0 %v1272
        %1625 = vmatpush1.bf16.msra.mxu0 %v1271
        %1626 = vmatprep.subr.bf16.mxu0 %v1256
        %1627 = vmatpush1.bf16.msra.mxu0 %v1255
        %1628 = vmatprep.subr.bf16.mxu0 %v1240
        %1629 = vmatpush1.bf16.msra.mxu0 %v1239
        %1630 = vmatprep.subr.bf16.mxu0 %v1224
        %1631 = vmatpush1.bf16.msra.mxu0 %v1223
        %1632 = vmatprep.subr.bf16.mxu0 %v1208
        %1633 = vmatpush1.bf16.msra.mxu0 %v1207
        %1634 = vmatprep.subr.bf16.mxu0 %v1192
        %1635 = vmatpush1.bf16.msra.mxu0 %v1191
        %1636 = vmatprep.subr.bf16.mxu0 %v1176
        %1637 = vmatpush1.bf16.msra.mxu0 %v1175
        %1638 = vmatprep.subr.bf16.mxu0 0
        %1639 = vmatpush2.bf16.msra.mxu0 0
        %1640 = vmatprep.subr.bf16.mxu0 0
        %1641 = vmatpush2.bf16.msra.mxu0 0
        %1642 = vmatprep.subr.bf16.mxu0 0
        %1643 = vmatpush2.bf16.msra.mxu0 0
        %1644 = vmatprep.subr.bf16.mxu0 0
        %1645 = vmatpush2.bf16.msra.mxu0 0
        %1646 = vmatprep.subr.bf16.mxu0 0
        %1647 = vmatpush2.bf16.msra.mxu0 0
        %1648 = vmatprep.subr.bf16.mxu0 0
        %1649 = vmatpush2.bf16.msra.mxu0 0
        %1650 = vmatprep.subr.bf16.mxu0 %v1320
        %1651 = vmatpush2.bf16.msra.mxu0 %v1319
        %1652 = vmatprep.subr.bf16.mxu0 %v1304
        %1653 = vmatpush2.bf16.msra.mxu0 %v1303
        %1654 = vmatprep.mubr.bf16.mxu0 %v1491
        %1655 = vmatmul.mubr.bf16.gmra.mxu0 %v686
        %v1656 = vpop.f32.mrf.mxu0
        %v1657 = vadd.f32 %v673, %v1656
        %v1658 = vpop.f32.mrf.mxu0
        %v1659 = vadd.f32 %v673, %v1658
        %v1660 = vpop.f32.mrf.mxu0
        %v1661 = vadd.f32 %v678, %v1660
        %v1662 = vpop.f32.mrf.mxu0
        %v1663 = vadd.f32 %v678, %v1662
        %1664 = vdwg.mxu0
        %1665 = vmatprep.subr.bf16.mxu0 %v1290
        %1666 = vmatpush1.bf16.msra.mxu0 %v1289
        %1667 = vmatprep.subr.bf16.mxu0 %v1274
        %1668 = vmatpush1.bf16.msra.mxu0 %v1273
        %1669 = vmatprep.subr.bf16.mxu0 %v1258
        %1670 = vmatpush1.bf16.msra.mxu0 %v1257
        %1671 = vmatprep.subr.bf16.mxu0 %v1242
        %1672 = vmatpush1.bf16.msra.mxu0 %v1241
        %1673 = vmatprep.subr.bf16.mxu0 %v1226
        %1674 = vmatpush1.bf16.msra.mxu0 %v1225
        %1675 = vmatprep.subr.bf16.mxu0 %v1210
        %1676 = vmatpush1.bf16.msra.mxu0 %v1209
        %1677 = vmatprep.subr.bf16.mxu0 %v1194
        %1678 = vmatpush1.bf16.msra.mxu0 %v1193
        %1679 = vmatprep.subr.bf16.mxu0 %v1178
        %1680 = vmatpush1.bf16.msra.mxu0 %v1177
        %1681 = vmatprep.subr.bf16.mxu0 0
        %1682 = vmatpush2.bf16.msra.mxu0 0
        %1683 = vmatprep.subr.bf16.mxu0 0
        %1684 = vmatpush2.bf16.msra.mxu0 0
        %1685 = vmatprep.subr.bf16.mxu0 0
        %1686 = vmatpush2.bf16.msra.mxu0 0
        %1687 = vmatprep.subr.bf16.mxu0 0
        %1688 = vmatpush2.bf16.msra.mxu0 0
        %1689 = vmatprep.subr.bf16.mxu0 0
        %1690 = vmatpush2.bf16.msra.mxu0 0
        %1691 = vmatprep.subr.bf16.mxu0 0
        %1692 = vmatpush2.bf16.msra.mxu0 0
        %1693 = vmatprep.subr.bf16.mxu0 %v1322
        %1694 = vmatpush2.bf16.msra.mxu0 %v1321
        %1695 = vmatprep.subr.bf16.mxu0 %v1306
        %1696 = vmatpush2.bf16.msra.mxu0 %v1305
        %1697 = vmatprep.mubr.bf16.mxu0 %v1491
        %1698 = vmatmul.mubr.bf16.gmra.mxu0 %v686
        %v1699 = vpop.f32.mrf.mxu0
        %v1700 = vadd.f32 %v673, %v1699
        %v1701 = vpop.f32.mrf.mxu0
        %v1702 = vadd.f32 %v673, %v1701
        %v1703 = vpop.f32.mrf.mxu0
        %v1704 = vadd.f32 %v678, %v1703
        %v1705 = vpop.f32.mrf.mxu0
        %v1706 = vadd.f32 %v678, %v1705
        %1707 = vdwg.mxu0
        %1708 = vmatprep.subr.bf16.mxu0 %v1292
        %1709 = vmatpush1.bf16.msra.mxu0 %v1291
        %1710 = vmatprep.subr.bf16.mxu0 %v1276
        %1711 = vmatpush1.bf16.msra.mxu0 %v1275
        %1712 = vmatprep.subr.bf16.mxu0 %v1260
        %1713 = vmatpush1.bf16.msra.mxu0 %v1259
        %1714 = vmatprep.subr.bf16.mxu0 %v1244
        %1715 = vmatpush1.bf16.msra.mxu0 %v1243
        %1716 = vmatprep.subr.bf16.mxu0 %v1228
        %1717 = vmatpush1.bf16.msra.mxu0 %v1227
        %1718 = vmatprep.subr.bf16.mxu0 %v1212
        %1719 = vmatpush1.bf16.msra.mxu0 %v1211
        %1720 = vmatprep.subr.bf16.mxu0 %v1196
        %1721 = vmatpush1.bf16.msra.mxu0 %v1195
        %1722 = vmatprep.subr.bf16.mxu0 %v1180
        %1723 = vmatpush1.bf16.msra.mxu0 %v1179
        %1724 = vmatprep.subr.bf16.mxu0 0
        %1725 = vmatpush2.bf16.msra.mxu0 0
        %1726 = vmatprep.subr.bf16.mxu0 0
        %1727 = vmatpush2.bf16.msra.mxu0 0
        %1728 = vmatprep.subr.bf16.mxu0 0
        %1729 = vmatpush2.bf16.msra.mxu0 0
        %1730 = vmatprep.subr.bf16.mxu0 0
        %1731 = vmatpush2.bf16.msra.mxu0 0
        %1732 = vmatprep.subr.bf16.mxu0 0
        %1733 = vmatpush2.bf16.msra.mxu0 0
        %1734 = vmatprep.subr.bf16.mxu0 0
        %1735 = vmatpush2.bf16.msra.mxu0 0
        %1736 = vmatprep.subr.bf16.mxu0 %v1324
        %1737 = vmatpush2.bf16.msra.mxu0 %v1323
        %1738 = vmatprep.subr.bf16.mxu0 %v1308
        %1739 = vmatpush2.bf16.msra.mxu0 %v1307
        %1740 = vmatprep.mubr.bf16.mxu0 %v1491
        %1741 = vmatmul.mubr.bf16.gmra.mxu0 %v686
        %v1742 = vpop.f32.mrf.mxu0
        %v1743 = vadd.f32 %v673, %v1742
        %v1744 = vpop.f32.mrf.mxu0
        %v1745 = vadd.f32 %v673, %v1744
        %v1746 = vpop.f32.mrf.mxu0
        %v1747 = vadd.f32 %v678, %v1746
        %v1748 = vpop.f32.mrf.mxu0
        %v1749 = vadd.f32 %v678, %v1748
        %1750 = vdwg.mxu0
        %1751 = vmatprep.subr.bf16.mxu0 %v1294
        %1752 = vmatpush1.bf16.msra.mxu0 %v1293
        %1753 = vmatprep.subr.bf16.mxu0 %v1278
        %1754 = vmatpush1.bf16.msra.mxu0 %v1277
        %1755 = vmatprep.subr.bf16.mxu0 %v1262
        %1756 = vmatpush1.bf16.msra.mxu0 %v1261
        %1757 = vmatprep.subr.bf16.mxu0 %v1246
        %1758 = vmatpush1.bf16.msra.mxu0 %v1245
        %1759 = vmatprep.subr.bf16.mxu0 %v1230
        %1760 = vmatpush1.bf16.msra.mxu0 %v1229
        %1761 = vmatprep.subr.bf16.mxu0 %v1214
        %1762 = vmatpush1.bf16.msra.mxu0 %v1213
        %1763 = vmatprep.subr.bf16.mxu0 %v1198
        %1764 = vmatpush1.bf16.msra.mxu0 %v1197
        %1765 = vmatprep.subr.bf16.mxu0 %v1182
        %1766 = vmatpush1.bf16.msra.mxu0 %v1181
        %1767 = vmatprep.subr.bf16.mxu0 0
        %1768 = vmatpush2.bf16.msra.mxu0 0
        %1769 = vmatprep.subr.bf16.mxu0 0
        %1770 = vmatpush2.bf16.msra.mxu0 0
        %1771 = vmatprep.subr.bf16.mxu0 0
        %1772 = vmatpush2.bf16.msra.mxu0 0
        %1773 = vmatprep.subr.bf16.mxu0 0
        %1774 = vmatpush2.bf16.msra.mxu0 0
        %1775 = vmatprep.subr.bf16.mxu0 0
        %1776 = vmatpush2.bf16.msra.mxu0 0
        %1777 = vmatprep.subr.bf16.mxu0 0
        %1778 = vmatpush2.bf16.msra.mxu0 0
        %1779 = vmatprep.subr.bf16.mxu0 %v1326
        %1780 = vmatpush2.bf16.msra.mxu0 %v1325
        %1781 = vmatprep.subr.bf16.mxu0 %v1310
        %1782 = vmatpush2.bf16.msra.mxu0 %v1309
        %1783 = vmatprep.mubr.bf16.mxu0 %v1491
        %1784 = vmatmul.mubr.bf16.gmra.mxu0 %v686
        %v1785 = vpop.f32.mrf.mxu0
        %v1786 = vadd.f32 %v673, %v1785
        %v1787 = vpop.f32.mrf.mxu0
        %v1788 = vadd.f32 %v673, %v1787
        %v1789 = vpop.f32.mrf.mxu0
        %v1790 = vadd.f32 %v678, %v1789
        %v1791 = vpop.f32.mrf.mxu0
        %v1792 = vadd.f32 %v678, %v1791
        %1793 = vdwg.mxu0
        %1794 = vmatprep.subr.bf16.mxu0 %v1296
        %1795 = vmatpush1.bf16.msra.mxu0 %v1295
        %1796 = vmatprep.subr.bf16.mxu0 %v1280
        %1797 = vmatpush1.bf16.msra.mxu0 %v1279
        %1798 = vmatprep.subr.bf16.mxu0 %v1264
        %1799 = vmatpush1.bf16.msra.mxu0 %v1263
        %1800 = vmatprep.subr.bf16.mxu0 %v1248
        %1801 = vmatpush1.bf16.msra.mxu0 %v1247
        %1802 = vmatprep.subr.bf16.mxu0 %v1232
        %1803 = vmatpush1.bf16.msra.mxu0 %v1231
        %1804 = vmatprep.subr.bf16.mxu0 %v1216
        %1805 = vmatpush1.bf16.msra.mxu0 %v1215
        %1806 = vmatprep.subr.bf16.mxu0 %v1200
        %1807 = vmatpush1.bf16.msra.mxu0 %v1199
        %1808 = vmatprep.subr.bf16.mxu0 %v1184
        %1809 = vmatpush1.bf16.msra.mxu0 %v1183
        %1810 = vmatprep.subr.bf16.mxu0 0
        %1811 = vmatpush2.bf16.msra.mxu0 0
        %1812 = vmatprep.subr.bf16.mxu0 0
        %1813 = vmatpush2.bf16.msra.mxu0 0
        %1814 = vmatprep.subr.bf16.mxu0 0
        %1815 = vmatpush2.bf16.msra.mxu0 0
        %1816 = vmatprep.subr.bf16.mxu0 0
        %1817 = vmatpush2.bf16.msra.mxu0 0
        %1818 = vmatprep.subr.bf16.mxu0 0
        %1819 = vmatpush2.bf16.msra.mxu0 0
        %1820 = vmatprep.subr.bf16.mxu0 0
        %1821 = vmatpush2.bf16.msra.mxu0 0
        %1822 = vmatprep.subr.bf16.mxu0 %v1328
        %1823 = vmatpush2.bf16.msra.mxu0 %v1327
        %1824 = vmatprep.subr.bf16.mxu0 %v1312
        %1825 = vmatpush2.bf16.msra.mxu0 %v1311
        %1826 = vmatprep.mubr.bf16.mxu0 %v1491
        %1827 = vmatmul.mubr.bf16.gmra.mxu0 %v686
        %v1828 = vpop.f32.mrf.mxu0
        %v1829 = vadd.f32 %v673, %v1828
        %v1830 = vpop.f32.mrf.mxu0
        %v1831 = vadd.f32 %v673, %v1830
        %v1832 = vpop.f32.mrf.mxu0
        %v1833 = vadd.f32 %v678, %v1832
        %v1834 = vpop.f32.mrf.mxu0
        %v1835 = vadd.f32 %v678, %v1834
        %1836 = vdwg.mxu0
        %v1837 = vmax.f32 %v1528, 0.0
        %v1838 = vmax.f32 %v1530, 0.0
        %v1839 = vmax.f32 %v1571, 0.0
        %v1840 = vmax.f32 %v1573, 0.0
        %v1841 = vmax.f32 %v1614, 0.0
        %v1842 = vmax.f32 %v1616, 0.0
        %v1843 = vmax.f32 %v1657, 0.0
        %v1844 = vmax.f32 %v1659, 0.0
        %v1845 = vmax.f32 %v1700, 0.0
        %v1846 = vmax.f32 %v1702, 0.0
        %v1847 = vmax.f32 %v1743, 0.0
        %v1848 = vmax.f32 %v1745, 0.0
        %v1849 = vmax.f32 %v1786, 0.0
        %v1850 = vmax.f32 %v1788, 0.0
        %v1851 = vmax.f32 %v1829, 0.0
        %v1852 = vmax.f32 %v1831, 0.0
        %v1853 = vmax.f32 %v1532, 0.0
        %v1854 = vmax.f32 %v1534, 0.0
        %v1855 = vmax.f32 %v1575, 0.0
        %v1856 = vmax.f32 %v1577, 0.0
        %v1857 = vmax.f32 %v1618, 0.0
        %v1858 = vmax.f32 %v1620, 0.0
        %v1859 = vmax.f32 %v1661, 0.0
        %v1860 = vmax.f32 %v1663, 0.0
        %v1861 = vmax.f32 %v1704, 0.0
        %v1862 = vmax.f32 %v1706, 0.0
        %v1863 = vmax.f32 %v1747, 0.0
        %v1864 = vmax.f32 %v1749, 0.0
        %v1865 = vmax.f32 %v1790, 0.0
        %v1866 = vmax.f32 %v1792, 0.0
        %v1867 = vmax.f32 %v1833, 0.0
        %v1868 = vmax.f32 %v1835, 0.0
        %v1869 = vpack.c.bf16 %v1853, %v1837
        %v1870 = vpack.c.bf16 %v1854, %v1838
        %v1871 = vpack.c.bf16 %v1855, %v1839
        %v1872 = vpack.c.bf16 %v1856, %v1840
        %v1873 = vpack.c.bf16 %v1857, %v1841
        %v1874 = vpack.c.bf16 %v1858, %v1842
        %v1875 = vpack.c.bf16 %v1859, %v1843
        %v1876 = vpack.c.bf16 %v1860, %v1844
        %v1877 = vpack.c.bf16 %v1861, %v1845
        %v1878 = vpack.c.bf16 %v1862, %v1846
        %v1879 = vpack.c.bf16 %v1863, %v1847
        %v1880 = vpack.c.bf16 %v1864, %v1848
        %v1881 = vpack.c.bf16 %v1865, %v1849
        %v1882 = vpack.c.bf16 %v1866, %v1850
        %v1883 = vpack.c.bf16 %v1867, %v1851
        %v1884 = vpack.c.bf16 %v1868, %v1852
        %v1901 = vunpack.c.l.b16 %v1869
        %v1902 = vunpack.c.l.b16 %v1870
        %v1903 = vunpack.c.l.b16 %v1871
        %v1904 = vunpack.c.l.b16 %v1872
        %v1905 = vunpack.c.l.b16 %v1873
        %v1906 = vunpack.c.l.b16 %v1874
        %v1907 = vunpack.c.l.b16 %v1875
        %v1908 = vunpack.c.l.b16 %v1876
        %v1909 = vunpack.c.l.b16 %v1877
        %v1910 = vunpack.c.l.b16 %v1878
        %v1911 = vunpack.c.l.b16 %v1879
        %v1912 = vunpack.c.l.b16 %v1880
        %v1913 = vunpack.c.l.b16 %v1881
        %v1914 = vunpack.c.l.b16 %v1882
        %v1915 = vunpack.c.l.b16 %v1883
        %v1916 = vunpack.c.l.b16 %v1884
        %v1917 = vunpack.c.h.b16 %v1869
        %v1918 = vunpack.c.h.b16 %v1870
        %v1919 = vunpack.c.h.b16 %v1871
        %v1920 = vunpack.c.h.b16 %v1872
        %v1921 = vunpack.c.h.b16 %v1873
        %v1922 = vunpack.c.h.b16 %v1874
        %v1923 = vunpack.c.h.b16 %v1875
        %v1924 = vunpack.c.h.b16 %v1876
        %v1925 = vunpack.c.h.b16 %v1877
        %v1926 = vunpack.c.h.b16 %v1878
        %v1927 = vunpack.c.h.b16 %v1879
        %v1928 = vunpack.c.h.b16 %v1880
        %v1929 = vunpack.c.h.b16 %v1881
        %v1930 = vunpack.c.h.b16 %v1882
        %v1931 = vunpack.c.h.b16 %v1883
        %v1932 = vunpack.c.h.b16 %v1884
        %v1933 = vpack.c.b16 %v1902, %v1901
        %v1934 = vpack.c.b16 %v1904, %v1903
        %v1935 = vpack.c.b16 %v1906, %v1905
        %v1936 = vpack.c.b16 %v1908, %v1907
        %v1937 = vpack.c.b16 %v1910, %v1909
        %v1938 = vpack.c.b16 %v1912, %v1911
        %v1939 = vpack.c.b16 %v1914, %v1913
        %v1940 = vpack.c.b16 %v1916, %v1915
        %v1941 = vpack.c.b16 %v1918, %v1917
        %v1942 = vpack.c.b16 %v1920, %v1919
        %v1943 = vpack.c.b16 %v1922, %v1921
        %v1944 = vpack.c.b16 %v1924, %v1923
        %v1945 = vpack.c.b16 %v1926, %v1925
        %v1946 = vpack.c.b16 %v1928, %v1927
        %v1947 = vpack.c.b16 %v1930, %v1929
        %v1948 = vpack.c.b16 %v1932, %v1931
        %1965 = vst [vmem:[%s502] sm:$0xff] %v1933
        %1966 = vst [vmem:[%s502 + $0x8] sm:$0xff] %v1934
        %1967 = vst [vmem:[%s502 + $0x10] sm:$0xff] %v1935
        %1968 = vst [vmem:[%s502 + $0x18] sm:$0xff] %v1936
        %1969 = vst [vmem:[%s502 + $0x20] sm:$0xff] %v1937
        %1970 = vst [vmem:[%s502 + $0x28] sm:$0xff] %v1938
        %1971 = vst [vmem:[%s502 + $0x30] sm:$0xff] %v1939
        %1972 = vst [vmem:[%s502 + $0x38] sm:$0xff] %v1940
        %1973 = vst [vmem:[%s502 + $0x40] sm:$0xff] %v1941
        %1974 = vst [vmem:[%s502 + $0x48] sm:$0xff] %v1942
        %1975 = vst [vmem:[%s502 + $0x50] sm:$0xff] %v1943
        %1976 = vst [vmem:[%s502 + $0x58] sm:$0xff] %v1944
        %1977 = vst [vmem:[%s502 + $0x60] sm:$0xff] %v1945
        %1978 = vst [vmem:[%s502 + $0x68] sm:$0xff] %v1946
        %1979 = vst [vmem:[%s502 + $0x70] sm:$0xff] %v1947
        %1980 = vst [vmem:[%s502 + $0x78] sm:$0xff] %v1948
        %s1981 = sand.u32 %s90, 1
        %s1982 = sand.u32 %s90, 1
        %s1983 = smul.addr %s1982, 128
        %s1984 = scalar_lea.vmem [#allocation3], %s1983
        // Predicated region
        $region56: #{simple_cnn_forward.8} parent=50 // pred_check
          %p1985 = pneg %p100
        $region57: #{simple_cnn_forward.8} parent=50 // pred_check_branch
          %1987 = sbr.rel (%p1985) target = $region59
        $region58: #{simple_cnn_forward.8} parent=50 // pred_region
          %s1988 = smul.u32 16, %s14
          %s1989 = smul.addr %s1988, 4
          %s1990 = scalar_lea.vmem %s3, %s1989
          // Predicated region
          $region60: #{simple_cnn_forward.8} parent=58 // pred_check
            _
          $region61: #{simple_cnn_forward.8} parent=58 // pred_check_branch
            %1992 = sbr.rel (0) target = $region63
          $region62: #{simple_cnn_forward.8} parent=58 // pred_region
            // Predicated region
            $region64: #{simple_cnn_forward.8} parent=62 // pred_check
              _
            $region65: #{simple_cnn_forward.8} parent=62 // pred_check_branch
              %1994 = sbr.rel (0) target = $region67
            $region66: #{simple_cnn_forward.8} parent=62 // pred_region
              loop: start=0, step=1, limit=1
              $region68: #{simple_cnn_forward.8} parent=66 // loop_pre_header
                _
              $region69: #{simple_cnn_forward.8} parent=66 // loop_header
                %s1996 = sphi 0, %s2000
                %p1997 = scmp.ge.s32.totalorder %s1996, 1
                %s2001 = sphi %s1984, %s1984
                %s2002 = sphi %s1990, %s1990
              $region70: #{simple_cnn_forward.8} parent=66 // loop_header_branch
                %1999 = sbr.rel (%p1997) target = $region74
              $region71: #{simple_cnn_forward.8} parent=66 // loop_body
                %v2003 = vld [vmem:[%s2001] sm:$0xff]
                %2004 = vst [vmem:[%s2002] sm:$0xff] %v2003
                %v2005 = vld [vmem:[%s2001 + $0x8] sm:$0xff]
                %2006 = vst [vmem:[%s2002 + $0x8] sm:$0xff] %v2005
                %v2007 = vld [vmem:[%s2001 + $0x10] sm:$0xff]
                %2008 = vst [vmem:[%s2002 + $0x10] sm:$0xff] %v2007
                %v2009 = vld [vmem:[%s2001 + $0x18] sm:$0xff]
                %2010 = vst [vmem:[%s2002 + $0x18] sm:$0xff] %v2009
                %v2011 = vld [vmem:[%s2001 + $0x20] sm:$0xff]
                %2012 = vst [vmem:[%s2002 + $0x20] sm:$0xff] %v2011
                %v2013 = vld [vmem:[%s2001 + $0x28] sm:$0xff]
                %2014 = vst [vmem:[%s2002 + $0x28] sm:$0xff] %v2013
                %v2015 = vld [vmem:[%s2001 + $0x30] sm:$0xff]
                %2016 = vst [vmem:[%s2002 + $0x30] sm:$0xff] %v2015
                %v2017 = vld [vmem:[%s2001 + $0x38] sm:$0xff]
                %2018 = vst [vmem:[%s2002 + $0x38] sm:$0xff] %v2017
                %v2019 = vld [vmem:[%s2001 + $0x40] sm:$0xff]
                %2020 = vst [vmem:[%s2002 + $0x380] sm:$0xff] %v2019
                %v2021 = vld [vmem:[%s2001 + $0x48] sm:$0xff]
                %2022 = vst [vmem:[%s2002 + $0x388] sm:$0xff] %v2021
                %v2023 = vld [vmem:[%s2001 + $0x50] sm:$0xff]
                %2024 = vst [vmem:[%s2002 + $0x390] sm:$0xff] %v2023
                %v2025 = vld [vmem:[%s2001 + $0x58] sm:$0xff]
                %2026 = vst [vmem:[%s2002 + $0x398] sm:$0xff] %v2025
                %v2027 = vld [vmem:[%s2001 + $0x60] sm:$0xff]
                %2028 = vst [vmem:[%s2002 + $0x3a0] sm:$0xff] %v2027
                %v2029 = vld [vmem:[%s2001 + $0x68] sm:$0xff]
                %2030 = vst [vmem:[%s2002 + $0x3a8] sm:$0xff] %v2029
                %v2031 = vld [vmem:[%s2001 + $0x70] sm:$0xff]
                %2032 = vst [vmem:[%s2002 + $0x3b0] sm:$0xff] %v2031
                %v2033 = vld [vmem:[%s2001 + $0x78] sm:$0xff]
                %2034 = vst [vmem:[%s2002 + $0x3b8] sm:$0xff] %v2033
              $region72: #{simple_cnn_forward.8} parent=66 // loop_footer
                %s2000 = sadd.s32 1, %s1996
              $region73: #{simple_cnn_forward.8} parent=66 // loop_footer_branch
                %1995 = sbr.rel target = $region69
              $region74: #{simple_cnn_forward.8} parent=66 // loop_exit
                _
            $region67: #{simple_cnn_forward.8} parent=62 // pred_fallthru
              _
            // Predicated region
            $region75: #{simple_cnn_forward.8} parent=62 // pred_check
              _
            $region76: #{simple_cnn_forward.8} parent=62 // pred_check_branch
              %2036 = sbr.rel target = $region78
            $region77: #{simple_cnn_forward.8} parent=62 // pred_region
              _
            $region78: #{simple_cnn_forward.8} parent=62 // pred_fallthru
              _
          $region63: #{simple_cnn_forward.8} parent=58 // pred_fallthru
            _
          %2037 = vnop
        $region59: #{simple_cnn_forward.8} parent=50 // pred_fallthru
          _
      $region51: #{simple_cnn_forward.8} parent=5 // pred_fallthru
        _
      %p2038 = scmp.le.s32.totalorder 2, %s9
      // Predicated region
      $region79: #{simple_cnn_forward.8} parent=5 // pred_check
        %p2039 = pneg %p2038
      $region80: #{simple_cnn_forward.8} parent=5 // pred_check_branch
        %2041 = sbr.rel (%p2039) target = $region82
      $region81: #{simple_cnn_forward.8} parent=5 // pred_region
        %s2042 = ssub.s32 %s9, 2
        // Predicated region
        $region83: #{simple_cnn_forward.8} parent=81 // pred_check
          %p2043 = pneg %p106
        $region84: #{simple_cnn_forward.8} parent=81 // pred_check_branch
          %2045 = sbr.rel (%p2043) target = $region86
        $region85: #{simple_cnn_forward.8} parent=81 // pred_region
          %s2046 = sand.u32 %s91, 1
          %s2047 = sand.u32 %s91, 1
          %s2048 = smul.addr %s2047, 128
          %s2049 = scalar_lea.vmem [#allocation3], %s2048
        $region86: #{simple_cnn_forward.8} parent=81 // pred_fallthru
          _
      $region82: #{simple_cnn_forward.8} parent=5 // pred_fallthru
        _
    $region6: #{simple_cnn_forward.8} parent=1 // loop_footer
      %s13 = sadd.s32 1, %s9
    $region7: #{simple_cnn_forward.8} parent=1 // loop_footer_branch
      %8 = sbr.rel target = $region3
    $region8: #{simple_cnn_forward.8} parent=1 // loop_exit
      _

// kernel: simple_cnn_forward.9
$region0: #{simple_cnn_forward.9}
  #allocation0 [shape = 'u32[]', space=smem, size = 0x4, offset = 0x4, fixed_abs, tag = 'smem constant byte address 0x4 - core index']
  #allocation1 [shape = 'u32[144,128]{1,0:T(1,128)}', space=vmem, size = 0x12000, scoped, tag = 'internal scratch']
  %s0 = inlined_call_operand.vmem [shape: bf16[16,61,110], index: 0, kind: input, shape index: {}]
  %s1 = inlined_call_operand.vmem [shape: bf16[16,61,110], index: 1, kind: input, shape index: {}]
  %s2 = inlined_call_operand.vmem [shape: bf16[16,61,110], index: 2, kind: input, shape index: {}]
  %s3 = inlined_call_operand.vmem [shape: bf16[16,61,110], index: 3, kind: input, shape index: {}]
  %s4 = inlined_call_operand.vmem [shape: bf16[16,61,110], index: 4, kind: output, shape index: {}]
  %s5 = sld [smem:[#allocation0]]
  $region49: #{simple_cnn_forward.9} parent=0
    _
  %s7 = ssub.s32 1, %s5
  %s8 = scalar_select 0, %s7, %s5
  loop: start=0, step=1, limit=18
  $region2: #{simple_cnn_forward.9} parent=0 // loop_pre_header
    _
  $region3: #{simple_cnn_forward.9} parent=0 // loop_header
    %s10 = sphi 0, %s14
    %p11 = scmp.ge.s32.totalorder %s10, 18
    %s20 = sphi 0, %s22
    %s23 = sphi 0, %s20
    %s24 = sphi 0, %s23
    %s40 = sphi 0, %s24
    %s46 = sphi 0, %s48
    %s49 = sphi 0, %s46
    %s50 = sphi 0, %s49
    %s66 = sphi 0, %s50
    %s72 = sphi 0, %s74
    %s75 = sphi 0, %s72
    %s76 = sphi 0, %s75
    %s92 = sphi 0, %s76
    %s98 = sphi 0, %s100
    %s101 = sphi 0, %s98
    %s102 = sphi 0, %s101
    %s118 = sphi 0, %s102
    %s124 = sphi 0, %s126
    %s127 = sphi 0, %s124
    %s128 = sphi 0, %s127
    %s144 = sphi 0, %s128
  $region4: #{simple_cnn_forward.9} parent=0 // loop_header_branch
    %13 = sbr.rel (%p11) target = $region8
  $region5: #{simple_cnn_forward.9} parent=0 // loop_body
    %s15 = ssub.s32 %s10, 1
    %s16 = ssub.s32 %s10, 2
    %s17 = sadd.s32 %s10, 1
    %s18 = ssub.s32 %s10, %s17
    %p19 = scmp.eq.s32.totalorder %s18, 0
    %s21 = sadd.s32 %s20, 1
    %s22 = scalar_select %p19, %s20, %s21
    %p25 = pneg %p19
    %p26 = scmp.eq.s32.totalorder %s10, 15
    %p27 = por %p25, %p26
    %p28 = scmp.ne.s32.totalorder %s20, %s23
    %p29 = scmp.eq.s32.totalorder %s10, 0
    %p30 = por %p28, %p29
    %p31 = scmp.ne.s32.totalorder %s20, %s23
    %p32 = scmp.eq.s32.totalorder %s15, 15
    %p33 = por %p31, %p32
    %p34 = scmp.ne.s32.totalorder %s23, %s24
    %p35 = scmp.eq.s32.totalorder %s15, 0
    %p36 = por %p34, %p35
    %p37 = scmp.ne.s32.totalorder %s23, %s24
    %p38 = scmp.eq.s32.totalorder %s16, 15
    %p39 = por %p37, %p38
    %p41 = scmp.ne.s32.totalorder %s24, %s40
    %p42 = scmp.eq.s32.totalorder %s16, 0
    %p43 = por %p41, %p42
    %s44 = ssub.s32 %s10, %s17
    %p45 = scmp.eq.s32.totalorder %s44, 0
    %s47 = sadd.s32 %s46, 1
    %s48 = scalar_select %p45, %s46, %s47
    %p51 = pneg %p45
    %p52 = scmp.eq.s32.totalorder %s10, 15
    %p53 = por %p51, %p52
    %p54 = scmp.ne.s32.totalorder %s46, %s49
    %p55 = scmp.eq.s32.totalorder %s10, 0
    %p56 = por %p54, %p55
    %p57 = scmp.ne.s32.totalorder %s46, %s49
    %p58 = scmp.eq.s32.totalorder %s15, 15
    %p59 = por %p57, %p58
    %p60 = scmp.ne.s32.totalorder %s49, %s50
    %p61 = scmp.eq.s32.totalorder %s15, 0
    %p62 = por %p60, %p61
    %p63 = scmp.ne.s32.totalorder %s49, %s50
    %p64 = scmp.eq.s32.totalorder %s16, 15
    %p65 = por %p63, %p64
    %p67 = scmp.ne.s32.totalorder %s50, %s66
    %p68 = scmp.eq.s32.totalorder %s16, 0
    %p69 = por %p67, %p68
    %s70 = ssub.s32 %s10, %s17
    %p71 = scmp.eq.s32.totalorder %s70, 0
    %s73 = sadd.s32 %s72, 1
    %s74 = scalar_select %p71, %s72, %s73
    %p77 = pneg %p71
    %p78 = scmp.eq.s32.totalorder %s10, 15
    %p79 = por %p77, %p78
    %p80 = scmp.ne.s32.totalorder %s72, %s75
    %p81 = scmp.eq.s32.totalorder %s10, 0
    %p82 = por %p80, %p81
    %p83 = scmp.ne.s32.totalorder %s72, %s75
    %p84 = scmp.eq.s32.totalorder %s15, 15
    %p85 = por %p83, %p84
    %p86 = scmp.ne.s32.totalorder %s75, %s76
    %p87 = scmp.eq.s32.totalorder %s15, 0
    %p88 = por %p86, %p87
    %p89 = scmp.ne.s32.totalorder %s75, %s76
    %p90 = scmp.eq.s32.totalorder %s16, 15
    %p91 = por %p89, %p90
    %p93 = scmp.ne.s32.totalorder %s76, %s92
    %p94 = scmp.eq.s32.totalorder %s16, 0
    %p95 = por %p93, %p94
    %s96 = ssub.s32 %s10, %s17
    %p97 = scmp.eq.s32.totalorder %s96, 0
    %s99 = sadd.s32 %s98, 1
    %s100 = scalar_select %p97, %s98, %s99
    %p103 = pneg %p97
    %p104 = scmp.eq.s32.totalorder %s10, 15
    %p105 = por %p103, %p104
    %p106 = scmp.ne.s32.totalorder %s98, %s101
    %p107 = scmp.eq.s32.totalorder %s10, 0
    %p108 = por %p106, %p107
    %p109 = scmp.ne.s32.totalorder %s98, %s101
    %p110 = scmp.eq.s32.totalorder %s15, 15
    %p111 = por %p109, %p110
    %p112 = scmp.ne.s32.totalorder %s101, %s102
    %p113 = scmp.eq.s32.totalorder %s15, 0
    %p114 = por %p112, %p113
    %p115 = scmp.ne.s32.totalorder %s101, %s102
    %p116 = scmp.eq.s32.totalorder %s16, 15
    %p117 = por %p115, %p116
    %p119 = scmp.ne.s32.totalorder %s102, %s118
    %p120 = scmp.eq.s32.totalorder %s16, 0
    %p121 = por %p119, %p120
    %s122 = ssub.s32 %s10, %s17
    %p123 = scmp.eq.s32.totalorder %s122, 0
    %s125 = sadd.s32 %s124, 1
    %s126 = scalar_select %p123, %s124, %s125
    %p129 = pneg %p123
    %p130 = scmp.eq.s32.totalorder %s10, 15
    %p131 = por %p129, %p130
    %p132 = scmp.ne.s32.totalorder %s124, %s127
    %p133 = scmp.eq.s32.totalorder %s10, 0
    %p134 = por %p132, %p133
    %p135 = scmp.ne.s32.totalorder %s124, %s127
    %p136 = scmp.eq.s32.totalorder %s15, 15
    %p137 = por %p135, %p136
    %p138 = scmp.ne.s32.totalorder %s127, %s128
    %p139 = scmp.eq.s32.totalorder %s15, 0
    %p140 = por %p138, %p139
    %p141 = scmp.ne.s32.totalorder %s127, %s128
    %p142 = scmp.eq.s32.totalorder %s16, 15
    %p143 = por %p141, %p142
    %p145 = scmp.ne.s32.totalorder %s128, %s144
    %p146 = scmp.eq.s32.totalorder %s16, 0
    %p147 = por %p145, %p146
    %p148 = scmp.le.s32.totalorder 1, %s10
    %p149 = scmp.lt.s32.totalorder %s10, 17
    %p150 = pnand %p148, %p149
    %p151 = pneg %p150
    // Predicated region
    $region9: #{simple_cnn_forward.9} parent=5 // pred_check
      _
    $region10: #{simple_cnn_forward.9} parent=5 // pred_check_branch
      %153 = sbr.rel (%p150) target = $region12
    $region11: #{simple_cnn_forward.9} parent=5 // pred_region
      %s154 = ssub.s32 %s10, 1
    $region12: #{simple_cnn_forward.9} parent=5 // pred_fallthru
      _
    %p155 = scmp.lt.s32.totalorder %s10, 16
    // Predicated region
    $region13: #{simple_cnn_forward.9} parent=5 // pred_check
      %p156 = pneg %p155
    $region14: #{simple_cnn_forward.9} parent=5 // pred_check_branch
      %158 = sbr.rel (%p156) target = $region16
    $region15: #{simple_cnn_forward.9} parent=5 // pred_region
      // Predicated region
      $region17: #{simple_cnn_forward.9} parent=15 // pred_check
        %p159 = pneg %p30
      $region18: #{simple_cnn_forward.9} parent=15 // pred_check_branch
        %161 = sbr.rel (%p159) target = $region20
      $region19: #{simple_cnn_forward.9} parent=15 // pred_region
        %p162 = scmp.lt.s32.totalorder %s10, 15
        %s163 = scalar_select %p162, %s10, 15
        %s164 = smul.addr %s163, 8
        %s165 = smul.addr %s164, 4
        %s166 = scalar_lea.vmem %s0, %s165
      $region20: #{simple_cnn_forward.9} parent=15 // pred_fallthru
        _
      // Predicated region
      $region21: #{simple_cnn_forward.9} parent=15 // pred_check
        %p167 = pneg %p56
      $region22: #{simple_cnn_forward.9} parent=15 // pred_check_branch
        %169 = sbr.rel (%p167) target = $region24
      $region23: #{simple_cnn_forward.9} parent=15 // pred_region
        %p170 = scmp.lt.s32.totalorder %s10, 15
        %s171 = scalar_select %p170, %s10, 15
        %s172 = smul.addr %s171, 8
        %s173 = smul.addr %s172, 4
        %s174 = scalar_lea.vmem %s1, %s173
      $region24: #{simple_cnn_forward.9} parent=15 // pred_fallthru
        _
      // Predicated region
      $region25: #{simple_cnn_forward.9} parent=15 // pred_check
        %p175 = pneg %p82
      $region26: #{simple_cnn_forward.9} parent=15 // pred_check_branch
        %177 = sbr.rel (%p175) target = $region28
      $region27: #{simple_cnn_forward.9} parent=15 // pred_region
        %p178 = scmp.lt.s32.totalorder %s10, 15
        %s179 = scalar_select %p178, %s10, 15
        %s180 = smul.addr %s179, 8
        %s181 = smul.addr %s180, 4
        %s182 = scalar_lea.vmem %s2, %s181
      $region28: #{simple_cnn_forward.9} parent=15 // pred_fallthru
        _
      // Predicated region
      $region29: #{simple_cnn_forward.9} parent=15 // pred_check
        %p183 = pneg %p108
      $region30: #{simple_cnn_forward.9} parent=15 // pred_check_branch
        %185 = sbr.rel (%p183) target = $region32
      $region31: #{simple_cnn_forward.9} parent=15 // pred_region
        %p186 = scmp.lt.s32.totalorder %s10, 15
        %s187 = scalar_select %p186, %s10, 15
        %s188 = smul.addr %s187, 8
        %s189 = smul.addr %s188, 4
        %s190 = scalar_lea.vmem %s3, %s189
      $region32: #{simple_cnn_forward.9} parent=15 // pred_fallthru
        _
    $region16: #{simple_cnn_forward.9} parent=5 // pred_fallthru
      _
    %p191 = scmp.le.s32.totalorder 1, %s10
    %p192 = scmp.lt.s32.totalorder %s10, 17
    %p193 = pnand %p191, %p192
    %p194 = pneg %p193
    // Predicated region
    $region33: #{simple_cnn_forward.9} parent=5 // pred_check
      _
    $region34: #{simple_cnn_forward.9} parent=5 // pred_check_branch
      %196 = sbr.rel (%p193) target = $region36
    $region35: #{simple_cnn_forward.9} parent=5 // pred_region
      %s197 = ssub.s32 %s10, 1
      %p198 = scmp.lt.s32.totalorder %s15, 15
      %s199 = scalar_select %p198, %s15, 15
      %s200 = smul.addr %s199, 8
      %s201 = smul.addr %s200, 4
      %s202 = scalar_lea.vmem %s0, %s201
      %p203 = pneg %p36
      %p204 = pneg %p33
      %p205 = scmp.lt.s32.totalorder %s15, 15
      %s206 = scalar_select %p205, %s15, 15
      %s207 = smul.addr %s206, 8
      %s208 = smul.addr %s207, 4
      %s209 = scalar_lea.vmem %s1, %s208
      %p210 = pneg %p62
      %p211 = pneg %p59
      %p212 = scmp.lt.s32.totalorder %s15, 15
      %s213 = scalar_select %p212, %s15, 15
      %s214 = smul.addr %s213, 8
      %s215 = smul.addr %s214, 4
      %s216 = scalar_lea.vmem %s2, %s215
      %p217 = pneg %p88
      %p218 = pneg %p85
      %p219 = scmp.lt.s32.totalorder %s15, 15
      %s220 = scalar_select %p219, %s15, 15
      %s221 = smul.addr %s220, 8
      %s222 = smul.addr %s221, 4
      %s223 = scalar_lea.vmem %s3, %s222
      %p224 = pneg %p114
      %p225 = pneg %p111
      %p226 = pneg %p140
      %p227 = pneg %p137
      %p228 = scmp.lt.s32.totalorder %s15, 15
      %s229 = scalar_select %p228, %s15, 15
      %s230 = smul.addr %s229, 8
      %s231 = smul.addr %s230, 4
      %s232 = scalar_lea.vmem %s4, %s231
      %p233 = scmp.lt.s32.totalorder %s15, 15
      %s234 = scalar_select %p233, %s15, 15
      %s235 = smul.addr %s234, 8
      %s236 = smul.addr %s235, 4
      %s237 = scalar_lea.vmem %s0, %s236
      %p238 = scmp.lt.s32.totalorder %s15, 15
      %s239 = scalar_select %p238, %s15, 15
      %s240 = smul.addr %s239, 8
      %s241 = smul.addr %s240, 4
      %s242 = scalar_lea.vmem %s1, %s241
      %p243 = scmp.lt.s32.totalorder %s15, 15
      %s244 = scalar_select %p243, %s15, 15
      %s245 = smul.addr %s244, 8
      %s246 = smul.addr %s245, 4
      %s247 = scalar_lea.vmem %s2, %s246
      %p248 = scmp.lt.s32.totalorder %s15, 15
      %s249 = scalar_select %p248, %s15, 15
      %s250 = smul.addr %s249, 8
      %s251 = smul.addr %s250, 4
      %s252 = scalar_lea.vmem %s3, %s251
      %p253 = scmp.lt.s32.totalorder %s15, 15
      %s254 = scalar_select %p253, %s15, 15
      %s255 = smul.addr %s254, 8
      %s256 = smul.addr %s255, 4
      %s257 = scalar_lea.vmem %s4, %s256
      %v258 = vld [vmem:[%s237] sm:$0xf]
      %v259 = vld [vmem:[%s237 + $0x4] sm:$0xf]
      %v260 = vld [vmem:[%s237 + $0x8] sm:$0xf]
      %v261 = vld [vmem:[%s237 + $0xc] sm:$0xf]
      %v262 = vld [vmem:[%s237 + $0x10] sm:$0xf]
      %v263 = vld [vmem:[%s237 + $0x14] sm:$0xf]
      %v264 = vld [vmem:[%s237 + $0x18] sm:$0xf]
      %v265 = vld [vmem:[%s237 + $0x1c] sm:$0x7]
      %v266 = vld [vmem:[%s242] sm:$0xf]
      %v267 = vld [vmem:[%s242 + $0x4] sm:$0xf]
      %v268 = vld [vmem:[%s242 + $0x8] sm:$0xf]
      %v269 = vld [vmem:[%s242 + $0xc] sm:$0xf]
      %v270 = vld [vmem:[%s242 + $0x10] sm:$0xf]
      %v271 = vld [vmem:[%s242 + $0x14] sm:$0xf]
      %v272 = vld [vmem:[%s242 + $0x18] sm:$0xf]
      %v273 = vld [vmem:[%s242 + $0x1c] sm:$0x7]
      %v274 = vmax.bf16 %v258, %v266
      %v275 = vmax.bf16 %v259, %v267
      %v276 = vmax.bf16 %v260, %v268
      %v277 = vmax.bf16 %v261, %v269
      %v278 = vmax.bf16 %v262, %v270
      %v279 = vmax.bf16 %v263, %v271
      %v280 = vmax.bf16 %v264, %v272
      %v281 = vmax.bf16 %v265, %v273
      %v282 = vld [vmem:[%s247] sm:$0xf]
      %v283 = vld [vmem:[%s247 + $0x4] sm:$0xf]
      %v284 = vld [vmem:[%s247 + $0x8] sm:$0xf]
      %v285 = vld [vmem:[%s247 + $0xc] sm:$0xf]
      %v286 = vld [vmem:[%s247 + $0x10] sm:$0xf]
      %v287 = vld [vmem:[%s247 + $0x14] sm:$0xf]
      %v288 = vld [vmem:[%s247 + $0x18] sm:$0xf]
      %v289 = vld [vmem:[%s247 + $0x1c] sm:$0x7]
      %v290 = vld [vmem:[%s252] sm:$0xf]
      %v291 = vld [vmem:[%s252 + $0x4] sm:$0xf]
      %v292 = vld [vmem:[%s252 + $0x8] sm:$0xf]
      %v293 = vld [vmem:[%s252 + $0xc] sm:$0xf]
      %v294 = vld [vmem:[%s252 + $0x10] sm:$0xf]
      %v295 = vld [vmem:[%s252 + $0x14] sm:$0xf]
      %v296 = vld [vmem:[%s252 + $0x18] sm:$0xf]
      %v297 = vld [vmem:[%s252 + $0x1c] sm:$0x7]
      %v298 = vmax.bf16 %v282, %v290
      %v299 = vmax.bf16 %v283, %v291
      %v300 = vmax.bf16 %v284, %v292
      %v301 = vmax.bf16 %v285, %v293
      %v302 = vmax.bf16 %v286, %v294
      %v303 = vmax.bf16 %v287, %v295
      %v304 = vmax.bf16 %v288, %v296
      %v305 = vmax.bf16 %v289, %v297
      %v306 = vmax.bf16 %v274, %v298
      %v307 = vmax.bf16 %v275, %v299
      %v308 = vmax.bf16 %v276, %v300
      %v309 = vmax.bf16 %v277, %v301
      %v310 = vmax.bf16 %v278, %v302
      %v311 = vmax.bf16 %v279, %v303
      %v312 = vmax.bf16 %v280, %v304
      %v313 = vmax.bf16 %v281, %v305
      %vm314 = vcmask 896000
      %315 = vst.msk [vmem:[%s257] sm:$0xf] %vm314, %v306
      %316 = vst.msk [vmem:[%s257 + $0x4] sm:$0xf] %vm314, %v307
      %317 = vst.msk [vmem:[%s257 + $0x8] sm:$0xf] %vm314, %v308
      %318 = vst.msk [vmem:[%s257 + $0xc] sm:$0xf] %vm314, %v309
      %319 = vst.msk [vmem:[%s257 + $0x10] sm:$0xf] %vm314, %v310
      %320 = vst.msk [vmem:[%s257 + $0x14] sm:$0xf] %vm314, %v311
      %321 = vst.msk [vmem:[%s257 + $0x18] sm:$0xf] %vm314, %v312
      %vm322 = vcmask 894976
      %vm323 = vsmask.f32 2304
      %vm324 = vmand %vm322, %vm323
      %v325 = vld [vmem:[%s257 + $0x1c] sm:$0x7]
      %v326 = vsel %vm324, %v313, %v325
      %327 = vst [vmem:[%s257 + $0x1c] sm:$0x7] %v326
      %p328 = scmp.lt.s32.totalorder %s15, 15
      %s329 = scalar_select %p328, %s15, 15
      %s330 = smul.addr %s329, 8
      %s331 = smul.addr %s330, 4
      %s332 = scalar_lea.vmem %s4, %s331
      // Predicated region
      $region37: #{simple_cnn_forward.9} parent=35 // pred_check
        %p333 = pneg %p137
      $region38: #{simple_cnn_forward.9} parent=35 // pred_check_branch
        %335 = sbr.rel (%p333) target = $region40
      $region39: #{simple_cnn_forward.9} parent=35 // pred_region
        _
      $region40: #{simple_cnn_forward.9} parent=35 // pred_fallthru
        _
    $region36: #{simple_cnn_forward.9} parent=5 // pred_fallthru
      _
    %p336 = scmp.le.s32.totalorder 2, %s10
    // Predicated region
    $region41: #{simple_cnn_forward.9} parent=5 // pred_check
      %p337 = pneg %p336
    $region42: #{simple_cnn_forward.9} parent=5 // pred_check_branch
      %339 = sbr.rel (%p337) target = $region44
    $region43: #{simple_cnn_forward.9} parent=5 // pred_region
      %s340 = ssub.s32 %s10, 2
      // Predicated region
      $region45: #{simple_cnn_forward.9} parent=43 // pred_check
        %p341 = pneg %p143
      $region46: #{simple_cnn_forward.9} parent=43 // pred_check_branch
        %343 = sbr.rel (%p341) target = $region48
      $region47: #{simple_cnn_forward.9} parent=43 // pred_region
        %p344 = scmp.lt.s32.totalorder %s16, 15
        %s345 = scalar_select %p344, %s16, 15
        %s346 = smul.addr %s345, 8
        %s347 = smul.addr %s346, 4
        %s348 = scalar_lea.vmem %s4, %s347
      $region48: #{simple_cnn_forward.9} parent=43 // pred_fallthru
        _
    $region44: #{simple_cnn_forward.9} parent=5 // pred_fallthru
      _
  $region6: #{simple_cnn_forward.9} parent=0 // loop_footer
    %s14 = sadd.s32 1, %s10
  $region7: #{simple_cnn_forward.9} parent=0 // loop_footer_branch
    %9 = sbr.rel target = $region3
  $region8: #{simple_cnn_forward.9} parent=0 // loop_exit
    _

// kernel: simple_cnn_forward.11
$region0: #{simple_cnn_forward.11}
  #allocation0 [shape = 'u32[]', space=smem, size = 0x4, offset = 0x4, fixed_abs, tag = 'smem constant byte address 0x4 - core index']
  #allocation1 [shape = 'u32[144,128]{1,0:T(1,128)}', space=vmem, size = 0x12000, scoped, tag = 'internal scratch']
  #allocation2 [shape = 'f32[1,1]{1,0:T(1,128)S(1)}', space=vmem, size = 0x200, scoped, tag = 'scoped memory for simple_cnn_forward.11']
  %s0 = inlined_call_operand.vmem [shape: f32[2,8,128], index: 0, kind: input, shape index: {}]
  %s1 = inlined_call_operand.vmem [shape: f32[1,128], index: 1, kind: input, shape index: {}]
  %s2 = inlined_call_operand.vmem [shape: bf16[128,84], index: 2, kind: input, shape index: {}]
  %s3 = inlined_call_operand.vmem [shape: f32[1,84], index: 3, kind: input, shape index: {}]
  %s4 = inlined_call_operand.vmem [shape: f32[1,84], index: 4, kind: input, shape index: {}]
  %s5 = inlined_call_operand.<no memory space> [shape: f32[1,1], index: 5, kind: input, shape index: {}]
  %s6 = inlined_call_operand.vmem [shape: f32[8,1], index: 6, kind: output, shape index: {}]
  %s7 = sld [smem:[#allocation0]]
  $region34: #{simple_cnn_forward.11} parent=0
    _
  %s9 = ssub.s32 1, %s7
  %s10 = scalar_select 0, %s9, %s7
  %v11 = vstv %s5
  %12 = vst [vmem:[#allocation2] sm:$0x1] %v11
  // Predicated region
  $region2: #{simple_cnn_forward.11} parent=0 // pred_check
    _
  $region3: #{simple_cnn_forward.11} parent=0 // pred_check_branch
    %14 = sbr.rel (0) target = $region5
  $region4: #{simple_cnn_forward.11} parent=0 // pred_region
    _
  $region5: #{simple_cnn_forward.11} parent=0 // pred_fallthru
    _
  // Predicated region
  $region6: #{simple_cnn_forward.11} parent=0 // pred_check
    _
  $region7: #{simple_cnn_forward.11} parent=0 // pred_check_branch
    %16 = sbr.rel (0) target = $region9
  $region8: #{simple_cnn_forward.11} parent=0 // pred_region
    _
  $region9: #{simple_cnn_forward.11} parent=0 // pred_fallthru
    _
  // Predicated region
  $region10: #{simple_cnn_forward.11} parent=0 // pred_check
    _
  $region11: #{simple_cnn_forward.11} parent=0 // pred_check_branch
    %18 = sbr.rel (0) target = $region13
  $region12: #{simple_cnn_forward.11} parent=0 // pred_region
    _
  $region13: #{simple_cnn_forward.11} parent=0 // pred_fallthru
    _
  // Predicated region
  $region14: #{simple_cnn_forward.11} parent=0 // pred_check
    _
  $region15: #{simple_cnn_forward.11} parent=0 // pred_check_branch
    %20 = sbr.rel (0) target = $region17
  $region16: #{simple_cnn_forward.11} parent=0 // pred_region
    _
  $region17: #{simple_cnn_forward.11} parent=0 // pred_fallthru
    _
  // Predicated region
  $region18: #{simple_cnn_forward.11} parent=0 // pred_check
    _
  $region19: #{simple_cnn_forward.11} parent=0 // pred_check_branch
    %22 = sbr.rel (0) target = $region21
  $region20: #{simple_cnn_forward.11} parent=0 // pred_region
    _
  $region21: #{simple_cnn_forward.11} parent=0 // pred_fallthru
    _
  // Predicated region
  $region22: #{simple_cnn_forward.11} parent=0 // pred_check
    _
  $region23: #{simple_cnn_forward.11} parent=0 // pred_check_branch
    %24 = sbr.rel (0) target = $region25
  $region24: #{simple_cnn_forward.11} parent=0 // pred_region
    _
  $region25: #{simple_cnn_forward.11} parent=0 // pred_fallthru
    _
  %v26 = vld [vmem:[%s0] sm:$0xff]
  %s27 = scalar_lea.vmem %s0, 8
  %v28 = vld [vmem:[%s27] sm:$0xff]
  %v29 = vadd.f32 %v26, %v28
  %v30 = vld [vmem:[%s1] sm:$0x1]
  %v32 = vlaneseq
  %v33 = vshrl.u32 %v32, 7
  %v34 = vsub.s32 0, %v33
  %v35 = vrot.slane %v30, %v34
  %v37 = vadd.f32 %v29, %v35
  %v38 = vmax.f32 %v37, 0.0
  %v39 = vpack.c.bf16 %v38, %v38
  %v40 = vld [vmem:[%s2] sm:$0xf]
  %v41 = vld [vmem:[%s2 + $0x4] sm:$0xf]
  %v42 = vld [vmem:[%s2 + $0x8] sm:$0xf]
  %v43 = vld [vmem:[%s2 + $0xc] sm:$0xf]
  %v44 = vld [vmem:[%s2 + $0x10] sm:$0xf]
  %v45 = vld [vmem:[%s2 + $0x14] sm:$0xf]
  %v46 = vld [vmem:[%s2 + $0x18] sm:$0xf]
  %v47 = vld [vmem:[%s2 + $0x1c] sm:$0xf]
  %v48 = vld [vmem:[%s2 + $0x20] sm:$0xf]
  %v49 = vld [vmem:[%s2 + $0x24] sm:$0xf]
  %v50 = vld [vmem:[%s2 + $0x28] sm:$0xf]
  %v51 = vld [vmem:[%s2 + $0x2c] sm:$0xf]
  %v52 = vld [vmem:[%s2 + $0x30] sm:$0xf]
  %v53 = vld [vmem:[%s2 + $0x34] sm:$0xf]
  %v54 = vld [vmem:[%s2 + $0x38] sm:$0xf]
  %v55 = vld [vmem:[%s2 + $0x3c] sm:$0xf]
  %v56 = vld [vmem:[%s3] sm:$0x1]
  %v58 = vlaneseq
  %v59 = vshrl.u32 %v58, 7
  %v60 = vsub.s32 0, %v59
  %v61 = vrot.slane %v56, %v60
  %v79 = vunpack.c.l.b16 %v40
  %v80 = vunpack.c.l.b16 %v41
  %v81 = vunpack.c.l.b16 %v42
  %v82 = vunpack.c.l.b16 %v43
  %v83 = vunpack.c.l.b16 %v44
  %v84 = vunpack.c.l.b16 %v45
  %v85 = vunpack.c.l.b16 %v46
  %v86 = vunpack.c.l.b16 %v47
  %v87 = vunpack.c.l.b16 %v48
  %v88 = vunpack.c.l.b16 %v49
  %v89 = vunpack.c.l.b16 %v50
  %v90 = vunpack.c.l.b16 %v51
  %v91 = vunpack.c.l.b16 %v52
  %v92 = vunpack.c.l.b16 %v53
  %v93 = vunpack.c.l.b16 %v54
  %v94 = vunpack.c.l.b16 %v55
  %v95 = vpack.c.b16 %v80, %v79
  %v96 = vpack.c.b16 %v82, %v81
  %v97 = vpack.c.b16 %v84, %v83
  %v98 = vpack.c.b16 %v86, %v85
  %v99 = vpack.c.b16 %v88, %v87
  %v100 = vpack.c.b16 %v90, %v89
  %v101 = vpack.c.b16 %v92, %v91
  %v102 = vpack.c.b16 %v94, %v93
  %111 = vmatprep.subr.bf16.mxu0 0
  %112 = vmatpush1.bf16.msra.mxu0 %v102
  %113 = vmatprep.subr.bf16.mxu0 0
  %114 = vmatpush1.bf16.msra.mxu0 %v101
  %115 = vmatprep.subr.bf16.mxu0 0
  %116 = vmatpush1.bf16.msra.mxu0 %v100
  %117 = vmatprep.subr.bf16.mxu0 0
  %118 = vmatpush1.bf16.msra.mxu0 %v99
  %119 = vmatprep.subr.bf16.mxu0 0
  %120 = vmatpush1.bf16.msra.mxu0 %v98
  %121 = vmatprep.subr.bf16.mxu0 0
  %122 = vmatpush1.bf16.msra.mxu0 %v97
  %123 = vmatprep.subr.bf16.mxu0 0
  %124 = vmatpush1.bf16.msra.mxu0 %v96
  %125 = vmatprep.subr.bf16.mxu0 0
  %126 = vmatpush1.bf16.msra.mxu0 %v95
  %127 = vmatprep.subr.bf16.mxu0 0
  %128 = vmatpush2.bf16.msra.mxu0 0
  %129 = vmatprep.subr.bf16.mxu0 0
  %130 = vmatpush2.bf16.msra.mxu0 0
  %131 = vmatprep.subr.bf16.mxu0 0
  %132 = vmatpush2.bf16.msra.mxu0 0
  %133 = vmatprep.subr.bf16.mxu0 0
  %134 = vmatpush2.bf16.msra.mxu0 0
  %135 = vmatprep.subr.bf16.mxu0 0
  %136 = vmatpush2.bf16.msra.mxu0 0
  %137 = vmatprep.subr.bf16.mxu0 0
  %138 = vmatpush2.bf16.msra.mxu0 0
  %139 = vmatprep.subr.bf16.mxu0 0
  %140 = vmatpush2.bf16.msra.mxu0 0
  %141 = vmatprep.subr.bf16.mxu0 0
  %142 = vmatpush2.bf16.msra.mxu0 0
  %143 = vmatprep.mubr.bf16.mxu0 0
  %144 = vmatmul.mubr.bf16.gmra.mxu0 %v39
  %v145 = vpop.f32.mrf.mxu0
  %v146 = vadd.f32 %v61, %v145
  %v147 = vpop.f32.mrf.mxu0
  %v148 = vpop.f32.mrf.mxu0
  %v149 = vpop.f32.mrf.mxu0
  %150 = vdwg.mxu0
  %v151 = vmax.f32 %v146, 0.0
  %v152 = vld [vmem:[%s4] sm:$0x1]
  %v154 = vlaneseq
  %v155 = vshrl.u32 %v154, 7
  %v156 = vsub.s32 0, %v155
  %v157 = vrot.slane %v152, %v156
  %v159 = vmul.f32 %v151, %v157
  %vm160 = vcmask 687104
  %v161 = vsel %vm160, %v159, 0.0
  %162 = vadd.xlane.f32.xlu0 %v161
  %v163 = vpop.xlane.xlu0 %162
  %v164 = vld [vmem:[#allocation2] sm:$0x1]
  %v166 = vlaneseq
  %v167 = vshrl.u32 %v166, 7
  %v168 = vsub.s32 0, %v167
  %v169 = vrot.slane %v164, %v168
  %v171 = vadd.f32 %v163, %v169
  %vm172 = vcmask 7168
  %173 = vst.msk [vmem:[%s6] sm:$0xff] %vm172, %v171
  // Predicated region
  $region26: #{simple_cnn_forward.11} parent=0 // pred_check
    _
  $region27: #{simple_cnn_forward.11} parent=0 // pred_check_branch
    %175 = sbr.rel (0) target = $region29
  $region28: #{simple_cnn_forward.11} parent=0 // pred_region
    _
  $region29: #{simple_cnn_forward.11} parent=0 // pred_fallthru
    _
  // Predicated region
  $region30: #{simple_cnn_forward.11} parent=0 // pred_check
    _
  $region31: #{simple_cnn_forward.11} parent=0 // pred_check_branch
    %177 = sbr.rel (0) target = $region33
  $region32: #{simple_cnn_forward.11} parent=0 // pred_region
    _
  $region33: #{simple_cnn_forward.11} parent=0 // pred_fallthru
    _

// kernel: simple_cnn_forward.10
$region0: #{simple_cnn_forward.10}
  #allocation0 [shape = 'u32[]', space=smem, size = 0x4, offset = 0x4, fixed_abs, tag = 'smem constant byte address 0x4 - core index']
  #allocation1 [shape = 'u32[144,128]{1,0:T(1,128)}', space=vmem, size = 0x12000, scoped, tag = 'internal scratch']
  %s0 = inlined_call_operand.vmem [shape: bf16[8,114688], index: 0, kind: input, shape index: {}]
  %s1 = inlined_call_operand.vmem [shape: bf16[114688,128], index: 1, kind: input, shape index: {}]
  %s2 = inlined_call_operand.vmem [shape: f32[2,8,128], index: 2, kind: output, shape index: {}]
  %s3 = sld [smem:[#allocation0]]
  $region45: #{simple_cnn_forward.10} parent=0
    _
  %s5 = ssub.s32 1, %s3
  %s6 = scalar_select 0, %s5, %s3
  loop: start=0, step=1, limit=16
  $region2: #{simple_cnn_forward.10} parent=0 // loop_pre_header
    _
  $region3: #{simple_cnn_forward.10} parent=0 // loop_header
    %s8 = sphi 0, %s12
    %p9 = scmp.ge.s32.totalorder %s8, 16
    %s15 = sphi 0, %s27
    %s16 = sphi 0, %s23
    %s17 = sphi 0, %s15
    %s18 = sphi 0, %s16
    %s19 = sphi 0, %s17
    %s20 = sphi 0, %s18
    %s34 = sphi 0, %s36
    %s37 = sphi 0, %s34
    %s38 = sphi 0, %s37
    %s54 = sphi 0, %s38
    %s64 = sphi 0, %s66
    %s67 = sphi 0, %s64
    %s68 = sphi 0, %s67
    %s84 = sphi 0, %s68
    %s90 = sphi 0, %s92
    %s93 = sphi 0, %s90
    %s94 = sphi 0, %s93
    %s110 = sphi 0, %s94
  $region4: #{simple_cnn_forward.10} parent=0 // loop_header_branch
    %11 = sbr.rel (%p9) target = $region8
  $region5: #{simple_cnn_forward.10} parent=0 // loop_body
    %s13 = ssub.s32 %s8, 1
    %s14 = ssub.s32 %s8, 2
    %s21 = sadd.s32 1, %s16
    %p22 = scmp.ge.s32.totalorder %s21, 7
    %s23 = scalar_select %p22, 0, %s21
    %s24 = sadd.s32 1, %s15
    %s25 = scalar_select %p22, %s24, %s15
    %p26 = scmp.ge.s32.totalorder %s25, 2
    %s27 = scalar_select %p26, 0, %s25
    %s28 = smul.u32 %s15, 7
    %s29 = sadd.s32 %s28, %s16
    %s30 = smul.u32 %s27, 7
    %s31 = sadd.s32 %s30, %s23
    %s32 = ssub.s32 %s29, %s31
    %p33 = scmp.eq.s32.totalorder %s32, 0
    %s35 = sadd.s32 %s34, 1
    %s36 = scalar_select %p33, %s34, %s35
    %p39 = pneg %p33
    %p40 = scmp.eq.s32.totalorder %s8, 13
    %p41 = por %p39, %p40
    %p42 = scmp.ne.s32.totalorder %s34, %s37
    %p43 = scmp.eq.s32.totalorder %s8, 0
    %p44 = por %p42, %p43
    %p45 = scmp.ne.s32.totalorder %s34, %s37
    %p46 = scmp.eq.s32.totalorder %s13, 13
    %p47 = por %p45, %p46
    %p48 = scmp.ne.s32.totalorder %s37, %s38
    %p49 = scmp.eq.s32.totalorder %s13, 0
    %p50 = por %p48, %p49
    %p51 = scmp.ne.s32.totalorder %s37, %s38
    %p52 = scmp.eq.s32.totalorder %s14, 13
    %p53 = por %p51, %p52
    %p55 = scmp.ne.s32.totalorder %s38, %s54
    %p56 = scmp.eq.s32.totalorder %s14, 0
    %p57 = por %p55, %p56
    %s58 = smul.u32 %s15, 7
    %s59 = sadd.s32 %s58, %s16
    %s60 = smul.u32 %s27, 7
    %s61 = sadd.s32 %s60, %s23
    %s62 = ssub.s32 %s59, %s61
    %p63 = scmp.eq.s32.totalorder %s62, 0
    %s65 = sadd.s32 %s64, 1
    %s66 = scalar_select %p63, %s64, %s65
    %p69 = pneg %p63
    %p70 = scmp.eq.s32.totalorder %s8, 13
    %p71 = por %p69, %p70
    %p72 = scmp.ne.s32.totalorder %s64, %s67
    %p73 = scmp.eq.s32.totalorder %s8, 0
    %p74 = por %p72, %p73
    %p75 = scmp.ne.s32.totalorder %s64, %s67
    %p76 = scmp.eq.s32.totalorder %s13, 13
    %p77 = por %p75, %p76
    %p78 = scmp.ne.s32.totalorder %s67, %s68
    %p79 = scmp.eq.s32.totalorder %s13, 0
    %p80 = por %p78, %p79
    %p81 = scmp.ne.s32.totalorder %s67, %s68
    %p82 = scmp.eq.s32.totalorder %s14, 13
    %p83 = por %p81, %p82
    %p85 = scmp.ne.s32.totalorder %s68, %s84
    %p86 = scmp.eq.s32.totalorder %s14, 0
    %p87 = por %p85, %p86
    %s88 = ssub.s32 %s15, %s27
    %p89 = scmp.eq.s32.totalorder %s88, 0
    %s91 = sadd.s32 %s90, 1
    %s92 = scalar_select %p89, %s90, %s91
    %p95 = pneg %p89
    %p96 = scmp.eq.s32.totalorder %s8, 13
    %p97 = por %p95, %p96
    %p98 = scmp.ne.s32.totalorder %s90, %s93
    %p99 = scmp.eq.s32.totalorder %s8, 0
    %p100 = por %p98, %p99
    %p101 = scmp.ne.s32.totalorder %s90, %s93
    %p102 = scmp.eq.s32.totalorder %s13, 13
    %p103 = por %p101, %p102
    %p104 = scmp.ne.s32.totalorder %s93, %s94
    %p105 = scmp.eq.s32.totalorder %s13, 0
    %p106 = por %p104, %p105
    %p107 = scmp.ne.s32.totalorder %s93, %s94
    %p108 = scmp.eq.s32.totalorder %s14, 13
    %p109 = por %p107, %p108
    %p111 = scmp.ne.s32.totalorder %s94, %s110
    %p112 = scmp.eq.s32.totalorder %s14, 0
    %p113 = por %p111, %p112
    %p114 = scmp.le.s32.totalorder 1, %s8
    %p115 = scmp.lt.s32.totalorder %s8, 15
    %p116 = pnand %p114, %p115
    %p117 = pneg %p116
    // Predicated region
    $region9: #{simple_cnn_forward.10} parent=5 // pred_check
      _
    $region10: #{simple_cnn_forward.10} parent=5 // pred_check_branch
      %119 = sbr.rel (%p116) target = $region12
    $region11: #{simple_cnn_forward.10} parent=5 // pred_region
      %s120 = ssub.s32 %s8, 1
    $region12: #{simple_cnn_forward.10} parent=5 // pred_fallthru
      _
    %p121 = scmp.lt.s32.totalorder %s8, 14
    // Predicated region
    $region13: #{simple_cnn_forward.10} parent=5 // pred_check
      %p122 = pneg %p121
    $region14: #{simple_cnn_forward.10} parent=5 // pred_check_branch
      %124 = sbr.rel (%p122) target = $region16
    $region15: #{simple_cnn_forward.10} parent=5 // pred_region
      // Predicated region
      $region17: #{simple_cnn_forward.10} parent=15 // pred_check
        %p125 = pneg %p44
      $region18: #{simple_cnn_forward.10} parent=15 // pred_check_branch
        %127 = sbr.rel (%p125) target = $region20
      $region19: #{simple_cnn_forward.10} parent=15 // pred_region
        %s128 = smul.u32 %s15, 7
        %s129 = sadd.s32 %s128, %s16
        %s130 = smul.u32 64, %s129
        %p131 = scmp.lt.s32.totalorder %s130, 895
        %s132 = scalar_select %p131, %s130, 895
        %s133 = smul.addr %s132, 4
        %s134 = scalar_lea.vmem %s0, %s133
        %s135 = smul.u32 %s15, 7
        %s136 = sadd.s32 %s135, %s16
        %s137 = smul.u32 64, %s136
      $region20: #{simple_cnn_forward.10} parent=15 // pred_fallthru
        _
      // Predicated region
      $region21: #{simple_cnn_forward.10} parent=15 // pred_check
        %p138 = pneg %p74
      $region22: #{simple_cnn_forward.10} parent=15 // pred_check_branch
        %140 = sbr.rel (%p138) target = $region24
      $region23: #{simple_cnn_forward.10} parent=15 // pred_region
        %s141 = smul.u32 %s15, 7
        %s142 = sadd.s32 %s141, %s16
        %s143 = smul.u32 1024, %s142
        %p144 = scmp.lt.s32.totalorder %s143, 14335
        %s145 = scalar_select %p144, %s143, 14335
        %s146 = smul.addr %s145, 4
        %s147 = scalar_lea.vmem %s1, %s146
        %s148 = smul.u32 %s15, 7
        %s149 = sadd.s32 %s148, %s16
        %s150 = smul.u32 1024, %s149
      $region24: #{simple_cnn_forward.10} parent=15 // pred_fallthru
        _
    $region16: #{simple_cnn_forward.10} parent=5 // pred_fallthru
      _
    %p151 = scmp.le.s32.totalorder 1, %s8
    %p152 = scmp.lt.s32.totalorder %s8, 15
    %p153 = pnand %p151, %p152
    %p154 = pneg %p153
    // Predicated region
    $region25: #{simple_cnn_forward.10} parent=5 // pred_check
      _
    $region26: #{simple_cnn_forward.10} parent=5 // pred_check_branch
      %156 = sbr.rel (%p153) target = $region28
    $region27: #{simple_cnn_forward.10} parent=5 // pred_region
      %s157 = ssub.s32 %s8, 1
      %s158 = smul.u32 %s17, 7
      %s159 = sadd.s32 %s158, %s18
      %s160 = smul.u32 64, %s159
      %p161 = scmp.lt.s32.totalorder %s160, 895
      %s162 = scalar_select %p161, %s160, 895
      %s163 = smul.addr %s162, 4
      %s164 = scalar_lea.vmem %s0, %s163
      %p165 = pneg %p50
      %p166 = pneg %p47
      %s167 = smul.u32 %s17, 7
      %s168 = sadd.s32 %s167, %s18
      %s169 = smul.u32 1024, %s168
      %p170 = scmp.lt.s32.totalorder %s169, 14335
      %s171 = scalar_select %p170, %s169, 14335
      %s172 = smul.addr %s171, 4
      %s173 = scalar_lea.vmem %s1, %s172
      %p174 = pneg %p80
      %p175 = pneg %p77
      %p176 = pneg %p106
      %p177 = pneg %p103
      %p178 = scmp.lt.s32.totalorder %s17, 1
      %s179 = scalar_select %p178, %s17, 1
      %s180 = smul.addr %s179, 8
      %s181 = scalar_lea.vmem %s2, %s180
      %s182 = smul.u32 %s17, 7
      %s183 = sadd.s32 %s182, %s18
      %s184 = smul.u32 64, %s183
      %p185 = scmp.lt.s32.totalorder %s184, 895
      %s186 = scalar_select %p185, %s184, 895
      %s187 = smul.addr %s186, 4
      %s188 = scalar_lea.vmem %s0, %s187
      %s189 = smul.u32 %s17, 7
      %s190 = sadd.s32 %s189, %s18
      %s191 = smul.u32 64, %s190
      %s192 = smul.u32 %s17, 7
      %s193 = sadd.s32 %s192, %s18
      %s194 = smul.u32 1024, %s193
      %p195 = scmp.lt.s32.totalorder %s194, 14335
      %s196 = scalar_select %p195, %s194, 14335
      %s197 = smul.addr %s196, 4
      %s198 = scalar_lea.vmem %s1, %s197
      %s199 = smul.u32 %s17, 7
      %s200 = sadd.s32 %s199, %s18
      %s201 = smul.u32 1024, %s200
      %p202 = scmp.lt.s32.totalorder %s17, 1
      %s203 = scalar_select %p202, %s17, 1
      %s204 = smul.addr %s203, 8
      %s205 = scalar_lea.vmem %s2, %s204
      %p207 = scmp.eq.s32.totalorder %s18, 0
      // Predicated region
      $region29: #{simple_cnn_forward.10} parent=27 // pred_check
        %p208 = pneg %p207
      $region30: #{simple_cnn_forward.10} parent=27 // pred_check_branch
        %210 = sbr.rel (%p208) target = $region32
      $region31: #{simple_cnn_forward.10} parent=27 // pred_region
        %211 = vst [vmem:[%s205] sm:$0xff] 0.0
      $region32: #{simple_cnn_forward.10} parent=27 // pred_fallthru
        _
      %v212 = vld [vmem:[%s205] sm:$0xff]
      %v213 = vld [vmem:[%s188] sm:$0xff]
      %v214 = vld [vmem:[%s188 + $0x8] sm:$0xff]
      %v215 = vld [vmem:[%s188 + $0x10] sm:$0xff]
      %v216 = vld [vmem:[%s188 + $0x18] sm:$0xff]
      %v217 = vld [vmem:[%s188 + $0x20] sm:$0xff]
      %v218 = vld [vmem:[%s188 + $0x28] sm:$0xff]
      %v219 = vld [vmem:[%s188 + $0x30] sm:$0xff]
      %v220 = vld [vmem:[%s188 + $0x38] sm:$0xff]
      %v221 = vld [vmem:[%s188 + $0x40] sm:$0xff]
      %v222 = vld [vmem:[%s188 + $0x48] sm:$0xff]
      %v223 = vld [vmem:[%s188 + $0x50] sm:$0xff]
      %v224 = vld [vmem:[%s188 + $0x58] sm:$0xff]
      %v225 = vld [vmem:[%s188 + $0x60] sm:$0xff]
      %v226 = vld [vmem:[%s188 + $0x68] sm:$0xff]
      %v227 = vld [vmem:[%s188 + $0x70] sm:$0xff]
      %v228 = vld [vmem:[%s188 + $0x78] sm:$0xff]
      %v229 = vld [vmem:[%s188 + $0x80] sm:$0xff]
      %v230 = vld [vmem:[%s188 + $0x88] sm:$0xff]
      %v231 = vld [vmem:[%s188 + $0x90] sm:$0xff]
      %v232 = vld [vmem:[%s188 + $0x98] sm:$0xff]
      %v233 = vld [vmem:[%s188 + $0xa0] sm:$0xff]
      %v234 = vld [vmem:[%s188 + $0xa8] sm:$0xff]
      %v235 = vld [vmem:[%s188 + $0xb0] sm:$0xff]
      %v236 = vld [vmem:[%s188 + $0xb8] sm:$0xff]
      %v237 = vld [vmem:[%s188 + $0xc0] sm:$0xff]
      %v238 = vld [vmem:[%s188 + $0xc8] sm:$0xff]
      %v239 = vld [vmem:[%s188 + $0xd0] sm:$0xff]
      %v240 = vld [vmem:[%s188 + $0xd8] sm:$0xff]
      %v241 = vld [vmem:[%s188 + $0xe0] sm:$0xff]
      %v242 = vld [vmem:[%s188 + $0xe8] sm:$0xff]
      %v243 = vld [vmem:[%s188 + $0xf0] sm:$0xff]
      %v244 = vld [vmem:[%s188 + $0xf8] sm:$0xff]
      %v245 = vld [vmem:[%s198] sm:$0xf]
      %v246 = vld [vmem:[%s198 + $0x4] sm:$0xf]
      %v247 = vld [vmem:[%s198 + $0x8] sm:$0xf]
      %v248 = vld [vmem:[%s198 + $0xc] sm:$0xf]
      %v249 = vld [vmem:[%s198 + $0x10] sm:$0xf]
      %v250 = vld [vmem:[%s198 + $0x14] sm:$0xf]
      %v251 = vld [vmem:[%s198 + $0x18] sm:$0xf]
      %v252 = vld [vmem:[%s198 + $0x1c] sm:$0xf]
      %v253 = vld [vmem:[%s198 + $0x20] sm:$0xf]
      %v254 = vld [vmem:[%s198 + $0x24] sm:$0xf]
      %v255 = vld [vmem:[%s198 + $0x28] sm:$0xf]
      %v256 = vld [vmem:[%s198 + $0x2c] sm:$0xf]
      %v257 = vld [vmem:[%s198 + $0x30] sm:$0xf]
      %v258 = vld [vmem:[%s198 + $0x34] sm:$0xf]
      %v259 = vld [vmem:[%s198 + $0x38] sm:$0xf]
      %v260 = vld [vmem:[%s198 + $0x3c] sm:$0xf]
      %v261 = vld [vmem:[%s198 + $0x40] sm:$0xf]
      %v262 = vld [vmem:[%s198 + $0x44] sm:$0xf]
      %v263 = vld [vmem:[%s198 + $0x48] sm:$0xf]
      %v264 = vld [vmem:[%s198 + $0x4c] sm:$0xf]
      %v265 = vld [vmem:[%s198 + $0x50] sm:$0xf]
      %v266 = vld [vmem:[%s198 + $0x54] sm:$0xf]
      %v267 = vld [vmem:[%s198 + $0x58] sm:$0xf]
      %v268 = vld [vmem:[%s198 + $0x5c] sm:$0xf]
      %v269 = vld [vmem:[%s198 + $0x60] sm:$0xf]
      %v270 = vld [vmem:[%s198 + $0x64] sm:$0xf]
      %v271 = vld [vmem:[%s198 + $0x68] sm:$0xf]
      %v272 = vld [vmem:[%s198 + $0x6c] sm:$0xf]
      %v273 = vld [vmem:[%s198 + $0x70] sm:$0xf]
      %v274 = vld [vmem:[%s198 + $0x74] sm:$0xf]
      %v275 = vld [vmem:[%s198 + $0x78] sm:$0xf]
      %v276 = vld [vmem:[%s198 + $0x7c] sm:$0xf]
      %v277 = vld [vmem:[%s198 + $0x80] sm:$0xf]
      %v278 = vld [vmem:[%s198 + $0x84] sm:$0xf]
      %v279 = vld [vmem:[%s198 + $0x88] sm:$0xf]
      %v280 = vld [vmem:[%s198 + $0x8c] sm:$0xf]
      %v281 = vld [vmem:[%s198 + $0x90] sm:$0xf]
      %v282 = vld [vmem:[%s198 + $0x94] sm:$0xf]
      %v283 = vld [vmem:[%s198 + $0x98] sm:$0xf]
      %v284 = vld [vmem:[%s198 + $0x9c] sm:$0xf]
      %v285 = vld [vmem:[%s198 + $0xa0] sm:$0xf]
      %v286 = vld [vmem:[%s198 + $0xa4] sm:$0xf]
      %v287 = vld [vmem:[%s198 + $0xa8] sm:$0xf]
      %v288 = vld [vmem:[%s198 + $0xac] sm:$0xf]
      %v289 = vld [vmem:[%s198 + $0xb0] sm:$0xf]
      %v290 = vld [vmem:[%s198 + $0xb4] sm:$0xf]
      %v291 = vld [vmem:[%s198 + $0xb8] sm:$0xf]
      %v292 = vld [vmem:[%s198 + $0xbc] sm:$0xf]
      %v293 = vld [vmem:[%s198 + $0xc0] sm:$0xf]
      %v294 = vld [vmem:[%s198 + $0xc4] sm:$0xf]
      %v295 = vld [vmem:[%s198 + $0xc8] sm:$0xf]
      %v296 = vld [vmem:[%s198 + $0xcc] sm:$0xf]
      %v297 = vld [vmem:[%s198 + $0xd0] sm:$0xf]
      %v298 = vld [vmem:[%s198 + $0xd4] sm:$0xf]
      %v299 = vld [vmem:[%s198 + $0xd8] sm:$0xf]
      %v300 = vld [vmem:[%s198 + $0xdc] sm:$0xf]
      %v301 = vld [vmem:[%s198 + $0xe0] sm:$0xf]
      %v302 = vld [vmem:[%s198 + $0xe4] sm:$0xf]
      %v303 = vld [vmem:[%s198 + $0xe8] sm:$0xf]
      %v304 = vld [vmem:[%s198 + $0xec] sm:$0xf]
      %v305 = vld [vmem:[%s198 + $0xf0] sm:$0xf]
      %v306 = vld [vmem:[%s198 + $0xf4] sm:$0xf]
      %v307 = vld [vmem:[%s198 + $0xf8] sm:$0xf]
      %v308 = vld [vmem:[%s198 + $0xfc] sm:$0xf]
      %v309 = vld [vmem:[%s198 + $0x100] sm:$0xf]
      %v310 = vld [vmem:[%s198 + $0x104] sm:$0xf]
      %v311 = vld [vmem:[%s198 + $0x108] sm:$0xf]
      %v312 = vld [vmem:[%s198 + $0x10c] sm:$0xf]
      %v313 = vld [vmem:[%s198 + $0x110] sm:$0xf]
      %v314 = vld [vmem:[%s198 + $0x114] sm:$0xf]
      %v315 = vld [vmem:[%s198 + $0x118] sm:$0xf]
      %v316 = vld [vmem:[%s198 + $0x11c] sm:$0xf]
      %v317 = vld [vmem:[%s198 + $0x120] sm:$0xf]
      %v318 = vld [vmem:[%s198 + $0x124] sm:$0xf]
      %v319 = vld [vmem:[%s198 + $0x128] sm:$0xf]
      %v320 = vld [vmem:[%s198 + $0x12c] sm:$0xf]
      %v321 = vld [vmem:[%s198 + $0x130] sm:$0xf]
      %v322 = vld [vmem:[%s198 + $0x134] sm:$0xf]
      %v323 = vld [vmem:[%s198 + $0x138] sm:$0xf]
      %v324 = vld [vmem:[%s198 + $0x13c] sm:$0xf]
      %v325 = vld [vmem:[%s198 + $0x140] sm:$0xf]
      %v326 = vld [vmem:[%s198 + $0x144] sm:$0xf]
      %v327 = vld [vmem:[%s198 + $0x148] sm:$0xf]
      %v328 = vld [vmem:[%s198 + $0x14c] sm:$0xf]
      %v329 = vld [vmem:[%s198 + $0x150] sm:$0xf]
      %v330 = vld [vmem:[%s198 + $0x154] sm:$0xf]
      %v331 = vld [vmem:[%s198 + $0x158] sm:$0xf]
      %v332 = vld [vmem:[%s198 + $0x15c] sm:$0xf]
      %v333 = vld [vmem:[%s198 + $0x160] sm:$0xf]
      %v334 = vld [vmem:[%s198 + $0x164] sm:$0xf]
      %v335 = vld [vmem:[%s198 + $0x168] sm:$0xf]
      %v336 = vld [vmem:[%s198 + $0x16c] sm:$0xf]
      %v337 = vld [vmem:[%s198 + $0x170] sm:$0xf]
      %v338 = vld [vmem:[%s198 + $0x174] sm:$0xf]
      %v339 = vld [vmem:[%s198 + $0x178] sm:$0xf]
      %v340 = vld [vmem:[%s198 + $0x17c] sm:$0xf]
      %v341 = vld [vmem:[%s198 + $0x180] sm:$0xf]
      %v342 = vld [vmem:[%s198 + $0x184] sm:$0xf]
      %v343 = vld [vmem:[%s198 + $0x188] sm:$0xf]
      %v344 = vld [vmem:[%s198 + $0x18c] sm:$0xf]
      %v345 = vld [vmem:[%s198 + $0x190] sm:$0xf]
      %v346 = vld [vmem:[%s198 + $0x194] sm:$0xf]
      %v347 = vld [vmem:[%s198 + $0x198] sm:$0xf]
      %v348 = vld [vmem:[%s198 + $0x19c] sm:$0xf]
      %v349 = vld [vmem:[%s198 + $0x1a0] sm:$0xf]
      %v350 = vld [vmem:[%s198 + $0x1a4] sm:$0xf]
      %v351 = vld [vmem:[%s198 + $0x1a8] sm:$0xf]
      %v352 = vld [vmem:[%s198 + $0x1ac] sm:$0xf]
      %v353 = vld [vmem:[%s198 + $0x1b0] sm:$0xf]
      %v354 = vld [vmem:[%s198 + $0x1b4] sm:$0xf]
      %v355 = vld [vmem:[%s198 + $0x1b8] sm:$0xf]
      %v356 = vld [vmem:[%s198 + $0x1bc] sm:$0xf]
      %v357 = vld [vmem:[%s198 + $0x1c0] sm:$0xf]
      %v358 = vld [vmem:[%s198 + $0x1c4] sm:$0xf]
      %v359 = vld [vmem:[%s198 + $0x1c8] sm:$0xf]
      %v360 = vld [vmem:[%s198 + $0x1cc] sm:$0xf]
      %v361 = vld [vmem:[%s198 + $0x1d0] sm:$0xf]
      %v362 = vld [vmem:[%s198 + $0x1d4] sm:$0xf]
      %v363 = vld [vmem:[%s198 + $0x1d8] sm:$0xf]
      %v364 = vld [vmem:[%s198 + $0x1dc] sm:$0xf]
      %v365 = vld [vmem:[%s198 + $0x1e0] sm:$0xf]
      %v366 = vld [vmem:[%s198 + $0x1e4] sm:$0xf]
      %v367 = vld [vmem:[%s198 + $0x1e8] sm:$0xf]
      %v368 = vld [vmem:[%s198 + $0x1ec] sm:$0xf]
      %v369 = vld [vmem:[%s198 + $0x1f0] sm:$0xf]
      %v370 = vld [vmem:[%s198 + $0x1f4] sm:$0xf]
      %v371 = vld [vmem:[%s198 + $0x1f8] sm:$0xf]
      %v372 = vld [vmem:[%s198 + $0x1fc] sm:$0xf]
      %v373 = vld [vmem:[%s198 + $0x200] sm:$0xf]
      %v374 = vld [vmem:[%s198 + $0x204] sm:$0xf]
      %v375 = vld [vmem:[%s198 + $0x208] sm:$0xf]
      %v376 = vld [vmem:[%s198 + $0x20c] sm:$0xf]
      %v377 = vld [vmem:[%s198 + $0x210] sm:$0xf]
      %v378 = vld [vmem:[%s198 + $0x214] sm:$0xf]
      %v379 = vld [vmem:[%s198 + $0x218] sm:$0xf]
      %v380 = vld [vmem:[%s198 + $0x21c] sm:$0xf]
      %v381 = vld [vmem:[%s198 + $0x220] sm:$0xf]
      %v382 = vld [vmem:[%s198 + $0x224] sm:$0xf]
      %v383 = vld [vmem:[%s198 + $0x228] sm:$0xf]
      %v384 = vld [vmem:[%s198 + $0x22c] sm:$0xf]
      %v385 = vld [vmem:[%s198 + $0x230] sm:$0xf]
      %v386 = vld [vmem:[%s198 + $0x234] sm:$0xf]
      %v387 = vld [vmem:[%s198 + $0x238] sm:$0xf]
      %v388 = vld [vmem:[%s198 + $0x23c] sm:$0xf]
      %v389 = vld [vmem:[%s198 + $0x240] sm:$0xf]
      %v390 = vld [vmem:[%s198 + $0x244] sm:$0xf]
      %v391 = vld [vmem:[%s198 + $0x248] sm:$0xf]
      %v392 = vld [vmem:[%s198 + $0x24c] sm:$0xf]
      %v393 = vld [vmem:[%s198 + $0x250] sm:$0xf]
      %v394 = vld [vmem:[%s198 + $0x254] sm:$0xf]
      %v395 = vld [vmem:[%s198 + $0x258] sm:$0xf]
      %v396 = vld [vmem:[%s198 + $0x25c] sm:$0xf]
      %v397 = vld [vmem:[%s198 + $0x260] sm:$0xf]
      %v398 = vld [vmem:[%s198 + $0x264] sm:$0xf]
      %v399 = vld [vmem:[%s198 + $0x268] sm:$0xf]
      %v400 = vld [vmem:[%s198 + $0x26c] sm:$0xf]
      %v401 = vld [vmem:[%s198 + $0x270] sm:$0xf]
      %v402 = vld [vmem:[%s198 + $0x274] sm:$0xf]
      %v403 = vld [vmem:[%s198 + $0x278] sm:$0xf]
      %v404 = vld [vmem:[%s198 + $0x27c] sm:$0xf]
      %v405 = vld [vmem:[%s198 + $0x280] sm:$0xf]
      %v406 = vld [vmem:[%s198 + $0x284] sm:$0xf]
      %v407 = vld [vmem:[%s198 + $0x288] sm:$0xf]
      %v408 = vld [vmem:[%s198 + $0x28c] sm:$0xf]
      %v409 = vld [vmem:[%s198 + $0x290] sm:$0xf]
      %v410 = vld [vmem:[%s198 + $0x294] sm:$0xf]
      %v411 = vld [vmem:[%s198 + $0x298] sm:$0xf]
      %v412 = vld [vmem:[%s198 + $0x29c] sm:$0xf]
      %v413 = vld [vmem:[%s198 + $0x2a0] sm:$0xf]
      %v414 = vld [vmem:[%s198 + $0x2a4] sm:$0xf]
      %v415 = vld [vmem:[%s198 + $0x2a8] sm:$0xf]
      %v416 = vld [vmem:[%s198 + $0x2ac] sm:$0xf]
      %v417 = vld [vmem:[%s198 + $0x2b0] sm:$0xf]
      %v418 = vld [vmem:[%s198 + $0x2b4] sm:$0xf]
      %v419 = vld [vmem:[%s198 + $0x2b8] sm:$0xf]
      %v420 = vld [vmem:[%s198 + $0x2bc] sm:$0xf]
      %v421 = vld [vmem:[%s198 + $0x2c0] sm:$0xf]
      %v422 = vld [vmem:[%s198 + $0x2c4] sm:$0xf]
      %v423 = vld [vmem:[%s198 + $0x2c8] sm:$0xf]
      %v424 = vld [vmem:[%s198 + $0x2cc] sm:$0xf]
      %v425 = vld [vmem:[%s198 + $0x2d0] sm:$0xf]
      %v426 = vld [vmem:[%s198 + $0x2d4] sm:$0xf]
      %v427 = vld [vmem:[%s198 + $0x2d8] sm:$0xf]
      %v428 = vld [vmem:[%s198 + $0x2dc] sm:$0xf]
      %v429 = vld [vmem:[%s198 + $0x2e0] sm:$0xf]
      %v430 = vld [vmem:[%s198 + $0x2e4] sm:$0xf]
      %v431 = vld [vmem:[%s198 + $0x2e8] sm:$0xf]
      %v432 = vld [vmem:[%s198 + $0x2ec] sm:$0xf]
      %v433 = vld [vmem:[%s198 + $0x2f0] sm:$0xf]
      %v434 = vld [vmem:[%s198 + $0x2f4] sm:$0xf]
      %v435 = vld [vmem:[%s198 + $0x2f8] sm:$0xf]
      %v436 = vld [vmem:[%s198 + $0x2fc] sm:$0xf]
      %v437 = vld [vmem:[%s198 + $0x300] sm:$0xf]
      %v438 = vld [vmem:[%s198 + $0x304] sm:$0xf]
      %v439 = vld [vmem:[%s198 + $0x308] sm:$0xf]
      %v440 = vld [vmem:[%s198 + $0x30c] sm:$0xf]
      %v441 = vld [vmem:[%s198 + $0x310] sm:$0xf]
      %v442 = vld [vmem:[%s198 + $0x314] sm:$0xf]
      %v443 = vld [vmem:[%s198 + $0x318] sm:$0xf]
      %v444 = vld [vmem:[%s198 + $0x31c] sm:$0xf]
      %v445 = vld [vmem:[%s198 + $0x320] sm:$0xf]
      %v446 = vld [vmem:[%s198 + $0x324] sm:$0xf]
      %v447 = vld [vmem:[%s198 + $0x328] sm:$0xf]
      %v448 = vld [vmem:[%s198 + $0x32c] sm:$0xf]
      %v449 = vld [vmem:[%s198 + $0x330] sm:$0xf]
      %v450 = vld [vmem:[%s198 + $0x334] sm:$0xf]
      %v451 = vld [vmem:[%s198 + $0x338] sm:$0xf]
      %v452 = vld [vmem:[%s198 + $0x33c] sm:$0xf]
      %v453 = vld [vmem:[%s198 + $0x340] sm:$0xf]
      %v454 = vld [vmem:[%s198 + $0x344] sm:$0xf]
      %v455 = vld [vmem:[%s198 + $0x348] sm:$0xf]
      %v456 = vld [vmem:[%s198 + $0x34c] sm:$0xf]
      %v457 = vld [vmem:[%s198 + $0x350] sm:$0xf]
      %v458 = vld [vmem:[%s198 + $0x354] sm:$0xf]
      %v459 = vld [vmem:[%s198 + $0x358] sm:$0xf]
      %v460 = vld [vmem:[%s198 + $0x35c] sm:$0xf]
      %v461 = vld [vmem:[%s198 + $0x360] sm:$0xf]
      %v462 = vld [vmem:[%s198 + $0x364] sm:$0xf]
      %v463 = vld [vmem:[%s198 + $0x368] sm:$0xf]
      %v464 = vld [vmem:[%s198 + $0x36c] sm:$0xf]
      %v465 = vld [vmem:[%s198 + $0x370] sm:$0xf]
      %v466 = vld [vmem:[%s198 + $0x374] sm:$0xf]
      %v467 = vld [vmem:[%s198 + $0x378] sm:$0xf]
      %v468 = vld [vmem:[%s198 + $0x37c] sm:$0xf]
      %v469 = vld [vmem:[%s198 + $0x380] sm:$0xf]
      %v470 = vld [vmem:[%s198 + $0x384] sm:$0xf]
      %v471 = vld [vmem:[%s198 + $0x388] sm:$0xf]
      %v472 = vld [vmem:[%s198 + $0x38c] sm:$0xf]
      %v473 = vld [vmem:[%s198 + $0x390] sm:$0xf]
      %v474 = vld [vmem:[%s198 + $0x394] sm:$0xf]
      %v475 = vld [vmem:[%s198 + $0x398] sm:$0xf]
      %v476 = vld [vmem:[%s198 + $0x39c] sm:$0xf]
      %v477 = vld [vmem:[%s198 + $0x3a0] sm:$0xf]
      %v478 = vld [vmem:[%s198 + $0x3a4] sm:$0xf]
      %v479 = vld [vmem:[%s198 + $0x3a8] sm:$0xf]
      %v480 = vld [vmem:[%s198 + $0x3ac] sm:$0xf]
      %v481 = vld [vmem:[%s198 + $0x3b0] sm:$0xf]
      %v482 = vld [vmem:[%s198 + $0x3b4] sm:$0xf]
      %v483 = vld [vmem:[%s198 + $0x3b8] sm:$0xf]
      %v484 = vld [vmem:[%s198 + $0x3bc] sm:$0xf]
      %v485 = vld [vmem:[%s198 + $0x3c0] sm:$0xf]
      %v486 = vld [vmem:[%s198 + $0x3c4] sm:$0xf]
      %v487 = vld [vmem:[%s198 + $0x3c8] sm:$0xf]
      %v488 = vld [vmem:[%s198 + $0x3cc] sm:$0xf]
      %v489 = vld [vmem:[%s198 + $0x3d0] sm:$0xf]
      %v490 = vld [vmem:[%s198 + $0x3d4] sm:$0xf]
      %v491 = vld [vmem:[%s198 + $0x3d8] sm:$0xf]
      %v492 = vld [vmem:[%s198 + $0x3dc] sm:$0xf]
      %v493 = vld [vmem:[%s198 + $0x3e0] sm:$0xf]
      %v494 = vld [vmem:[%s198 + $0x3e4] sm:$0xf]
      %v495 = vld [vmem:[%s198 + $0x3e8] sm:$0xf]
      %v496 = vld [vmem:[%s198 + $0x3ec] sm:$0xf]
      %v497 = vld [vmem:[%s198 + $0x3f0] sm:$0xf]
      %v498 = vld [vmem:[%s198 + $0x3f4] sm:$0xf]
      %v499 = vld [vmem:[%s198 + $0x3f8] sm:$0xf]
      %v500 = vld [vmem:[%s198 + $0x3fc] sm:$0xf]
      %v501 = vld [vmem:[%s198 + $0x400] sm:$0xf]
      %v502 = vld [vmem:[%s198 + $0x404] sm:$0xf]
      %v503 = vld [vmem:[%s198 + $0x408] sm:$0xf]
      %v504 = vld [vmem:[%s198 + $0x40c] sm:$0xf]
      %v505 = vld [vmem:[%s198 + $0x410] sm:$0xf]
      %v506 = vld [vmem:[%s198 + $0x414] sm:$0xf]
      %v507 = vld [vmem:[%s198 + $0x418] sm:$0xf]
      %v508 = vld [vmem:[%s198 + $0x41c] sm:$0xf]
      %v509 = vld [vmem:[%s198 + $0x420] sm:$0xf]
      %v510 = vld [vmem:[%s198 + $0x424] sm:$0xf]
      %v511 = vld [vmem:[%s198 + $0x428] sm:$0xf]
      %v512 = vld [vmem:[%s198 + $0x42c] sm:$0xf]
      %v513 = vld [vmem:[%s198 + $0x430] sm:$0xf]
      %v514 = vld [vmem:[%s198 + $0x434] sm:$0xf]
      %v515 = vld [vmem:[%s198 + $0x438] sm:$0xf]
      %v516 = vld [vmem:[%s198 + $0x43c] sm:$0xf]
      %v517 = vld [vmem:[%s198 + $0x440] sm:$0xf]
      %v518 = vld [vmem:[%s198 + $0x444] sm:$0xf]
      %v519 = vld [vmem:[%s198 + $0x448] sm:$0xf]
      %v520 = vld [vmem:[%s198 + $0x44c] sm:$0xf]
      %v521 = vld [vmem:[%s198 + $0x450] sm:$0xf]
      %v522 = vld [vmem:[%s198 + $0x454] sm:$0xf]
      %v523 = vld [vmem:[%s198 + $0x458] sm:$0xf]
      %v524 = vld [vmem:[%s198 + $0x45c] sm:$0xf]
      %v525 = vld [vmem:[%s198 + $0x460] sm:$0xf]
      %v526 = vld [vmem:[%s198 + $0x464] sm:$0xf]
      %v527 = vld [vmem:[%s198 + $0x468] sm:$0xf]
      %v528 = vld [vmem:[%s198 + $0x46c] sm:$0xf]
      %v529 = vld [vmem:[%s198 + $0x470] sm:$0xf]
      %v530 = vld [vmem:[%s198 + $0x474] sm:$0xf]
      %v531 = vld [vmem:[%s198 + $0x478] sm:$0xf]
      %v532 = vld [vmem:[%s198 + $0x47c] sm:$0xf]
      %v533 = vld [vmem:[%s198 + $0x480] sm:$0xf]
      %v534 = vld [vmem:[%s198 + $0x484] sm:$0xf]
      %v535 = vld [vmem:[%s198 + $0x488] sm:$0xf]
      %v536 = vld [vmem:[%s198 + $0x48c] sm:$0xf]
      %v537 = vld [vmem:[%s198 + $0x490] sm:$0xf]
      %v538 = vld [vmem:[%s198 + $0x494] sm:$0xf]
      %v539 = vld [vmem:[%s198 + $0x498] sm:$0xf]
      %v540 = vld [vmem:[%s198 + $0x49c] sm:$0xf]
      %v541 = vld [vmem:[%s198 + $0x4a0] sm:$0xf]
      %v542 = vld [vmem:[%s198 + $0x4a4] sm:$0xf]
      %v543 = vld [vmem:[%s198 + $0x4a8] sm:$0xf]
      %v544 = vld [vmem:[%s198 + $0x4ac] sm:$0xf]
      %v545 = vld [vmem:[%s198 + $0x4b0] sm:$0xf]
      %v546 = vld [vmem:[%s198 + $0x4b4] sm:$0xf]
      %v547 = vld [vmem:[%s198 + $0x4b8] sm:$0xf]
      %v548 = vld [vmem:[%s198 + $0x4bc] sm:$0xf]
      %v549 = vld [vmem:[%s198 + $0x4c0] sm:$0xf]
      %v550 = vld [vmem:[%s198 + $0x4c4] sm:$0xf]
      %v551 = vld [vmem:[%s198 + $0x4c8] sm:$0xf]
      %v552 = vld [vmem:[%s198 + $0x4cc] sm:$0xf]
      %v553 = vld [vmem:[%s198 + $0x4d0] sm:$0xf]
      %v554 = vld [vmem:[%s198 + $0x4d4] sm:$0xf]
      %v555 = vld [vmem:[%s198 + $0x4d8] sm:$0xf]
      %v556 = vld [vmem:[%s198 + $0x4dc] sm:$0xf]
      %v557 = vld [vmem:[%s198 + $0x4e0] sm:$0xf]
      %v558 = vld [vmem:[%s198 + $0x4e4] sm:$0xf]
      %v559 = vld [vmem:[%s198 + $0x4e8] sm:$0xf]
      %v560 = vld [vmem:[%s198 + $0x4ec] sm:$0xf]
      %v561 = vld [vmem:[%s198 + $0x4f0] sm:$0xf]
      %v562 = vld [vmem:[%s198 + $0x4f4] sm:$0xf]
      %v563 = vld [vmem:[%s198 + $0x4f8] sm:$0xf]
      %v564 = vld [vmem:[%s198 + $0x4fc] sm:$0xf]
      %v565 = vld [vmem:[%s198 + $0x500] sm:$0xf]
      %v566 = vld [vmem:[%s198 + $0x504] sm:$0xf]
      %v567 = vld [vmem:[%s198 + $0x508] sm:$0xf]
      %v568 = vld [vmem:[%s198 + $0x50c] sm:$0xf]
      %v569 = vld [vmem:[%s198 + $0x510] sm:$0xf]
      %v570 = vld [vmem:[%s198 + $0x514] sm:$0xf]
      %v571 = vld [vmem:[%s198 + $0x518] sm:$0xf]
      %v572 = vld [vmem:[%s198 + $0x51c] sm:$0xf]
      %v573 = vld [vmem:[%s198 + $0x520] sm:$0xf]
      %v574 = vld [vmem:[%s198 + $0x524] sm:$0xf]
      %v575 = vld [vmem:[%s198 + $0x528] sm:$0xf]
      %v576 = vld [vmem:[%s198 + $0x52c] sm:$0xf]
      %v577 = vld [vmem:[%s198 + $0x530] sm:$0xf]
      %v578 = vld [vmem:[%s198 + $0x534] sm:$0xf]
      %v579 = vld [vmem:[%s198 + $0x538] sm:$0xf]
      %v580 = vld [vmem:[%s198 + $0x53c] sm:$0xf]
      %v581 = vld [vmem:[%s198 + $0x540] sm:$0xf]
      %v582 = vld [vmem:[%s198 + $0x544] sm:$0xf]
      %v583 = vld [vmem:[%s198 + $0x548] sm:$0xf]
      %v584 = vld [vmem:[%s198 + $0x54c] sm:$0xf]
      %v585 = vld [vmem:[%s198 + $0x550] sm:$0xf]
      %v586 = vld [vmem:[%s198 + $0x554] sm:$0xf]
      %v587 = vld [vmem:[%s198 + $0x558] sm:$0xf]
      %v588 = vld [vmem:[%s198 + $0x55c] sm:$0xf]
      %v589 = vld [vmem:[%s198 + $0x560] sm:$0xf]
      %v590 = vld [vmem:[%s198 + $0x564] sm:$0xf]
      %v591 = vld [vmem:[%s198 + $0x568] sm:$0xf]
      %v592 = vld [vmem:[%s198 + $0x56c] sm:$0xf]
      %v593 = vld [vmem:[%s198 + $0x570] sm:$0xf]
      %v594 = vld [vmem:[%s198 + $0x574] sm:$0xf]
      %v595 = vld [vmem:[%s198 + $0x578] sm:$0xf]
      %v596 = vld [vmem:[%s198 + $0x57c] sm:$0xf]
      %v597 = vld [vmem:[%s198 + $0x580] sm:$0xf]
      %v598 = vld [vmem:[%s198 + $0x584] sm:$0xf]
      %v599 = vld [vmem:[%s198 + $0x588] sm:$0xf]
      %v600 = vld [vmem:[%s198 + $0x58c] sm:$0xf]
      %v601 = vld [vmem:[%s198 + $0x590] sm:$0xf]
      %v602 = vld [vmem:[%s198 + $0x594] sm:$0xf]
      %v603 = vld [vmem:[%s198 + $0x598] sm:$0xf]
      %v604 = vld [vmem:[%s198 + $0x59c] sm:$0xf]
      %v605 = vld [vmem:[%s198 + $0x5a0] sm:$0xf]
      %v606 = vld [vmem:[%s198 + $0x5a4] sm:$0xf]
      %v607 = vld [vmem:[%s198 + $0x5a8] sm:$0xf]
      %v608 = vld [vmem:[%s198 + $0x5ac] sm:$0xf]
      %v609 = vld [vmem:[%s198 + $0x5b0] sm:$0xf]
      %v610 = vld [vmem:[%s198 + $0x5b4] sm:$0xf]
      %v611 = vld [vmem:[%s198 + $0x5b8] sm:$0xf]
      %v612 = vld [vmem:[%s198 + $0x5bc] sm:$0xf]
      %v613 = vld [vmem:[%s198 + $0x5c0] sm:$0xf]
      %v614 = vld [vmem:[%s198 + $0x5c4] sm:$0xf]
      %v615 = vld [vmem:[%s198 + $0x5c8] sm:$0xf]
      %v616 = vld [vmem:[%s198 + $0x5cc] sm:$0xf]
      %v617 = vld [vmem:[%s198 + $0x5d0] sm:$0xf]
      %v618 = vld [vmem:[%s198 + $0x5d4] sm:$0xf]
      %v619 = vld [vmem:[%s198 + $0x5d8] sm:$0xf]
      %v620 = vld [vmem:[%s198 + $0x5dc] sm:$0xf]
      %v621 = vld [vmem:[%s198 + $0x5e0] sm:$0xf]
      %v622 = vld [vmem:[%s198 + $0x5e4] sm:$0xf]
      %v623 = vld [vmem:[%s198 + $0x5e8] sm:$0xf]
      %v624 = vld [vmem:[%s198 + $0x5ec] sm:$0xf]
      %v625 = vld [vmem:[%s198 + $0x5f0] sm:$0xf]
      %v626 = vld [vmem:[%s198 + $0x5f4] sm:$0xf]
      %v627 = vld [vmem:[%s198 + $0x5f8] sm:$0xf]
      %v628 = vld [vmem:[%s198 + $0x5fc] sm:$0xf]
      %v629 = vld [vmem:[%s198 + $0x600] sm:$0xf]
      %v630 = vld [vmem:[%s198 + $0x604] sm:$0xf]
      %v631 = vld [vmem:[%s198 + $0x608] sm:$0xf]
      %v632 = vld [vmem:[%s198 + $0x60c] sm:$0xf]
      %v633 = vld [vmem:[%s198 + $0x610] sm:$0xf]
      %v634 = vld [vmem:[%s198 + $0x614] sm:$0xf]
      %v635 = vld [vmem:[%s198 + $0x618] sm:$0xf]
      %v636 = vld [vmem:[%s198 + $0x61c] sm:$0xf]
      %v637 = vld [vmem:[%s198 + $0x620] sm:$0xf]
      %v638 = vld [vmem:[%s198 + $0x624] sm:$0xf]
      %v639 = vld [vmem:[%s198 + $0x628] sm:$0xf]
      %v640 = vld [vmem:[%s198 + $0x62c] sm:$0xf]
      %v641 = vld [vmem:[%s198 + $0x630] sm:$0xf]
      %v642 = vld [vmem:[%s198 + $0x634] sm:$0xf]
      %v643 = vld [vmem:[%s198 + $0x638] sm:$0xf]
      %v644 = vld [vmem:[%s198 + $0x63c] sm:$0xf]
      %v645 = vld [vmem:[%s198 + $0x640] sm:$0xf]
      %v646 = vld [vmem:[%s198 + $0x644] sm:$0xf]
      %v647 = vld [vmem:[%s198 + $0x648] sm:$0xf]
      %v648 = vld [vmem:[%s198 + $0x64c] sm:$0xf]
      %v649 = vld [vmem:[%s198 + $0x650] sm:$0xf]
      %v650 = vld [vmem:[%s198 + $0x654] sm:$0xf]
      %v651 = vld [vmem:[%s198 + $0x658] sm:$0xf]
      %v652 = vld [vmem:[%s198 + $0x65c] sm:$0xf]
      %v653 = vld [vmem:[%s198 + $0x660] sm:$0xf]
      %v654 = vld [vmem:[%s198 + $0x664] sm:$0xf]
      %v655 = vld [vmem:[%s198 + $0x668] sm:$0xf]
      %v656 = vld [vmem:[%s198 + $0x66c] sm:$0xf]
      %v657 = vld [vmem:[%s198 + $0x670] sm:$0xf]
      %v658 = vld [vmem:[%s198 + $0x674] sm:$0xf]
      %v659 = vld [vmem:[%s198 + $0x678] sm:$0xf]
      %v660 = vld [vmem:[%s198 + $0x67c] sm:$0xf]
      %v661 = vld [vmem:[%s198 + $0x680] sm:$0xf]
      %v662 = vld [vmem:[%s198 + $0x684] sm:$0xf]
      %v663 = vld [vmem:[%s198 + $0x688] sm:$0xf]
      %v664 = vld [vmem:[%s198 + $0x68c] sm:$0xf]
      %v665 = vld [vmem:[%s198 + $0x690] sm:$0xf]
      %v666 = vld [vmem:[%s198 + $0x694] sm:$0xf]
      %v667 = vld [vmem:[%s198 + $0x698] sm:$0xf]
      %v668 = vld [vmem:[%s198 + $0x69c] sm:$0xf]
      %v669 = vld [vmem:[%s198 + $0x6a0] sm:$0xf]
      %v670 = vld [vmem:[%s198 + $0x6a4] sm:$0xf]
      %v671 = vld [vmem:[%s198 + $0x6a8] sm:$0xf]
      %v672 = vld [vmem:[%s198 + $0x6ac] sm:$0xf]
      %v673 = vld [vmem:[%s198 + $0x6b0] sm:$0xf]
      %v674 = vld [vmem:[%s198 + $0x6b4] sm:$0xf]
      %v675 = vld [vmem:[%s198 + $0x6b8] sm:$0xf]
      %v676 = vld [vmem:[%s198 + $0x6bc] sm:$0xf]
      %v677 = vld [vmem:[%s198 + $0x6c0] sm:$0xf]
      %v678 = vld [vmem:[%s198 + $0x6c4] sm:$0xf]
      %v679 = vld [vmem:[%s198 + $0x6c8] sm:$0xf]
      %v680 = vld [vmem:[%s198 + $0x6cc] sm:$0xf]
      %v681 = vld [vmem:[%s198 + $0x6d0] sm:$0xf]
      %v682 = vld [vmem:[%s198 + $0x6d4] sm:$0xf]
      %v683 = vld [vmem:[%s198 + $0x6d8] sm:$0xf]
      %v684 = vld [vmem:[%s198 + $0x6dc] sm:$0xf]
      %v685 = vld [vmem:[%s198 + $0x6e0] sm:$0xf]
      %v686 = vld [vmem:[%s198 + $0x6e4] sm:$0xf]
      %v687 = vld [vmem:[%s198 + $0x6e8] sm:$0xf]
      %v688 = vld [vmem:[%s198 + $0x6ec] sm:$0xf]
      %v689 = vld [vmem:[%s198 + $0x6f0] sm:$0xf]
      %v690 = vld [vmem:[%s198 + $0x6f4] sm:$0xf]
      %v691 = vld [vmem:[%s198 + $0x6f8] sm:$0xf]
      %v692 = vld [vmem:[%s198 + $0x6fc] sm:$0xf]
      %v693 = vld [vmem:[%s198 + $0x700] sm:$0xf]
      %v694 = vld [vmem:[%s198 + $0x704] sm:$0xf]
      %v695 = vld [vmem:[%s198 + $0x708] sm:$0xf]
      %v696 = vld [vmem:[%s198 + $0x70c] sm:$0xf]
      %v697 = vld [vmem:[%s198 + $0x710] sm:$0xf]
      %v698 = vld [vmem:[%s198 + $0x714] sm:$0xf]
      %v699 = vld [vmem:[%s198 + $0x718] sm:$0xf]
      %v700 = vld [vmem:[%s198 + $0x71c] sm:$0xf]
      %v701 = vld [vmem:[%s198 + $0x720] sm:$0xf]
      %v702 = vld [vmem:[%s198 + $0x724] sm:$0xf]
      %v703 = vld [vmem:[%s198 + $0x728] sm:$0xf]
      %v704 = vld [vmem:[%s198 + $0x72c] sm:$0xf]
      %v705 = vld [vmem:[%s198 + $0x730] sm:$0xf]
      %v706 = vld [vmem:[%s198 + $0x734] sm:$0xf]
      %v707 = vld [vmem:[%s198 + $0x738] sm:$0xf]
      %v708 = vld [vmem:[%s198 + $0x73c] sm:$0xf]
      %v709 = vld [vmem:[%s198 + $0x740] sm:$0xf]
      %v710 = vld [vmem:[%s198 + $0x744] sm:$0xf]
      %v711 = vld [vmem:[%s198 + $0x748] sm:$0xf]
      %v712 = vld [vmem:[%s198 + $0x74c] sm:$0xf]
      %v713 = vld [vmem:[%s198 + $0x750] sm:$0xf]
      %v714 = vld [vmem:[%s198 + $0x754] sm:$0xf]
      %v715 = vld [vmem:[%s198 + $0x758] sm:$0xf]
      %v716 = vld [vmem:[%s198 + $0x75c] sm:$0xf]
      %v717 = vld [vmem:[%s198 + $0x760] sm:$0xf]
      %v718 = vld [vmem:[%s198 + $0x764] sm:$0xf]
      %v719 = vld [vmem:[%s198 + $0x768] sm:$0xf]
      %v720 = vld [vmem:[%s198 + $0x76c] sm:$0xf]
      %v721 = vld [vmem:[%s198 + $0x770] sm:$0xf]
      %v722 = vld [vmem:[%s198 + $0x774] sm:$0xf]
      %v723 = vld [vmem:[%s198 + $0x778] sm:$0xf]
      %v724 = vld [vmem:[%s198 + $0x77c] sm:$0xf]
      %v725 = vld [vmem:[%s198 + $0x780] sm:$0xf]
      %v726 = vld [vmem:[%s198 + $0x784] sm:$0xf]
      %v727 = vld [vmem:[%s198 + $0x788] sm:$0xf]
      %v728 = vld [vmem:[%s198 + $0x78c] sm:$0xf]
      %v729 = vld [vmem:[%s198 + $0x790] sm:$0xf]
      %v730 = vld [vmem:[%s198 + $0x794] sm:$0xf]
      %v731 = vld [vmem:[%s198 + $0x798] sm:$0xf]
      %v732 = vld [vmem:[%s198 + $0x79c] sm:$0xf]
      %v733 = vld [vmem:[%s198 + $0x7a0] sm:$0xf]
      %v734 = vld [vmem:[%s198 + $0x7a4] sm:$0xf]
      %v735 = vld [vmem:[%s198 + $0x7a8] sm:$0xf]
      %v736 = vld [vmem:[%s198 + $0x7ac] sm:$0xf]
      %v737 = vld [vmem:[%s198 + $0x7b0] sm:$0xf]
      %v738 = vld [vmem:[%s198 + $0x7b4] sm:$0xf]
      %v739 = vld [vmem:[%s198 + $0x7b8] sm:$0xf]
      %v740 = vld [vmem:[%s198 + $0x7bc] sm:$0xf]
      %v741 = vld [vmem:[%s198 + $0x7c0] sm:$0xf]
      %v742 = vld [vmem:[%s198 + $0x7c4] sm:$0xf]
      %v743 = vld [vmem:[%s198 + $0x7c8] sm:$0xf]
      %v744 = vld [vmem:[%s198 + $0x7cc] sm:$0xf]
      %v745 = vld [vmem:[%s198 + $0x7d0] sm:$0xf]
      %v746 = vld [vmem:[%s198 + $0x7d4] sm:$0xf]
      %v747 = vld [vmem:[%s198 + $0x7d8] sm:$0xf]
      %v748 = vld [vmem:[%s198 + $0x7dc] sm:$0xf]
      %v749 = vld [vmem:[%s198 + $0x7e0] sm:$0xf]
      %v750 = vld [vmem:[%s198 + $0x7e4] sm:$0xf]
      %v751 = vld [vmem:[%s198 + $0x7e8] sm:$0xf]
      %v752 = vld [vmem:[%s198 + $0x7ec] sm:$0xf]
      %v753 = vld [vmem:[%s198 + $0x7f0] sm:$0xf]
      %v754 = vld [vmem:[%s198 + $0x7f4] sm:$0xf]
      %v755 = vld [vmem:[%s198 + $0x7f8] sm:$0xf]
      %v756 = vld [vmem:[%s198 + $0x7fc] sm:$0xf]
      %v757 = vld [vmem:[%s198 + $0x800] sm:$0xf]
      %v758 = vld [vmem:[%s198 + $0x804] sm:$0xf]
      %v759 = vld [vmem:[%s198 + $0x808] sm:$0xf]
      %v760 = vld [vmem:[%s198 + $0x80c] sm:$0xf]
      %v761 = vld [vmem:[%s198 + $0x810] sm:$0xf]
      %v762 = vld [vmem:[%s198 + $0x814] sm:$0xf]
      %v763 = vld [vmem:[%s198 + $0x818] sm:$0xf]
      %v764 = vld [vmem:[%s198 + $0x81c] sm:$0xf]
      %v765 = vld [vmem:[%s198 + $0x820] sm:$0xf]
      %v766 = vld [vmem:[%s198 + $0x824] sm:$0xf]
      %v767 = vld [vmem:[%s198 + $0x828] sm:$0xf]
      %v768 = vld [vmem:[%s198 + $0x82c] sm:$0xf]
      %v769 = vld [vmem:[%s198 + $0x830] sm:$0xf]
      %v770 = vld [vmem:[%s198 + $0x834] sm:$0xf]
      %v771 = vld [vmem:[%s198 + $0x838] sm:$0xf]
      %v772 = vld [vmem:[%s198 + $0x83c] sm:$0xf]
      %v773 = vld [vmem:[%s198 + $0x840] sm:$0xf]
      %v774 = vld [vmem:[%s198 + $0x844] sm:$0xf]
      %v775 = vld [vmem:[%s198 + $0x848] sm:$0xf]
      %v776 = vld [vmem:[%s198 + $0x84c] sm:$0xf]
      %v777 = vld [vmem:[%s198 + $0x850] sm:$0xf]
      %v778 = vld [vmem:[%s198 + $0x854] sm:$0xf]
      %v779 = vld [vmem:[%s198 + $0x858] sm:$0xf]
      %v780 = vld [vmem:[%s198 + $0x85c] sm:$0xf]
      %v781 = vld [vmem:[%s198 + $0x860] sm:$0xf]
      %v782 = vld [vmem:[%s198 + $0x864] sm:$0xf]
      %v783 = vld [vmem:[%s198 + $0x868] sm:$0xf]
      %v784 = vld [vmem:[%s198 + $0x86c] sm:$0xf]
      %v785 = vld [vmem:[%s198 + $0x870] sm:$0xf]
      %v786 = vld [vmem:[%s198 + $0x874] sm:$0xf]
      %v787 = vld [vmem:[%s198 + $0x878] sm:$0xf]
      %v788 = vld [vmem:[%s198 + $0x87c] sm:$0xf]
      %v789 = vld [vmem:[%s198 + $0x880] sm:$0xf]
      %v790 = vld [vmem:[%s198 + $0x884] sm:$0xf]
      %v791 = vld [vmem:[%s198 + $0x888] sm:$0xf]
      %v792 = vld [vmem:[%s198 + $0x88c] sm:$0xf]
      %v793 = vld [vmem:[%s198 + $0x890] sm:$0xf]
      %v794 = vld [vmem:[%s198 + $0x894] sm:$0xf]
      %v795 = vld [vmem:[%s198 + $0x898] sm:$0xf]
      %v796 = vld [vmem:[%s198 + $0x89c] sm:$0xf]
      %v797 = vld [vmem:[%s198 + $0x8a0] sm:$0xf]
      %v798 = vld [vmem:[%s198 + $0x8a4] sm:$0xf]
      %v799 = vld [vmem:[%s198 + $0x8a8] sm:$0xf]
      %v800 = vld [vmem:[%s198 + $0x8ac] sm:$0xf]
      %v801 = vld [vmem:[%s198 + $0x8b0] sm:$0xf]
      %v802 = vld [vmem:[%s198 + $0x8b4] sm:$0xf]
      %v803 = vld [vmem:[%s198 + $0x8b8] sm:$0xf]
      %v804 = vld [vmem:[%s198 + $0x8bc] sm:$0xf]
      %v805 = vld [vmem:[%s198 + $0x8c0] sm:$0xf]
      %v806 = vld [vmem:[%s198 + $0x8c4] sm:$0xf]
      %v807 = vld [vmem:[%s198 + $0x8c8] sm:$0xf]
      %v808 = vld [vmem:[%s198 + $0x8cc] sm:$0xf]
      %v809 = vld [vmem:[%s198 + $0x8d0] sm:$0xf]
      %v810 = vld [vmem:[%s198 + $0x8d4] sm:$0xf]
      %v811 = vld [vmem:[%s198 + $0x8d8] sm:$0xf]
      %v812 = vld [vmem:[%s198 + $0x8dc] sm:$0xf]
      %v813 = vld [vmem:[%s198 + $0x8e0] sm:$0xf]
      %v814 = vld [vmem:[%s198 + $0x8e4] sm:$0xf]
      %v815 = vld [vmem:[%s198 + $0x8e8] sm:$0xf]
      %v816 = vld [vmem:[%s198 + $0x8ec] sm:$0xf]
      %v817 = vld [vmem:[%s198 + $0x8f0] sm:$0xf]
      %v818 = vld [vmem:[%s198 + $0x8f4] sm:$0xf]
      %v819 = vld [vmem:[%s198 + $0x8f8] sm:$0xf]
      %v820 = vld [vmem:[%s198 + $0x8fc] sm:$0xf]
      %v821 = vld [vmem:[%s198 + $0x900] sm:$0xf]
      %v822 = vld [vmem:[%s198 + $0x904] sm:$0xf]
      %v823 = vld [vmem:[%s198 + $0x908] sm:$0xf]
      %v824 = vld [vmem:[%s198 + $0x90c] sm:$0xf]
      %v825 = vld [vmem:[%s198 + $0x910] sm:$0xf]
      %v826 = vld [vmem:[%s198 + $0x914] sm:$0xf]
      %v827 = vld [vmem:[%s198 + $0x918] sm:$0xf]
      %v828 = vld [vmem:[%s198 + $0x91c] sm:$0xf]
      %v829 = vld [vmem:[%s198 + $0x920] sm:$0xf]
      %v830 = vld [vmem:[%s198 + $0x924] sm:$0xf]
      %v831 = vld [vmem:[%s198 + $0x928] sm:$0xf]
      %v832 = vld [vmem:[%s198 + $0x92c] sm:$0xf]
      %v833 = vld [vmem:[%s198 + $0x930] sm:$0xf]
      %v834 = vld [vmem:[%s198 + $0x934] sm:$0xf]
      %v835 = vld [vmem:[%s198 + $0x938] sm:$0xf]
      %v836 = vld [vmem:[%s198 + $0x93c] sm:$0xf]
      %v837 = vld [vmem:[%s198 + $0x940] sm:$0xf]
      %v838 = vld [vmem:[%s198 + $0x944] sm:$0xf]
      %v839 = vld [vmem:[%s198 + $0x948] sm:$0xf]
      %v840 = vld [vmem:[%s198 + $0x94c] sm:$0xf]
      %v841 = vld [vmem:[%s198 + $0x950] sm:$0xf]
      %v842 = vld [vmem:[%s198 + $0x954] sm:$0xf]
      %v843 = vld [vmem:[%s198 + $0x958] sm:$0xf]
      %v844 = vld [vmem:[%s198 + $0x95c] sm:$0xf]
      %v845 = vld [vmem:[%s198 + $0x960] sm:$0xf]
      %v846 = vld [vmem:[%s198 + $0x964] sm:$0xf]
      %v847 = vld [vmem:[%s198 + $0x968] sm:$0xf]
      %v848 = vld [vmem:[%s198 + $0x96c] sm:$0xf]
      %v849 = vld [vmem:[%s198 + $0x970] sm:$0xf]
      %v850 = vld [vmem:[%s198 + $0x974] sm:$0xf]
      %v851 = vld [vmem:[%s198 + $0x978] sm:$0xf]
      %v852 = vld [vmem:[%s198 + $0x97c] sm:$0xf]
      %v853 = vld [vmem:[%s198 + $0x980] sm:$0xf]
      %v854 = vld [vmem:[%s198 + $0x984] sm:$0xf]
      %v855 = vld [vmem:[%s198 + $0x988] sm:$0xf]
      %v856 = vld [vmem:[%s198 + $0x98c] sm:$0xf]
      %v857 = vld [vmem:[%s198 + $0x990] sm:$0xf]
      %v858 = vld [vmem:[%s198 + $0x994] sm:$0xf]
      %v859 = vld [vmem:[%s198 + $0x998] sm:$0xf]
      %v860 = vld [vmem:[%s198 + $0x99c] sm:$0xf]
      %v861 = vld [vmem:[%s198 + $0x9a0] sm:$0xf]
      %v862 = vld [vmem:[%s198 + $0x9a4] sm:$0xf]
      %v863 = vld [vmem:[%s198 + $0x9a8] sm:$0xf]
      %v864 = vld [vmem:[%s198 + $0x9ac] sm:$0xf]
      %v865 = vld [vmem:[%s198 + $0x9b0] sm:$0xf]
      %v866 = vld [vmem:[%s198 + $0x9b4] sm:$0xf]
      %v867 = vld [vmem:[%s198 + $0x9b8] sm:$0xf]
      %v868 = vld [vmem:[%s198 + $0x9bc] sm:$0xf]
      %v869 = vld [vmem:[%s198 + $0x9c0] sm:$0xf]
      %v870 = vld [vmem:[%s198 + $0x9c4] sm:$0xf]
      %v871 = vld [vmem:[%s198 + $0x9c8] sm:$0xf]
      %v872 = vld [vmem:[%s198 + $0x9cc] sm:$0xf]
      %v873 = vld [vmem:[%s198 + $0x9d0] sm:$0xf]
      %v874 = vld [vmem:[%s198 + $0x9d4] sm:$0xf]
      %v875 = vld [vmem:[%s198 + $0x9d8] sm:$0xf]
      %v876 = vld [vmem:[%s198 + $0x9dc] sm:$0xf]
      %v877 = vld [vmem:[%s198 + $0x9e0] sm:$0xf]
      %v878 = vld [vmem:[%s198 + $0x9e4] sm:$0xf]
      %v879 = vld [vmem:[%s198 + $0x9e8] sm:$0xf]
      %v880 = vld [vmem:[%s198 + $0x9ec] sm:$0xf]
      %v881 = vld [vmem:[%s198 + $0x9f0] sm:$0xf]
      %v882 = vld [vmem:[%s198 + $0x9f4] sm:$0xf]
      %v883 = vld [vmem:[%s198 + $0x9f8] sm:$0xf]
      %v884 = vld [vmem:[%s198 + $0x9fc] sm:$0xf]
      %v885 = vld [vmem:[%s198 + $0xa00] sm:$0xf]
      %v886 = vld [vmem:[%s198 + $0xa04] sm:$0xf]
      %v887 = vld [vmem:[%s198 + $0xa08] sm:$0xf]
      %v888 = vld [vmem:[%s198 + $0xa0c] sm:$0xf]
      %v889 = vld [vmem:[%s198 + $0xa10] sm:$0xf]
      %v890 = vld [vmem:[%s198 + $0xa14] sm:$0xf]
      %v891 = vld [vmem:[%s198 + $0xa18] sm:$0xf]
      %v892 = vld [vmem:[%s198 + $0xa1c] sm:$0xf]
      %v893 = vld [vmem:[%s198 + $0xa20] sm:$0xf]
      %v894 = vld [vmem:[%s198 + $0xa24] sm:$0xf]
      %v895 = vld [vmem:[%s198 + $0xa28] sm:$0xf]
      %v896 = vld [vmem:[%s198 + $0xa2c] sm:$0xf]
      %v897 = vld [vmem:[%s198 + $0xa30] sm:$0xf]
      %v898 = vld [vmem:[%s198 + $0xa34] sm:$0xf]
      %v899 = vld [vmem:[%s198 + $0xa38] sm:$0xf]
      %v900 = vld [vmem:[%s198 + $0xa3c] sm:$0xf]
      %v901 = vld [vmem:[%s198 + $0xa40] sm:$0xf]
      %v902 = vld [vmem:[%s198 + $0xa44] sm:$0xf]
      %v903 = vld [vmem:[%s198 + $0xa48] sm:$0xf]
      %v904 = vld [vmem:[%s198 + $0xa4c] sm:$0xf]
      %v905 = vld [vmem:[%s198 + $0xa50] sm:$0xf]
      %v906 = vld [vmem:[%s198 + $0xa54] sm:$0xf]
      %v907 = vld [vmem:[%s198 + $0xa58] sm:$0xf]
      %v908 = vld [vmem:[%s198 + $0xa5c] sm:$0xf]
      %v909 = vld [vmem:[%s198 + $0xa60] sm:$0xf]
      %v910 = vld [vmem:[%s198 + $0xa64] sm:$0xf]
      %v911 = vld [vmem:[%s198 + $0xa68] sm:$0xf]
      %v912 = vld [vmem:[%s198 + $0xa6c] sm:$0xf]
      %v913 = vld [vmem:[%s198 + $0xa70] sm:$0xf]
      %v914 = vld [vmem:[%s198 + $0xa74] sm:$0xf]
      %v915 = vld [vmem:[%s198 + $0xa78] sm:$0xf]
      %v916 = vld [vmem:[%s198 + $0xa7c] sm:$0xf]
      %v917 = vld [vmem:[%s198 + $0xa80] sm:$0xf]
      %v918 = vld [vmem:[%s198 + $0xa84] sm:$0xf]
      %v919 = vld [vmem:[%s198 + $0xa88] sm:$0xf]
      %v920 = vld [vmem:[%s198 + $0xa8c] sm:$0xf]
      %v921 = vld [vmem:[%s198 + $0xa90] sm:$0xf]
      %v922 = vld [vmem:[%s198 + $0xa94] sm:$0xf]
      %v923 = vld [vmem:[%s198 + $0xa98] sm:$0xf]
      %v924 = vld [vmem:[%s198 + $0xa9c] sm:$0xf]
      %v925 = vld [vmem:[%s198 + $0xaa0] sm:$0xf]
      %v926 = vld [vmem:[%s198 + $0xaa4] sm:$0xf]
      %v927 = vld [vmem:[%s198 + $0xaa8] sm:$0xf]
      %v928 = vld [vmem:[%s198 + $0xaac] sm:$0xf]
      %v929 = vld [vmem:[%s198 + $0xab0] sm:$0xf]
      %v930 = vld [vmem:[%s198 + $0xab4] sm:$0xf]
      %v931 = vld [vmem:[%s198 + $0xab8] sm:$0xf]
      %v932 = vld [vmem:[%s198 + $0xabc] sm:$0xf]
      %v933 = vld [vmem:[%s198 + $0xac0] sm:$0xf]
      %v934 = vld [vmem:[%s198 + $0xac4] sm:$0xf]
      %v935 = vld [vmem:[%s198 + $0xac8] sm:$0xf]
      %v936 = vld [vmem:[%s198 + $0xacc] sm:$0xf]
      %v937 = vld [vmem:[%s198 + $0xad0] sm:$0xf]
      %v938 = vld [vmem:[%s198 + $0xad4] sm:$0xf]
      %v939 = vld [vmem:[%s198 + $0xad8] sm:$0xf]
      %v940 = vld [vmem:[%s198 + $0xadc] sm:$0xf]
      %v941 = vld [vmem:[%s198 + $0xae0] sm:$0xf]
      %v942 = vld [vmem:[%s198 + $0xae4] sm:$0xf]
      %v943 = vld [vmem:[%s198 + $0xae8] sm:$0xf]
      %v944 = vld [vmem:[%s198 + $0xaec] sm:$0xf]
      %v945 = vld [vmem:[%s198 + $0xaf0] sm:$0xf]
      %v946 = vld [vmem:[%s198 + $0xaf4] sm:$0xf]
      %v947 = vld [vmem:[%s198 + $0xaf8] sm:$0xf]
      %v948 = vld [vmem:[%s198 + $0xafc] sm:$0xf]
      %v949 = vld [vmem:[%s198 + $0xb00] sm:$0xf]
      %v950 = vld [vmem:[%s198 + $0xb04] sm:$0xf]
      %v951 = vld [vmem:[%s198 + $0xb08] sm:$0xf]
      %v952 = vld [vmem:[%s198 + $0xb0c] sm:$0xf]
      %v953 = vld [vmem:[%s198 + $0xb10] sm:$0xf]
      %v954 = vld [vmem:[%s198 + $0xb14] sm:$0xf]
      %v955 = vld [vmem:[%s198 + $0xb18] sm:$0xf]
      %v956 = vld [vmem:[%s198 + $0xb1c] sm:$0xf]
      %v957 = vld [vmem:[%s198 + $0xb20] sm:$0xf]
      %v958 = vld [vmem:[%s198 + $0xb24] sm:$0xf]
      %v959 = vld [vmem:[%s198 + $0xb28] sm:$0xf]
      %v960 = vld [vmem:[%s198 + $0xb2c] sm:$0xf]
      %v961 = vld [vmem:[%s198 + $0xb30] sm:$0xf]
      %v962 = vld [vmem:[%s198 + $0xb34] sm:$0xf]
      %v963 = vld [vmem:[%s198 + $0xb38] sm:$0xf]
      %v964 = vld [vmem:[%s198 + $0xb3c] sm:$0xf]
      %v965 = vld [vmem:[%s198 + $0xb40] sm:$0xf]
      %v966 = vld [vmem:[%s198 + $0xb44] sm:$0xf]
      %v967 = vld [vmem:[%s198 + $0xb48] sm:$0xf]
      %v968 = vld [vmem:[%s198 + $0xb4c] sm:$0xf]
      %v969 = vld [vmem:[%s198 + $0xb50] sm:$0xf]
      %v970 = vld [vmem:[%s198 + $0xb54] sm:$0xf]
      %v971 = vld [vmem:[%s198 + $0xb58] sm:$0xf]
      %v972 = vld [vmem:[%s198 + $0xb5c] sm:$0xf]
      %v973 = vld [vmem:[%s198 + $0xb60] sm:$0xf]
      %v974 = vld [vmem:[%s198 + $0xb64] sm:$0xf]
      %v975 = vld [vmem:[%s198 + $0xb68] sm:$0xf]
      %v976 = vld [vmem:[%s198 + $0xb6c] sm:$0xf]
      %v977 = vld [vmem:[%s198 + $0xb70] sm:$0xf]
      %v978 = vld [vmem:[%s198 + $0xb74] sm:$0xf]
      %v979 = vld [vmem:[%s198 + $0xb78] sm:$0xf]
      %v980 = vld [vmem:[%s198 + $0xb7c] sm:$0xf]
      %v981 = vld [vmem:[%s198 + $0xb80] sm:$0xf]
      %v982 = vld [vmem:[%s198 + $0xb84] sm:$0xf]
      %v983 = vld [vmem:[%s198 + $0xb88] sm:$0xf]
      %v984 = vld [vmem:[%s198 + $0xb8c] sm:$0xf]
      %v985 = vld [vmem:[%s198 + $0xb90] sm:$0xf]
      %v986 = vld [vmem:[%s198 + $0xb94] sm:$0xf]
      %v987 = vld [vmem:[%s198 + $0xb98] sm:$0xf]
      %v988 = vld [vmem:[%s198 + $0xb9c] sm:$0xf]
      %v989 = vld [vmem:[%s198 + $0xba0] sm:$0xf]
      %v990 = vld [vmem:[%s198 + $0xba4] sm:$0xf]
      %v991 = vld [vmem:[%s198 + $0xba8] sm:$0xf]
      %v992 = vld [vmem:[%s198 + $0xbac] sm:$0xf]
      %v993 = vld [vmem:[%s198 + $0xbb0] sm:$0xf]
      %v994 = vld [vmem:[%s198 + $0xbb4] sm:$0xf]
      %v995 = vld [vmem:[%s198 + $0xbb8] sm:$0xf]
      %v996 = vld [vmem:[%s198 + $0xbbc] sm:$0xf]
      %v997 = vld [vmem:[%s198 + $0xbc0] sm:$0xf]
      %v998 = vld [vmem:[%s198 + $0xbc4] sm:$0xf]
      %v999 = vld [vmem:[%s198 + $0xbc8] sm:$0xf]
      %v1000 = vld [vmem:[%s198 + $0xbcc] sm:$0xf]
      %v1001 = vld [vmem:[%s198 + $0xbd0] sm:$0xf]
      %v1002 = vld [vmem:[%s198 + $0xbd4] sm:$0xf]
      %v1003 = vld [vmem:[%s198 + $0xbd8] sm:$0xf]
      %v1004 = vld [vmem:[%s198 + $0xbdc] sm:$0xf]
      %v1005 = vld [vmem:[%s198 + $0xbe0] sm:$0xf]
      %v1006 = vld [vmem:[%s198 + $0xbe4] sm:$0xf]
      %v1007 = vld [vmem:[%s198 + $0xbe8] sm:$0xf]
      %v1008 = vld [vmem:[%s198 + $0xbec] sm:$0xf]
      %v1009 = vld [vmem:[%s198 + $0xbf0] sm:$0xf]
      %v1010 = vld [vmem:[%s198 + $0xbf4] sm:$0xf]
      %v1011 = vld [vmem:[%s198 + $0xbf8] sm:$0xf]
      %v1012 = vld [vmem:[%s198 + $0xbfc] sm:$0xf]
      %v1013 = vld [vmem:[%s198 + $0xc00] sm:$0xf]
      %v1014 = vld [vmem:[%s198 + $0xc04] sm:$0xf]
      %v1015 = vld [vmem:[%s198 + $0xc08] sm:$0xf]
      %v1016 = vld [vmem:[%s198 + $0xc0c] sm:$0xf]
      %v1017 = vld [vmem:[%s198 + $0xc10] sm:$0xf]
      %v1018 = vld [vmem:[%s198 + $0xc14] sm:$0xf]
      %v1019 = vld [vmem:[%s198 + $0xc18] sm:$0xf]
      %v1020 = vld [vmem:[%s198 + $0xc1c] sm:$0xf]
      %v1021 = vld [vmem:[%s198 + $0xc20] sm:$0xf]
      %v1022 = vld [vmem:[%s198 + $0xc24] sm:$0xf]
      %v1023 = vld [vmem:[%s198 + $0xc28] sm:$0xf]
      %v1024 = vld [vmem:[%s198 + $0xc2c] sm:$0xf]
      %v1025 = vld [vmem:[%s198 + $0xc30] sm:$0xf]
      %v1026 = vld [vmem:[%s198 + $0xc34] sm:$0xf]
      %v1027 = vld [vmem:[%s198 + $0xc38] sm:$0xf]
      %v1028 = vld [vmem:[%s198 + $0xc3c] sm:$0xf]
      %v1029 = vld [vmem:[%s198 + $0xc40] sm:$0xf]
      %v1030 = vld [vmem:[%s198 + $0xc44] sm:$0xf]
      %v1031 = vld [vmem:[%s198 + $0xc48] sm:$0xf]
      %v1032 = vld [vmem:[%s198 + $0xc4c] sm:$0xf]
      %v1033 = vld [vmem:[%s198 + $0xc50] sm:$0xf]
      %v1034 = vld [vmem:[%s198 + $0xc54] sm:$0xf]
      %v1035 = vld [vmem:[%s198 + $0xc58] sm:$0xf]
      %v1036 = vld [vmem:[%s198 + $0xc5c] sm:$0xf]
      %v1037 = vld [vmem:[%s198 + $0xc60] sm:$0xf]
      %v1038 = vld [vmem:[%s198 + $0xc64] sm:$0xf]
      %v1039 = vld [vmem:[%s198 + $0xc68] sm:$0xf]
      %v1040 = vld [vmem:[%s198 + $0xc6c] sm:$0xf]
      %v1041 = vld [vmem:[%s198 + $0xc70] sm:$0xf]
      %v1042 = vld [vmem:[%s198 + $0xc74] sm:$0xf]
      %v1043 = vld [vmem:[%s198 + $0xc78] sm:$0xf]
      %v1044 = vld [vmem:[%s198 + $0xc7c] sm:$0xf]
      %v1045 = vld [vmem:[%s198 + $0xc80] sm:$0xf]
      %v1046 = vld [vmem:[%s198 + $0xc84] sm:$0xf]
      %v1047 = vld [vmem:[%s198 + $0xc88] sm:$0xf]
      %v1048 = vld [vmem:[%s198 + $0xc8c] sm:$0xf]
      %v1049 = vld [vmem:[%s198 + $0xc90] sm:$0xf]
      %v1050 = vld [vmem:[%s198 + $0xc94] sm:$0xf]
      %v1051 = vld [vmem:[%s198 + $0xc98] sm:$0xf]
      %v1052 = vld [vmem:[%s198 + $0xc9c] sm:$0xf]
      %v1053 = vld [vmem:[%s198 + $0xca0] sm:$0xf]
      %v1054 = vld [vmem:[%s198 + $0xca4] sm:$0xf]
      %v1055 = vld [vmem:[%s198 + $0xca8] sm:$0xf]
      %v1056 = vld [vmem:[%s198 + $0xcac] sm:$0xf]
      %v1057 = vld [vmem:[%s198 + $0xcb0] sm:$0xf]
      %v1058 = vld [vmem:[%s198 + $0xcb4] sm:$0xf]
      %v1059 = vld [vmem:[%s198 + $0xcb8] sm:$0xf]
      %v1060 = vld [vmem:[%s198 + $0xcbc] sm:$0xf]
      %v1061 = vld [vmem:[%s198 + $0xcc0] sm:$0xf]
      %v1062 = vld [vmem:[%s198 + $0xcc4] sm:$0xf]
      %v1063 = vld [vmem:[%s198 + $0xcc8] sm:$0xf]
      %v1064 = vld [vmem:[%s198 + $0xccc] sm:$0xf]
      %v1065 = vld [vmem:[%s198 + $0xcd0] sm:$0xf]
      %v1066 = vld [vmem:[%s198 + $0xcd4] sm:$0xf]
      %v1067 = vld [vmem:[%s198 + $0xcd8] sm:$0xf]
      %v1068 = vld [vmem:[%s198 + $0xcdc] sm:$0xf]
      %v1069 = vld [vmem:[%s198 + $0xce0] sm:$0xf]
      %v1070 = vld [vmem:[%s198 + $0xce4] sm:$0xf]
      %v1071 = vld [vmem:[%s198 + $0xce8] sm:$0xf]
      %v1072 = vld [vmem:[%s198 + $0xcec] sm:$0xf]
      %v1073 = vld [vmem:[%s198 + $0xcf0] sm:$0xf]
      %v1074 = vld [vmem:[%s198 + $0xcf4] sm:$0xf]
      %v1075 = vld [vmem:[%s198 + $0xcf8] sm:$0xf]
      %v1076 = vld [vmem:[%s198 + $0xcfc] sm:$0xf]
      %v1077 = vld [vmem:[%s198 + $0xd00] sm:$0xf]
      %v1078 = vld [vmem:[%s198 + $0xd04] sm:$0xf]
      %v1079 = vld [vmem:[%s198 + $0xd08] sm:$0xf]
      %v1080 = vld [vmem:[%s198 + $0xd0c] sm:$0xf]
      %v1081 = vld [vmem:[%s198 + $0xd10] sm:$0xf]
      %v1082 = vld [vmem:[%s198 + $0xd14] sm:$0xf]
      %v1083 = vld [vmem:[%s198 + $0xd18] sm:$0xf]
      %v1084 = vld [vmem:[%s198 + $0xd1c] sm:$0xf]
      %v1085 = vld [vmem:[%s198 + $0xd20] sm:$0xf]
      %v1086 = vld [vmem:[%s198 + $0xd24] sm:$0xf]
      %v1087 = vld [vmem:[%s198 + $0xd28] sm:$0xf]
      %v1088 = vld [vmem:[%s198 + $0xd2c] sm:$0xf]
      %v1089 = vld [vmem:[%s198 + $0xd30] sm:$0xf]
      %v1090 = vld [vmem:[%s198 + $0xd34] sm:$0xf]
      %v1091 = vld [vmem:[%s198 + $0xd38] sm:$0xf]
      %v1092 = vld [vmem:[%s198 + $0xd3c] sm:$0xf]
      %v1093 = vld [vmem:[%s198 + $0xd40] sm:$0xf]
      %v1094 = vld [vmem:[%s198 + $0xd44] sm:$0xf]
      %v1095 = vld [vmem:[%s198 + $0xd48] sm:$0xf]
      %v1096 = vld [vmem:[%s198 + $0xd4c] sm:$0xf]
      %v1097 = vld [vmem:[%s198 + $0xd50] sm:$0xf]
      %v1098 = vld [vmem:[%s198 + $0xd54] sm:$0xf]
      %v1099 = vld [vmem:[%s198 + $0xd58] sm:$0xf]
      %v1100 = vld [vmem:[%s198 + $0xd5c] sm:$0xf]
      %v1101 = vld [vmem:[%s198 + $0xd60] sm:$0xf]
      %v1102 = vld [vmem:[%s198 + $0xd64] sm:$0xf]
      %v1103 = vld [vmem:[%s198 + $0xd68] sm:$0xf]
      %v1104 = vld [vmem:[%s198 + $0xd6c] sm:$0xf]
      %v1105 = vld [vmem:[%s198 + $0xd70] sm:$0xf]
      %v1106 = vld [vmem:[%s198 + $0xd74] sm:$0xf]
      %v1107 = vld [vmem:[%s198 + $0xd78] sm:$0xf]
      %v1108 = vld [vmem:[%s198 + $0xd7c] sm:$0xf]
      %v1109 = vld [vmem:[%s198 + $0xd80] sm:$0xf]
      %v1110 = vld [vmem:[%s198 + $0xd84] sm:$0xf]
      %v1111 = vld [vmem:[%s198 + $0xd88] sm:$0xf]
      %v1112 = vld [vmem:[%s198 + $0xd8c] sm:$0xf]
      %v1113 = vld [vmem:[%s198 + $0xd90] sm:$0xf]
      %v1114 = vld [vmem:[%s198 + $0xd94] sm:$0xf]
      %v1115 = vld [vmem:[%s198 + $0xd98] sm:$0xf]
      %v1116 = vld [vmem:[%s198 + $0xd9c] sm:$0xf]
      %v1117 = vld [vmem:[%s198 + $0xda0] sm:$0xf]
      %v1118 = vld [vmem:[%s198 + $0xda4] sm:$0xf]
      %v1119 = vld [vmem:[%s198 + $0xda8] sm:$0xf]
      %v1120 = vld [vmem:[%s198 + $0xdac] sm:$0xf]
      %v1121 = vld [vmem:[%s198 + $0xdb0] sm:$0xf]
      %v1122 = vld [vmem:[%s198 + $0xdb4] sm:$0xf]
      %v1123 = vld [vmem:[%s198 + $0xdb8] sm:$0xf]
      %v1124 = vld [vmem:[%s198 + $0xdbc] sm:$0xf]
      %v1125 = vld [vmem:[%s198 + $0xdc0] sm:$0xf]
      %v1126 = vld [vmem:[%s198 + $0xdc4] sm:$0xf]
      %v1127 = vld [vmem:[%s198 + $0xdc8] sm:$0xf]
      %v1128 = vld [vmem:[%s198 + $0xdcc] sm:$0xf]
      %v1129 = vld [vmem:[%s198 + $0xdd0] sm:$0xf]
      %v1130 = vld [vmem:[%s198 + $0xdd4] sm:$0xf]
      %v1131 = vld [vmem:[%s198 + $0xdd8] sm:$0xf]
      %v1132 = vld [vmem:[%s198 + $0xddc] sm:$0xf]
      %v1133 = vld [vmem:[%s198 + $0xde0] sm:$0xf]
      %v1134 = vld [vmem:[%s198 + $0xde4] sm:$0xf]
      %v1135 = vld [vmem:[%s198 + $0xde8] sm:$0xf]
      %v1136 = vld [vmem:[%s198 + $0xdec] sm:$0xf]
      %v1137 = vld [vmem:[%s198 + $0xdf0] sm:$0xf]
      %v1138 = vld [vmem:[%s198 + $0xdf4] sm:$0xf]
      %v1139 = vld [vmem:[%s198 + $0xdf8] sm:$0xf]
      %v1140 = vld [vmem:[%s198 + $0xdfc] sm:$0xf]
      %v1141 = vld [vmem:[%s198 + $0xe00] sm:$0xf]
      %v1142 = vld [vmem:[%s198 + $0xe04] sm:$0xf]
      %v1143 = vld [vmem:[%s198 + $0xe08] sm:$0xf]
      %v1144 = vld [vmem:[%s198 + $0xe0c] sm:$0xf]
      %v1145 = vld [vmem:[%s198 + $0xe10] sm:$0xf]
      %v1146 = vld [vmem:[%s198 + $0xe14] sm:$0xf]
      %v1147 = vld [vmem:[%s198 + $0xe18] sm:$0xf]
      %v1148 = vld [vmem:[%s198 + $0xe1c] sm:$0xf]
      %v1149 = vld [vmem:[%s198 + $0xe20] sm:$0xf]
      %v1150 = vld [vmem:[%s198 + $0xe24] sm:$0xf]
      %v1151 = vld [vmem:[%s198 + $0xe28] sm:$0xf]
      %v1152 = vld [vmem:[%s198 + $0xe2c] sm:$0xf]
      %v1153 = vld [vmem:[%s198 + $0xe30] sm:$0xf]
      %v1154 = vld [vmem:[%s198 + $0xe34] sm:$0xf]
      %v1155 = vld [vmem:[%s198 + $0xe38] sm:$0xf]
      %v1156 = vld [vmem:[%s198 + $0xe3c] sm:$0xf]
      %v1157 = vld [vmem:[%s198 + $0xe40] sm:$0xf]
      %v1158 = vld [vmem:[%s198 + $0xe44] sm:$0xf]
      %v1159 = vld [vmem:[%s198 + $0xe48] sm:$0xf]
      %v1160 = vld [vmem:[%s198 + $0xe4c] sm:$0xf]
      %v1161 = vld [vmem:[%s198 + $0xe50] sm:$0xf]
      %v1162 = vld [vmem:[%s198 + $0xe54] sm:$0xf]
      %v1163 = vld [vmem:[%s198 + $0xe58] sm:$0xf]
      %v1164 = vld [vmem:[%s198 + $0xe5c] sm:$0xf]
      %v1165 = vld [vmem:[%s198 + $0xe60] sm:$0xf]
      %v1166 = vld [vmem:[%s198 + $0xe64] sm:$0xf]
      %v1167 = vld [vmem:[%s198 + $0xe68] sm:$0xf]
      %v1168 = vld [vmem:[%s198 + $0xe6c] sm:$0xf]
      %v1169 = vld [vmem:[%s198 + $0xe70] sm:$0xf]
      %v1170 = vld [vmem:[%s198 + $0xe74] sm:$0xf]
      %v1171 = vld [vmem:[%s198 + $0xe78] sm:$0xf]
      %v1172 = vld [vmem:[%s198 + $0xe7c] sm:$0xf]
      %v1173 = vld [vmem:[%s198 + $0xe80] sm:$0xf]
      %v1174 = vld [vmem:[%s198 + $0xe84] sm:$0xf]
      %v1175 = vld [vmem:[%s198 + $0xe88] sm:$0xf]
      %v1176 = vld [vmem:[%s198 + $0xe8c] sm:$0xf]
      %v1177 = vld [vmem:[%s198 + $0xe90] sm:$0xf]
      %v1178 = vld [vmem:[%s198 + $0xe94] sm:$0xf]
      %v1179 = vld [vmem:[%s198 + $0xe98] sm:$0xf]
      %v1180 = vld [vmem:[%s198 + $0xe9c] sm:$0xf]
      %v1181 = vld [vmem:[%s198 + $0xea0] sm:$0xf]
      %v1182 = vld [vmem:[%s198 + $0xea4] sm:$0xf]
      %v1183 = vld [vmem:[%s198 + $0xea8] sm:$0xf]
      %v1184 = vld [vmem:[%s198 + $0xeac] sm:$0xf]
      %v1185 = vld [vmem:[%s198 + $0xeb0] sm:$0xf]
      %v1186 = vld [vmem:[%s198 + $0xeb4] sm:$0xf]
      %v1187 = vld [vmem:[%s198 + $0xeb8] sm:$0xf]
      %v1188 = vld [vmem:[%s198 + $0xebc] sm:$0xf]
      %v1189 = vld [vmem:[%s198 + $0xec0] sm:$0xf]
      %v1190 = vld [vmem:[%s198 + $0xec4] sm:$0xf]
      %v1191 = vld [vmem:[%s198 + $0xec8] sm:$0xf]
      %v1192 = vld [vmem:[%s198 + $0xecc] sm:$0xf]
      %v1193 = vld [vmem:[%s198 + $0xed0] sm:$0xf]
      %v1194 = vld [vmem:[%s198 + $0xed4] sm:$0xf]
      %v1195 = vld [vmem:[%s198 + $0xed8] sm:$0xf]
      %v1196 = vld [vmem:[%s198 + $0xedc] sm:$0xf]
      %v1197 = vld [vmem:[%s198 + $0xee0] sm:$0xf]
      %v1198 = vld [vmem:[%s198 + $0xee4] sm:$0xf]
      %v1199 = vld [vmem:[%s198 + $0xee8] sm:$0xf]
      %v1200 = vld [vmem:[%s198 + $0xeec] sm:$0xf]
      %v1201 = vld [vmem:[%s198 + $0xef0] sm:$0xf]
      %v1202 = vld [vmem:[%s198 + $0xef4] sm:$0xf]
      %v1203 = vld [vmem:[%s198 + $0xef8] sm:$0xf]
      %v1204 = vld [vmem:[%s198 + $0xefc] sm:$0xf]
      %v1205 = vld [vmem:[%s198 + $0xf00] sm:$0xf]
      %v1206 = vld [vmem:[%s198 + $0xf04] sm:$0xf]
      %v1207 = vld [vmem:[%s198 + $0xf08] sm:$0xf]
      %v1208 = vld [vmem:[%s198 + $0xf0c] sm:$0xf]
      %v1209 = vld [vmem:[%s198 + $0xf10] sm:$0xf]
      %v1210 = vld [vmem:[%s198 + $0xf14] sm:$0xf]
      %v1211 = vld [vmem:[%s198 + $0xf18] sm:$0xf]
      %v1212 = vld [vmem:[%s198 + $0xf1c] sm:$0xf]
      %v1213 = vld [vmem:[%s198 + $0xf20] sm:$0xf]
      %v1214 = vld [vmem:[%s198 + $0xf24] sm:$0xf]
      %v1215 = vld [vmem:[%s198 + $0xf28] sm:$0xf]
      %v1216 = vld [vmem:[%s198 + $0xf2c] sm:$0xf]
      %v1217 = vld [vmem:[%s198 + $0xf30] sm:$0xf]
      %v1218 = vld [vmem:[%s198 + $0xf34] sm:$0xf]
      %v1219 = vld [vmem:[%s198 + $0xf38] sm:$0xf]
      %v1220 = vld [vmem:[%s198 + $0xf3c] sm:$0xf]
      %v1221 = vld [vmem:[%s198 + $0xf40] sm:$0xf]
      %v1222 = vld [vmem:[%s198 + $0xf44] sm:$0xf]
      %v1223 = vld [vmem:[%s198 + $0xf48] sm:$0xf]
      %v1224 = vld [vmem:[%s198 + $0xf4c] sm:$0xf]
      %v1225 = vld [vmem:[%s198 + $0xf50] sm:$0xf]
      %v1226 = vld [vmem:[%s198 + $0xf54] sm:$0xf]
      %v1227 = vld [vmem:[%s198 + $0xf58] sm:$0xf]
      %v1228 = vld [vmem:[%s198 + $0xf5c] sm:$0xf]
      %v1229 = vld [vmem:[%s198 + $0xf60] sm:$0xf]
      %v1230 = vld [vmem:[%s198 + $0xf64] sm:$0xf]
      %v1231 = vld [vmem:[%s198 + $0xf68] sm:$0xf]
      %v1232 = vld [vmem:[%s198 + $0xf6c] sm:$0xf]
      %v1233 = vld [vmem:[%s198 + $0xf70] sm:$0xf]
      %v1234 = vld [vmem:[%s198 + $0xf74] sm:$0xf]
      %v1235 = vld [vmem:[%s198 + $0xf78] sm:$0xf]
      %v1236 = vld [vmem:[%s198 + $0xf7c] sm:$0xf]
      %v1237 = vld [vmem:[%s198 + $0xf80] sm:$0xf]
      %v1238 = vld [vmem:[%s198 + $0xf84] sm:$0xf]
      %v1239 = vld [vmem:[%s198 + $0xf88] sm:$0xf]
      %v1240 = vld [vmem:[%s198 + $0xf8c] sm:$0xf]
      %v1241 = vld [vmem:[%s198 + $0xf90] sm:$0xf]
      %v1242 = vld [vmem:[%s198 + $0xf94] sm:$0xf]
      %v1243 = vld [vmem:[%s198 + $0xf98] sm:$0xf]
      %v1244 = vld [vmem:[%s198 + $0xf9c] sm:$0xf]
      %v1245 = vld [vmem:[%s198 + $0xfa0] sm:$0xf]
      %v1246 = vld [vmem:[%s198 + $0xfa4] sm:$0xf]
      %v1247 = vld [vmem:[%s198 + $0xfa8] sm:$0xf]
      %v1248 = vld [vmem:[%s198 + $0xfac] sm:$0xf]
      %v1249 = vld [vmem:[%s198 + $0xfb0] sm:$0xf]
      %v1250 = vld [vmem:[%s198 + $0xfb4] sm:$0xf]
      %v1251 = vld [vmem:[%s198 + $0xfb8] sm:$0xf]
      %v1252 = vld [vmem:[%s198 + $0xfbc] sm:$0xf]
      %v1253 = vld [vmem:[%s198 + $0xfc0] sm:$0xf]
      %v1254 = vld [vmem:[%s198 + $0xfc4] sm:$0xf]
      %v1255 = vld [vmem:[%s198 + $0xfc8] sm:$0xf]
      %v1256 = vld [vmem:[%s198 + $0xfcc] sm:$0xf]
      %v1257 = vld [vmem:[%s198 + $0xfd0] sm:$0xf]
      %v1258 = vld [vmem:[%s198 + $0xfd4] sm:$0xf]
      %v1259 = vld [vmem:[%s198 + $0xfd8] sm:$0xf]
      %v1260 = vld [vmem:[%s198 + $0xfdc] sm:$0xf]
      %v1261 = vld [vmem:[%s198 + $0xfe0] sm:$0xf]
      %v1262 = vld [vmem:[%s198 + $0xfe4] sm:$0xf]
      %v1263 = vld [vmem:[%s198 + $0xfe8] sm:$0xf]
      %v1264 = vld [vmem:[%s198 + $0xfec] sm:$0xf]
      %v1265 = vld [vmem:[%s198 + $0xff0] sm:$0xf]
      %v1266 = vld [vmem:[%s198 + $0xff4] sm:$0xf]
      %v1267 = vld [vmem:[%s198 + $0xff8] sm:$0xf]
      %v1268 = vld [vmem:[%s198 + $0xffc] sm:$0xf]
      %v1301 = vunpack.c.l.b16 %v213
      %v1302 = vunpack.c.h.b16 %v213
      %v1303 = vunpack.c.l.b16 %v214
      %v1304 = vunpack.c.h.b16 %v214
      %v1305 = vunpack.c.l.b16 %v215
      %v1306 = vunpack.c.h.b16 %v215
      %v1307 = vunpack.c.l.b16 %v216
      %v1308 = vunpack.c.h.b16 %v216
      %v1309 = vunpack.c.l.b16 %v217
      %v1310 = vunpack.c.h.b16 %v217
      %v1311 = vunpack.c.l.b16 %v218
      %v1312 = vunpack.c.h.b16 %v218
      %v1313 = vunpack.c.l.b16 %v219
      %v1314 = vunpack.c.h.b16 %v219
      %v1315 = vunpack.c.l.b16 %v220
      %v1316 = vunpack.c.h.b16 %v220
      %v1317 = vunpack.c.l.b16 %v221
      %v1318 = vunpack.c.h.b16 %v221
      %v1319 = vunpack.c.l.b16 %v222
      %v1320 = vunpack.c.h.b16 %v222
      %v1321 = vunpack.c.l.b16 %v223
      %v1322 = vunpack.c.h.b16 %v223
      %v1323 = vunpack.c.l.b16 %v224
      %v1324 = vunpack.c.h.b16 %v224
      %v1325 = vunpack.c.l.b16 %v225
      %v1326 = vunpack.c.h.b16 %v225
      %v1327 = vunpack.c.l.b16 %v226
      %v1328 = vunpack.c.h.b16 %v226
      %v1329 = vunpack.c.l.b16 %v227
      %v1330 = vunpack.c.h.b16 %v227
      %v1331 = vunpack.c.l.b16 %v228
      %v1332 = vunpack.c.h.b16 %v228
      %v1333 = vunpack.c.l.b16 %v229
      %v1334 = vunpack.c.h.b16 %v229
      %v1335 = vunpack.c.l.b16 %v230
      %v1336 = vunpack.c.h.b16 %v230
      %v1337 = vunpack.c.l.b16 %v231
      %v1338 = vunpack.c.h.b16 %v231
      %v1339 = vunpack.c.l.b16 %v232
      %v1340 = vunpack.c.h.b16 %v232
      %v1341 = vunpack.c.l.b16 %v233
      %v1342 = vunpack.c.h.b16 %v233
      %v1343 = vunpack.c.l.b16 %v234
      %v1344 = vunpack.c.h.b16 %v234
      %v1345 = vunpack.c.l.b16 %v235
      %v1346 = vunpack.c.h.b16 %v235
      %v1347 = vunpack.c.l.b16 %v236
      %v1348 = vunpack.c.h.b16 %v236
      %v1349 = vunpack.c.l.b16 %v237
      %v1350 = vunpack.c.h.b16 %v237
      %v1351 = vunpack.c.l.b16 %v238
      %v1352 = vunpack.c.h.b16 %v238
      %v1353 = vunpack.c.l.b16 %v239
      %v1354 = vunpack.c.h.b16 %v239
      %v1355 = vunpack.c.l.b16 %v240
      %v1356 = vunpack.c.h.b16 %v240
      %v1357 = vunpack.c.l.b16 %v241
      %v1358 = vunpack.c.h.b16 %v241
      %v1359 = vunpack.c.l.b16 %v242
      %v1360 = vunpack.c.h.b16 %v242
      %v1361 = vunpack.c.l.b16 %v243
      %v1362 = vunpack.c.h.b16 %v243
      %v1363 = vunpack.c.l.b16 %v244
      %v1364 = vunpack.c.h.b16 %v244
      %v1365 = vpack.c.b16 %v1301, %v1301
      %v1366 = vpack.c.b16 %v1302, %v1302
      %v1367 = vpack.c.b16 %v1303, %v1303
      %v1368 = vpack.c.b16 %v1304, %v1304
      %v1369 = vpack.c.b16 %v1305, %v1305
      %v1370 = vpack.c.b16 %v1306, %v1306
      %v1371 = vpack.c.b16 %v1307, %v1307
      %v1372 = vpack.c.b16 %v1308, %v1308
      %v1373 = vpack.c.b16 %v1309, %v1309
      %v1374 = vpack.c.b16 %v1310, %v1310
      %v1375 = vpack.c.b16 %v1311, %v1311
      %v1376 = vpack.c.b16 %v1312, %v1312
      %v1377 = vpack.c.b16 %v1313, %v1313
      %v1378 = vpack.c.b16 %v1314, %v1314
      %v1379 = vpack.c.b16 %v1315, %v1315
      %v1380 = vpack.c.b16 %v1316, %v1316
      %v1381 = vpack.c.b16 %v1317, %v1317
      %v1382 = vpack.c.b16 %v1318, %v1318
      %v1383 = vpack.c.b16 %v1319, %v1319
      %v1384 = vpack.c.b16 %v1320, %v1320
      %v1385 = vpack.c.b16 %v1321, %v1321
      %v1386 = vpack.c.b16 %v1322, %v1322
      %v1387 = vpack.c.b16 %v1323, %v1323
      %v1388 = vpack.c.b16 %v1324, %v1324
      %v1389 = vpack.c.b16 %v1325, %v1325
      %v1390 = vpack.c.b16 %v1326, %v1326
      %v1391 = vpack.c.b16 %v1327, %v1327
      %v1392 = vpack.c.b16 %v1328, %v1328
      %v1393 = vpack.c.b16 %v1329, %v1329
      %v1394 = vpack.c.b16 %v1330, %v1330
      %v1395 = vpack.c.b16 %v1331, %v1331
      %v1396 = vpack.c.b16 %v1332, %v1332
      %v1397 = vpack.c.b16 %v1333, %v1333
      %v1398 = vpack.c.b16 %v1334, %v1334
      %v1399 = vpack.c.b16 %v1335, %v1335
      %v1400 = vpack.c.b16 %v1336, %v1336
      %v1401 = vpack.c.b16 %v1337, %v1337
      %v1402 = vpack.c.b16 %v1338, %v1338
      %v1403 = vpack.c.b16 %v1339, %v1339
      %v1404 = vpack.c.b16 %v1340, %v1340
      %v1405 = vpack.c.b16 %v1341, %v1341
      %v1406 = vpack.c.b16 %v1342, %v1342
      %v1407 = vpack.c.b16 %v1343, %v1343
      %v1408 = vpack.c.b16 %v1344, %v1344
      %v1409 = vpack.c.b16 %v1345, %v1345
      %v1410 = vpack.c.b16 %v1346, %v1346
      %v1411 = vpack.c.b16 %v1347, %v1347
      %v1412 = vpack.c.b16 %v1348, %v1348
      %v1413 = vpack.c.b16 %v1349, %v1349
      %v1414 = vpack.c.b16 %v1350, %v1350
      %v1415 = vpack.c.b16 %v1351, %v1351
      %v1416 = vpack.c.b16 %v1352, %v1352
      %v1417 = vpack.c.b16 %v1353, %v1353
      %v1418 = vpack.c.b16 %v1354, %v1354
      %v1419 = vpack.c.b16 %v1355, %v1355
      %v1420 = vpack.c.b16 %v1356, %v1356
      %v1421 = vpack.c.b16 %v1357, %v1357
      %v1422 = vpack.c.b16 %v1358, %v1358
      %v1423 = vpack.c.b16 %v1359, %v1359
      %v1424 = vpack.c.b16 %v1360, %v1360
      %v1425 = vpack.c.b16 %v1361, %v1361
      %v1426 = vpack.c.b16 %v1362, %v1362
      %v1427 = vpack.c.b16 %v1363, %v1363
      %v1428 = vpack.c.b16 %v1364, %v1364
      %v2517 = vunpack.c.l.b16 %v245
      %v2518 = vunpack.c.l.b16 %v246
      %v2519 = vunpack.c.l.b16 %v247
      %v2520 = vunpack.c.l.b16 %v248
      %v2521 = vunpack.c.l.b16 %v249
      %v2522 = vunpack.c.l.b16 %v250
      %v2523 = vunpack.c.l.b16 %v251
      %v2524 = vunpack.c.l.b16 %v252
      %v2525 = vunpack.c.l.b16 %v253
      %v2526 = vunpack.c.l.b16 %v254
      %v2527 = vunpack.c.l.b16 %v255
      %v2528 = vunpack.c.l.b16 %v256
      %v2529 = vunpack.c.l.b16 %v257
      %v2530 = vunpack.c.l.b16 %v258
      %v2531 = vunpack.c.l.b16 %v259
      %v2532 = vunpack.c.l.b16 %v260
      %v2533 = vunpack.c.l.b16 %v261
      %v2534 = vunpack.c.l.b16 %v262
      %v2535 = vunpack.c.l.b16 %v263
      %v2536 = vunpack.c.l.b16 %v264
      %v2537 = vunpack.c.l.b16 %v265
      %v2538 = vunpack.c.l.b16 %v266
      %v2539 = vunpack.c.l.b16 %v267
      %v2540 = vunpack.c.l.b16 %v268
      %v2541 = vunpack.c.l.b16 %v269
      %v2542 = vunpack.c.l.b16 %v270
      %v2543 = vunpack.c.l.b16 %v271
      %v2544 = vunpack.c.l.b16 %v272
      %v2545 = vunpack.c.l.b16 %v273
      %v2546 = vunpack.c.l.b16 %v274
      %v2547 = vunpack.c.l.b16 %v275
      %v2548 = vunpack.c.l.b16 %v276
      %v2549 = vunpack.c.l.b16 %v277
      %v2550 = vunpack.c.l.b16 %v278
      %v2551 = vunpack.c.l.b16 %v279
      %v2552 = vunpack.c.l.b16 %v280
      %v2553 = vunpack.c.l.b16 %v281
      %v2554 = vunpack.c.l.b16 %v282
      %v2555 = vunpack.c.l.b16 %v283
      %v2556 = vunpack.c.l.b16 %v284
      %v2557 = vunpack.c.l.b16 %v285
      %v2558 = vunpack.c.l.b16 %v286
      %v2559 = vunpack.c.l.b16 %v287
      %v2560 = vunpack.c.l.b16 %v288
      %v2561 = vunpack.c.l.b16 %v289
      %v2562 = vunpack.c.l.b16 %v290
      %v2563 = vunpack.c.l.b16 %v291
      %v2564 = vunpack.c.l.b16 %v292
      %v2565 = vunpack.c.l.b16 %v293
      %v2566 = vunpack.c.l.b16 %v294
      %v2567 = vunpack.c.l.b16 %v295
      %v2568 = vunpack.c.l.b16 %v296
      %v2569 = vunpack.c.l.b16 %v297
      %v2570 = vunpack.c.l.b16 %v298
      %v2571 = vunpack.c.l.b16 %v299
      %v2572 = vunpack.c.l.b16 %v300
      %v2573 = vunpack.c.l.b16 %v301
      %v2574 = vunpack.c.l.b16 %v302
      %v2575 = vunpack.c.l.b16 %v303
      %v2576 = vunpack.c.l.b16 %v304
      %v2577 = vunpack.c.l.b16 %v305
      %v2578 = vunpack.c.l.b16 %v306
      %v2579 = vunpack.c.l.b16 %v307
      %v2580 = vunpack.c.l.b16 %v308
      %v2581 = vunpack.c.l.b16 %v309
      %v2582 = vunpack.c.l.b16 %v310
      %v2583 = vunpack.c.l.b16 %v311
      %v2584 = vunpack.c.l.b16 %v312
      %v2585 = vunpack.c.l.b16 %v313
      %v2586 = vunpack.c.l.b16 %v314
      %v2587 = vunpack.c.l.b16 %v315
      %v2588 = vunpack.c.l.b16 %v316
      %v2589 = vunpack.c.l.b16 %v317
      %v2590 = vunpack.c.l.b16 %v318
      %v2591 = vunpack.c.l.b16 %v319
      %v2592 = vunpack.c.l.b16 %v320
      %v2593 = vunpack.c.l.b16 %v321
      %v2594 = vunpack.c.l.b16 %v322
      %v2595 = vunpack.c.l.b16 %v323
      %v2596 = vunpack.c.l.b16 %v324
      %v2597 = vunpack.c.l.b16 %v325
      %v2598 = vunpack.c.l.b16 %v326
      %v2599 = vunpack.c.l.b16 %v327
      %v2600 = vunpack.c.l.b16 %v328
      %v2601 = vunpack.c.l.b16 %v329
      %v2602 = vunpack.c.l.b16 %v330
      %v2603 = vunpack.c.l.b16 %v331
      %v2604 = vunpack.c.l.b16 %v332
      %v2605 = vunpack.c.l.b16 %v333
      %v2606 = vunpack.c.l.b16 %v334
      %v2607 = vunpack.c.l.b16 %v335
      %v2608 = vunpack.c.l.b16 %v336
      %v2609 = vunpack.c.l.b16 %v337
      %v2610 = vunpack.c.l.b16 %v338
      %v2611 = vunpack.c.l.b16 %v339
      %v2612 = vunpack.c.l.b16 %v340
      %v2613 = vunpack.c.l.b16 %v341
      %v2614 = vunpack.c.l.b16 %v342
      %v2615 = vunpack.c.l.b16 %v343
      %v2616 = vunpack.c.l.b16 %v344
      %v2617 = vunpack.c.l.b16 %v345
      %v2618 = vunpack.c.l.b16 %v346
      %v2619 = vunpack.c.l.b16 %v347
      %v2620 = vunpack.c.l.b16 %v348
      %v2621 = vunpack.c.l.b16 %v349
      %v2622 = vunpack.c.l.b16 %v350
      %v2623 = vunpack.c.l.b16 %v351
      %v2624 = vunpack.c.l.b16 %v352
      %v2625 = vunpack.c.l.b16 %v353
      %v2626 = vunpack.c.l.b16 %v354
      %v2627 = vunpack.c.l.b16 %v355
      %v2628 = vunpack.c.l.b16 %v356
      %v2629 = vunpack.c.l.b16 %v357
      %v2630 = vunpack.c.l.b16 %v358
      %v2631 = vunpack.c.l.b16 %v359
      %v2632 = vunpack.c.l.b16 %v360
      %v2633 = vunpack.c.l.b16 %v361
      %v2634 = vunpack.c.l.b16 %v362
      %v2635 = vunpack.c.l.b16 %v363
      %v2636 = vunpack.c.l.b16 %v364
      %v2637 = vunpack.c.l.b16 %v365
      %v2638 = vunpack.c.l.b16 %v366
      %v2639 = vunpack.c.l.b16 %v367
      %v2640 = vunpack.c.l.b16 %v368
      %v2641 = vunpack.c.l.b16 %v369
      %v2642 = vunpack.c.l.b16 %v370
      %v2643 = vunpack.c.l.b16 %v371
      %v2644 = vunpack.c.l.b16 %v372
      %v2645 = vunpack.c.l.b16 %v373
      %v2646 = vunpack.c.l.b16 %v374
      %v2647 = vunpack.c.l.b16 %v375
      %v2648 = vunpack.c.l.b16 %v376
      %v2649 = vunpack.c.l.b16 %v377
      %v2650 = vunpack.c.l.b16 %v378
      %v2651 = vunpack.c.l.b16 %v379
      %v2652 = vunpack.c.l.b16 %v380
      %v2653 = vunpack.c.l.b16 %v381
      %v2654 = vunpack.c.l.b16 %v382
      %v2655 = vunpack.c.l.b16 %v383
      %v2656 = vunpack.c.l.b16 %v384
      %v2657 = vunpack.c.l.b16 %v385
      %v2658 = vunpack.c.l.b16 %v386
      %v2659 = vunpack.c.l.b16 %v387
      %v2660 = vunpack.c.l.b16 %v388
      %v2661 = vunpack.c.l.b16 %v389
      %v2662 = vunpack.c.l.b16 %v390
      %v2663 = vunpack.c.l.b16 %v391
      %v2664 = vunpack.c.l.b16 %v392
      %v2665 = vunpack.c.l.b16 %v393
      %v2666 = vunpack.c.l.b16 %v394
      %v2667 = vunpack.c.l.b16 %v395
      %v2668 = vunpack.c.l.b16 %v396
      %v2669 = vunpack.c.l.b16 %v397
      %v2670 = vunpack.c.l.b16 %v398
      %v2671 = vunpack.c.l.b16 %v399
      %v2672 = vunpack.c.l.b16 %v400
      %v2673 = vunpack.c.l.b16 %v401
      %v2674 = vunpack.c.l.b16 %v402
      %v2675 = vunpack.c.l.b16 %v403
      %v2676 = vunpack.c.l.b16 %v404
      %v2677 = vunpack.c.l.b16 %v405
      %v2678 = vunpack.c.l.b16 %v406
      %v2679 = vunpack.c.l.b16 %v407
      %v2680 = vunpack.c.l.b16 %v408
      %v2681 = vunpack.c.l.b16 %v409
      %v2682 = vunpack.c.l.b16 %v410
      %v2683 = vunpack.c.l.b16 %v411
      %v2684 = vunpack.c.l.b16 %v412
      %v2685 = vunpack.c.l.b16 %v413
      %v2686 = vunpack.c.l.b16 %v414
      %v2687 = vunpack.c.l.b16 %v415
      %v2688 = vunpack.c.l.b16 %v416
      %v2689 = vunpack.c.l.b16 %v417
      %v2690 = vunpack.c.l.b16 %v418
      %v2691 = vunpack.c.l.b16 %v419
      %v2692 = vunpack.c.l.b16 %v420
      %v2693 = vunpack.c.l.b16 %v421
      %v2694 = vunpack.c.l.b16 %v422
      %v2695 = vunpack.c.l.b16 %v423
      %v2696 = vunpack.c.l.b16 %v424
      %v2697 = vunpack.c.l.b16 %v425
      %v2698 = vunpack.c.l.b16 %v426
      %v2699 = vunpack.c.l.b16 %v427
      %v2700 = vunpack.c.l.b16 %v428
      %v2701 = vunpack.c.l.b16 %v429
      %v2702 = vunpack.c.l.b16 %v430
      %v2703 = vunpack.c.l.b16 %v431
      %v2704 = vunpack.c.l.b16 %v432
      %v2705 = vunpack.c.l.b16 %v433
      %v2706 = vunpack.c.l.b16 %v434
      %v2707 = vunpack.c.l.b16 %v435
      %v2708 = vunpack.c.l.b16 %v436
      %v2709 = vunpack.c.l.b16 %v437
      %v2710 = vunpack.c.l.b16 %v438
      %v2711 = vunpack.c.l.b16 %v439
      %v2712 = vunpack.c.l.b16 %v440
      %v2713 = vunpack.c.l.b16 %v441
      %v2714 = vunpack.c.l.b16 %v442
      %v2715 = vunpack.c.l.b16 %v443
      %v2716 = vunpack.c.l.b16 %v444
      %v2717 = vunpack.c.l.b16 %v445
      %v2718 = vunpack.c.l.b16 %v446
      %v2719 = vunpack.c.l.b16 %v447
      %v2720 = vunpack.c.l.b16 %v448
      %v2721 = vunpack.c.l.b16 %v449
      %v2722 = vunpack.c.l.b16 %v450
      %v2723 = vunpack.c.l.b16 %v451
      %v2724 = vunpack.c.l.b16 %v452
      %v2725 = vunpack.c.l.b16 %v453
      %v2726 = vunpack.c.l.b16 %v454
      %v2727 = vunpack.c.l.b16 %v455
      %v2728 = vunpack.c.l.b16 %v456
      %v2729 = vunpack.c.l.b16 %v457
      %v2730 = vunpack.c.l.b16 %v458
      %v2731 = vunpack.c.l.b16 %v459
      %v2732 = vunpack.c.l.b16 %v460
      %v2733 = vunpack.c.l.b16 %v461
      %v2734 = vunpack.c.l.b16 %v462
      %v2735 = vunpack.c.l.b16 %v463
      %v2736 = vunpack.c.l.b16 %v464
      %v2737 = vunpack.c.l.b16 %v465
      %v2738 = vunpack.c.l.b16 %v466
      %v2739 = vunpack.c.l.b16 %v467
      %v2740 = vunpack.c.l.b16 %v468
      %v2741 = vunpack.c.l.b16 %v469
      %v2742 = vunpack.c.l.b16 %v470
      %v2743 = vunpack.c.l.b16 %v471
      %v2744 = vunpack.c.l.b16 %v472
      %v2745 = vunpack.c.l.b16 %v473
      %v2746 = vunpack.c.l.b16 %v474
      %v2747 = vunpack.c.l.b16 %v475
      %v2748 = vunpack.c.l.b16 %v476
      %v2749 = vunpack.c.l.b16 %v477
      %v2750 = vunpack.c.l.b16 %v478
      %v2751 = vunpack.c.l.b16 %v479
      %v2752 = vunpack.c.l.b16 %v480
      %v2753 = vunpack.c.l.b16 %v481
      %v2754 = vunpack.c.l.b16 %v482
      %v2755 = vunpack.c.l.b16 %v483
      %v2756 = vunpack.c.l.b16 %v484
      %v2757 = vunpack.c.l.b16 %v485
      %v2758 = vunpack.c.l.b16 %v486
      %v2759 = vunpack.c.l.b16 %v487
      %v2760 = vunpack.c.l.b16 %v488
      %v2761 = vunpack.c.l.b16 %v489
      %v2762 = vunpack.c.l.b16 %v490
      %v2763 = vunpack.c.l.b16 %v491
      %v2764 = vunpack.c.l.b16 %v492
      %v2765 = vunpack.c.l.b16 %v493
      %v2766 = vunpack.c.l.b16 %v494
      %v2767 = vunpack.c.l.b16 %v495
      %v2768 = vunpack.c.l.b16 %v496
      %v2769 = vunpack.c.l.b16 %v497
      %v2770 = vunpack.c.l.b16 %v498
      %v2771 = vunpack.c.l.b16 %v499
      %v2772 = vunpack.c.l.b16 %v500
      %v2773 = vunpack.c.l.b16 %v501
      %v2774 = vunpack.c.l.b16 %v502
      %v2775 = vunpack.c.l.b16 %v503
      %v2776 = vunpack.c.l.b16 %v504
      %v2777 = vunpack.c.l.b16 %v505
      %v2778 = vunpack.c.l.b16 %v506
      %v2779 = vunpack.c.l.b16 %v507
      %v2780 = vunpack.c.l.b16 %v508
      %v2781 = vunpack.c.l.b16 %v509
      %v2782 = vunpack.c.l.b16 %v510
      %v2783 = vunpack.c.l.b16 %v511
      %v2784 = vunpack.c.l.b16 %v512
      %v2785 = vunpack.c.l.b16 %v513
      %v2786 = vunpack.c.l.b16 %v514
      %v2787 = vunpack.c.l.b16 %v515
      %v2788 = vunpack.c.l.b16 %v516
      %v2789 = vunpack.c.l.b16 %v517
      %v2790 = vunpack.c.l.b16 %v518
      %v2791 = vunpack.c.l.b16 %v519
      %v2792 = vunpack.c.l.b16 %v520
      %v2793 = vunpack.c.l.b16 %v521
      %v2794 = vunpack.c.l.b16 %v522
      %v2795 = vunpack.c.l.b16 %v523
      %v2796 = vunpack.c.l.b16 %v524
      %v2797 = vunpack.c.l.b16 %v525
      %v2798 = vunpack.c.l.b16 %v526
      %v2799 = vunpack.c.l.b16 %v527
      %v2800 = vunpack.c.l.b16 %v528
      %v2801 = vunpack.c.l.b16 %v529
      %v2802 = vunpack.c.l.b16 %v530
      %v2803 = vunpack.c.l.b16 %v531
      %v2804 = vunpack.c.l.b16 %v532
      %v2805 = vunpack.c.l.b16 %v533
      %v2806 = vunpack.c.l.b16 %v534
      %v2807 = vunpack.c.l.b16 %v535
      %v2808 = vunpack.c.l.b16 %v536
      %v2809 = vunpack.c.l.b16 %v537
      %v2810 = vunpack.c.l.b16 %v538
      %v2811 = vunpack.c.l.b16 %v539
      %v2812 = vunpack.c.l.b16 %v540
      %v2813 = vunpack.c.l.b16 %v541
      %v2814 = vunpack.c.l.b16 %v542
      %v2815 = vunpack.c.l.b16 %v543
      %v2816 = vunpack.c.l.b16 %v544
      %v2817 = vunpack.c.l.b16 %v545
      %v2818 = vunpack.c.l.b16 %v546
      %v2819 = vunpack.c.l.b16 %v547
      %v2820 = vunpack.c.l.b16 %v548
      %v2821 = vunpack.c.l.b16 %v549
      %v2822 = vunpack.c.l.b16 %v550
      %v2823 = vunpack.c.l.b16 %v551
      %v2824 = vunpack.c.l.b16 %v552
      %v2825 = vunpack.c.l.b16 %v553
      %v2826 = vunpack.c.l.b16 %v554
      %v2827 = vunpack.c.l.b16 %v555
      %v2828 = vunpack.c.l.b16 %v556
      %v2829 = vunpack.c.l.b16 %v557
      %v2830 = vunpack.c.l.b16 %v558
      %v2831 = vunpack.c.l.b16 %v559
      %v2832 = vunpack.c.l.b16 %v560
      %v2833 = vunpack.c.l.b16 %v561
      %v2834 = vunpack.c.l.b16 %v562
      %v2835 = vunpack.c.l.b16 %v563
      %v2836 = vunpack.c.l.b16 %v564
      %v2837 = vunpack.c.l.b16 %v565
      %v2838 = vunpack.c.l.b16 %v566
      %v2839 = vunpack.c.l.b16 %v567
      %v2840 = vunpack.c.l.b16 %v568
      %v2841 = vunpack.c.l.b16 %v569
      %v2842 = vunpack.c.l.b16 %v570
      %v2843 = vunpack.c.l.b16 %v571
      %v2844 = vunpack.c.l.b16 %v572
      %v2845 = vunpack.c.l.b16 %v573
      %v2846 = vunpack.c.l.b16 %v574
      %v2847 = vunpack.c.l.b16 %v575
      %v2848 = vunpack.c.l.b16 %v576
      %v2849 = vunpack.c.l.b16 %v577
      %v2850 = vunpack.c.l.b16 %v578
      %v2851 = vunpack.c.l.b16 %v579
      %v2852 = vunpack.c.l.b16 %v580
      %v2853 = vunpack.c.l.b16 %v581
      %v2854 = vunpack.c.l.b16 %v582
      %v2855 = vunpack.c.l.b16 %v583
      %v2856 = vunpack.c.l.b16 %v584
      %v2857 = vunpack.c.l.b16 %v585
      %v2858 = vunpack.c.l.b16 %v586
      %v2859 = vunpack.c.l.b16 %v587
      %v2860 = vunpack.c.l.b16 %v588
      %v2861 = vunpack.c.l.b16 %v589
      %v2862 = vunpack.c.l.b16 %v590
      %v2863 = vunpack.c.l.b16 %v591
      %v2864 = vunpack.c.l.b16 %v592
      %v2865 = vunpack.c.l.b16 %v593
      %v2866 = vunpack.c.l.b16 %v594
      %v2867 = vunpack.c.l.b16 %v595
      %v2868 = vunpack.c.l.b16 %v596
      %v2869 = vunpack.c.l.b16 %v597
      %v2870 = vunpack.c.l.b16 %v598
      %v2871 = vunpack.c.l.b16 %v599
      %v2872 = vunpack.c.l.b16 %v600
      %v2873 = vunpack.c.l.b16 %v601
      %v2874 = vunpack.c.l.b16 %v602
      %v2875 = vunpack.c.l.b16 %v603
      %v2876 = vunpack.c.l.b16 %v604
      %v2877 = vunpack.c.l.b16 %v605
      %v2878 = vunpack.c.l.b16 %v606
      %v2879 = vunpack.c.l.b16 %v607
      %v2880 = vunpack.c.l.b16 %v608
      %v2881 = vunpack.c.l.b16 %v609
      %v2882 = vunpack.c.l.b16 %v610
      %v2883 = vunpack.c.l.b16 %v611
      %v2884 = vunpack.c.l.b16 %v612
      %v2885 = vunpack.c.l.b16 %v613
      %v2886 = vunpack.c.l.b16 %v614
      %v2887 = vunpack.c.l.b16 %v615
      %v2888 = vunpack.c.l.b16 %v616
      %v2889 = vunpack.c.l.b16 %v617
      %v2890 = vunpack.c.l.b16 %v618
      %v2891 = vunpack.c.l.b16 %v619
      %v2892 = vunpack.c.l.b16 %v620
      %v2893 = vunpack.c.l.b16 %v621
      %v2894 = vunpack.c.l.b16 %v622
      %v2895 = vunpack.c.l.b16 %v623
      %v2896 = vunpack.c.l.b16 %v624
      %v2897 = vunpack.c.l.b16 %v625
      %v2898 = vunpack.c.l.b16 %v626
      %v2899 = vunpack.c.l.b16 %v627
      %v2900 = vunpack.c.l.b16 %v628
      %v2901 = vunpack.c.l.b16 %v629
      %v2902 = vunpack.c.l.b16 %v630
      %v2903 = vunpack.c.l.b16 %v631
      %v2904 = vunpack.c.l.b16 %v632
      %v2905 = vunpack.c.l.b16 %v633
      %v2906 = vunpack.c.l.b16 %v634
      %v2907 = vunpack.c.l.b16 %v635
      %v2908 = vunpack.c.l.b16 %v636
      %v2909 = vunpack.c.l.b16 %v637
      %v2910 = vunpack.c.l.b16 %v638
      %v2911 = vunpack.c.l.b16 %v639
      %v2912 = vunpack.c.l.b16 %v640
      %v2913 = vunpack.c.l.b16 %v641
      %v2914 = vunpack.c.l.b16 %v642
      %v2915 = vunpack.c.l.b16 %v643
      %v2916 = vunpack.c.l.b16 %v644
      %v2917 = vunpack.c.l.b16 %v645
      %v2918 = vunpack.c.l.b16 %v646
      %v2919 = vunpack.c.l.b16 %v647
      %v2920 = vunpack.c.l.b16 %v648
      %v2921 = vunpack.c.l.b16 %v649
      %v2922 = vunpack.c.l.b16 %v650
      %v2923 = vunpack.c.l.b16 %v651
      %v2924 = vunpack.c.l.b16 %v652
      %v2925 = vunpack.c.l.b16 %v653
      %v2926 = vunpack.c.l.b16 %v654
      %v2927 = vunpack.c.l.b16 %v655
      %v2928 = vunpack.c.l.b16 %v656
      %v2929 = vunpack.c.l.b16 %v657
      %v2930 = vunpack.c.l.b16 %v658
      %v2931 = vunpack.c.l.b16 %v659
      %v2932 = vunpack.c.l.b16 %v660
      %v2933 = vunpack.c.l.b16 %v661
      %v2934 = vunpack.c.l.b16 %v662
      %v2935 = vunpack.c.l.b16 %v663
      %v2936 = vunpack.c.l.b16 %v664
      %v2937 = vunpack.c.l.b16 %v665
      %v2938 = vunpack.c.l.b16 %v666
      %v2939 = vunpack.c.l.b16 %v667
      %v2940 = vunpack.c.l.b16 %v668
      %v2941 = vunpack.c.l.b16 %v669
      %v2942 = vunpack.c.l.b16 %v670
      %v2943 = vunpack.c.l.b16 %v671
      %v2944 = vunpack.c.l.b16 %v672
      %v2945 = vunpack.c.l.b16 %v673
      %v2946 = vunpack.c.l.b16 %v674
      %v2947 = vunpack.c.l.b16 %v675
      %v2948 = vunpack.c.l.b16 %v676
      %v2949 = vunpack.c.l.b16 %v677
      %v2950 = vunpack.c.l.b16 %v678
      %v2951 = vunpack.c.l.b16 %v679
      %v2952 = vunpack.c.l.b16 %v680
      %v2953 = vunpack.c.l.b16 %v681
      %v2954 = vunpack.c.l.b16 %v682
      %v2955 = vunpack.c.l.b16 %v683
      %v2956 = vunpack.c.l.b16 %v684
      %v2957 = vunpack.c.l.b16 %v685
      %v2958 = vunpack.c.l.b16 %v686
      %v2959 = vunpack.c.l.b16 %v687
      %v2960 = vunpack.c.l.b16 %v688
      %v2961 = vunpack.c.l.b16 %v689
      %v2962 = vunpack.c.l.b16 %v690
      %v2963 = vunpack.c.l.b16 %v691
      %v2964 = vunpack.c.l.b16 %v692
      %v2965 = vunpack.c.l.b16 %v693
      %v2966 = vunpack.c.l.b16 %v694
      %v2967 = vunpack.c.l.b16 %v695
      %v2968 = vunpack.c.l.b16 %v696
      %v2969 = vunpack.c.l.b16 %v697
      %v2970 = vunpack.c.l.b16 %v698
      %v2971 = vunpack.c.l.b16 %v699
      %v2972 = vunpack.c.l.b16 %v700
      %v2973 = vunpack.c.l.b16 %v701
      %v2974 = vunpack.c.l.b16 %v702
      %v2975 = vunpack.c.l.b16 %v703
      %v2976 = vunpack.c.l.b16 %v704
      %v2977 = vunpack.c.l.b16 %v705
      %v2978 = vunpack.c.l.b16 %v706
      %v2979 = vunpack.c.l.b16 %v707
      %v2980 = vunpack.c.l.b16 %v708
      %v2981 = vunpack.c.l.b16 %v709
      %v2982 = vunpack.c.l.b16 %v710
      %v2983 = vunpack.c.l.b16 %v711
      %v2984 = vunpack.c.l.b16 %v712
      %v2985 = vunpack.c.l.b16 %v713
      %v2986 = vunpack.c.l.b16 %v714
      %v2987 = vunpack.c.l.b16 %v715
      %v2988 = vunpack.c.l.b16 %v716
      %v2989 = vunpack.c.l.b16 %v717
      %v2990 = vunpack.c.l.b16 %v718
      %v2991 = vunpack.c.l.b16 %v719
      %v2992 = vunpack.c.l.b16 %v720
      %v2993 = vunpack.c.l.b16 %v721
      %v2994 = vunpack.c.l.b16 %v722
      %v2995 = vunpack.c.l.b16 %v723
      %v2996 = vunpack.c.l.b16 %v724
      %v2997 = vunpack.c.l.b16 %v725
      %v2998 = vunpack.c.l.b16 %v726
      %v2999 = vunpack.c.l.b16 %v727
      %v3000 = vunpack.c.l.b16 %v728
      %v3001 = vunpack.c.l.b16 %v729
      %v3002 = vunpack.c.l.b16 %v730
      %v3003 = vunpack.c.l.b16 %v731
      %v3004 = vunpack.c.l.b16 %v732
      %v3005 = vunpack.c.l.b16 %v733
      %v3006 = vunpack.c.l.b16 %v734
      %v3007 = vunpack.c.l.b16 %v735
      %v3008 = vunpack.c.l.b16 %v736
      %v3009 = vunpack.c.l.b16 %v737
      %v3010 = vunpack.c.l.b16 %v738
      %v3011 = vunpack.c.l.b16 %v739
      %v3012 = vunpack.c.l.b16 %v740
      %v3013 = vunpack.c.l.b16 %v741
      %v3014 = vunpack.c.l.b16 %v742
      %v3015 = vunpack.c.l.b16 %v743
      %v3016 = vunpack.c.l.b16 %v744
      %v3017 = vunpack.c.l.b16 %v745
      %v3018 = vunpack.c.l.b16 %v746
      %v3019 = vunpack.c.l.b16 %v747
      %v3020 = vunpack.c.l.b16 %v748
      %v3021 = vunpack.c.l.b16 %v749
      %v3022 = vunpack.c.l.b16 %v750
      %v3023 = vunpack.c.l.b16 %v751
      %v3024 = vunpack.c.l.b16 %v752
      %v3025 = vunpack.c.l.b16 %v753
      %v3026 = vunpack.c.l.b16 %v754
      %v3027 = vunpack.c.l.b16 %v755
      %v3028 = vunpack.c.l.b16 %v756
      %v3029 = vunpack.c.l.b16 %v757
      %v3030 = vunpack.c.l.b16 %v758
      %v3031 = vunpack.c.l.b16 %v759
      %v3032 = vunpack.c.l.b16 %v760
      %v3033 = vunpack.c.l.b16 %v761
      %v3034 = vunpack.c.l.b16 %v762
      %v3035 = vunpack.c.l.b16 %v763
      %v3036 = vunpack.c.l.b16 %v764
      %v3037 = vunpack.c.l.b16 %v765
      %v3038 = vunpack.c.l.b16 %v766
      %v3039 = vunpack.c.l.b16 %v767
      %v3040 = vunpack.c.l.b16 %v768
      %v3041 = vunpack.c.l.b16 %v769
      %v3042 = vunpack.c.l.b16 %v770
      %v3043 = vunpack.c.l.b16 %v771
      %v3044 = vunpack.c.l.b16 %v772
      %v3045 = vunpack.c.l.b16 %v773
      %v3046 = vunpack.c.l.b16 %v774
      %v3047 = vunpack.c.l.b16 %v775
      %v3048 = vunpack.c.l.b16 %v776
      %v3049 = vunpack.c.l.b16 %v777
      %v3050 = vunpack.c.l.b16 %v778
      %v3051 = vunpack.c.l.b16 %v779
      %v3052 = vunpack.c.l.b16 %v780
      %v3053 = vunpack.c.l.b16 %v781
      %v3054 = vunpack.c.l.b16 %v782
      %v3055 = vunpack.c.l.b16 %v783
      %v3056 = vunpack.c.l.b16 %v784
      %v3057 = vunpack.c.l.b16 %v785
      %v3058 = vunpack.c.l.b16 %v786
      %v3059 = vunpack.c.l.b16 %v787
      %v3060 = vunpack.c.l.b16 %v788
      %v3061 = vunpack.c.l.b16 %v789
      %v3062 = vunpack.c.l.b16 %v790
      %v3063 = vunpack.c.l.b16 %v791
      %v3064 = vunpack.c.l.b16 %v792
      %v3065 = vunpack.c.l.b16 %v793
      %v3066 = vunpack.c.l.b16 %v794
      %v3067 = vunpack.c.l.b16 %v795
      %v3068 = vunpack.c.l.b16 %v796
      %v3069 = vunpack.c.l.b16 %v797
      %v3070 = vunpack.c.l.b16 %v798
      %v3071 = vunpack.c.l.b16 %v799
      %v3072 = vunpack.c.l.b16 %v800
      %v3073 = vunpack.c.l.b16 %v801
      %v3074 = vunpack.c.l.b16 %v802
      %v3075 = vunpack.c.l.b16 %v803
      %v3076 = vunpack.c.l.b16 %v804
      %v3077 = vunpack.c.l.b16 %v805
      %v3078 = vunpack.c.l.b16 %v806
      %v3079 = vunpack.c.l.b16 %v807
      %v3080 = vunpack.c.l.b16 %v808
      %v3081 = vunpack.c.l.b16 %v809
      %v3082 = vunpack.c.l.b16 %v810
      %v3083 = vunpack.c.l.b16 %v811
      %v3084 = vunpack.c.l.b16 %v812
      %v3085 = vunpack.c.l.b16 %v813
      %v3086 = vunpack.c.l.b16 %v814
      %v3087 = vunpack.c.l.b16 %v815
      %v3088 = vunpack.c.l.b16 %v816
      %v3089 = vunpack.c.l.b16 %v817
      %v3090 = vunpack.c.l.b16 %v818
      %v3091 = vunpack.c.l.b16 %v819
      %v3092 = vunpack.c.l.b16 %v820
      %v3093 = vunpack.c.l.b16 %v821
      %v3094 = vunpack.c.l.b16 %v822
      %v3095 = vunpack.c.l.b16 %v823
      %v3096 = vunpack.c.l.b16 %v824
      %v3097 = vunpack.c.l.b16 %v825
      %v3098 = vunpack.c.l.b16 %v826
      %v3099 = vunpack.c.l.b16 %v827
      %v3100 = vunpack.c.l.b16 %v828
      %v3101 = vunpack.c.l.b16 %v829
      %v3102 = vunpack.c.l.b16 %v830
      %v3103 = vunpack.c.l.b16 %v831
      %v3104 = vunpack.c.l.b16 %v832
      %v3105 = vunpack.c.l.b16 %v833
      %v3106 = vunpack.c.l.b16 %v834
      %v3107 = vunpack.c.l.b16 %v835
      %v3108 = vunpack.c.l.b16 %v836
      %v3109 = vunpack.c.l.b16 %v837
      %v3110 = vunpack.c.l.b16 %v838
      %v3111 = vunpack.c.l.b16 %v839
      %v3112 = vunpack.c.l.b16 %v840
      %v3113 = vunpack.c.l.b16 %v841
      %v3114 = vunpack.c.l.b16 %v842
      %v3115 = vunpack.c.l.b16 %v843
      %v3116 = vunpack.c.l.b16 %v844
      %v3117 = vunpack.c.l.b16 %v845
      %v3118 = vunpack.c.l.b16 %v846
      %v3119 = vunpack.c.l.b16 %v847
      %v3120 = vunpack.c.l.b16 %v848
      %v3121 = vunpack.c.l.b16 %v849
      %v3122 = vunpack.c.l.b16 %v850
      %v3123 = vunpack.c.l.b16 %v851
      %v3124 = vunpack.c.l.b16 %v852
      %v3125 = vunpack.c.l.b16 %v853
      %v3126 = vunpack.c.l.b16 %v854
      %v3127 = vunpack.c.l.b16 %v855
      %v3128 = vunpack.c.l.b16 %v856
      %v3129 = vunpack.c.l.b16 %v857
      %v3130 = vunpack.c.l.b16 %v858
      %v3131 = vunpack.c.l.b16 %v859
      %v3132 = vunpack.c.l.b16 %v860
      %v3133 = vunpack.c.l.b16 %v861
      %v3134 = vunpack.c.l.b16 %v862
      %v3135 = vunpack.c.l.b16 %v863
      %v3136 = vunpack.c.l.b16 %v864
      %v3137 = vunpack.c.l.b16 %v865
      %v3138 = vunpack.c.l.b16 %v866
      %v3139 = vunpack.c.l.b16 %v867
      %v3140 = vunpack.c.l.b16 %v868
      %v3141 = vunpack.c.l.b16 %v869
      %v3142 = vunpack.c.l.b16 %v870
      %v3143 = vunpack.c.l.b16 %v871
      %v3144 = vunpack.c.l.b16 %v872
      %v3145 = vunpack.c.l.b16 %v873
      %v3146 = vunpack.c.l.b16 %v874
      %v3147 = vunpack.c.l.b16 %v875
      %v3148 = vunpack.c.l.b16 %v876
      %v3149 = vunpack.c.l.b16 %v877
      %v3150 = vunpack.c.l.b16 %v878
      %v3151 = vunpack.c.l.b16 %v879
      %v3152 = vunpack.c.l.b16 %v880
      %v3153 = vunpack.c.l.b16 %v881
      %v3154 = vunpack.c.l.b16 %v882
      %v3155 = vunpack.c.l.b16 %v883
      %v3156 = vunpack.c.l.b16 %v884
      %v3157 = vunpack.c.l.b16 %v885
      %v3158 = vunpack.c.l.b16 %v886
      %v3159 = vunpack.c.l.b16 %v887
      %v3160 = vunpack.c.l.b16 %v888
      %v3161 = vunpack.c.l.b16 %v889
      %v3162 = vunpack.c.l.b16 %v890
      %v3163 = vunpack.c.l.b16 %v891
      %v3164 = vunpack.c.l.b16 %v892
      %v3165 = vunpack.c.l.b16 %v893
      %v3166 = vunpack.c.l.b16 %v894
      %v3167 = vunpack.c.l.b16 %v895
      %v3168 = vunpack.c.l.b16 %v896
      %v3169 = vunpack.c.l.b16 %v897
      %v3170 = vunpack.c.l.b16 %v898
      %v3171 = vunpack.c.l.b16 %v899
      %v3172 = vunpack.c.l.b16 %v900
      %v3173 = vunpack.c.l.b16 %v901
      %v3174 = vunpack.c.l.b16 %v902
      %v3175 = vunpack.c.l.b16 %v903
      %v3176 = vunpack.c.l.b16 %v904
      %v3177 = vunpack.c.l.b16 %v905
      %v3178 = vunpack.c.l.b16 %v906
      %v3179 = vunpack.c.l.b16 %v907
      %v3180 = vunpack.c.l.b16 %v908
      %v3181 = vunpack.c.l.b16 %v909
      %v3182 = vunpack.c.l.b16 %v910
      %v3183 = vunpack.c.l.b16 %v911
      %v3184 = vunpack.c.l.b16 %v912
      %v3185 = vunpack.c.l.b16 %v913
      %v3186 = vunpack.c.l.b16 %v914
      %v3187 = vunpack.c.l.b16 %v915
      %v3188 = vunpack.c.l.b16 %v916
      %v3189 = vunpack.c.l.b16 %v917
      %v3190 = vunpack.c.l.b16 %v918
      %v3191 = vunpack.c.l.b16 %v919
      %v3192 = vunpack.c.l.b16 %v920
      %v3193 = vunpack.c.l.b16 %v921
      %v3194 = vunpack.c.l.b16 %v922
      %v3195 = vunpack.c.l.b16 %v923
      %v3196 = vunpack.c.l.b16 %v924
      %v3197 = vunpack.c.l.b16 %v925
      %v3198 = vunpack.c.l.b16 %v926
      %v3199 = vunpack.c.l.b16 %v927
      %v3200 = vunpack.c.l.b16 %v928
      %v3201 = vunpack.c.l.b16 %v929
      %v3202 = vunpack.c.l.b16 %v930
      %v3203 = vunpack.c.l.b16 %v931
      %v3204 = vunpack.c.l.b16 %v932
      %v3205 = vunpack.c.l.b16 %v933
      %v3206 = vunpack.c.l.b16 %v934
      %v3207 = vunpack.c.l.b16 %v935
      %v3208 = vunpack.c.l.b16 %v936
      %v3209 = vunpack.c.l.b16 %v937
      %v3210 = vunpack.c.l.b16 %v938
      %v3211 = vunpack.c.l.b16 %v939
      %v3212 = vunpack.c.l.b16 %v940
      %v3213 = vunpack.c.l.b16 %v941
      %v3214 = vunpack.c.l.b16 %v942
      %v3215 = vunpack.c.l.b16 %v943
      %v3216 = vunpack.c.l.b16 %v944
      %v3217 = vunpack.c.l.b16 %v945
      %v3218 = vunpack.c.l.b16 %v946
      %v3219 = vunpack.c.l.b16 %v947
      %v3220 = vunpack.c.l.b16 %v948
      %v3221 = vunpack.c.l.b16 %v949
      %v3222 = vunpack.c.l.b16 %v950
      %v3223 = vunpack.c.l.b16 %v951
      %v3224 = vunpack.c.l.b16 %v952
      %v3225 = vunpack.c.l.b16 %v953
      %v3226 = vunpack.c.l.b16 %v954
      %v3227 = vunpack.c.l.b16 %v955
      %v3228 = vunpack.c.l.b16 %v956
      %v3229 = vunpack.c.l.b16 %v957
      %v3230 = vunpack.c.l.b16 %v958
      %v3231 = vunpack.c.l.b16 %v959
      %v3232 = vunpack.c.l.b16 %v960
      %v3233 = vunpack.c.l.b16 %v961
      %v3234 = vunpack.c.l.b16 %v962
      %v3235 = vunpack.c.l.b16 %v963
      %v3236 = vunpack.c.l.b16 %v964
      %v3237 = vunpack.c.l.b16 %v965
      %v3238 = vunpack.c.l.b16 %v966
      %v3239 = vunpack.c.l.b16 %v967
      %v3240 = vunpack.c.l.b16 %v968
      %v3241 = vunpack.c.l.b16 %v969
      %v3242 = vunpack.c.l.b16 %v970
      %v3243 = vunpack.c.l.b16 %v971
      %v3244 = vunpack.c.l.b16 %v972
      %v3245 = vunpack.c.l.b16 %v973
      %v3246 = vunpack.c.l.b16 %v974
      %v3247 = vunpack.c.l.b16 %v975
      %v3248 = vunpack.c.l.b16 %v976
      %v3249 = vunpack.c.l.b16 %v977
      %v3250 = vunpack.c.l.b16 %v978
      %v3251 = vunpack.c.l.b16 %v979
      %v3252 = vunpack.c.l.b16 %v980
      %v3253 = vunpack.c.l.b16 %v981
      %v3254 = vunpack.c.l.b16 %v982
      %v3255 = vunpack.c.l.b16 %v983
      %v3256 = vunpack.c.l.b16 %v984
      %v3257 = vunpack.c.l.b16 %v985
      %v3258 = vunpack.c.l.b16 %v986
      %v3259 = vunpack.c.l.b16 %v987
      %v3260 = vunpack.c.l.b16 %v988
      %v3261 = vunpack.c.l.b16 %v989
      %v3262 = vunpack.c.l.b16 %v990
      %v3263 = vunpack.c.l.b16 %v991
      %v3264 = vunpack.c.l.b16 %v992
      %v3265 = vunpack.c.l.b16 %v993
      %v3266 = vunpack.c.l.b16 %v994
      %v3267 = vunpack.c.l.b16 %v995
      %v3268 = vunpack.c.l.b16 %v996
      %v3269 = vunpack.c.l.b16 %v997
      %v3270 = vunpack.c.l.b16 %v998
      %v3271 = vunpack.c.l.b16 %v999
      %v3272 = vunpack.c.l.b16 %v1000
      %v3273 = vunpack.c.l.b16 %v1001
      %v3274 = vunpack.c.l.b16 %v1002
      %v3275 = vunpack.c.l.b16 %v1003
      %v3276 = vunpack.c.l.b16 %v1004
      %v3277 = vunpack.c.l.b16 %v1005
      %v3278 = vunpack.c.l.b16 %v1006
      %v3279 = vunpack.c.l.b16 %v1007
      %v3280 = vunpack.c.l.b16 %v1008
      %v3281 = vunpack.c.l.b16 %v1009
      %v3282 = vunpack.c.l.b16 %v1010
      %v3283 = vunpack.c.l.b16 %v1011
      %v3284 = vunpack.c.l.b16 %v1012
      %v3285 = vunpack.c.l.b16 %v1013
      %v3286 = vunpack.c.l.b16 %v1014
      %v3287 = vunpack.c.l.b16 %v1015
      %v3288 = vunpack.c.l.b16 %v1016
      %v3289 = vunpack.c.l.b16 %v1017
      %v3290 = vunpack.c.l.b16 %v1018
      %v3291 = vunpack.c.l.b16 %v1019
      %v3292 = vunpack.c.l.b16 %v1020
      %v3293 = vunpack.c.l.b16 %v1021
      %v3294 = vunpack.c.l.b16 %v1022
      %v3295 = vunpack.c.l.b16 %v1023
      %v3296 = vunpack.c.l.b16 %v1024
      %v3297 = vunpack.c.l.b16 %v1025
      %v3298 = vunpack.c.l.b16 %v1026
      %v3299 = vunpack.c.l.b16 %v1027
      %v3300 = vunpack.c.l.b16 %v1028
      %v3301 = vunpack.c.l.b16 %v1029
      %v3302 = vunpack.c.l.b16 %v1030
      %v3303 = vunpack.c.l.b16 %v1031
      %v3304 = vunpack.c.l.b16 %v1032
      %v3305 = vunpack.c.l.b16 %v1033
      %v3306 = vunpack.c.l.b16 %v1034
      %v3307 = vunpack.c.l.b16 %v1035
      %v3308 = vunpack.c.l.b16 %v1036
      %v3309 = vunpack.c.l.b16 %v1037
      %v3310 = vunpack.c.l.b16 %v1038
      %v3311 = vunpack.c.l.b16 %v1039
      %v3312 = vunpack.c.l.b16 %v1040
      %v3313 = vunpack.c.l.b16 %v1041
      %v3314 = vunpack.c.l.b16 %v1042
      %v3315 = vunpack.c.l.b16 %v1043
      %v3316 = vunpack.c.l.b16 %v1044
      %v3317 = vunpack.c.l.b16 %v1045
      %v3318 = vunpack.c.l.b16 %v1046
      %v3319 = vunpack.c.l.b16 %v1047
      %v3320 = vunpack.c.l.b16 %v1048
      %v3321 = vunpack.c.l.b16 %v1049
      %v3322 = vunpack.c.l.b16 %v1050
      %v3323 = vunpack.c.l.b16 %v1051
      %v3324 = vunpack.c.l.b16 %v1052
      %v3325 = vunpack.c.l.b16 %v1053
      %v3326 = vunpack.c.l.b16 %v1054
      %v3327 = vunpack.c.l.b16 %v1055
      %v3328 = vunpack.c.l.b16 %v1056
      %v3329 = vunpack.c.l.b16 %v1057
      %v3330 = vunpack.c.l.b16 %v1058
      %v3331 = vunpack.c.l.b16 %v1059
      %v3332 = vunpack.c.l.b16 %v1060
      %v3333 = vunpack.c.l.b16 %v1061
      %v3334 = vunpack.c.l.b16 %v1062
      %v3335 = vunpack.c.l.b16 %v1063
      %v3336 = vunpack.c.l.b16 %v1064
      %v3337 = vunpack.c.l.b16 %v1065
      %v3338 = vunpack.c.l.b16 %v1066
      %v3339 = vunpack.c.l.b16 %v1067
      %v3340 = vunpack.c.l.b16 %v1068
      %v3341 = vunpack.c.l.b16 %v1069
      %v3342 = vunpack.c.l.b16 %v1070
      %v3343 = vunpack.c.l.b16 %v1071
      %v3344 = vunpack.c.l.b16 %v1072
      %v3345 = vunpack.c.l.b16 %v1073
      %v3346 = vunpack.c.l.b16 %v1074
      %v3347 = vunpack.c.l.b16 %v1075
      %v3348 = vunpack.c.l.b16 %v1076
      %v3349 = vunpack.c.l.b16 %v1077
      %v3350 = vunpack.c.l.b16 %v1078
      %v3351 = vunpack.c.l.b16 %v1079
      %v3352 = vunpack.c.l.b16 %v1080
      %v3353 = vunpack.c.l.b16 %v1081
      %v3354 = vunpack.c.l.b16 %v1082
      %v3355 = vunpack.c.l.b16 %v1083
      %v3356 = vunpack.c.l.b16 %v1084
      %v3357 = vunpack.c.l.b16 %v1085
      %v3358 = vunpack.c.l.b16 %v1086
      %v3359 = vunpack.c.l.b16 %v1087
      %v3360 = vunpack.c.l.b16 %v1088
      %v3361 = vunpack.c.l.b16 %v1089
      %v3362 = vunpack.c.l.b16 %v1090
      %v3363 = vunpack.c.l.b16 %v1091
      %v3364 = vunpack.c.l.b16 %v1092
      %v3365 = vunpack.c.l.b16 %v1093
      %v3366 = vunpack.c.l.b16 %v1094
      %v3367 = vunpack.c.l.b16 %v1095
      %v3368 = vunpack.c.l.b16 %v1096
      %v3369 = vunpack.c.l.b16 %v1097
      %v3370 = vunpack.c.l.b16 %v1098
      %v3371 = vunpack.c.l.b16 %v1099
      %v3372 = vunpack.c.l.b16 %v1100
      %v3373 = vunpack.c.l.b16 %v1101
      %v3374 = vunpack.c.l.b16 %v1102
      %v3375 = vunpack.c.l.b16 %v1103
      %v3376 = vunpack.c.l.b16 %v1104
      %v3377 = vunpack.c.l.b16 %v1105
      %v3378 = vunpack.c.l.b16 %v1106
      %v3379 = vunpack.c.l.b16 %v1107
      %v3380 = vunpack.c.l.b16 %v1108
      %v3381 = vunpack.c.l.b16 %v1109
      %v3382 = vunpack.c.l.b16 %v1110
      %v3383 = vunpack.c.l.b16 %v1111
      %v3384 = vunpack.c.l.b16 %v1112
      %v3385 = vunpack.c.l.b16 %v1113
      %v3386 = vunpack.c.l.b16 %v1114
      %v3387 = vunpack.c.l.b16 %v1115
      %v3388 = vunpack.c.l.b16 %v1116
      %v3389 = vunpack.c.l.b16 %v1117
      %v3390 = vunpack.c.l.b16 %v1118
      %v3391 = vunpack.c.l.b16 %v1119
      %v3392 = vunpack.c.l.b16 %v1120
      %v3393 = vunpack.c.l.b16 %v1121
      %v3394 = vunpack.c.l.b16 %v1122
      %v3395 = vunpack.c.l.b16 %v1123
      %v3396 = vunpack.c.l.b16 %v1124
      %v3397 = vunpack.c.l.b16 %v1125
      %v3398 = vunpack.c.l.b16 %v1126
      %v3399 = vunpack.c.l.b16 %v1127
      %v3400 = vunpack.c.l.b16 %v1128
      %v3401 = vunpack.c.l.b16 %v1129
      %v3402 = vunpack.c.l.b16 %v1130
      %v3403 = vunpack.c.l.b16 %v1131
      %v3404 = vunpack.c.l.b16 %v1132
      %v3405 = vunpack.c.l.b16 %v1133
      %v3406 = vunpack.c.l.b16 %v1134
      %v3407 = vunpack.c.l.b16 %v1135
      %v3408 = vunpack.c.l.b16 %v1136
      %v3409 = vunpack.c.l.b16 %v1137
      %v3410 = vunpack.c.l.b16 %v1138
      %v3411 = vunpack.c.l.b16 %v1139
      %v3412 = vunpack.c.l.b16 %v1140
      %v3413 = vunpack.c.l.b16 %v1141
      %v3414 = vunpack.c.l.b16 %v1142
      %v3415 = vunpack.c.l.b16 %v1143
      %v3416 = vunpack.c.l.b16 %v1144
      %v3417 = vunpack.c.l.b16 %v1145
      %v3418 = vunpack.c.l.b16 %v1146
      %v3419 = vunpack.c.l.b16 %v1147
      %v3420 = vunpack.c.l.b16 %v1148
      %v3421 = vunpack.c.l.b16 %v1149
      %v3422 = vunpack.c.l.b16 %v1150
      %v3423 = vunpack.c.l.b16 %v1151
      %v3424 = vunpack.c.l.b16 %v1152
      %v3425 = vunpack.c.l.b16 %v1153
      %v3426 = vunpack.c.l.b16 %v1154
      %v3427 = vunpack.c.l.b16 %v1155
      %v3428 = vunpack.c.l.b16 %v1156
      %v3429 = vunpack.c.l.b16 %v1157
      %v3430 = vunpack.c.l.b16 %v1158
      %v3431 = vunpack.c.l.b16 %v1159
      %v3432 = vunpack.c.l.b16 %v1160
      %v3433 = vunpack.c.l.b16 %v1161
      %v3434 = vunpack.c.l.b16 %v1162
      %v3435 = vunpack.c.l.b16 %v1163
      %v3436 = vunpack.c.l.b16 %v1164
      %v3437 = vunpack.c.l.b16 %v1165
      %v3438 = vunpack.c.l.b16 %v1166
      %v3439 = vunpack.c.l.b16 %v1167
      %v3440 = vunpack.c.l.b16 %v1168
      %v3441 = vunpack.c.l.b16 %v1169
      %v3442 = vunpack.c.l.b16 %v1170
      %v3443 = vunpack.c.l.b16 %v1171
      %v3444 = vunpack.c.l.b16 %v1172
      %v3445 = vunpack.c.l.b16 %v1173
      %v3446 = vunpack.c.l.b16 %v1174
      %v3447 = vunpack.c.l.b16 %v1175
      %v3448 = vunpack.c.l.b16 %v1176
      %v3449 = vunpack.c.l.b16 %v1177
      %v3450 = vunpack.c.l.b16 %v1178
      %v3451 = vunpack.c.l.b16 %v1179
      %v3452 = vunpack.c.l.b16 %v1180
      %v3453 = vunpack.c.l.b16 %v1181
      %v3454 = vunpack.c.l.b16 %v1182
      %v3455 = vunpack.c.l.b16 %v1183
      %v3456 = vunpack.c.l.b16 %v1184
      %v3457 = vunpack.c.l.b16 %v1185
      %v3458 = vunpack.c.l.b16 %v1186
      %v3459 = vunpack.c.l.b16 %v1187
      %v3460 = vunpack.c.l.b16 %v1188
      %v3461 = vunpack.c.l.b16 %v1189
      %v3462 = vunpack.c.l.b16 %v1190
      %v3463 = vunpack.c.l.b16 %v1191
      %v3464 = vunpack.c.l.b16 %v1192
      %v3465 = vunpack.c.l.b16 %v1193
      %v3466 = vunpack.c.l.b16 %v1194
      %v3467 = vunpack.c.l.b16 %v1195
      %v3468 = vunpack.c.l.b16 %v1196
      %v3469 = vunpack.c.l.b16 %v1197
      %v3470 = vunpack.c.l.b16 %v1198
      %v3471 = vunpack.c.l.b16 %v1199
      %v3472 = vunpack.c.l.b16 %v1200
      %v3473 = vunpack.c.l.b16 %v1201
      %v3474 = vunpack.c.l.b16 %v1202
      %v3475 = vunpack.c.l.b16 %v1203
      %v3476 = vunpack.c.l.b16 %v1204
      %v3477 = vunpack.c.l.b16 %v1205
      %v3478 = vunpack.c.l.b16 %v1206
      %v3479 = vunpack.c.l.b16 %v1207
      %v3480 = vunpack.c.l.b16 %v1208
      %v3481 = vunpack.c.l.b16 %v1209
      %v3482 = vunpack.c.l.b16 %v1210
      %v3483 = vunpack.c.l.b16 %v1211
      %v3484 = vunpack.c.l.b16 %v1212
      %v3485 = vunpack.c.l.b16 %v1213
      %v3486 = vunpack.c.l.b16 %v1214
      %v3487 = vunpack.c.l.b16 %v1215
      %v3488 = vunpack.c.l.b16 %v1216
      %v3489 = vunpack.c.l.b16 %v1217
      %v3490 = vunpack.c.l.b16 %v1218
      %v3491 = vunpack.c.l.b16 %v1219
      %v3492 = vunpack.c.l.b16 %v1220
      %v3493 = vunpack.c.l.b16 %v1221
      %v3494 = vunpack.c.l.b16 %v1222
      %v3495 = vunpack.c.l.b16 %v1223
      %v3496 = vunpack.c.l.b16 %v1224
      %v3497 = vunpack.c.l.b16 %v1225
      %v3498 = vunpack.c.l.b16 %v1226
      %v3499 = vunpack.c.l.b16 %v1227
      %v3500 = vunpack.c.l.b16 %v1228
      %v3501 = vunpack.c.l.b16 %v1229
      %v3502 = vunpack.c.l.b16 %v1230
      %v3503 = vunpack.c.l.b16 %v1231
      %v3504 = vunpack.c.l.b16 %v1232
      %v3505 = vunpack.c.l.b16 %v1233
      %v3506 = vunpack.c.l.b16 %v1234
      %v3507 = vunpack.c.l.b16 %v1235
      %v3508 = vunpack.c.l.b16 %v1236
      %v3509 = vunpack.c.l.b16 %v1237
      %v3510 = vunpack.c.l.b16 %v1238
      %v3511 = vunpack.c.l.b16 %v1239
      %v3512 = vunpack.c.l.b16 %v1240
      %v3513 = vunpack.c.l.b16 %v1241
      %v3514 = vunpack.c.l.b16 %v1242
      %v3515 = vunpack.c.l.b16 %v1243
      %v3516 = vunpack.c.l.b16 %v1244
      %v3517 = vunpack.c.l.b16 %v1245
      %v3518 = vunpack.c.l.b16 %v1246
      %v3519 = vunpack.c.l.b16 %v1247
      %v3520 = vunpack.c.l.b16 %v1248
      %v3521 = vunpack.c.l.b16 %v1249
      %v3522 = vunpack.c.l.b16 %v1250
      %v3523 = vunpack.c.l.b16 %v1251
      %v3524 = vunpack.c.l.b16 %v1252
      %v3525 = vunpack.c.l.b16 %v1253
      %v3526 = vunpack.c.l.b16 %v1254
      %v3527 = vunpack.c.l.b16 %v1255
      %v3528 = vunpack.c.l.b16 %v1256
      %v3529 = vunpack.c.l.b16 %v1257
      %v3530 = vunpack.c.l.b16 %v1258
      %v3531 = vunpack.c.l.b16 %v1259
      %v3532 = vunpack.c.l.b16 %v1260
      %v3533 = vunpack.c.l.b16 %v1261
      %v3534 = vunpack.c.l.b16 %v1262
      %v3535 = vunpack.c.l.b16 %v1263
      %v3536 = vunpack.c.l.b16 %v1264
      %v3537 = vunpack.c.l.b16 %v1265
      %v3538 = vunpack.c.l.b16 %v1266
      %v3539 = vunpack.c.l.b16 %v1267
      %v3540 = vunpack.c.l.b16 %v1268
      %v3541 = vpack.c.b16 %v2518, %v2517
      %v3542 = vpack.c.b16 %v2520, %v2519
      %v3543 = vpack.c.b16 %v2522, %v2521
      %v3544 = vpack.c.b16 %v2524, %v2523
      %v3545 = vpack.c.b16 %v2526, %v2525
      %v3546 = vpack.c.b16 %v2528, %v2527
      %v3547 = vpack.c.b16 %v2530, %v2529
      %v3548 = vpack.c.b16 %v2532, %v2531
      %v3549 = vpack.c.b16 %v2534, %v2533
      %v3550 = vpack.c.b16 %v2536, %v2535
      %v3551 = vpack.c.b16 %v2538, %v2537
      %v3552 = vpack.c.b16 %v2540, %v2539
      %v3553 = vpack.c.b16 %v2542, %v2541
      %v3554 = vpack.c.b16 %v2544, %v2543
      %v3555 = vpack.c.b16 %v2546, %v2545
      %v3556 = vpack.c.b16 %v2548, %v2547
      %v3557 = vpack.c.b16 %v2550, %v2549
      %v3558 = vpack.c.b16 %v2552, %v2551
      %v3559 = vpack.c.b16 %v2554, %v2553
      %v3560 = vpack.c.b16 %v2556, %v2555
      %v3561 = vpack.c.b16 %v2558, %v2557
      %v3562 = vpack.c.b16 %v2560, %v2559
      %v3563 = vpack.c.b16 %v2562, %v2561
      %v3564 = vpack.c.b16 %v2564, %v2563
      %v3565 = vpack.c.b16 %v2566, %v2565
      %v3566 = vpack.c.b16 %v2568, %v2567
      %v3567 = vpack.c.b16 %v2570, %v2569
      %v3568 = vpack.c.b16 %v2572, %v2571
      %v3569 = vpack.c.b16 %v2574, %v2573
      %v3570 = vpack.c.b16 %v2576, %v2575
      %v3571 = vpack.c.b16 %v2578, %v2577
      %v3572 = vpack.c.b16 %v2580, %v2579
      %v3573 = vpack.c.b16 %v2582, %v2581
      %v3574 = vpack.c.b16 %v2584, %v2583
      %v3575 = vpack.c.b16 %v2586, %v2585
      %v3576 = vpack.c.b16 %v2588, %v2587
      %v3577 = vpack.c.b16 %v2590, %v2589
      %v3578 = vpack.c.b16 %v2592, %v2591
      %v3579 = vpack.c.b16 %v2594, %v2593
      %v3580 = vpack.c.b16 %v2596, %v2595
      %v3581 = vpack.c.b16 %v2598, %v2597
      %v3582 = vpack.c.b16 %v2600, %v2599
      %v3583 = vpack.c.b16 %v2602, %v2601
      %v3584 = vpack.c.b16 %v2604, %v2603
      %v3585 = vpack.c.b16 %v2606, %v2605
      %v3586 = vpack.c.b16 %v2608, %v2607
      %v3587 = vpack.c.b16 %v2610, %v2609
      %v3588 = vpack.c.b16 %v2612, %v2611
      %v3589 = vpack.c.b16 %v2614, %v2613
      %v3590 = vpack.c.b16 %v2616, %v2615
      %v3591 = vpack.c.b16 %v2618, %v2617
      %v3592 = vpack.c.b16 %v2620, %v2619
      %v3593 = vpack.c.b16 %v2622, %v2621
      %v3594 = vpack.c.b16 %v2624, %v2623
      %v3595 = vpack.c.b16 %v2626, %v2625
      %v3596 = vpack.c.b16 %v2628, %v2627
      %v3597 = vpack.c.b16 %v2630, %v2629
      %v3598 = vpack.c.b16 %v2632, %v2631
      %v3599 = vpack.c.b16 %v2634, %v2633
      %v3600 = vpack.c.b16 %v2636, %v2635
      %v3601 = vpack.c.b16 %v2638, %v2637
      %v3602 = vpack.c.b16 %v2640, %v2639
      %v3603 = vpack.c.b16 %v2642, %v2641
      %v3604 = vpack.c.b16 %v2644, %v2643
      %v3605 = vpack.c.b16 %v2646, %v2645
      %v3606 = vpack.c.b16 %v2648, %v2647
      %v3607 = vpack.c.b16 %v2650, %v2649
      %v3608 = vpack.c.b16 %v2652, %v2651
      %v3609 = vpack.c.b16 %v2654, %v2653
      %v3610 = vpack.c.b16 %v2656, %v2655
      %v3611 = vpack.c.b16 %v2658, %v2657
      %v3612 = vpack.c.b16 %v2660, %v2659
      %v3613 = vpack.c.b16 %v2662, %v2661
      %v3614 = vpack.c.b16 %v2664, %v2663
      %v3615 = vpack.c.b16 %v2666, %v2665
      %v3616 = vpack.c.b16 %v2668, %v2667
      %v3617 = vpack.c.b16 %v2670, %v2669
      %v3618 = vpack.c.b16 %v2672, %v2671
      %v3619 = vpack.c.b16 %v2674, %v2673
      %v3620 = vpack.c.b16 %v2676, %v2675
      %v3621 = vpack.c.b16 %v2678, %v2677
      %v3622 = vpack.c.b16 %v2680, %v2679
      %v3623 = vpack.c.b16 %v2682, %v2681
      %v3624 = vpack.c.b16 %v2684, %v2683
      %v3625 = vpack.c.b16 %v2686, %v2685
      %v3626 = vpack.c.b16 %v2688, %v2687
      %v3627 = vpack.c.b16 %v2690, %v2689
      %v3628 = vpack.c.b16 %v2692, %v2691
      %v3629 = vpack.c.b16 %v2694, %v2693
      %v3630 = vpack.c.b16 %v2696, %v2695
      %v3631 = vpack.c.b16 %v2698, %v2697
      %v3632 = vpack.c.b16 %v2700, %v2699
      %v3633 = vpack.c.b16 %v2702, %v2701
      %v3634 = vpack.c.b16 %v2704, %v2703
      %v3635 = vpack.c.b16 %v2706, %v2705
      %v3636 = vpack.c.b16 %v2708, %v2707
      %v3637 = vpack.c.b16 %v2710, %v2709
      %v3638 = vpack.c.b16 %v2712, %v2711
      %v3639 = vpack.c.b16 %v2714, %v2713
      %v3640 = vpack.c.b16 %v2716, %v2715
      %v3641 = vpack.c.b16 %v2718, %v2717
      %v3642 = vpack.c.b16 %v2720, %v2719
      %v3643 = vpack.c.b16 %v2722, %v2721
      %v3644 = vpack.c.b16 %v2724, %v2723
      %v3645 = vpack.c.b16 %v2726, %v2725
      %v3646 = vpack.c.b16 %v2728, %v2727
      %v3647 = vpack.c.b16 %v2730, %v2729
      %v3648 = vpack.c.b16 %v2732, %v2731
      %v3649 = vpack.c.b16 %v2734, %v2733
      %v3650 = vpack.c.b16 %v2736, %v2735
      %v3651 = vpack.c.b16 %v2738, %v2737
      %v3652 = vpack.c.b16 %v2740, %v2739
      %v3653 = vpack.c.b16 %v2742, %v2741
      %v3654 = vpack.c.b16 %v2744, %v2743
      %v3655 = vpack.c.b16 %v2746, %v2745
      %v3656 = vpack.c.b16 %v2748, %v2747
      %v3657 = vpack.c.b16 %v2750, %v2749
      %v3658 = vpack.c.b16 %v2752, %v2751
      %v3659 = vpack.c.b16 %v2754, %v2753
      %v3660 = vpack.c.b16 %v2756, %v2755
      %v3661 = vpack.c.b16 %v2758, %v2757
      %v3662 = vpack.c.b16 %v2760, %v2759
      %v3663 = vpack.c.b16 %v2762, %v2761
      %v3664 = vpack.c.b16 %v2764, %v2763
      %v3665 = vpack.c.b16 %v2766, %v2765
      %v3666 = vpack.c.b16 %v2768, %v2767
      %v3667 = vpack.c.b16 %v2770, %v2769
      %v3668 = vpack.c.b16 %v2772, %v2771
      %v3669 = vpack.c.b16 %v2774, %v2773
      %v3670 = vpack.c.b16 %v2776, %v2775
      %v3671 = vpack.c.b16 %v2778, %v2777
      %v3672 = vpack.c.b16 %v2780, %v2779
      %v3673 = vpack.c.b16 %v2782, %v2781
      %v3674 = vpack.c.b16 %v2784, %v2783
      %v3675 = vpack.c.b16 %v2786, %v2785
      %v3676 = vpack.c.b16 %v2788, %v2787
      %v3677 = vpack.c.b16 %v2790, %v2789
      %v3678 = vpack.c.b16 %v2792, %v2791
      %v3679 = vpack.c.b16 %v2794, %v2793
      %v3680 = vpack.c.b16 %v2796, %v2795
      %v3681 = vpack.c.b16 %v2798, %v2797
      %v3682 = vpack.c.b16 %v2800, %v2799
      %v3683 = vpack.c.b16 %v2802, %v2801
      %v3684 = vpack.c.b16 %v2804, %v2803
      %v3685 = vpack.c.b16 %v2806, %v2805
      %v3686 = vpack.c.b16 %v2808, %v2807
      %v3687 = vpack.c.b16 %v2810, %v2809
      %v3688 = vpack.c.b16 %v2812, %v2811
      %v3689 = vpack.c.b16 %v2814, %v2813
      %v3690 = vpack.c.b16 %v2816, %v2815
      %v3691 = vpack.c.b16 %v2818, %v2817
      %v3692 = vpack.c.b16 %v2820, %v2819
      %v3693 = vpack.c.b16 %v2822, %v2821
      %v3694 = vpack.c.b16 %v2824, %v2823
      %v3695 = vpack.c.b16 %v2826, %v2825
      %v3696 = vpack.c.b16 %v2828, %v2827
      %v3697 = vpack.c.b16 %v2830, %v2829
      %v3698 = vpack.c.b16 %v2832, %v2831
      %v3699 = vpack.c.b16 %v2834, %v2833
      %v3700 = vpack.c.b16 %v2836, %v2835
      %v3701 = vpack.c.b16 %v2838, %v2837
      %v3702 = vpack.c.b16 %v2840, %v2839
      %v3703 = vpack.c.b16 %v2842, %v2841
      %v3704 = vpack.c.b16 %v2844, %v2843
      %v3705 = vpack.c.b16 %v2846, %v2845
      %v3706 = vpack.c.b16 %v2848, %v2847
      %v3707 = vpack.c.b16 %v2850, %v2849
      %v3708 = vpack.c.b16 %v2852, %v2851
      %v3709 = vpack.c.b16 %v2854, %v2853
      %v3710 = vpack.c.b16 %v2856, %v2855
      %v3711 = vpack.c.b16 %v2858, %v2857
      %v3712 = vpack.c.b16 %v2860, %v2859
      %v3713 = vpack.c.b16 %v2862, %v2861
      %v3714 = vpack.c.b16 %v2864, %v2863
      %v3715 = vpack.c.b16 %v2866, %v2865
      %v3716 = vpack.c.b16 %v2868, %v2867
      %v3717 = vpack.c.b16 %v2870, %v2869
      %v3718 = vpack.c.b16 %v2872, %v2871
      %v3719 = vpack.c.b16 %v2874, %v2873
      %v3720 = vpack.c.b16 %v2876, %v2875
      %v3721 = vpack.c.b16 %v2878, %v2877
      %v3722 = vpack.c.b16 %v2880, %v2879
      %v3723 = vpack.c.b16 %v2882, %v2881
      %v3724 = vpack.c.b16 %v2884, %v2883
      %v3725 = vpack.c.b16 %v2886, %v2885
      %v3726 = vpack.c.b16 %v2888, %v2887
      %v3727 = vpack.c.b16 %v2890, %v2889
      %v3728 = vpack.c.b16 %v2892, %v2891
      %v3729 = vpack.c.b16 %v2894, %v2893
      %v3730 = vpack.c.b16 %v2896, %v2895
      %v3731 = vpack.c.b16 %v2898, %v2897
      %v3732 = vpack.c.b16 %v2900, %v2899
      %v3733 = vpack.c.b16 %v2902, %v2901
      %v3734 = vpack.c.b16 %v2904, %v2903
      %v3735 = vpack.c.b16 %v2906, %v2905
      %v3736 = vpack.c.b16 %v2908, %v2907
      %v3737 = vpack.c.b16 %v2910, %v2909
      %v3738 = vpack.c.b16 %v2912, %v2911
      %v3739 = vpack.c.b16 %v2914, %v2913
      %v3740 = vpack.c.b16 %v2916, %v2915
      %v3741 = vpack.c.b16 %v2918, %v2917
      %v3742 = vpack.c.b16 %v2920, %v2919
      %v3743 = vpack.c.b16 %v2922, %v2921
      %v3744 = vpack.c.b16 %v2924, %v2923
      %v3745 = vpack.c.b16 %v2926, %v2925
      %v3746 = vpack.c.b16 %v2928, %v2927
      %v3747 = vpack.c.b16 %v2930, %v2929
      %v3748 = vpack.c.b16 %v2932, %v2931
      %v3749 = vpack.c.b16 %v2934, %v2933
      %v3750 = vpack.c.b16 %v2936, %v2935
      %v3751 = vpack.c.b16 %v2938, %v2937
      %v3752 = vpack.c.b16 %v2940, %v2939
      %v3753 = vpack.c.b16 %v2942, %v2941
      %v3754 = vpack.c.b16 %v2944, %v2943
      %v3755 = vpack.c.b16 %v2946, %v2945
      %v3756 = vpack.c.b16 %v2948, %v2947
      %v3757 = vpack.c.b16 %v2950, %v2949
      %v3758 = vpack.c.b16 %v2952, %v2951
      %v3759 = vpack.c.b16 %v2954, %v2953
      %v3760 = vpack.c.b16 %v2956, %v2955
      %v3761 = vpack.c.b16 %v2958, %v2957
      %v3762 = vpack.c.b16 %v2960, %v2959
      %v3763 = vpack.c.b16 %v2962, %v2961
      %v3764 = vpack.c.b16 %v2964, %v2963
      %v3765 = vpack.c.b16 %v2966, %v2965
      %v3766 = vpack.c.b16 %v2968, %v2967
      %v3767 = vpack.c.b16 %v2970, %v2969
      %v3768 = vpack.c.b16 %v2972, %v2971
      %v3769 = vpack.c.b16 %v2974, %v2973
      %v3770 = vpack.c.b16 %v2976, %v2975
      %v3771 = vpack.c.b16 %v2978, %v2977
      %v3772 = vpack.c.b16 %v2980, %v2979
      %v3773 = vpack.c.b16 %v2982, %v2981
      %v3774 = vpack.c.b16 %v2984, %v2983
      %v3775 = vpack.c.b16 %v2986, %v2985
      %v3776 = vpack.c.b16 %v2988, %v2987
      %v3777 = vpack.c.b16 %v2990, %v2989
      %v3778 = vpack.c.b16 %v2992, %v2991
      %v3779 = vpack.c.b16 %v2994, %v2993
      %v3780 = vpack.c.b16 %v2996, %v2995
      %v3781 = vpack.c.b16 %v2998, %v2997
      %v3782 = vpack.c.b16 %v3000, %v2999
      %v3783 = vpack.c.b16 %v3002, %v3001
      %v3784 = vpack.c.b16 %v3004, %v3003
      %v3785 = vpack.c.b16 %v3006, %v3005
      %v3786 = vpack.c.b16 %v3008, %v3007
      %v3787 = vpack.c.b16 %v3010, %v3009
      %v3788 = vpack.c.b16 %v3012, %v3011
      %v3789 = vpack.c.b16 %v3014, %v3013
      %v3790 = vpack.c.b16 %v3016, %v3015
      %v3791 = vpack.c.b16 %v3018, %v3017
      %v3792 = vpack.c.b16 %v3020, %v3019
      %v3793 = vpack.c.b16 %v3022, %v3021
      %v3794 = vpack.c.b16 %v3024, %v3023
      %v3795 = vpack.c.b16 %v3026, %v3025
      %v3796 = vpack.c.b16 %v3028, %v3027
      %v3797 = vpack.c.b16 %v3030, %v3029
      %v3798 = vpack.c.b16 %v3032, %v3031
      %v3799 = vpack.c.b16 %v3034, %v3033
      %v3800 = vpack.c.b16 %v3036, %v3035
      %v3801 = vpack.c.b16 %v3038, %v3037
      %v3802 = vpack.c.b16 %v3040, %v3039
      %v3803 = vpack.c.b16 %v3042, %v3041
      %v3804 = vpack.c.b16 %v3044, %v3043
      %v3805 = vpack.c.b16 %v3046, %v3045
      %v3806 = vpack.c.b16 %v3048, %v3047
      %v3807 = vpack.c.b16 %v3050, %v3049
      %v3808 = vpack.c.b16 %v3052, %v3051
      %v3809 = vpack.c.b16 %v3054, %v3053
      %v3810 = vpack.c.b16 %v3056, %v3055
      %v3811 = vpack.c.b16 %v3058, %v3057
      %v3812 = vpack.c.b16 %v3060, %v3059
      %v3813 = vpack.c.b16 %v3062, %v3061
      %v3814 = vpack.c.b16 %v3064, %v3063
      %v3815 = vpack.c.b16 %v3066, %v3065
      %v3816 = vpack.c.b16 %v3068, %v3067
      %v3817 = vpack.c.b16 %v3070, %v3069
      %v3818 = vpack.c.b16 %v3072, %v3071
      %v3819 = vpack.c.b16 %v3074, %v3073
      %v3820 = vpack.c.b16 %v3076, %v3075
      %v3821 = vpack.c.b16 %v3078, %v3077
      %v3822 = vpack.c.b16 %v3080, %v3079
      %v3823 = vpack.c.b16 %v3082, %v3081
      %v3824 = vpack.c.b16 %v3084, %v3083
      %v3825 = vpack.c.b16 %v3086, %v3085
      %v3826 = vpack.c.b16 %v3088, %v3087
      %v3827 = vpack.c.b16 %v3090, %v3089
      %v3828 = vpack.c.b16 %v3092, %v3091
      %v3829 = vpack.c.b16 %v3094, %v3093
      %v3830 = vpack.c.b16 %v3096, %v3095
      %v3831 = vpack.c.b16 %v3098, %v3097
      %v3832 = vpack.c.b16 %v3100, %v3099
      %v3833 = vpack.c.b16 %v3102, %v3101
      %v3834 = vpack.c.b16 %v3104, %v3103
      %v3835 = vpack.c.b16 %v3106, %v3105
      %v3836 = vpack.c.b16 %v3108, %v3107
      %v3837 = vpack.c.b16 %v3110, %v3109
      %v3838 = vpack.c.b16 %v3112, %v3111
      %v3839 = vpack.c.b16 %v3114, %v3113
      %v3840 = vpack.c.b16 %v3116, %v3115
      %v3841 = vpack.c.b16 %v3118, %v3117
      %v3842 = vpack.c.b16 %v3120, %v3119
      %v3843 = vpack.c.b16 %v3122, %v3121
      %v3844 = vpack.c.b16 %v3124, %v3123
      %v3845 = vpack.c.b16 %v3126, %v3125
      %v3846 = vpack.c.b16 %v3128, %v3127
      %v3847 = vpack.c.b16 %v3130, %v3129
      %v3848 = vpack.c.b16 %v3132, %v3131
      %v3849 = vpack.c.b16 %v3134, %v3133
      %v3850 = vpack.c.b16 %v3136, %v3135
      %v3851 = vpack.c.b16 %v3138, %v3137
      %v3852 = vpack.c.b16 %v3140, %v3139
      %v3853 = vpack.c.b16 %v3142, %v3141
      %v3854 = vpack.c.b16 %v3144, %v3143
      %v3855 = vpack.c.b16 %v3146, %v3145
      %v3856 = vpack.c.b16 %v3148, %v3147
      %v3857 = vpack.c.b16 %v3150, %v3149
      %v3858 = vpack.c.b16 %v3152, %v3151
      %v3859 = vpack.c.b16 %v3154, %v3153
      %v3860 = vpack.c.b16 %v3156, %v3155
      %v3861 = vpack.c.b16 %v3158, %v3157
      %v3862 = vpack.c.b16 %v3160, %v3159
      %v3863 = vpack.c.b16 %v3162, %v3161
      %v3864 = vpack.c.b16 %v3164, %v3163
      %v3865 = vpack.c.b16 %v3166, %v3165
      %v3866 = vpack.c.b16 %v3168, %v3167
      %v3867 = vpack.c.b16 %v3170, %v3169
      %v3868 = vpack.c.b16 %v3172, %v3171
      %v3869 = vpack.c.b16 %v3174, %v3173
      %v3870 = vpack.c.b16 %v3176, %v3175
      %v3871 = vpack.c.b16 %v3178, %v3177
      %v3872 = vpack.c.b16 %v3180, %v3179
      %v3873 = vpack.c.b16 %v3182, %v3181
      %v3874 = vpack.c.b16 %v3184, %v3183
      %v3875 = vpack.c.b16 %v3186, %v3185
      %v3876 = vpack.c.b16 %v3188, %v3187
      %v3877 = vpack.c.b16 %v3190, %v3189
      %v3878 = vpack.c.b16 %v3192, %v3191
      %v3879 = vpack.c.b16 %v3194, %v3193
      %v3880 = vpack.c.b16 %v3196, %v3195
      %v3881 = vpack.c.b16 %v3198, %v3197
      %v3882 = vpack.c.b16 %v3200, %v3199
      %v3883 = vpack.c.b16 %v3202, %v3201
      %v3884 = vpack.c.b16 %v3204, %v3203
      %v3885 = vpack.c.b16 %v3206, %v3205
      %v3886 = vpack.c.b16 %v3208, %v3207
      %v3887 = vpack.c.b16 %v3210, %v3209
      %v3888 = vpack.c.b16 %v3212, %v3211
      %v3889 = vpack.c.b16 %v3214, %v3213
      %v3890 = vpack.c.b16 %v3216, %v3215
      %v3891 = vpack.c.b16 %v3218, %v3217
      %v3892 = vpack.c.b16 %v3220, %v3219
      %v3893 = vpack.c.b16 %v3222, %v3221
      %v3894 = vpack.c.b16 %v3224, %v3223
      %v3895 = vpack.c.b16 %v3226, %v3225
      %v3896 = vpack.c.b16 %v3228, %v3227
      %v3897 = vpack.c.b16 %v3230, %v3229
      %v3898 = vpack.c.b16 %v3232, %v3231
      %v3899 = vpack.c.b16 %v3234, %v3233
      %v3900 = vpack.c.b16 %v3236, %v3235
      %v3901 = vpack.c.b16 %v3238, %v3237
      %v3902 = vpack.c.b16 %v3240, %v3239
      %v3903 = vpack.c.b16 %v3242, %v3241
      %v3904 = vpack.c.b16 %v3244, %v3243
      %v3905 = vpack.c.b16 %v3246, %v3245
      %v3906 = vpack.c.b16 %v3248, %v3247
      %v3907 = vpack.c.b16 %v3250, %v3249
      %v3908 = vpack.c.b16 %v3252, %v3251
      %v3909 = vpack.c.b16 %v3254, %v3253
      %v3910 = vpack.c.b16 %v3256, %v3255
      %v3911 = vpack.c.b16 %v3258, %v3257
      %v3912 = vpack.c.b16 %v3260, %v3259
      %v3913 = vpack.c.b16 %v3262, %v3261
      %v3914 = vpack.c.b16 %v3264, %v3263
      %v3915 = vpack.c.b16 %v3266, %v3265
      %v3916 = vpack.c.b16 %v3268, %v3267
      %v3917 = vpack.c.b16 %v3270, %v3269
      %v3918 = vpack.c.b16 %v3272, %v3271
      %v3919 = vpack.c.b16 %v3274, %v3273
      %v3920 = vpack.c.b16 %v3276, %v3275
      %v3921 = vpack.c.b16 %v3278, %v3277
      %v3922 = vpack.c.b16 %v3280, %v3279
      %v3923 = vpack.c.b16 %v3282, %v3281
      %v3924 = vpack.c.b16 %v3284, %v3283
      %v3925 = vpack.c.b16 %v3286, %v3285
      %v3926 = vpack.c.b16 %v3288, %v3287
      %v3927 = vpack.c.b16 %v3290, %v3289
      %v3928 = vpack.c.b16 %v3292, %v3291
      %v3929 = vpack.c.b16 %v3294, %v3293
      %v3930 = vpack.c.b16 %v3296, %v3295
      %v3931 = vpack.c.b16 %v3298, %v3297
      %v3932 = vpack.c.b16 %v3300, %v3299
      %v3933 = vpack.c.b16 %v3302, %v3301
      %v3934 = vpack.c.b16 %v3304, %v3303
      %v3935 = vpack.c.b16 %v3306, %v3305
      %v3936 = vpack.c.b16 %v3308, %v3307
      %v3937 = vpack.c.b16 %v3310, %v3309
      %v3938 = vpack.c.b16 %v3312, %v3311
      %v3939 = vpack.c.b16 %v3314, %v3313
      %v3940 = vpack.c.b16 %v3316, %v3315
      %v3941 = vpack.c.b16 %v3318, %v3317
      %v3942 = vpack.c.b16 %v3320, %v3319
      %v3943 = vpack.c.b16 %v3322, %v3321
      %v3944 = vpack.c.b16 %v3324, %v3323
      %v3945 = vpack.c.b16 %v3326, %v3325
      %v3946 = vpack.c.b16 %v3328, %v3327
      %v3947 = vpack.c.b16 %v3330, %v3329
      %v3948 = vpack.c.b16 %v3332, %v3331
      %v3949 = vpack.c.b16 %v3334, %v3333
      %v3950 = vpack.c.b16 %v3336, %v3335
      %v3951 = vpack.c.b16 %v3338, %v3337
      %v3952 = vpack.c.b16 %v3340, %v3339
      %v3953 = vpack.c.b16 %v3342, %v3341
      %v3954 = vpack.c.b16 %v3344, %v3343
      %v3955 = vpack.c.b16 %v3346, %v3345
      %v3956 = vpack.c.b16 %v3348, %v3347
      %v3957 = vpack.c.b16 %v3350, %v3349
      %v3958 = vpack.c.b16 %v3352, %v3351
      %v3959 = vpack.c.b16 %v3354, %v3353
      %v3960 = vpack.c.b16 %v3356, %v3355
      %v3961 = vpack.c.b16 %v3358, %v3357
      %v3962 = vpack.c.b16 %v3360, %v3359
      %v3963 = vpack.c.b16 %v3362, %v3361
      %v3964 = vpack.c.b16 %v3364, %v3363
      %v3965 = vpack.c.b16 %v3366, %v3365
      %v3966 = vpack.c.b16 %v3368, %v3367
      %v3967 = vpack.c.b16 %v3370, %v3369
      %v3968 = vpack.c.b16 %v3372, %v3371
      %v3969 = vpack.c.b16 %v3374, %v3373
      %v3970 = vpack.c.b16 %v3376, %v3375
      %v3971 = vpack.c.b16 %v3378, %v3377
      %v3972 = vpack.c.b16 %v3380, %v3379
      %v3973 = vpack.c.b16 %v3382, %v3381
      %v3974 = vpack.c.b16 %v3384, %v3383
      %v3975 = vpack.c.b16 %v3386, %v3385
      %v3976 = vpack.c.b16 %v3388, %v3387
      %v3977 = vpack.c.b16 %v3390, %v3389
      %v3978 = vpack.c.b16 %v3392, %v3391
      %v3979 = vpack.c.b16 %v3394, %v3393
      %v3980 = vpack.c.b16 %v3396, %v3395
      %v3981 = vpack.c.b16 %v3398, %v3397
      %v3982 = vpack.c.b16 %v3400, %v3399
      %v3983 = vpack.c.b16 %v3402, %v3401
      %v3984 = vpack.c.b16 %v3404, %v3403
      %v3985 = vpack.c.b16 %v3406, %v3405
      %v3986 = vpack.c.b16 %v3408, %v3407
      %v3987 = vpack.c.b16 %v3410, %v3409
      %v3988 = vpack.c.b16 %v3412, %v3411
      %v3989 = vpack.c.b16 %v3414, %v3413
      %v3990 = vpack.c.b16 %v3416, %v3415
      %v3991 = vpack.c.b16 %v3418, %v3417
      %v3992 = vpack.c.b16 %v3420, %v3419
      %v3993 = vpack.c.b16 %v3422, %v3421
      %v3994 = vpack.c.b16 %v3424, %v3423
      %v3995 = vpack.c.b16 %v3426, %v3425
      %v3996 = vpack.c.b16 %v3428, %v3427
      %v3997 = vpack.c.b16 %v3430, %v3429
      %v3998 = vpack.c.b16 %v3432, %v3431
      %v3999 = vpack.c.b16 %v3434, %v3433
      %v4000 = vpack.c.b16 %v3436, %v3435
      %v4001 = vpack.c.b16 %v3438, %v3437
      %v4002 = vpack.c.b16 %v3440, %v3439
      %v4003 = vpack.c.b16 %v3442, %v3441
      %v4004 = vpack.c.b16 %v3444, %v3443
      %v4005 = vpack.c.b16 %v3446, %v3445
      %v4006 = vpack.c.b16 %v3448, %v3447
      %v4007 = vpack.c.b16 %v3450, %v3449
      %v4008 = vpack.c.b16 %v3452, %v3451
      %v4009 = vpack.c.b16 %v3454, %v3453
      %v4010 = vpack.c.b16 %v3456, %v3455
      %v4011 = vpack.c.b16 %v3458, %v3457
      %v4012 = vpack.c.b16 %v3460, %v3459
      %v4013 = vpack.c.b16 %v3462, %v3461
      %v4014 = vpack.c.b16 %v3464, %v3463
      %v4015 = vpack.c.b16 %v3466, %v3465
      %v4016 = vpack.c.b16 %v3468, %v3467
      %v4017 = vpack.c.b16 %v3470, %v3469
      %v4018 = vpack.c.b16 %v3472, %v3471
      %v4019 = vpack.c.b16 %v3474, %v3473
      %v4020 = vpack.c.b16 %v3476, %v3475
      %v4021 = vpack.c.b16 %v3478, %v3477
      %v4022 = vpack.c.b16 %v3480, %v3479
      %v4023 = vpack.c.b16 %v3482, %v3481
      %v4024 = vpack.c.b16 %v3484, %v3483
      %v4025 = vpack.c.b16 %v3486, %v3485
      %v4026 = vpack.c.b16 %v3488, %v3487
      %v4027 = vpack.c.b16 %v3490, %v3489
      %v4028 = vpack.c.b16 %v3492, %v3491
      %v4029 = vpack.c.b16 %v3494, %v3493
      %v4030 = vpack.c.b16 %v3496, %v3495
      %v4031 = vpack.c.b16 %v3498, %v3497
      %v4032 = vpack.c.b16 %v3500, %v3499
      %v4033 = vpack.c.b16 %v3502, %v3501
      %v4034 = vpack.c.b16 %v3504, %v3503
      %v4035 = vpack.c.b16 %v3506, %v3505
      %v4036 = vpack.c.b16 %v3508, %v3507
      %v4037 = vpack.c.b16 %v3510, %v3509
      %v4038 = vpack.c.b16 %v3512, %v3511
      %v4039 = vpack.c.b16 %v3514, %v3513
      %v4040 = vpack.c.b16 %v3516, %v3515
      %v4041 = vpack.c.b16 %v3518, %v3517
      %v4042 = vpack.c.b16 %v3520, %v3519
      %v4043 = vpack.c.b16 %v3522, %v3521
      %v4044 = vpack.c.b16 %v3524, %v3523
      %v4045 = vpack.c.b16 %v3526, %v3525
      %v4046 = vpack.c.b16 %v3528, %v3527
      %v4047 = vpack.c.b16 %v3530, %v3529
      %v4048 = vpack.c.b16 %v3532, %v3531
      %v4049 = vpack.c.b16 %v3534, %v3533
      %v4050 = vpack.c.b16 %v3536, %v3535
      %v4051 = vpack.c.b16 %v3538, %v3537
      %v4052 = vpack.c.b16 %v3540, %v3539
      %4565 = vmatprep.subr.bf16.mxu0 0
      %4566 = vmatpush1.bf16.msra.mxu0 %v3548
      %4567 = vmatprep.subr.bf16.mxu0 0
      %4568 = vmatpush1.bf16.msra.mxu0 %v3547
      %4569 = vmatprep.subr.bf16.mxu0 0
      %4570 = vmatpush1.bf16.msra.mxu0 %v3546
      %4571 = vmatprep.subr.bf16.mxu0 0
      %4572 = vmatpush1.bf16.msra.mxu0 %v3545
      %4573 = vmatprep.subr.bf16.mxu0 0
      %4574 = vmatpush1.bf16.msra.mxu0 %v3544
      %4575 = vmatprep.subr.bf16.mxu0 0
      %4576 = vmatpush1.bf16.msra.mxu0 %v3543
      %4577 = vmatprep.subr.bf16.mxu0 0
      %4578 = vmatpush1.bf16.msra.mxu0 %v3542
      %4579 = vmatprep.subr.bf16.mxu0 0
      %4580 = vmatpush1.bf16.msra.mxu0 %v3541
      %4581 = vmatprep.subr.bf16.mxu0 0
      %4582 = vmatpush2.bf16.msra.mxu0 %v3556
      %4583 = vmatprep.subr.bf16.mxu0 0
      %4584 = vmatpush2.bf16.msra.mxu0 %v3555
      %4585 = vmatprep.subr.bf16.mxu0 0
      %4586 = vmatpush2.bf16.msra.mxu0 %v3554
      %4587 = vmatprep.subr.bf16.mxu0 0
      %4588 = vmatpush2.bf16.msra.mxu0 %v3553
      %4589 = vmatprep.subr.bf16.mxu0 0
      %4590 = vmatpush2.bf16.msra.mxu0 %v3552
      %4591 = vmatprep.subr.bf16.mxu0 0
      %4592 = vmatpush2.bf16.msra.mxu0 %v3551
      %4593 = vmatprep.subr.bf16.mxu0 0
      %4594 = vmatpush2.bf16.msra.mxu0 %v3550
      %4595 = vmatprep.subr.bf16.mxu0 0
      %4596 = vmatpush2.bf16.msra.mxu0 %v3549
      %4597 = vmatprep.mubr.bf16.mxu0 %v1366
      %4598 = vmatmul.mubr.bf16.gmra.mxu0 %v1365
      %v4599 = vpop.f32.mrf.mxu0
      %v4600 = vadd.f32 0.0, %v4599
      %v4601 = vpop.f32.mrf.mxu0
      %v4602 = vpop.f32.mrf.mxu0
      %v4603 = vpop.f32.mrf.mxu0
      %4604 = vdwg.mxu0
      %4605 = vmatprep.subr.bf16.mxu0 0
      %4606 = vmatpush1.bf16.msra.mxu0 %v3564
      %4607 = vmatprep.subr.bf16.mxu0 0
      %4608 = vmatpush1.bf16.msra.mxu0 %v3563
      %4609 = vmatprep.subr.bf16.mxu0 0
      %4610 = vmatpush1.bf16.msra.mxu0 %v3562
      %4611 = vmatprep.subr.bf16.mxu0 0
      %4612 = vmatpush1.bf16.msra.mxu0 %v3561
      %4613 = vmatprep.subr.bf16.mxu0 0
      %4614 = vmatpush1.bf16.msra.mxu0 %v3560
      %4615 = vmatprep.subr.bf16.mxu0 0
      %4616 = vmatpush1.bf16.msra.mxu0 %v3559
      %4617 = vmatprep.subr.bf16.mxu0 0
      %4618 = vmatpush1.bf16.msra.mxu0 %v3558
      %4619 = vmatprep.subr.bf16.mxu0 0
      %4620 = vmatpush1.bf16.msra.mxu0 %v3557
      %4621 = vmatprep.subr.bf16.mxu0 0
      %4622 = vmatpush2.bf16.msra.mxu0 %v3572
      %4623 = vmatprep.subr.bf16.mxu0 0
      %4624 = vmatpush2.bf16.msra.mxu0 %v3571
      %4625 = vmatprep.subr.bf16.mxu0 0
      %4626 = vmatpush2.bf16.msra.mxu0 %v3570
      %4627 = vmatprep.subr.bf16.mxu0 0
      %4628 = vmatpush2.bf16.msra.mxu0 %v3569
      %4629 = vmatprep.subr.bf16.mxu0 0
      %4630 = vmatpush2.bf16.msra.mxu0 %v3568
      %4631 = vmatprep.subr.bf16.mxu0 0
      %4632 = vmatpush2.bf16.msra.mxu0 %v3567
      %4633 = vmatprep.subr.bf16.mxu0 0
      %4634 = vmatpush2.bf16.msra.mxu0 %v3566
      %4635 = vmatprep.subr.bf16.mxu0 0
      %4636 = vmatpush2.bf16.msra.mxu0 %v3565
      %4637 = vmatprep.mubr.bf16.mxu0 %v1368
      %4638 = vmatmul.mubr.bf16.gmra.mxu0 %v1367
      %v4639 = vpop.f32.mrf.mxu0
      %v4640 = vadd.f32 %v4600, %v4639
      %v4641 = vpop.f32.mrf.mxu0
      %v4642 = vpop.f32.mrf.mxu0
      %v4643 = vpop.f32.mrf.mxu0
      %4644 = vdwg.mxu0
      %4645 = vmatprep.subr.bf16.mxu0 0
      %4646 = vmatpush1.bf16.msra.mxu0 %v3580
      %4647 = vmatprep.subr.bf16.mxu0 0
      %4648 = vmatpush1.bf16.msra.mxu0 %v3579
      %4649 = vmatprep.subr.bf16.mxu0 0
      %4650 = vmatpush1.bf16.msra.mxu0 %v3578
      %4651 = vmatprep.subr.bf16.mxu0 0
      %4652 = vmatpush1.bf16.msra.mxu0 %v3577
      %4653 = vmatprep.subr.bf16.mxu0 0
      %4654 = vmatpush1.bf16.msra.mxu0 %v3576
      %4655 = vmatprep.subr.bf16.mxu0 0
      %4656 = vmatpush1.bf16.msra.mxu0 %v3575
      %4657 = vmatprep.subr.bf16.mxu0 0
      %4658 = vmatpush1.bf16.msra.mxu0 %v3574
      %4659 = vmatprep.subr.bf16.mxu0 0
      %4660 = vmatpush1.bf16.msra.mxu0 %v3573
      %4661 = vmatprep.subr.bf16.mxu0 0
      %4662 = vmatpush2.bf16.msra.mxu0 %v3588
      %4663 = vmatprep.subr.bf16.mxu0 0
      %4664 = vmatpush2.bf16.msra.mxu0 %v3587
      %4665 = vmatprep.subr.bf16.mxu0 0
      %4666 = vmatpush2.bf16.msra.mxu0 %v3586
      %4667 = vmatprep.subr.bf16.mxu0 0
      %4668 = vmatpush2.bf16.msra.mxu0 %v3585
      %4669 = vmatprep.subr.bf16.mxu0 0
      %4670 = vmatpush2.bf16.msra.mxu0 %v3584
      %4671 = vmatprep.subr.bf16.mxu0 0
      %4672 = vmatpush2.bf16.msra.mxu0 %v3583
      %4673 = vmatprep.subr.bf16.mxu0 0
      %4674 = vmatpush2.bf16.msra.mxu0 %v3582
      %4675 = vmatprep.subr.bf16.mxu0 0
      %4676 = vmatpush2.bf16.msra.mxu0 %v3581
      %4677 = vmatprep.mubr.bf16.mxu0 %v1370
      %4678 = vmatmul.mubr.bf16.gmra.mxu0 %v1369
      %v4679 = vpop.f32.mrf.mxu0
      %v4680 = vadd.f32 %v4640, %v4679
      %v4681 = vpop.f32.mrf.mxu0
      %v4682 = vpop.f32.mrf.mxu0
      %v4683 = vpop.f32.mrf.mxu0
      %4684 = vdwg.mxu0
      %4685 = vmatprep.subr.bf16.mxu0 0
      %4686 = vmatpush1.bf16.msra.mxu0 %v3596
      %4687 = vmatprep.subr.bf16.mxu0 0
      %4688 = vmatpush1.bf16.msra.mxu0 %v3595
      %4689 = vmatprep.subr.bf16.mxu0 0
      %4690 = vmatpush1.bf16.msra.mxu0 %v3594
      %4691 = vmatprep.subr.bf16.mxu0 0
      %4692 = vmatpush1.bf16.msra.mxu0 %v3593
      %4693 = vmatprep.subr.bf16.mxu0 0
      %4694 = vmatpush1.bf16.msra.mxu0 %v3592
      %4695 = vmatprep.subr.bf16.mxu0 0
      %4696 = vmatpush1.bf16.msra.mxu0 %v3591
      %4697 = vmatprep.subr.bf16.mxu0 0
      %4698 = vmatpush1.bf16.msra.mxu0 %v3590
      %4699 = vmatprep.subr.bf16.mxu0 0
      %4700 = vmatpush1.bf16.msra.mxu0 %v3589
      %4701 = vmatprep.subr.bf16.mxu0 0
      %4702 = vmatpush2.bf16.msra.mxu0 %v3604
      %4703 = vmatprep.subr.bf16.mxu0 0
      %4704 = vmatpush2.bf16.msra.mxu0 %v3603
      %4705 = vmatprep.subr.bf16.mxu0 0
      %4706 = vmatpush2.bf16.msra.mxu0 %v3602
      %4707 = vmatprep.subr.bf16.mxu0 0
      %4708 = vmatpush2.bf16.msra.mxu0 %v3601
      %4709 = vmatprep.subr.bf16.mxu0 0
      %4710 = vmatpush2.bf16.msra.mxu0 %v3600
      %4711 = vmatprep.subr.bf16.mxu0 0
      %4712 = vmatpush2.bf16.msra.mxu0 %v3599
      %4713 = vmatprep.subr.bf16.mxu0 0
      %4714 = vmatpush2.bf16.msra.mxu0 %v3598
      %4715 = vmatprep.subr.bf16.mxu0 0
      %4716 = vmatpush2.bf16.msra.mxu0 %v3597
      %4717 = vmatprep.mubr.bf16.mxu0 %v1372
      %4718 = vmatmul.mubr.bf16.gmra.mxu0 %v1371
      %v4719 = vpop.f32.mrf.mxu0
      %v4720 = vadd.f32 %v4680, %v4719
      %v4721 = vpop.f32.mrf.mxu0
      %v4722 = vpop.f32.mrf.mxu0
      %v4723 = vpop.f32.mrf.mxu0
      %4724 = vdwg.mxu0
      %4725 = vmatprep.subr.bf16.mxu0 0
      %4726 = vmatpush1.bf16.msra.mxu0 %v3612
      %4727 = vmatprep.subr.bf16.mxu0 0
      %4728 = vmatpush1.bf16.msra.mxu0 %v3611
      %4729 = vmatprep.subr.bf16.mxu0 0
      %4730 = vmatpush1.bf16.msra.mxu0 %v3610
      %4731 = vmatprep.subr.bf16.mxu0 0
      %4732 = vmatpush1.bf16.msra.mxu0 %v3609
      %4733 = vmatprep.subr.bf16.mxu0 0
      %4734 = vmatpush1.bf16.msra.mxu0 %v3608
      %4735 = vmatprep.subr.bf16.mxu0 0
      %4736 = vmatpush1.bf16.msra.mxu0 %v3607
      %4737 = vmatprep.subr.bf16.mxu0 0
      %4738 = vmatpush1.bf16.msra.mxu0 %v3606
      %4739 = vmatprep.subr.bf16.mxu0 0
      %4740 = vmatpush1.bf16.msra.mxu0 %v3605
      %4741 = vmatprep.subr.bf16.mxu0 0
      %4742 = vmatpush2.bf16.msra.mxu0 %v3620
      %4743 = vmatprep.subr.bf16.mxu0 0
      %4744 = vmatpush2.bf16.msra.mxu0 %v3619
      %4745 = vmatprep.subr.bf16.mxu0 0
      %4746 = vmatpush2.bf16.msra.mxu0 %v3618
      %4747 = vmatprep.subr.bf16.mxu0 0
      %4748 = vmatpush2.bf16.msra.mxu0 %v3617
      %4749 = vmatprep.subr.bf16.mxu0 0
      %4750 = vmatpush2.bf16.msra.mxu0 %v3616
      %4751 = vmatprep.subr.bf16.mxu0 0
      %4752 = vmatpush2.bf16.msra.mxu0 %v3615
      %4753 = vmatprep.subr.bf16.mxu0 0
      %4754 = vmatpush2.bf16.msra.mxu0 %v3614
      %4755 = vmatprep.subr.bf16.mxu0 0
      %4756 = vmatpush2.bf16.msra.mxu0 %v3613
      %4757 = vmatprep.mubr.bf16.mxu0 %v1374
      %4758 = vmatmul.mubr.bf16.gmra.mxu0 %v1373
      %v4759 = vpop.f32.mrf.mxu0
      %v4760 = vadd.f32 %v4720, %v4759
      %v4761 = vpop.f32.mrf.mxu0
      %v4762 = vpop.f32.mrf.mxu0
      %v4763 = vpop.f32.mrf.mxu0
      %4764 = vdwg.mxu0
      %4765 = vmatprep.subr.bf16.mxu0 0
      %4766 = vmatpush1.bf16.msra.mxu0 %v3628
      %4767 = vmatprep.subr.bf16.mxu0 0
      %4768 = vmatpush1.bf16.msra.mxu0 %v3627
      %4769 = vmatprep.subr.bf16.mxu0 0
      %4770 = vmatpush1.bf16.msra.mxu0 %v3626
      %4771 = vmatprep.subr.bf16.mxu0 0
      %4772 = vmatpush1.bf16.msra.mxu0 %v3625
      %4773 = vmatprep.subr.bf16.mxu0 0
      %4774 = vmatpush1.bf16.msra.mxu0 %v3624
      %4775 = vmatprep.subr.bf16.mxu0 0
      %4776 = vmatpush1.bf16.msra.mxu0 %v3623
      %4777 = vmatprep.subr.bf16.mxu0 0
      %4778 = vmatpush1.bf16.msra.mxu0 %v3622
      %4779 = vmatprep.subr.bf16.mxu0 0
      %4780 = vmatpush1.bf16.msra.mxu0 %v3621
      %4781 = vmatprep.subr.bf16.mxu0 0
      %4782 = vmatpush2.bf16.msra.mxu0 %v3636
      %4783 = vmatprep.subr.bf16.mxu0 0
      %4784 = vmatpush2.bf16.msra.mxu0 %v3635
      %4785 = vmatprep.subr.bf16.mxu0 0
      %4786 = vmatpush2.bf16.msra.mxu0 %v3634
      %4787 = vmatprep.subr.bf16.mxu0 0
      %4788 = vmatpush2.bf16.msra.mxu0 %v3633
      %4789 = vmatprep.subr.bf16.mxu0 0
      %4790 = vmatpush2.bf16.msra.mxu0 %v3632
      %4791 = vmatprep.subr.bf16.mxu0 0
      %4792 = vmatpush2.bf16.msra.mxu0 %v3631
      %4793 = vmatprep.subr.bf16.mxu0 0
      %4794 = vmatpush2.bf16.msra.mxu0 %v3630
      %4795 = vmatprep.subr.bf16.mxu0 0
      %4796 = vmatpush2.bf16.msra.mxu0 %v3629
      %4797 = vmatprep.mubr.bf16.mxu0 %v1376
      %4798 = vmatmul.mubr.bf16.gmra.mxu0 %v1375
      %v4799 = vpop.f32.mrf.mxu0
      %v4800 = vadd.f32 %v4760, %v4799
      %v4801 = vpop.f32.mrf.mxu0
      %v4802 = vpop.f32.mrf.mxu0
      %v4803 = vpop.f32.mrf.mxu0
      %4804 = vdwg.mxu0
      %4805 = vmatprep.subr.bf16.mxu0 0
      %4806 = vmatpush1.bf16.msra.mxu0 %v3644
      %4807 = vmatprep.subr.bf16.mxu0 0
      %4808 = vmatpush1.bf16.msra.mxu0 %v3643
      %4809 = vmatprep.subr.bf16.mxu0 0
      %4810 = vmatpush1.bf16.msra.mxu0 %v3642
      %4811 = vmatprep.subr.bf16.mxu0 0
      %4812 = vmatpush1.bf16.msra.mxu0 %v3641
      %4813 = vmatprep.subr.bf16.mxu0 0
      %4814 = vmatpush1.bf16.msra.mxu0 %v3640
      %4815 = vmatprep.subr.bf16.mxu0 0
      %4816 = vmatpush1.bf16.msra.mxu0 %v3639
      %4817 = vmatprep.subr.bf16.mxu0 0
      %4818 = vmatpush1.bf16.msra.mxu0 %v3638
      %4819 = vmatprep.subr.bf16.mxu0 0
      %4820 = vmatpush1.bf16.msra.mxu0 %v3637
      %4821 = vmatprep.subr.bf16.mxu0 0
      %4822 = vmatpush2.bf16.msra.mxu0 %v3652
      %4823 = vmatprep.subr.bf16.mxu0 0
      %4824 = vmatpush2.bf16.msra.mxu0 %v3651
      %4825 = vmatprep.subr.bf16.mxu0 0
      %4826 = vmatpush2.bf16.msra.mxu0 %v3650
      %4827 = vmatprep.subr.bf16.mxu0 0
      %4828 = vmatpush2.bf16.msra.mxu0 %v3649
      %4829 = vmatprep.subr.bf16.mxu0 0
      %4830 = vmatpush2.bf16.msra.mxu0 %v3648
      %4831 = vmatprep.subr.bf16.mxu0 0
      %4832 = vmatpush2.bf16.msra.mxu0 %v3647
      %4833 = vmatprep.subr.bf16.mxu0 0
      %4834 = vmatpush2.bf16.msra.mxu0 %v3646
      %4835 = vmatprep.subr.bf16.mxu0 0
      %4836 = vmatpush2.bf16.msra.mxu0 %v3645
      %4837 = vmatprep.mubr.bf16.mxu0 %v1378
      %4838 = vmatmul.mubr.bf16.gmra.mxu0 %v1377
      %v4839 = vpop.f32.mrf.mxu0
      %v4840 = vadd.f32 %v4800, %v4839
      %v4841 = vpop.f32.mrf.mxu0
      %v4842 = vpop.f32.mrf.mxu0
      %v4843 = vpop.f32.mrf.mxu0
      %4844 = vdwg.mxu0
      %4845 = vmatprep.subr.bf16.mxu0 0
      %4846 = vmatpush1.bf16.msra.mxu0 %v3660
      %4847 = vmatprep.subr.bf16.mxu0 0
      %4848 = vmatpush1.bf16.msra.mxu0 %v3659
      %4849 = vmatprep.subr.bf16.mxu0 0
      %4850 = vmatpush1.bf16.msra.mxu0 %v3658
      %4851 = vmatprep.subr.bf16.mxu0 0
      %4852 = vmatpush1.bf16.msra.mxu0 %v3657
      %4853 = vmatprep.subr.bf16.mxu0 0
      %4854 = vmatpush1.bf16.msra.mxu0 %v3656
      %4855 = vmatprep.subr.bf16.mxu0 0
      %4856 = vmatpush1.bf16.msra.mxu0 %v3655
      %4857 = vmatprep.subr.bf16.mxu0 0
      %4858 = vmatpush1.bf16.msra.mxu0 %v3654
      %4859 = vmatprep.subr.bf16.mxu0 0
      %4860 = vmatpush1.bf16.msra.mxu0 %v3653
      %4861 = vmatprep.subr.bf16.mxu0 0
      %4862 = vmatpush2.bf16.msra.mxu0 %v3668
      %4863 = vmatprep.subr.bf16.mxu0 0
      %4864 = vmatpush2.bf16.msra.mxu0 %v3667
      %4865 = vmatprep.subr.bf16.mxu0 0
      %4866 = vmatpush2.bf16.msra.mxu0 %v3666
      %4867 = vmatprep.subr.bf16.mxu0 0
      %4868 = vmatpush2.bf16.msra.mxu0 %v3665
      %4869 = vmatprep.subr.bf16.mxu0 0
      %4870 = vmatpush2.bf16.msra.mxu0 %v3664
      %4871 = vmatprep.subr.bf16.mxu0 0
      %4872 = vmatpush2.bf16.msra.mxu0 %v3663
      %4873 = vmatprep.subr.bf16.mxu0 0
      %4874 = vmatpush2.bf16.msra.mxu0 %v3662
      %4875 = vmatprep.subr.bf16.mxu0 0
      %4876 = vmatpush2.bf16.msra.mxu0 %v3661
      %4877 = vmatprep.mubr.bf16.mxu0 %v1380
      %4878 = vmatmul.mubr.bf16.gmra.mxu0 %v1379
      %v4879 = vpop.f32.mrf.mxu0
      %v4880 = vadd.f32 %v4840, %v4879
      %v4881 = vpop.f32.mrf.mxu0
      %v4882 = vpop.f32.mrf.mxu0
      %v4883 = vpop.f32.mrf.mxu0
      %4884 = vdwg.mxu0
      %4885 = vmatprep.subr.bf16.mxu0 0
      %4886 = vmatpush1.bf16.msra.mxu0 %v3676
      %4887 = vmatprep.subr.bf16.mxu0 0
      %4888 = vmatpush1.bf16.msra.mxu0 %v3675
      %4889 = vmatprep.subr.bf16.mxu0 0
      %4890 = vmatpush1.bf16.msra.mxu0 %v3674
      %4891 = vmatprep.subr.bf16.mxu0 0
      %4892 = vmatpush1.bf16.msra.mxu0 %v3673
      %4893 = vmatprep.subr.bf16.mxu0 0
      %4894 = vmatpush1.bf16.msra.mxu0 %v3672
      %4895 = vmatprep.subr.bf16.mxu0 0
      %4896 = vmatpush1.bf16.msra.mxu0 %v3671
      %4897 = vmatprep.subr.bf16.mxu0 0
      %4898 = vmatpush1.bf16.msra.mxu0 %v3670
      %4899 = vmatprep.subr.bf16.mxu0 0
      %4900 = vmatpush1.bf16.msra.mxu0 %v3669
      %4901 = vmatprep.subr.bf16.mxu0 0
      %4902 = vmatpush2.bf16.msra.mxu0 %v3684
      %4903 = vmatprep.subr.bf16.mxu0 0
      %4904 = vmatpush2.bf16.msra.mxu0 %v3683
      %4905 = vmatprep.subr.bf16.mxu0 0
      %4906 = vmatpush2.bf16.msra.mxu0 %v3682
      %4907 = vmatprep.subr.bf16.mxu0 0
      %4908 = vmatpush2.bf16.msra.mxu0 %v3681
      %4909 = vmatprep.subr.bf16.mxu0 0
      %4910 = vmatpush2.bf16.msra.mxu0 %v3680
      %4911 = vmatprep.subr.bf16.mxu0 0
      %4912 = vmatpush2.bf16.msra.mxu0 %v3679
      %4913 = vmatprep.subr.bf16.mxu0 0
      %4914 = vmatpush2.bf16.msra.mxu0 %v3678
      %4915 = vmatprep.subr.bf16.mxu0 0
      %4916 = vmatpush2.bf16.msra.mxu0 %v3677
      %4917 = vmatprep.mubr.bf16.mxu0 %v1382
      %4918 = vmatmul.mubr.bf16.gmra.mxu0 %v1381
      %v4919 = vpop.f32.mrf.mxu0
      %v4920 = vadd.f32 %v4880, %v4919
      %v4921 = vpop.f32.mrf.mxu0
      %v4922 = vpop.f32.mrf.mxu0
      %v4923 = vpop.f32.mrf.mxu0
      %4924 = vdwg.mxu0
      %4925 = vmatprep.subr.bf16.mxu0 0
      %4926 = vmatpush1.bf16.msra.mxu0 %v3692
      %4927 = vmatprep.subr.bf16.mxu0 0
      %4928 = vmatpush1.bf16.msra.mxu0 %v3691
      %4929 = vmatprep.subr.bf16.mxu0 0
      %4930 = vmatpush1.bf16.msra.mxu0 %v3690
      %4931 = vmatprep.subr.bf16.mxu0 0
      %4932 = vmatpush1.bf16.msra.mxu0 %v3689
      %4933 = vmatprep.subr.bf16.mxu0 0
      %4934 = vmatpush1.bf16.msra.mxu0 %v3688
      %4935 = vmatprep.subr.bf16.mxu0 0
      %4936 = vmatpush1.bf16.msra.mxu0 %v3687
      %4937 = vmatprep.subr.bf16.mxu0 0
      %4938 = vmatpush1.bf16.msra.mxu0 %v3686
      %4939 = vmatprep.subr.bf16.mxu0 0
      %4940 = vmatpush1.bf16.msra.mxu0 %v3685
      %4941 = vmatprep.subr.bf16.mxu0 0
      %4942 = vmatpush2.bf16.msra.mxu0 %v3700
      %4943 = vmatprep.subr.bf16.mxu0 0
      %4944 = vmatpush2.bf16.msra.mxu0 %v3699
      %4945 = vmatprep.subr.bf16.mxu0 0
      %4946 = vmatpush2.bf16.msra.mxu0 %v3698
      %4947 = vmatprep.subr.bf16.mxu0 0
      %4948 = vmatpush2.bf16.msra.mxu0 %v3697
      %4949 = vmatprep.subr.bf16.mxu0 0
      %4950 = vmatpush2.bf16.msra.mxu0 %v3696
      %4951 = vmatprep.subr.bf16.mxu0 0
      %4952 = vmatpush2.bf16.msra.mxu0 %v3695
      %4953 = vmatprep.subr.bf16.mxu0 0
      %4954 = vmatpush2.bf16.msra.mxu0 %v3694
      %4955 = vmatprep.subr.bf16.mxu0 0
      %4956 = vmatpush2.bf16.msra.mxu0 %v3693
      %4957 = vmatprep.mubr.bf16.mxu0 %v1384
      %4958 = vmatmul.mubr.bf16.gmra.mxu0 %v1383
      %v4959 = vpop.f32.mrf.mxu0
      %v4960 = vadd.f32 %v4920, %v4959
      %v4961 = vpop.f32.mrf.mxu0
      %v4962 = vpop.f32.mrf.mxu0
      %v4963 = vpop.f32.mrf.mxu0
      %4964 = vdwg.mxu0
      %4965 = vmatprep.subr.bf16.mxu0 0
      %4966 = vmatpush1.bf16.msra.mxu0 %v3708
      %4967 = vmatprep.subr.bf16.mxu0 0
      %4968 = vmatpush1.bf16.msra.mxu0 %v3707
      %4969 = vmatprep.subr.bf16.mxu0 0
      %4970 = vmatpush1.bf16.msra.mxu0 %v3706
      %4971 = vmatprep.subr.bf16.mxu0 0
      %4972 = vmatpush1.bf16.msra.mxu0 %v3705
      %4973 = vmatprep.subr.bf16.mxu0 0
      %4974 = vmatpush1.bf16.msra.mxu0 %v3704
      %4975 = vmatprep.subr.bf16.mxu0 0
      %4976 = vmatpush1.bf16.msra.mxu0 %v3703
      %4977 = vmatprep.subr.bf16.mxu0 0
      %4978 = vmatpush1.bf16.msra.mxu0 %v3702
      %4979 = vmatprep.subr.bf16.mxu0 0
      %4980 = vmatpush1.bf16.msra.mxu0 %v3701
      %4981 = vmatprep.subr.bf16.mxu0 0
      %4982 = vmatpush2.bf16.msra.mxu0 %v3716
      %4983 = vmatprep.subr.bf16.mxu0 0
      %4984 = vmatpush2.bf16.msra.mxu0 %v3715
      %4985 = vmatprep.subr.bf16.mxu0 0
      %4986 = vmatpush2.bf16.msra.mxu0 %v3714
      %4987 = vmatprep.subr.bf16.mxu0 0
      %4988 = vmatpush2.bf16.msra.mxu0 %v3713
      %4989 = vmatprep.subr.bf16.mxu0 0
      %4990 = vmatpush2.bf16.msra.mxu0 %v3712
      %4991 = vmatprep.subr.bf16.mxu0 0
      %4992 = vmatpush2.bf16.msra.mxu0 %v3711
      %4993 = vmatprep.subr.bf16.mxu0 0
      %4994 = vmatpush2.bf16.msra.mxu0 %v3710
      %4995 = vmatprep.subr.bf16.mxu0 0
      %4996 = vmatpush2.bf16.msra.mxu0 %v3709
      %4997 = vmatprep.mubr.bf16.mxu0 %v1386
      %4998 = vmatmul.mubr.bf16.gmra.mxu0 %v1385
      %v4999 = vpop.f32.mrf.mxu0
      %v5000 = vadd.f32 %v4960, %v4999
      %v5001 = vpop.f32.mrf.mxu0
      %v5002 = vpop.f32.mrf.mxu0
      %v5003 = vpop.f32.mrf.mxu0
      %5004 = vdwg.mxu0
      %5005 = vmatprep.subr.bf16.mxu0 0
      %5006 = vmatpush1.bf16.msra.mxu0 %v3724
      %5007 = vmatprep.subr.bf16.mxu0 0
      %5008 = vmatpush1.bf16.msra.mxu0 %v3723
      %5009 = vmatprep.subr.bf16.mxu0 0
      %5010 = vmatpush1.bf16.msra.mxu0 %v3722
      %5011 = vmatprep.subr.bf16.mxu0 0
      %5012 = vmatpush1.bf16.msra.mxu0 %v3721
      %5013 = vmatprep.subr.bf16.mxu0 0
      %5014 = vmatpush1.bf16.msra.mxu0 %v3720
      %5015 = vmatprep.subr.bf16.mxu0 0
      %5016 = vmatpush1.bf16.msra.mxu0 %v3719
      %5017 = vmatprep.subr.bf16.mxu0 0
      %5018 = vmatpush1.bf16.msra.mxu0 %v3718
      %5019 = vmatprep.subr.bf16.mxu0 0
      %5020 = vmatpush1.bf16.msra.mxu0 %v3717
      %5021 = vmatprep.subr.bf16.mxu0 0
      %5022 = vmatpush2.bf16.msra.mxu0 %v3732
      %5023 = vmatprep.subr.bf16.mxu0 0
      %5024 = vmatpush2.bf16.msra.mxu0 %v3731
      %5025 = vmatprep.subr.bf16.mxu0 0
      %5026 = vmatpush2.bf16.msra.mxu0 %v3730
      %5027 = vmatprep.subr.bf16.mxu0 0
      %5028 = vmatpush2.bf16.msra.mxu0 %v3729
      %5029 = vmatprep.subr.bf16.mxu0 0
      %5030 = vmatpush2.bf16.msra.mxu0 %v3728
      %5031 = vmatprep.subr.bf16.mxu0 0
      %5032 = vmatpush2.bf16.msra.mxu0 %v3727
      %5033 = vmatprep.subr.bf16.mxu0 0
      %5034 = vmatpush2.bf16.msra.mxu0 %v3726
      %5035 = vmatprep.subr.bf16.mxu0 0
      %5036 = vmatpush2.bf16.msra.mxu0 %v3725
      %5037 = vmatprep.mubr.bf16.mxu0 %v1388
      %5038 = vmatmul.mubr.bf16.gmra.mxu0 %v1387
      %v5039 = vpop.f32.mrf.mxu0
      %v5040 = vadd.f32 %v5000, %v5039
      %v5041 = vpop.f32.mrf.mxu0
      %v5042 = vpop.f32.mrf.mxu0
      %v5043 = vpop.f32.mrf.mxu0
      %5044 = vdwg.mxu0
      %5045 = vmatprep.subr.bf16.mxu0 0
      %5046 = vmatpush1.bf16.msra.mxu0 %v3740
      %5047 = vmatprep.subr.bf16.mxu0 0
      %5048 = vmatpush1.bf16.msra.mxu0 %v3739
      %5049 = vmatprep.subr.bf16.mxu0 0
      %5050 = vmatpush1.bf16.msra.mxu0 %v3738
      %5051 = vmatprep.subr.bf16.mxu0 0
      %5052 = vmatpush1.bf16.msra.mxu0 %v3737
      %5053 = vmatprep.subr.bf16.mxu0 0
      %5054 = vmatpush1.bf16.msra.mxu0 %v3736
      %5055 = vmatprep.subr.bf16.mxu0 0
      %5056 = vmatpush1.bf16.msra.mxu0 %v3735
      %5057 = vmatprep.subr.bf16.mxu0 0
      %5058 = vmatpush1.bf16.msra.mxu0 %v3734
      %5059 = vmatprep.subr.bf16.mxu0 0
      %5060 = vmatpush1.bf16.msra.mxu0 %v3733
      %5061 = vmatprep.subr.bf16.mxu0 0
      %5062 = vmatpush2.bf16.msra.mxu0 %v3748
      %5063 = vmatprep.subr.bf16.mxu0 0
      %5064 = vmatpush2.bf16.msra.mxu0 %v3747
      %5065 = vmatprep.subr.bf16.mxu0 0
      %5066 = vmatpush2.bf16.msra.mxu0 %v3746
      %5067 = vmatprep.subr.bf16.mxu0 0
      %5068 = vmatpush2.bf16.msra.mxu0 %v3745
      %5069 = vmatprep.subr.bf16.mxu0 0
      %5070 = vmatpush2.bf16.msra.mxu0 %v3744
      %5071 = vmatprep.subr.bf16.mxu0 0
      %5072 = vmatpush2.bf16.msra.mxu0 %v3743
      %5073 = vmatprep.subr.bf16.mxu0 0
      %5074 = vmatpush2.bf16.msra.mxu0 %v3742
      %5075 = vmatprep.subr.bf16.mxu0 0
      %5076 = vmatpush2.bf16.msra.mxu0 %v3741
      %5077 = vmatprep.mubr.bf16.mxu0 %v1390
      %5078 = vmatmul.mubr.bf16.gmra.mxu0 %v1389
      %v5079 = vpop.f32.mrf.mxu0
      %v5080 = vadd.f32 %v5040, %v5079
      %v5081 = vpop.f32.mrf.mxu0
      %v5082 = vpop.f32.mrf.mxu0
      %v5083 = vpop.f32.mrf.mxu0
      %5084 = vdwg.mxu0
      %5085 = vmatprep.subr.bf16.mxu0 0
      %5086 = vmatpush1.bf16.msra.mxu0 %v3756
      %5087 = vmatprep.subr.bf16.mxu0 0
      %5088 = vmatpush1.bf16.msra.mxu0 %v3755
      %5089 = vmatprep.subr.bf16.mxu0 0
      %5090 = vmatpush1.bf16.msra.mxu0 %v3754
      %5091 = vmatprep.subr.bf16.mxu0 0
      %5092 = vmatpush1.bf16.msra.mxu0 %v3753
      %5093 = vmatprep.subr.bf16.mxu0 0
      %5094 = vmatpush1.bf16.msra.mxu0 %v3752
      %5095 = vmatprep.subr.bf16.mxu0 0
      %5096 = vmatpush1.bf16.msra.mxu0 %v3751
      %5097 = vmatprep.subr.bf16.mxu0 0
      %5098 = vmatpush1.bf16.msra.mxu0 %v3750
      %5099 = vmatprep.subr.bf16.mxu0 0
      %5100 = vmatpush1.bf16.msra.mxu0 %v3749
      %5101 = vmatprep.subr.bf16.mxu0 0
      %5102 = vmatpush2.bf16.msra.mxu0 %v3764
      %5103 = vmatprep.subr.bf16.mxu0 0
      %5104 = vmatpush2.bf16.msra.mxu0 %v3763
      %5105 = vmatprep.subr.bf16.mxu0 0
      %5106 = vmatpush2.bf16.msra.mxu0 %v3762
      %5107 = vmatprep.subr.bf16.mxu0 0
      %5108 = vmatpush2.bf16.msra.mxu0 %v3761
      %5109 = vmatprep.subr.bf16.mxu0 0
      %5110 = vmatpush2.bf16.msra.mxu0 %v3760
      %5111 = vmatprep.subr.bf16.mxu0 0
      %5112 = vmatpush2.bf16.msra.mxu0 %v3759
      %5113 = vmatprep.subr.bf16.mxu0 0
      %5114 = vmatpush2.bf16.msra.mxu0 %v3758
      %5115 = vmatprep.subr.bf16.mxu0 0
      %5116 = vmatpush2.bf16.msra.mxu0 %v3757
      %5117 = vmatprep.mubr.bf16.mxu0 %v1392
      %5118 = vmatmul.mubr.bf16.gmra.mxu0 %v1391
      %v5119 = vpop.f32.mrf.mxu0
      %v5120 = vadd.f32 %v5080, %v5119
      %v5121 = vpop.f32.mrf.mxu0
      %v5122 = vpop.f32.mrf.mxu0
      %v5123 = vpop.f32.mrf.mxu0
      %5124 = vdwg.mxu0
      %5125 = vmatprep.subr.bf16.mxu0 0
      %5126 = vmatpush1.bf16.msra.mxu0 %v3772
      %5127 = vmatprep.subr.bf16.mxu0 0
      %5128 = vmatpush1.bf16.msra.mxu0 %v3771
      %5129 = vmatprep.subr.bf16.mxu0 0
      %5130 = vmatpush1.bf16.msra.mxu0 %v3770
      %5131 = vmatprep.subr.bf16.mxu0 0
      %5132 = vmatpush1.bf16.msra.mxu0 %v3769
      %5133 = vmatprep.subr.bf16.mxu0 0
      %5134 = vmatpush1.bf16.msra.mxu0 %v3768
      %5135 = vmatprep.subr.bf16.mxu0 0
      %5136 = vmatpush1.bf16.msra.mxu0 %v3767
      %5137 = vmatprep.subr.bf16.mxu0 0
      %5138 = vmatpush1.bf16.msra.mxu0 %v3766
      %5139 = vmatprep.subr.bf16.mxu0 0
      %5140 = vmatpush1.bf16.msra.mxu0 %v3765
      %5141 = vmatprep.subr.bf16.mxu0 0
      %5142 = vmatpush2.bf16.msra.mxu0 %v3780
      %5143 = vmatprep.subr.bf16.mxu0 0
      %5144 = vmatpush2.bf16.msra.mxu0 %v3779
      %5145 = vmatprep.subr.bf16.mxu0 0
      %5146 = vmatpush2.bf16.msra.mxu0 %v3778
      %5147 = vmatprep.subr.bf16.mxu0 0
      %5148 = vmatpush2.bf16.msra.mxu0 %v3777
      %5149 = vmatprep.subr.bf16.mxu0 0
      %5150 = vmatpush2.bf16.msra.mxu0 %v3776
      %5151 = vmatprep.subr.bf16.mxu0 0
      %5152 = vmatpush2.bf16.msra.mxu0 %v3775
      %5153 = vmatprep.subr.bf16.mxu0 0
      %5154 = vmatpush2.bf16.msra.mxu0 %v3774
      %5155 = vmatprep.subr.bf16.mxu0 0
      %5156 = vmatpush2.bf16.msra.mxu0 %v3773
      %5157 = vmatprep.mubr.bf16.mxu0 %v1394
      %5158 = vmatmul.mubr.bf16.gmra.mxu0 %v1393
      %v5159 = vpop.f32.mrf.mxu0
      %v5160 = vadd.f32 %v5120, %v5159
      %v5161 = vpop.f32.mrf.mxu0
      %v5162 = vpop.f32.mrf.mxu0
      %v5163 = vpop.f32.mrf.mxu0
      %5164 = vdwg.mxu0
      %5165 = vmatprep.subr.bf16.mxu0 0
      %5166 = vmatpush1.bf16.msra.mxu0 %v3788
      %5167 = vmatprep.subr.bf16.mxu0 0
      %5168 = vmatpush1.bf16.msra.mxu0 %v3787
      %5169 = vmatprep.subr.bf16.mxu0 0
      %5170 = vmatpush1.bf16.msra.mxu0 %v3786
      %5171 = vmatprep.subr.bf16.mxu0 0
      %5172 = vmatpush1.bf16.msra.mxu0 %v3785
      %5173 = vmatprep.subr.bf16.mxu0 0
      %5174 = vmatpush1.bf16.msra.mxu0 %v3784
      %5175 = vmatprep.subr.bf16.mxu0 0
      %5176 = vmatpush1.bf16.msra.mxu0 %v3783
      %5177 = vmatprep.subr.bf16.mxu0 0
      %5178 = vmatpush1.bf16.msra.mxu0 %v3782
      %5179 = vmatprep.subr.bf16.mxu0 0
      %5180 = vmatpush1.bf16.msra.mxu0 %v3781
      %5181 = vmatprep.subr.bf16.mxu0 0
      %5182 = vmatpush2.bf16.msra.mxu0 %v3796
      %5183 = vmatprep.subr.bf16.mxu0 0
      %5184 = vmatpush2.bf16.msra.mxu0 %v3795
      %5185 = vmatprep.subr.bf16.mxu0 0
      %5186 = vmatpush2.bf16.msra.mxu0 %v3794
      %5187 = vmatprep.subr.bf16.mxu0 0
      %5188 = vmatpush2.bf16.msra.mxu0 %v3793
      %5189 = vmatprep.subr.bf16.mxu0 0
      %5190 = vmatpush2.bf16.msra.mxu0 %v3792
      %5191 = vmatprep.subr.bf16.mxu0 0
      %5192 = vmatpush2.bf16.msra.mxu0 %v3791
      %5193 = vmatprep.subr.bf16.mxu0 0
      %5194 = vmatpush2.bf16.msra.mxu0 %v3790
      %5195 = vmatprep.subr.bf16.mxu0 0
      %5196 = vmatpush2.bf16.msra.mxu0 %v3789
      %5197 = vmatprep.mubr.bf16.mxu0 %v1396
      %5198 = vmatmul.mubr.bf16.gmra.mxu0 %v1395
      %v5199 = vpop.f32.mrf.mxu0
      %v5200 = vadd.f32 %v5160, %v5199
      %v5201 = vpop.f32.mrf.mxu0
      %v5202 = vpop.f32.mrf.mxu0
      %v5203 = vpop.f32.mrf.mxu0
      %5204 = vdwg.mxu0
      %5205 = vmatprep.subr.bf16.mxu0 0
      %5206 = vmatpush1.bf16.msra.mxu0 %v3804
      %5207 = vmatprep.subr.bf16.mxu0 0
      %5208 = vmatpush1.bf16.msra.mxu0 %v3803
      %5209 = vmatprep.subr.bf16.mxu0 0
      %5210 = vmatpush1.bf16.msra.mxu0 %v3802
      %5211 = vmatprep.subr.bf16.mxu0 0
      %5212 = vmatpush1.bf16.msra.mxu0 %v3801
      %5213 = vmatprep.subr.bf16.mxu0 0
      %5214 = vmatpush1.bf16.msra.mxu0 %v3800
      %5215 = vmatprep.subr.bf16.mxu0 0
      %5216 = vmatpush1.bf16.msra.mxu0 %v3799
      %5217 = vmatprep.subr.bf16.mxu0 0
      %5218 = vmatpush1.bf16.msra.mxu0 %v3798
      %5219 = vmatprep.subr.bf16.mxu0 0
      %5220 = vmatpush1.bf16.msra.mxu0 %v3797
      %5221 = vmatprep.subr.bf16.mxu0 0
      %5222 = vmatpush2.bf16.msra.mxu0 %v3812
      %5223 = vmatprep.subr.bf16.mxu0 0
      %5224 = vmatpush2.bf16.msra.mxu0 %v3811
      %5225 = vmatprep.subr.bf16.mxu0 0
      %5226 = vmatpush2.bf16.msra.mxu0 %v3810
      %5227 = vmatprep.subr.bf16.mxu0 0
      %5228 = vmatpush2.bf16.msra.mxu0 %v3809
      %5229 = vmatprep.subr.bf16.mxu0 0
      %5230 = vmatpush2.bf16.msra.mxu0 %v3808
      %5231 = vmatprep.subr.bf16.mxu0 0
      %5232 = vmatpush2.bf16.msra.mxu0 %v3807
      %5233 = vmatprep.subr.bf16.mxu0 0
      %5234 = vmatpush2.bf16.msra.mxu0 %v3806
      %5235 = vmatprep.subr.bf16.mxu0 0
      %5236 = vmatpush2.bf16.msra.mxu0 %v3805
      %5237 = vmatprep.mubr.bf16.mxu0 %v1398
      %5238 = vmatmul.mubr.bf16.gmra.mxu0 %v1397
      %v5239 = vpop.f32.mrf.mxu0
      %v5240 = vadd.f32 %v5200, %v5239
      %v5241 = vpop.f32.mrf.mxu0
      %v5242 = vpop.f32.mrf.mxu0
      %v5243 = vpop.f32.mrf.mxu0
      %5244 = vdwg.mxu0
      %5245 = vmatprep.subr.bf16.mxu0 0
      %5246 = vmatpush1.bf16.msra.mxu0 %v3820
      %5247 = vmatprep.subr.bf16.mxu0 0
      %5248 = vmatpush1.bf16.msra.mxu0 %v3819
      %5249 = vmatprep.subr.bf16.mxu0 0
      %5250 = vmatpush1.bf16.msra.mxu0 %v3818
      %5251 = vmatprep.subr.bf16.mxu0 0
      %5252 = vmatpush1.bf16.msra.mxu0 %v3817
      %5253 = vmatprep.subr.bf16.mxu0 0
      %5254 = vmatpush1.bf16.msra.mxu0 %v3816
      %5255 = vmatprep.subr.bf16.mxu0 0
      %5256 = vmatpush1.bf16.msra.mxu0 %v3815
      %5257 = vmatprep.subr.bf16.mxu0 0
      %5258 = vmatpush1.bf16.msra.mxu0 %v3814
      %5259 = vmatprep.subr.bf16.mxu0 0
      %5260 = vmatpush1.bf16.msra.mxu0 %v3813
      %5261 = vmatprep.subr.bf16.mxu0 0
      %5262 = vmatpush2.bf16.msra.mxu0 %v3828
      %5263 = vmatprep.subr.bf16.mxu0 0
      %5264 = vmatpush2.bf16.msra.mxu0 %v3827
      %5265 = vmatprep.subr.bf16.mxu0 0
      %5266 = vmatpush2.bf16.msra.mxu0 %v3826
      %5267 = vmatprep.subr.bf16.mxu0 0
      %5268 = vmatpush2.bf16.msra.mxu0 %v3825
      %5269 = vmatprep.subr.bf16.mxu0 0
      %5270 = vmatpush2.bf16.msra.mxu0 %v3824
      %5271 = vmatprep.subr.bf16.mxu0 0
      %5272 = vmatpush2.bf16.msra.mxu0 %v3823
      %5273 = vmatprep.subr.bf16.mxu0 0
      %5274 = vmatpush2.bf16.msra.mxu0 %v3822
      %5275 = vmatprep.subr.bf16.mxu0 0
      %5276 = vmatpush2.bf16.msra.mxu0 %v3821
      %5277 = vmatprep.mubr.bf16.mxu0 %v1400
      %5278 = vmatmul.mubr.bf16.gmra.mxu0 %v1399
      %v5279 = vpop.f32.mrf.mxu0
      %v5280 = vadd.f32 %v5240, %v5279
      %v5281 = vpop.f32.mrf.mxu0
      %v5282 = vpop.f32.mrf.mxu0
      %v5283 = vpop.f32.mrf.mxu0
      %5284 = vdwg.mxu0
      %5285 = vmatprep.subr.bf16.mxu0 0
      %5286 = vmatpush1.bf16.msra.mxu0 %v3836
      %5287 = vmatprep.subr.bf16.mxu0 0
      %5288 = vmatpush1.bf16.msra.mxu0 %v3835
      %5289 = vmatprep.subr.bf16.mxu0 0
      %5290 = vmatpush1.bf16.msra.mxu0 %v3834
      %5291 = vmatprep.subr.bf16.mxu0 0
      %5292 = vmatpush1.bf16.msra.mxu0 %v3833
      %5293 = vmatprep.subr.bf16.mxu0 0
      %5294 = vmatpush1.bf16.msra.mxu0 %v3832
      %5295 = vmatprep.subr.bf16.mxu0 0
      %5296 = vmatpush1.bf16.msra.mxu0 %v3831
      %5297 = vmatprep.subr.bf16.mxu0 0
      %5298 = vmatpush1.bf16.msra.mxu0 %v3830
      %5299 = vmatprep.subr.bf16.mxu0 0
      %5300 = vmatpush1.bf16.msra.mxu0 %v3829
      %5301 = vmatprep.subr.bf16.mxu0 0
      %5302 = vmatpush2.bf16.msra.mxu0 %v3844
      %5303 = vmatprep.subr.bf16.mxu0 0
      %5304 = vmatpush2.bf16.msra.mxu0 %v3843
      %5305 = vmatprep.subr.bf16.mxu0 0
      %5306 = vmatpush2.bf16.msra.mxu0 %v3842
      %5307 = vmatprep.subr.bf16.mxu0 0
      %5308 = vmatpush2.bf16.msra.mxu0 %v3841
      %5309 = vmatprep.subr.bf16.mxu0 0
      %5310 = vmatpush2.bf16.msra.mxu0 %v3840
      %5311 = vmatprep.subr.bf16.mxu0 0
      %5312 = vmatpush2.bf16.msra.mxu0 %v3839
      %5313 = vmatprep.subr.bf16.mxu0 0
      %5314 = vmatpush2.bf16.msra.mxu0 %v3838
      %5315 = vmatprep.subr.bf16.mxu0 0
      %5316 = vmatpush2.bf16.msra.mxu0 %v3837
      %5317 = vmatprep.mubr.bf16.mxu0 %v1402
      %5318 = vmatmul.mubr.bf16.gmra.mxu0 %v1401
      %v5319 = vpop.f32.mrf.mxu0
      %v5320 = vadd.f32 %v5280, %v5319
      %v5321 = vpop.f32.mrf.mxu0
      %v5322 = vpop.f32.mrf.mxu0
      %v5323 = vpop.f32.mrf.mxu0
      %5324 = vdwg.mxu0
      %5325 = vmatprep.subr.bf16.mxu0 0
      %5326 = vmatpush1.bf16.msra.mxu0 %v3852
      %5327 = vmatprep.subr.bf16.mxu0 0
      %5328 = vmatpush1.bf16.msra.mxu0 %v3851
      %5329 = vmatprep.subr.bf16.mxu0 0
      %5330 = vmatpush1.bf16.msra.mxu0 %v3850
      %5331 = vmatprep.subr.bf16.mxu0 0
      %5332 = vmatpush1.bf16.msra.mxu0 %v3849
      %5333 = vmatprep.subr.bf16.mxu0 0
      %5334 = vmatpush1.bf16.msra.mxu0 %v3848
      %5335 = vmatprep.subr.bf16.mxu0 0
      %5336 = vmatpush1.bf16.msra.mxu0 %v3847
      %5337 = vmatprep.subr.bf16.mxu0 0
      %5338 = vmatpush1.bf16.msra.mxu0 %v3846
      %5339 = vmatprep.subr.bf16.mxu0 0
      %5340 = vmatpush1.bf16.msra.mxu0 %v3845
      %5341 = vmatprep.subr.bf16.mxu0 0
      %5342 = vmatpush2.bf16.msra.mxu0 %v3860
      %5343 = vmatprep.subr.bf16.mxu0 0
      %5344 = vmatpush2.bf16.msra.mxu0 %v3859
      %5345 = vmatprep.subr.bf16.mxu0 0
      %5346 = vmatpush2.bf16.msra.mxu0 %v3858
      %5347 = vmatprep.subr.bf16.mxu0 0
      %5348 = vmatpush2.bf16.msra.mxu0 %v3857
      %5349 = vmatprep.subr.bf16.mxu0 0
      %5350 = vmatpush2.bf16.msra.mxu0 %v3856
      %5351 = vmatprep.subr.bf16.mxu0 0
      %5352 = vmatpush2.bf16.msra.mxu0 %v3855
      %5353 = vmatprep.subr.bf16.mxu0 0
      %5354 = vmatpush2.bf16.msra.mxu0 %v3854
      %5355 = vmatprep.subr.bf16.mxu0 0
      %5356 = vmatpush2.bf16.msra.mxu0 %v3853
      %5357 = vmatprep.mubr.bf16.mxu0 %v1404
      %5358 = vmatmul.mubr.bf16.gmra.mxu0 %v1403
      %v5359 = vpop.f32.mrf.mxu0
      %v5360 = vadd.f32 %v5320, %v5359
      %v5361 = vpop.f32.mrf.mxu0
      %v5362 = vpop.f32.mrf.mxu0
      %v5363 = vpop.f32.mrf.mxu0
      %5364 = vdwg.mxu0
      %5365 = vmatprep.subr.bf16.mxu0 0
      %5366 = vmatpush1.bf16.msra.mxu0 %v3868
      %5367 = vmatprep.subr.bf16.mxu0 0
      %5368 = vmatpush1.bf16.msra.mxu0 %v3867
      %5369 = vmatprep.subr.bf16.mxu0 0
      %5370 = vmatpush1.bf16.msra.mxu0 %v3866
      %5371 = vmatprep.subr.bf16.mxu0 0
      %5372 = vmatpush1.bf16.msra.mxu0 %v3865
      %5373 = vmatprep.subr.bf16.mxu0 0
      %5374 = vmatpush1.bf16.msra.mxu0 %v3864
      %5375 = vmatprep.subr.bf16.mxu0 0
      %5376 = vmatpush1.bf16.msra.mxu0 %v3863
      %5377 = vmatprep.subr.bf16.mxu0 0
      %5378 = vmatpush1.bf16.msra.mxu0 %v3862
      %5379 = vmatprep.subr.bf16.mxu0 0
      %5380 = vmatpush1.bf16.msra.mxu0 %v3861
      %5381 = vmatprep.subr.bf16.mxu0 0
      %5382 = vmatpush2.bf16.msra.mxu0 %v3876
      %5383 = vmatprep.subr.bf16.mxu0 0
      %5384 = vmatpush2.bf16.msra.mxu0 %v3875
      %5385 = vmatprep.subr.bf16.mxu0 0
      %5386 = vmatpush2.bf16.msra.mxu0 %v3874
      %5387 = vmatprep.subr.bf16.mxu0 0
      %5388 = vmatpush2.bf16.msra.mxu0 %v3873
      %5389 = vmatprep.subr.bf16.mxu0 0
      %5390 = vmatpush2.bf16.msra.mxu0 %v3872
      %5391 = vmatprep.subr.bf16.mxu0 0
      %5392 = vmatpush2.bf16.msra.mxu0 %v3871
      %5393 = vmatprep.subr.bf16.mxu0 0
      %5394 = vmatpush2.bf16.msra.mxu0 %v3870
      %5395 = vmatprep.subr.bf16.mxu0 0
      %5396 = vmatpush2.bf16.msra.mxu0 %v3869
      %5397 = vmatprep.mubr.bf16.mxu0 %v1406
      %5398 = vmatmul.mubr.bf16.gmra.mxu0 %v1405
      %v5399 = vpop.f32.mrf.mxu0
      %v5400 = vadd.f32 %v5360, %v5399
      %v5401 = vpop.f32.mrf.mxu0
      %v5402 = vpop.f32.mrf.mxu0
      %v5403 = vpop.f32.mrf.mxu0
      %5404 = vdwg.mxu0
      %5405 = vmatprep.subr.bf16.mxu0 0
      %5406 = vmatpush1.bf16.msra.mxu0 %v3884
      %5407 = vmatprep.subr.bf16.mxu0 0
      %5408 = vmatpush1.bf16.msra.mxu0 %v3883
      %5409 = vmatprep.subr.bf16.mxu0 0
      %5410 = vmatpush1.bf16.msra.mxu0 %v3882
      %5411 = vmatprep.subr.bf16.mxu0 0
      %5412 = vmatpush1.bf16.msra.mxu0 %v3881
      %5413 = vmatprep.subr.bf16.mxu0 0
      %5414 = vmatpush1.bf16.msra.mxu0 %v3880
      %5415 = vmatprep.subr.bf16.mxu0 0
      %5416 = vmatpush1.bf16.msra.mxu0 %v3879
      %5417 = vmatprep.subr.bf16.mxu0 0
      %5418 = vmatpush1.bf16.msra.mxu0 %v3878
      %5419 = vmatprep.subr.bf16.mxu0 0
      %5420 = vmatpush1.bf16.msra.mxu0 %v3877
      %5421 = vmatprep.subr.bf16.mxu0 0
      %5422 = vmatpush2.bf16.msra.mxu0 %v3892
      %5423 = vmatprep.subr.bf16.mxu0 0
      %5424 = vmatpush2.bf16.msra.mxu0 %v3891
      %5425 = vmatprep.subr.bf16.mxu0 0
      %5426 = vmatpush2.bf16.msra.mxu0 %v3890
      %5427 = vmatprep.subr.bf16.mxu0 0
      %5428 = vmatpush2.bf16.msra.mxu0 %v3889
      %5429 = vmatprep.subr.bf16.mxu0 0
      %5430 = vmatpush2.bf16.msra.mxu0 %v3888
      %5431 = vmatprep.subr.bf16.mxu0 0
      %5432 = vmatpush2.bf16.msra.mxu0 %v3887
      %5433 = vmatprep.subr.bf16.mxu0 0
      %5434 = vmatpush2.bf16.msra.mxu0 %v3886
      %5435 = vmatprep.subr.bf16.mxu0 0
      %5436 = vmatpush2.bf16.msra.mxu0 %v3885
      %5437 = vmatprep.mubr.bf16.mxu0 %v1408
      %5438 = vmatmul.mubr.bf16.gmra.mxu0 %v1407
      %v5439 = vpop.f32.mrf.mxu0
      %v5440 = vadd.f32 %v5400, %v5439
      %v5441 = vpop.f32.mrf.mxu0
      %v5442 = vpop.f32.mrf.mxu0
      %v5443 = vpop.f32.mrf.mxu0
      %5444 = vdwg.mxu0
      %5445 = vmatprep.subr.bf16.mxu0 0
      %5446 = vmatpush1.bf16.msra.mxu0 %v3900
      %5447 = vmatprep.subr.bf16.mxu0 0
      %5448 = vmatpush1.bf16.msra.mxu0 %v3899
      %5449 = vmatprep.subr.bf16.mxu0 0
      %5450 = vmatpush1.bf16.msra.mxu0 %v3898
      %5451 = vmatprep.subr.bf16.mxu0 0
      %5452 = vmatpush1.bf16.msra.mxu0 %v3897
      %5453 = vmatprep.subr.bf16.mxu0 0
      %5454 = vmatpush1.bf16.msra.mxu0 %v3896
      %5455 = vmatprep.subr.bf16.mxu0 0
      %5456 = vmatpush1.bf16.msra.mxu0 %v3895
      %5457 = vmatprep.subr.bf16.mxu0 0
      %5458 = vmatpush1.bf16.msra.mxu0 %v3894
      %5459 = vmatprep.subr.bf16.mxu0 0
      %5460 = vmatpush1.bf16.msra.mxu0 %v3893
      %5461 = vmatprep.subr.bf16.mxu0 0
      %5462 = vmatpush2.bf16.msra.mxu0 %v3908
      %5463 = vmatprep.subr.bf16.mxu0 0
      %5464 = vmatpush2.bf16.msra.mxu0 %v3907
      %5465 = vmatprep.subr.bf16.mxu0 0
      %5466 = vmatpush2.bf16.msra.mxu0 %v3906
      %5467 = vmatprep.subr.bf16.mxu0 0
      %5468 = vmatpush2.bf16.msra.mxu0 %v3905
      %5469 = vmatprep.subr.bf16.mxu0 0
      %5470 = vmatpush2.bf16.msra.mxu0 %v3904
      %5471 = vmatprep.subr.bf16.mxu0 0
      %5472 = vmatpush2.bf16.msra.mxu0 %v3903
      %5473 = vmatprep.subr.bf16.mxu0 0
      %5474 = vmatpush2.bf16.msra.mxu0 %v3902
      %5475 = vmatprep.subr.bf16.mxu0 0
      %5476 = vmatpush2.bf16.msra.mxu0 %v3901
      %5477 = vmatprep.mubr.bf16.mxu0 %v1410
      %5478 = vmatmul.mubr.bf16.gmra.mxu0 %v1409
      %v5479 = vpop.f32.mrf.mxu0
      %v5480 = vadd.f32 %v5440, %v5479
      %v5481 = vpop.f32.mrf.mxu0
      %v5482 = vpop.f32.mrf.mxu0
      %v5483 = vpop.f32.mrf.mxu0
      %5484 = vdwg.mxu0
      %5485 = vmatprep.subr.bf16.mxu0 0
      %5486 = vmatpush1.bf16.msra.mxu0 %v3916
      %5487 = vmatprep.subr.bf16.mxu0 0
      %5488 = vmatpush1.bf16.msra.mxu0 %v3915
      %5489 = vmatprep.subr.bf16.mxu0 0
      %5490 = vmatpush1.bf16.msra.mxu0 %v3914
      %5491 = vmatprep.subr.bf16.mxu0 0
      %5492 = vmatpush1.bf16.msra.mxu0 %v3913
      %5493 = vmatprep.subr.bf16.mxu0 0
      %5494 = vmatpush1.bf16.msra.mxu0 %v3912
      %5495 = vmatprep.subr.bf16.mxu0 0
      %5496 = vmatpush1.bf16.msra.mxu0 %v3911
      %5497 = vmatprep.subr.bf16.mxu0 0
      %5498 = vmatpush1.bf16.msra.mxu0 %v3910
      %5499 = vmatprep.subr.bf16.mxu0 0
      %5500 = vmatpush1.bf16.msra.mxu0 %v3909
      %5501 = vmatprep.subr.bf16.mxu0 0
      %5502 = vmatpush2.bf16.msra.mxu0 %v3924
      %5503 = vmatprep.subr.bf16.mxu0 0
      %5504 = vmatpush2.bf16.msra.mxu0 %v3923
      %5505 = vmatprep.subr.bf16.mxu0 0
      %5506 = vmatpush2.bf16.msra.mxu0 %v3922
      %5507 = vmatprep.subr.bf16.mxu0 0
      %5508 = vmatpush2.bf16.msra.mxu0 %v3921
      %5509 = vmatprep.subr.bf16.mxu0 0
      %5510 = vmatpush2.bf16.msra.mxu0 %v3920
      %5511 = vmatprep.subr.bf16.mxu0 0
      %5512 = vmatpush2.bf16.msra.mxu0 %v3919
      %5513 = vmatprep.subr.bf16.mxu0 0
      %5514 = vmatpush2.bf16.msra.mxu0 %v3918
      %5515 = vmatprep.subr.bf16.mxu0 0
      %5516 = vmatpush2.bf16.msra.mxu0 %v3917
      %5517 = vmatprep.mubr.bf16.mxu0 %v1412
      %5518 = vmatmul.mubr.bf16.gmra.mxu0 %v1411
      %v5519 = vpop.f32.mrf.mxu0
      %v5520 = vadd.f32 %v5480, %v5519
      %v5521 = vpop.f32.mrf.mxu0
      %v5522 = vpop.f32.mrf.mxu0
      %v5523 = vpop.f32.mrf.mxu0
      %5524 = vdwg.mxu0
      %5525 = vmatprep.subr.bf16.mxu0 0
      %5526 = vmatpush1.bf16.msra.mxu0 %v3932
      %5527 = vmatprep.subr.bf16.mxu0 0
      %5528 = vmatpush1.bf16.msra.mxu0 %v3931
      %5529 = vmatprep.subr.bf16.mxu0 0
      %5530 = vmatpush1.bf16.msra.mxu0 %v3930
      %5531 = vmatprep.subr.bf16.mxu0 0
      %5532 = vmatpush1.bf16.msra.mxu0 %v3929
      %5533 = vmatprep.subr.bf16.mxu0 0
      %5534 = vmatpush1.bf16.msra.mxu0 %v3928
      %5535 = vmatprep.subr.bf16.mxu0 0
      %5536 = vmatpush1.bf16.msra.mxu0 %v3927
      %5537 = vmatprep.subr.bf16.mxu0 0
      %5538 = vmatpush1.bf16.msra.mxu0 %v3926
      %5539 = vmatprep.subr.bf16.mxu0 0
      %5540 = vmatpush1.bf16.msra.mxu0 %v3925
      %5541 = vmatprep.subr.bf16.mxu0 0
      %5542 = vmatpush2.bf16.msra.mxu0 %v3940
      %5543 = vmatprep.subr.bf16.mxu0 0
      %5544 = vmatpush2.bf16.msra.mxu0 %v3939
      %5545 = vmatprep.subr.bf16.mxu0 0
      %5546 = vmatpush2.bf16.msra.mxu0 %v3938
      %5547 = vmatprep.subr.bf16.mxu0 0
      %5548 = vmatpush2.bf16.msra.mxu0 %v3937
      %5549 = vmatprep.subr.bf16.mxu0 0
      %5550 = vmatpush2.bf16.msra.mxu0 %v3936
      %5551 = vmatprep.subr.bf16.mxu0 0
      %5552 = vmatpush2.bf16.msra.mxu0 %v3935
      %5553 = vmatprep.subr.bf16.mxu0 0
      %5554 = vmatpush2.bf16.msra.mxu0 %v3934
      %5555 = vmatprep.subr.bf16.mxu0 0
      %5556 = vmatpush2.bf16.msra.mxu0 %v3933
      %5557 = vmatprep.mubr.bf16.mxu0 %v1414
      %5558 = vmatmul.mubr.bf16.gmra.mxu0 %v1413
      %v5559 = vpop.f32.mrf.mxu0
      %v5560 = vadd.f32 %v5520, %v5559
      %v5561 = vpop.f32.mrf.mxu0
      %v5562 = vpop.f32.mrf.mxu0
      %v5563 = vpop.f32.mrf.mxu0
      %5564 = vdwg.mxu0
      %5565 = vmatprep.subr.bf16.mxu0 0
      %5566 = vmatpush1.bf16.msra.mxu0 %v3948
      %5567 = vmatprep.subr.bf16.mxu0 0
      %5568 = vmatpush1.bf16.msra.mxu0 %v3947
      %5569 = vmatprep.subr.bf16.mxu0 0
      %5570 = vmatpush1.bf16.msra.mxu0 %v3946
      %5571 = vmatprep.subr.bf16.mxu0 0
      %5572 = vmatpush1.bf16.msra.mxu0 %v3945
      %5573 = vmatprep.subr.bf16.mxu0 0
      %5574 = vmatpush1.bf16.msra.mxu0 %v3944
      %5575 = vmatprep.subr.bf16.mxu0 0
      %5576 = vmatpush1.bf16.msra.mxu0 %v3943
      %5577 = vmatprep.subr.bf16.mxu0 0
      %5578 = vmatpush1.bf16.msra.mxu0 %v3942
      %5579 = vmatprep.subr.bf16.mxu0 0
      %5580 = vmatpush1.bf16.msra.mxu0 %v3941
      %5581 = vmatprep.subr.bf16.mxu0 0
      %5582 = vmatpush2.bf16.msra.mxu0 %v3956
      %5583 = vmatprep.subr.bf16.mxu0 0
      %5584 = vmatpush2.bf16.msra.mxu0 %v3955
      %5585 = vmatprep.subr.bf16.mxu0 0
      %5586 = vmatpush2.bf16.msra.mxu0 %v3954
      %5587 = vmatprep.subr.bf16.mxu0 0
      %5588 = vmatpush2.bf16.msra.mxu0 %v3953
      %5589 = vmatprep.subr.bf16.mxu0 0
      %5590 = vmatpush2.bf16.msra.mxu0 %v3952
      %5591 = vmatprep.subr.bf16.mxu0 0
      %5592 = vmatpush2.bf16.msra.mxu0 %v3951
      %5593 = vmatprep.subr.bf16.mxu0 0
      %5594 = vmatpush2.bf16.msra.mxu0 %v3950
      %5595 = vmatprep.subr.bf16.mxu0 0
      %5596 = vmatpush2.bf16.msra.mxu0 %v3949
      %5597 = vmatprep.mubr.bf16.mxu0 %v1416
      %5598 = vmatmul.mubr.bf16.gmra.mxu0 %v1415
      %v5599 = vpop.f32.mrf.mxu0
      %v5600 = vadd.f32 %v5560, %v5599
      %v5601 = vpop.f32.mrf.mxu0
      %v5602 = vpop.f32.mrf.mxu0
      %v5603 = vpop.f32.mrf.mxu0
      %5604 = vdwg.mxu0
      %5605 = vmatprep.subr.bf16.mxu0 0
      %5606 = vmatpush1.bf16.msra.mxu0 %v3964
      %5607 = vmatprep.subr.bf16.mxu0 0
      %5608 = vmatpush1.bf16.msra.mxu0 %v3963
      %5609 = vmatprep.subr.bf16.mxu0 0
      %5610 = vmatpush1.bf16.msra.mxu0 %v3962
      %5611 = vmatprep.subr.bf16.mxu0 0
      %5612 = vmatpush1.bf16.msra.mxu0 %v3961
      %5613 = vmatprep.subr.bf16.mxu0 0
      %5614 = vmatpush1.bf16.msra.mxu0 %v3960
      %5615 = vmatprep.subr.bf16.mxu0 0
      %5616 = vmatpush1.bf16.msra.mxu0 %v3959
      %5617 = vmatprep.subr.bf16.mxu0 0
      %5618 = vmatpush1.bf16.msra.mxu0 %v3958
      %5619 = vmatprep.subr.bf16.mxu0 0
      %5620 = vmatpush1.bf16.msra.mxu0 %v3957
      %5621 = vmatprep.subr.bf16.mxu0 0
      %5622 = vmatpush2.bf16.msra.mxu0 %v3972
      %5623 = vmatprep.subr.bf16.mxu0 0
      %5624 = vmatpush2.bf16.msra.mxu0 %v3971
      %5625 = vmatprep.subr.bf16.mxu0 0
      %5626 = vmatpush2.bf16.msra.mxu0 %v3970
      %5627 = vmatprep.subr.bf16.mxu0 0
      %5628 = vmatpush2.bf16.msra.mxu0 %v3969
      %5629 = vmatprep.subr.bf16.mxu0 0
      %5630 = vmatpush2.bf16.msra.mxu0 %v3968
      %5631 = vmatprep.subr.bf16.mxu0 0
      %5632 = vmatpush2.bf16.msra.mxu0 %v3967
      %5633 = vmatprep.subr.bf16.mxu0 0
      %5634 = vmatpush2.bf16.msra.mxu0 %v3966
      %5635 = vmatprep.subr.bf16.mxu0 0
      %5636 = vmatpush2.bf16.msra.mxu0 %v3965
      %5637 = vmatprep.mubr.bf16.mxu0 %v1418
      %5638 = vmatmul.mubr.bf16.gmra.mxu0 %v1417
      %v5639 = vpop.f32.mrf.mxu0
      %v5640 = vadd.f32 %v5600, %v5639
      %v5641 = vpop.f32.mrf.mxu0
      %v5642 = vpop.f32.mrf.mxu0
      %v5643 = vpop.f32.mrf.mxu0
      %5644 = vdwg.mxu0
      %5645 = vmatprep.subr.bf16.mxu0 0
      %5646 = vmatpush1.bf16.msra.mxu0 %v3980
      %5647 = vmatprep.subr.bf16.mxu0 0
      %5648 = vmatpush1.bf16.msra.mxu0 %v3979
      %5649 = vmatprep.subr.bf16.mxu0 0
      %5650 = vmatpush1.bf16.msra.mxu0 %v3978
      %5651 = vmatprep.subr.bf16.mxu0 0
      %5652 = vmatpush1.bf16.msra.mxu0 %v3977
      %5653 = vmatprep.subr.bf16.mxu0 0
      %5654 = vmatpush1.bf16.msra.mxu0 %v3976
      %5655 = vmatprep.subr.bf16.mxu0 0
      %5656 = vmatpush1.bf16.msra.mxu0 %v3975
      %5657 = vmatprep.subr.bf16.mxu0 0
      %5658 = vmatpush1.bf16.msra.mxu0 %v3974
      %5659 = vmatprep.subr.bf16.mxu0 0
      %5660 = vmatpush1.bf16.msra.mxu0 %v3973
      %5661 = vmatprep.subr.bf16.mxu0 0
      %5662 = vmatpush2.bf16.msra.mxu0 %v3988
      %5663 = vmatprep.subr.bf16.mxu0 0
      %5664 = vmatpush2.bf16.msra.mxu0 %v3987
      %5665 = vmatprep.subr.bf16.mxu0 0
      %5666 = vmatpush2.bf16.msra.mxu0 %v3986
      %5667 = vmatprep.subr.bf16.mxu0 0
      %5668 = vmatpush2.bf16.msra.mxu0 %v3985
      %5669 = vmatprep.subr.bf16.mxu0 0
      %5670 = vmatpush2.bf16.msra.mxu0 %v3984
      %5671 = vmatprep.subr.bf16.mxu0 0
      %5672 = vmatpush2.bf16.msra.mxu0 %v3983
      %5673 = vmatprep.subr.bf16.mxu0 0
      %5674 = vmatpush2.bf16.msra.mxu0 %v3982
      %5675 = vmatprep.subr.bf16.mxu0 0
      %5676 = vmatpush2.bf16.msra.mxu0 %v3981
      %5677 = vmatprep.mubr.bf16.mxu0 %v1420
      %5678 = vmatmul.mubr.bf16.gmra.mxu0 %v1419
      %v5679 = vpop.f32.mrf.mxu0
      %v5680 = vadd.f32 %v5640, %v5679
      %v5681 = vpop.f32.mrf.mxu0
      %v5682 = vpop.f32.mrf.mxu0
      %v5683 = vpop.f32.mrf.mxu0
      %5684 = vdwg.mxu0
      %5685 = vmatprep.subr.bf16.mxu0 0
      %5686 = vmatpush1.bf16.msra.mxu0 %v3996
      %5687 = vmatprep.subr.bf16.mxu0 0
      %5688 = vmatpush1.bf16.msra.mxu0 %v3995
      %5689 = vmatprep.subr.bf16.mxu0 0
      %5690 = vmatpush1.bf16.msra.mxu0 %v3994
      %5691 = vmatprep.subr.bf16.mxu0 0
      %5692 = vmatpush1.bf16.msra.mxu0 %v3993
      %5693 = vmatprep.subr.bf16.mxu0 0
      %5694 = vmatpush1.bf16.msra.mxu0 %v3992
      %5695 = vmatprep.subr.bf16.mxu0 0
      %5696 = vmatpush1.bf16.msra.mxu0 %v3991
      %5697 = vmatprep.subr.bf16.mxu0 0
      %5698 = vmatpush1.bf16.msra.mxu0 %v3990
      %5699 = vmatprep.subr.bf16.mxu0 0
      %5700 = vmatpush1.bf16.msra.mxu0 %v3989
      %5701 = vmatprep.subr.bf16.mxu0 0
      %5702 = vmatpush2.bf16.msra.mxu0 %v4004
      %5703 = vmatprep.subr.bf16.mxu0 0
      %5704 = vmatpush2.bf16.msra.mxu0 %v4003
      %5705 = vmatprep.subr.bf16.mxu0 0
      %5706 = vmatpush2.bf16.msra.mxu0 %v4002
      %5707 = vmatprep.subr.bf16.mxu0 0
      %5708 = vmatpush2.bf16.msra.mxu0 %v4001
      %5709 = vmatprep.subr.bf16.mxu0 0
      %5710 = vmatpush2.bf16.msra.mxu0 %v4000
      %5711 = vmatprep.subr.bf16.mxu0 0
      %5712 = vmatpush2.bf16.msra.mxu0 %v3999
      %5713 = vmatprep.subr.bf16.mxu0 0
      %5714 = vmatpush2.bf16.msra.mxu0 %v3998
      %5715 = vmatprep.subr.bf16.mxu0 0
      %5716 = vmatpush2.bf16.msra.mxu0 %v3997
      %5717 = vmatprep.mubr.bf16.mxu0 %v1422
      %5718 = vmatmul.mubr.bf16.gmra.mxu0 %v1421
      %v5719 = vpop.f32.mrf.mxu0
      %v5720 = vadd.f32 %v5680, %v5719
      %v5721 = vpop.f32.mrf.mxu0
      %v5722 = vpop.f32.mrf.mxu0
      %v5723 = vpop.f32.mrf.mxu0
      %5724 = vdwg.mxu0
      %5725 = vmatprep.subr.bf16.mxu0 0
      %5726 = vmatpush1.bf16.msra.mxu0 %v4012
      %5727 = vmatprep.subr.bf16.mxu0 0
      %5728 = vmatpush1.bf16.msra.mxu0 %v4011
      %5729 = vmatprep.subr.bf16.mxu0 0
      %5730 = vmatpush1.bf16.msra.mxu0 %v4010
      %5731 = vmatprep.subr.bf16.mxu0 0
      %5732 = vmatpush1.bf16.msra.mxu0 %v4009
      %5733 = vmatprep.subr.bf16.mxu0 0
      %5734 = vmatpush1.bf16.msra.mxu0 %v4008
      %5735 = vmatprep.subr.bf16.mxu0 0
      %5736 = vmatpush1.bf16.msra.mxu0 %v4007
      %5737 = vmatprep.subr.bf16.mxu0 0
      %5738 = vmatpush1.bf16.msra.mxu0 %v4006
      %5739 = vmatprep.subr.bf16.mxu0 0
      %5740 = vmatpush1.bf16.msra.mxu0 %v4005
      %5741 = vmatprep.subr.bf16.mxu0 0
      %5742 = vmatpush2.bf16.msra.mxu0 %v4020
      %5743 = vmatprep.subr.bf16.mxu0 0
      %5744 = vmatpush2.bf16.msra.mxu0 %v4019
      %5745 = vmatprep.subr.bf16.mxu0 0
      %5746 = vmatpush2.bf16.msra.mxu0 %v4018
      %5747 = vmatprep.subr.bf16.mxu0 0
      %5748 = vmatpush2.bf16.msra.mxu0 %v4017
      %5749 = vmatprep.subr.bf16.mxu0 0
      %5750 = vmatpush2.bf16.msra.mxu0 %v4016
      %5751 = vmatprep.subr.bf16.mxu0 0
      %5752 = vmatpush2.bf16.msra.mxu0 %v4015
      %5753 = vmatprep.subr.bf16.mxu0 0
      %5754 = vmatpush2.bf16.msra.mxu0 %v4014
      %5755 = vmatprep.subr.bf16.mxu0 0
      %5756 = vmatpush2.bf16.msra.mxu0 %v4013
      %5757 = vmatprep.mubr.bf16.mxu0 %v1424
      %5758 = vmatmul.mubr.bf16.gmra.mxu0 %v1423
      %v5759 = vpop.f32.mrf.mxu0
      %v5760 = vadd.f32 %v5720, %v5759
      %v5761 = vpop.f32.mrf.mxu0
      %v5762 = vpop.f32.mrf.mxu0
      %v5763 = vpop.f32.mrf.mxu0
      %5764 = vdwg.mxu0
      %5765 = vmatprep.subr.bf16.mxu0 0
      %5766 = vmatpush1.bf16.msra.mxu0 %v4028
      %5767 = vmatprep.subr.bf16.mxu0 0
      %5768 = vmatpush1.bf16.msra.mxu0 %v4027
      %5769 = vmatprep.subr.bf16.mxu0 0
      %5770 = vmatpush1.bf16.msra.mxu0 %v4026
      %5771 = vmatprep.subr.bf16.mxu0 0
      %5772 = vmatpush1.bf16.msra.mxu0 %v4025
      %5773 = vmatprep.subr.bf16.mxu0 0
      %5774 = vmatpush1.bf16.msra.mxu0 %v4024
      %5775 = vmatprep.subr.bf16.mxu0 0
      %5776 = vmatpush1.bf16.msra.mxu0 %v4023
      %5777 = vmatprep.subr.bf16.mxu0 0
      %5778 = vmatpush1.bf16.msra.mxu0 %v4022
      %5779 = vmatprep.subr.bf16.mxu0 0
      %5780 = vmatpush1.bf16.msra.mxu0 %v4021
      %5781 = vmatprep.subr.bf16.mxu0 0
      %5782 = vmatpush2.bf16.msra.mxu0 %v4036
      %5783 = vmatprep.subr.bf16.mxu0 0
      %5784 = vmatpush2.bf16.msra.mxu0 %v4035
      %5785 = vmatprep.subr.bf16.mxu0 0
      %5786 = vmatpush2.bf16.msra.mxu0 %v4034
      %5787 = vmatprep.subr.bf16.mxu0 0
      %5788 = vmatpush2.bf16.msra.mxu0 %v4033
      %5789 = vmatprep.subr.bf16.mxu0 0
      %5790 = vmatpush2.bf16.msra.mxu0 %v4032
      %5791 = vmatprep.subr.bf16.mxu0 0
      %5792 = vmatpush2.bf16.msra.mxu0 %v4031
      %5793 = vmatprep.subr.bf16.mxu0 0
      %5794 = vmatpush2.bf16.msra.mxu0 %v4030
      %5795 = vmatprep.subr.bf16.mxu0 0
      %5796 = vmatpush2.bf16.msra.mxu0 %v4029
      %5797 = vmatprep.mubr.bf16.mxu0 %v1426
      %5798 = vmatmul.mubr.bf16.gmra.mxu0 %v1425
      %v5799 = vpop.f32.mrf.mxu0
      %v5800 = vadd.f32 %v5760, %v5799
      %v5801 = vpop.f32.mrf.mxu0
      %v5802 = vpop.f32.mrf.mxu0
      %v5803 = vpop.f32.mrf.mxu0
      %5804 = vdwg.mxu0
      %5805 = vmatprep.subr.bf16.mxu0 0
      %5806 = vmatpush1.bf16.msra.mxu0 %v4044
      %5807 = vmatprep.subr.bf16.mxu0 0
      %5808 = vmatpush1.bf16.msra.mxu0 %v4043
      %5809 = vmatprep.subr.bf16.mxu0 0
      %5810 = vmatpush1.bf16.msra.mxu0 %v4042
      %5811 = vmatprep.subr.bf16.mxu0 0
      %5812 = vmatpush1.bf16.msra.mxu0 %v4041
      %5813 = vmatprep.subr.bf16.mxu0 0
      %5814 = vmatpush1.bf16.msra.mxu0 %v4040
      %5815 = vmatprep.subr.bf16.mxu0 0
      %5816 = vmatpush1.bf16.msra.mxu0 %v4039
      %5817 = vmatprep.subr.bf16.mxu0 0
      %5818 = vmatpush1.bf16.msra.mxu0 %v4038
      %5819 = vmatprep.subr.bf16.mxu0 0
      %5820 = vmatpush1.bf16.msra.mxu0 %v4037
      %5821 = vmatprep.subr.bf16.mxu0 0
      %5822 = vmatpush2.bf16.msra.mxu0 %v4052
      %5823 = vmatprep.subr.bf16.mxu0 0
      %5824 = vmatpush2.bf16.msra.mxu0 %v4051
      %5825 = vmatprep.subr.bf16.mxu0 0
      %5826 = vmatpush2.bf16.msra.mxu0 %v4050
      %5827 = vmatprep.subr.bf16.mxu0 0
      %5828 = vmatpush2.bf16.msra.mxu0 %v4049
      %5829 = vmatprep.subr.bf16.mxu0 0
      %5830 = vmatpush2.bf16.msra.mxu0 %v4048
      %5831 = vmatprep.subr.bf16.mxu0 0
      %5832 = vmatpush2.bf16.msra.mxu0 %v4047
      %5833 = vmatprep.subr.bf16.mxu0 0
      %5834 = vmatpush2.bf16.msra.mxu0 %v4046
      %5835 = vmatprep.subr.bf16.mxu0 0
      %5836 = vmatpush2.bf16.msra.mxu0 %v4045
      %5837 = vmatprep.mubr.bf16.mxu0 %v1428
      %5838 = vmatmul.mubr.bf16.gmra.mxu0 %v1427
      %v5839 = vpop.f32.mrf.mxu0
      %v5840 = vadd.f32 %v5800, %v5839
      %v5841 = vpop.f32.mrf.mxu0
      %v5842 = vpop.f32.mrf.mxu0
      %v5843 = vpop.f32.mrf.mxu0
      %5844 = vdwg.mxu0
      %v5845 = vadd.f32 %v212, %v5840
      %5846 = vst [vmem:[%s205] sm:$0xff] %v5845
      %p5847 = scmp.lt.s32.totalorder %s17, 1
      %s5848 = scalar_select %p5847, %s17, 1
      %s5849 = smul.addr %s5848, 8
      %s5850 = scalar_lea.vmem %s2, %s5849
      // Predicated region
      $region33: #{simple_cnn_forward.10} parent=27 // pred_check
        %p5851 = pneg %p103
      $region34: #{simple_cnn_forward.10} parent=27 // pred_check_branch
        %5853 = sbr.rel (%p5851) target = $region36
      $region35: #{simple_cnn_forward.10} parent=27 // pred_region
        _
      $region36: #{simple_cnn_forward.10} parent=27 // pred_fallthru
        _
    $region28: #{simple_cnn_forward.10} parent=5 // pred_fallthru
      _
    %p5854 = scmp.le.s32.totalorder 2, %s8
    // Predicated region
    $region37: #{simple_cnn_forward.10} parent=5 // pred_check
      %p5855 = pneg %p5854
    $region38: #{simple_cnn_forward.10} parent=5 // pred_check_branch
      %5857 = sbr.rel (%p5855) target = $region40
    $region39: #{simple_cnn_forward.10} parent=5 // pred_region
      %s5858 = ssub.s32 %s8, 2
      // Predicated region
      $region41: #{simple_cnn_forward.10} parent=39 // pred_check
        %p5859 = pneg %p109
      $region42: #{simple_cnn_forward.10} parent=39 // pred_check_branch
        %5861 = sbr.rel (%p5859) target = $region44
      $region43: #{simple_cnn_forward.10} parent=39 // pred_region
        %p5862 = scmp.lt.s32.totalorder %s19, 1
        %s5863 = scalar_select %p5862, %s19, 1
        %s5864 = smul.addr %s5863, 8
        %s5865 = scalar_lea.vmem %s2, %s5864
      $region44: #{simple_cnn_forward.10} parent=39 // pred_fallthru
        _
    $region40: #{simple_cnn_forward.10} parent=5 // pred_fallthru
      _
  $region6: #{simple_cnn_forward.10} parent=0 // loop_footer
    %s12 = sadd.s32 1, %s8
  $region7: #{simple_cnn_forward.10} parent=0 // loop_footer_branch
    %7 = sbr.rel target = $region3
  $region8: #{simple_cnn_forward.10} parent=0 // loop_exit
    _

</llo_original>
